<compile_context>
chip_gen: v6e
topology: v6e:2x2x1
jax: 0.10.0
libtpu: 0.0.40
codegen_flags: <defaults>
</compile_context>

<pallas_src>
import jax
import jax.numpy as jnp
import numpy as np
from jax.experimental import pallas as pl
from jax.experimental.pallas import tpu as pltpu

D_MODEL = 768   # BERT hidden size (nn.Linear(768, 512) in the rank nets)
D_RANK = 512


# ----------------------------------------------------------------------------
# Fused kernel: masked mean pooling (MXU) + Priori/Posterior rank nets
# ----------------------------------------------------------------------------
def _vsum_rank_kernel(tok_ref, p_sent_ref, mask_num_ref, qsel_ref,
                      wk_ref, bk_ref, wq_ref, bq_ref, out_ref):
    """BT dialogs per grid step, everything bf16 on the MXU with f32 accumulation."""
    BT = tok_ref.shape[0]
    D = tok_ref.shape[2]
    S = out_ref.shape[2]
    H2 = wk_ref.shape[1]

    # One bf16 pooling matmul per dialog: rows 0..S-1 -> sentence embeddings,
    # row S -> prior average query, row S+1 -> pooled target response
    # (mask & 1/len folded into the pooling weights host-side).
    pooled = jnp.einsum("bpk,bkd->bpd", p_sent_ref[...], tok_ref[...],
                        preferred_element_type=jnp.float32)          # (BT, S+2, D) f32

    sent_emb = pooled[:, :S, :].astype(jnp.bfloat16)                 # (BT, S, D)
    q_in = pooled[:, S:S + 2, :].astype(jnp.bfloat16)                # (BT, 2, D)

    # Prior|posterior projections fused into single wide bf16 matmuls over the
    # whole BT-dialog block (weights remain bf16 in VMEM; f32 accumulate only).
    key_cat = (jnp.dot(sent_emb.reshape(BT * S, D), wk_ref[...],
                       preferred_element_type=jnp.float32)
               + bk_ref[...])                                        # (BT*S, 2H) f32
    q_cat = (jnp.dot(q_in.reshape(BT * 2, D), wq_ref[...],
                     preferred_element_type=jnp.float32)
             + bq_ref[...])                                          # (BT*2, 2H) f32

    # Host-precomputed half-select: query row 0 keeps the prior half of its
    # lanes, row 1 the posterior half, so one batched matmul gives both nets.
    q_sel = q_cat.reshape(BT, 2, H2) * qsel_ref[...][None]
    logits = jnp.einsum("bqh,bsh->bqs", q_sel, key_cat.reshape(BT, S, H2),
                        preferred_element_type=jnp.float32)          # (BT, 2, S)
    logits = logits + mask_num_ref[...]                              # broadcast (BT,1,S)

    # TODO(synk): the reference torch code softmaxes an unsqueezed size-1 axis
    # (identically 1.0); we softmax over the sentence axis — the ranking
    # distribution actually consumed by topk downstream.
    m = jnp.max(logits, axis=-1, keepdims=True)
    e = jnp.exp(logits - m)
    out_ref[...] = e * pl.reciprocal(jnp.sum(e, axis=-1, keepdims=True), approx=True)


# ----------------------------------------------------------------------------
# VSumDialog forward (implementable subset)
# ----------------------------------------------------------------------------
def _pick_block_batch(B):
    """Dialogs per grid step: amortize the per-step pipeline overhead but keep
    >= 2 grid steps so both v7x TensorCores get work."""
    bt = max(1, min(8, B // 2))
    while B % bt:
        bt -= 1
    return bt


def vsum_dialog_rank_forward(sentences_tok_hidden, sentences_ids_mask,
                             target_tok_hidden, target_response_mask,
                             sentence_num, params, block_batch=None):
    """Sentence-scoring core of VSumDialog.get_summary_and_decoder_input.

    Returns (prior_scores, posterior_scores), each (B, S, 1) float32."""
    B = sentence_num.shape[0]
    NS, L, D = sentences_tok_hidden.shape
    S = NS // B
    Lr = target_tok_hidden.shape[1]
    H = params["prior_wq"].shape[1]
    K = S * L + Lr
    f32, bf16 = jnp.float32, jnp.bfloat16

    BT = _pick_block_batch(B) if block_batch is None else block_batch
    assert B % BT == 0

    # --- token states in bf16: halves the dominant HBM stream & VMEM blocks ---
    if sentences_tok_hidden.dtype != bf16:
        sentences_tok_hidden = sentences_tok_hidden.astype(bf16)
    if target_tok_hidden.dtype != bf16:
        target_tok_hidden = target_tok_hidden.astype(bf16)
    tok = jnp.concatenate(
        [sentences_tok_hidden.reshape(B, S * L, D), target_tok_hidden], axis=1)  # (B, K, D)

    # --- pooling-weight matrix (bf16): per-sentence mean rows | prior-average
    #     row | target-response row, all with mask & 1/len folded in ----------
    tok_mask = sentences_ids_mask.astype(f32)                                    # (B*S, L)
    tok_w = (tok_mask / jnp.maximum(tok_mask.sum(-1, keepdims=True), 1.0)).reshape(B, S, L)
    block_diag = (jnp.eye(S, dtype=f32)[None, :, :, None] * tok_w[:, :, None, :]
                  ).reshape(B, S, S * L)
    sent_mask = (jnp.arange(S)[None, :] < sentence_num[:, None]).astype(f32)     # (B, S)
    # TODO(synk): torch divides by sentence_num with no guard (NaN for an empty
    # dialog); we guard with max(n, 1) so the result stays finite.
    n_safe = jnp.maximum(sentence_num.astype(f32), 1.0)
    prior_row = ((sent_mask / n_safe[:, None])[:, :, None] * tok_w).reshape(B, 1, S * L)
    tgt_mask = target_response_mask.astype(f32)
    tgt_w = (tgt_mask / jnp.maximum(tgt_mask.sum(-1, keepdims=True), 1.0)).reshape(B, 1, Lr)
    p_sent = jnp.concatenate([
        jnp.concatenate([jnp.concatenate([block_diag, prior_row], axis=1),
                         jnp.zeros((B, S + 1, Lr), f32)], axis=2),
        jnp.concatenate([jnp.zeros((B, 1, S * L), f32), tgt_w], axis=2),
    ], axis=1).astype(bf16)                                                      # (B, S+2, K)

    # Single remaining small per-dialog side input (tgt_w was folded into p_sent).
    mask_num = ((1.0 - sent_mask) * (-2000.0)).reshape(B, 1, S)

    # Prior|posterior nets fused: one wide key projection, one wide query projection.
    wk_cat = jnp.concatenate([params["prior_wk"], params["post_wk"]], axis=1).astype(bf16)
    wq_cat = jnp.concatenate([params["prior_wq"], params["post_wq"]], axis=1).astype(bf16)
    bk_cat = jnp.concatenate([params["prior_bk"], params["post_bk"]], axis=1)    # f32, tiny
    bq_cat = jnp.concatenate([params["prior_bq"], params["post_bq"]], axis=1)

    # Precomputed half-select: query row 0 keeps the prior half of its lanes,
    # row 1 keeps the posterior half.
    qsel = ((jnp.arange(2 * H)[None, :] >= H).astype(jnp.int32)
            == jnp.arange(2)[:, None]).astype(f32)                               # (2, 2H)

    const2 = lambda b: (0, 0)
    # VMEM/step (BT=2, bf16): tok ~2x432 KiB + weights ~2x3 MiB + small blocks
    # -> well under the 32 MiB scoped default (64 MiB physical on v7x).  For
    # large BT re-budget (or raise vmem_limit_bytes); on v7x the constant-index
    # weight specs could also be dropped to a single pipeline buffer.
    scores = pl.pallas_call(
        _vsum_rank_kernel,
        out_shape=jax.ShapeDtypeStruct((B, 2, S), f32),
        grid=(B // BT,),
        in_specs=[
            pl.BlockSpec((BT, K, D), lambda b: (b, 0, 0)),         # token states (sent | tgt), bf16
            pl.BlockSpec((BT, S + 2, K), lambda b: (b, 0, 0)),     # pooling weights, bf16
            pl.BlockSpec((BT, 1, S), lambda b: (b, 0, 0)),         # -2000 sentence mask
            pl.BlockSpec((2, 2 * H), const2),                      # prior/post half-select
            pl.BlockSpec((D, 2 * H), const2),                      # Wk (bf16)
            pl.BlockSpec((1, 2 * H), const2),                      # bk
            pl.BlockSpec((D, 2 * H), const2),                      # Wq (bf16)
            pl.BlockSpec((1, 2 * H), const2),                      # bq
        ],
        out_specs=pl.BlockSpec((BT, 2, S), lambda b: (b, 0, 0)),   # (prior, posterior) rows
        compiler_params=pltpu.CompilerParams(dimension_semantics=("parallel",)),
    )(tok, p_sent, mask_num, qsel, wk_cat, bk_cat, wq_cat, bq_cat)

    prior = scores[:, 0, :, None]   # (B, S, 1)
    post = scores[:, 1, :, None]    # (B, S, 1)
    return prior, post


def init_params(key, d_in=D_MODEL, d_out=D_RANK):
    ks = jax.random.split(key, 8)
    s = 1.0 / np.sqrt(d_in)

    def w(k):  # stored transposed vs. torch (in, out) so the matmul is x @ W
        return jax.random.uniform(k, (d_in, d_out), jnp.float32, -s, s)

    def b(k):
        return jax.random.uniform(k, (1, d_out), jnp.float32, -s, s)

    return {
        "prior_wq": w(ks[0]), "prior_bq": b(ks[1]),
        "prior_wk": w(ks[2]), "prior_bk": b(ks[3]),
        "post_wq": w(ks[4]), "post_bq": b(ks[5]),
        "post_wk": w(ks[6]), "post_bk": b(ks[7]),
    }


def _reference(sent_hidden, sent_mask, tgt_hidden, tgt_mask, sentence_num, params, B, S):
    """Pure-JAX reference mirroring the kernel's quantization scheme (bf16
    tokens / pooling weights / rank-net weights, f32 accumulation) so the check
    isolates kernel correctness rather than quantization policy."""
    f32, bf16 = jnp.float32, jnp.bfloat16
    L, D = sent_hidden.shape[1], sent_hidden.shape[2]
    q = lambda x: x.astype(bf16)

    tok_w = sent_mask.astype(f32)
    tok_w = (tok_w / jnp.maximum(tok_w.sum(-1, keepdims=True), 1.0)).reshape(B, S, L)
    tok = sent_hidden.reshape(B, S, L, D)
    sent_emb = jnp.einsum("bsl,bsld->bsd", q(tok_w), q(tok),
                          preferred_element_type=f32)                    # (B, S, D)

    tw = tgt_mask.astype(f32)
    tw = tw / jnp.maximum(tw.sum(-1, keepdims=True), 1.0)
    tgt_emb = jnp.einsum("bl,bld->bd", q(tw), q(tgt_hidden),
                         preferred_element_type=f32)                     # (B, D)

    mask = (jnp.arange(S)[None, :] < sentence_num[:, None]).astype(f32)
    mask_num = (1.0 - mask) * (-2000.0)
    n_safe = jnp.maximum(sentence_num.astype(f32), 1.0)
    prior_w = (mask / n_safe[:, None])[:, :, None] * tok_w               # (B, S, L)
    avg = jnp.einsum("bsl,bsld->bd", q(prior_w), q(tok),
                     preferred_element_type=f32)                         # (B, D)

    def net(q_in, wq, bq, wk, bk):
        qv = jnp.dot(q(q_in), q(wq), preferred_element_type=f32) + bq    # (B, H)
        k = jnp.einsum("bsd,dh->bsh", q(sent_emb), q(wk),
                       preferred_element_type=f32) + bk                  # (B, S, H)
        logits = jnp.einsum("bsh,bh->bs", k, qv) + mask_num
        return jax.nn.softmax(logits, axis=-1)[..., None]

    prior = net(avg, params["prior_wq"], params["prior_bq"],
                params["prior_wk"], params["prior_bk"])
    post = net(tgt_emb, params["post_wq"], params["post_bq"],
               params["post_wk"], params["post_bk"])
    return prior, post


if __name__ == "__main__":
    B, S, L, Lr = 4, 8, 16, 16
    key = jax.random.PRNGKey(0)
    k1, k2, k3, k4, kp = jax.random.split(key, 5)

    # Synthetic "BERT encoder" token-level outputs (the BertModel itself is out of scope).
    sentences_tok_hidden = jax.random.normal(k1, (B * S, L, D_MODEL), jnp.float32)
    sent_lens = jax.random.randint(k2, (B * S,), 0, L + 1)
    sentences_ids_mask = (jnp.arange(L)[None, :] < sent_lens[:, None]).astype(jnp.float32)

    target_tok_hidden = jax.random.normal(k3, (B, Lr, D_MODEL), jnp.float32)
    tgt_lens = jax.random.randint(k4, (B,), 1, Lr + 1)
    target_response_mask = (jnp.arange(Lr)[None, :] < tgt_lens[:, None]).astype(jnp.float32)

    sentence_num = jnp.array([5, 8, 3, 7], dtype=jnp.int32)   # max == S (padding convention)

    params = init_params(kp)

    prior, post = vsum_dialog_rank_forward(
        sentences_tok_hidden, sentences_ids_mask,
        target_tok_hidden, target_response_mask,
        sentence_num, params)
    jax.block_until_ready((prior, post))

    ref_prior, ref_post = _reference(
        sentences_tok_hidden, sentences_ids_mask,
        target_tok_hidden, target_response_mask,
        sentence_num, params, B, S)
    np.testing.assert_allclose(np.asarray(prior), np.asarray(ref_prior), atol=2e-3, rtol=2e-2)
    np.testing.assert_allclose(np.asarray(post), np.asarray(ref_post), atol=2e-3, rtol=2e-2)

    print("KERNEL_OK")
</pallas_src>

<mosaic_0001>
module attributes {stable_mosaic.version = 11 : i64} {
  func.func @_vsum_rank_kernel(%arg0: i32, %arg1: memref<2x144x768xbf16, #tpu.memory_space<vmem>>, %arg2: memref<2x10x144xbf16, #tpu.memory_space<vmem>>, %arg3: memref<2x1x8xf32, #tpu.memory_space<vmem>>, %arg4: memref<2x1024xf32, #tpu.memory_space<vmem>>, %arg5: memref<768x1024xbf16, #tpu.memory_space<vmem>>, %arg6: memref<1x1024xf32, #tpu.memory_space<vmem>>, %arg7: memref<768x1024xbf16, #tpu.memory_space<vmem>>, %arg8: memref<1x1024xf32, #tpu.memory_space<vmem>>, %arg9: memref<2x2x8xf32, #tpu.memory_space<vmem>>) attributes {dimension_semantics = [#tpu.dimension_semantics<parallel>], iteration_bounds = array<i64: 2>, scalar_prefetch = 0 : i64, scratch_operands = 0 : i64, tpu.core_type = #tpu.core_type<tc>, window_params = [{transform_indices = @transform_0, window_bounds = array<i64: 2, 144, 768>}, {transform_indices = @transform_1, window_bounds = array<i64: 2, 10, 144>}, {transform_indices = @transform_2, window_bounds = array<i64: 2, 1, 8>}, {pipeline_mode = #tpu.pipeline_mode<synchronous>, transform_indices = @transform_3, window_bounds = array<i64: 2, 1024>}, {pipeline_mode = #tpu.pipeline_mode<synchronous>, transform_indices = @transform_4, window_bounds = array<i64: 768, 1024>}, {pipeline_mode = #tpu.pipeline_mode<synchronous>, transform_indices = @transform_5, window_bounds = array<i64: 1, 1024>}, {pipeline_mode = #tpu.pipeline_mode<synchronous>, transform_indices = @transform_6, window_bounds = array<i64: 768, 1024>}, {pipeline_mode = #tpu.pipeline_mode<synchronous>, transform_indices = @transform_7, window_bounds = array<i64: 1, 1024>}, {transform_indices = @transform_8, window_bounds = array<i64: 2, 2, 8>}]} {
    %c0 = arith.constant 0 : index
    %c0_0 = arith.constant 0 : index
    %c0_1 = arith.constant 0 : index
    %0 = vector.load %arg2[%c0, %c0_0, %c0_1] : memref<2x10x144xbf16, #tpu.memory_space<vmem>>, vector<2x10x144xbf16>
    %c0_2 = arith.constant 0 : index
    %c0_3 = arith.constant 0 : index
    %c0_4 = arith.constant 0 : index
    %1 = vector.load %arg1[%c0_2, %c0_3, %c0_4] : memref<2x144x768xbf16, #tpu.memory_space<vmem>>, vector<2x144x768xbf16>
    "tpu.trace_start"() <{level = 10 : i32, message = "bpk,bkd->bpd"}> : () -> ()
    %cst = arith.constant dense<0.000000e+00> : vector<2x10x768xf32>
    %2 = tpu.matmul %0, %1, %cst {dimension_numbers = #tpu.dot_dimension_numbers<[2], [1], [1], [2], [0, 0, 0, 1, 1, 2], [0], [0]>} : vector<2x10x144xbf16>, vector<2x144x768xbf16>, vector<2x10x768xf32> -> vector<2x10x768xf32>
    "tpu.trace_stop"() : () -> ()
    %3 = vector.extract_strided_slice %2 {offsets = [0, 0, 0], sizes = [2, 8, 768], strides = [1, 1, 1]} : vector<2x10x768xf32> to vector<2x8x768xf32>
    %4 = arith.truncf %3 : vector<2x8x768xf32> to vector<2x8x768xbf16>
    %5 = vector.extract_strided_slice %2 {offsets = [0, 8, 0], sizes = [2, 2, 768], strides = [1, 1, 1]} : vector<2x10x768xf32> to vector<2x2x768xf32>
    %6 = arith.truncf %5 : vector<2x2x768xf32> to vector<2x2x768xbf16>
    %7 = vector.shape_cast %4 : vector<2x8x768xbf16> to vector<16x768xbf16>
    %c0_5 = arith.constant 0 : index
    %c0_6 = arith.constant 0 : index
    %8 = vector.load %arg5[%c0_5, %c0_6] : memref<768x1024xbf16, #tpu.memory_space<vmem>>, vector<768x1024xbf16>
    %cst_7 = arith.constant dense<0.000000e+00> : vector<16x1024xf32>
    %9 = tpu.matmul %7, %8, %cst_7 {dimension_numbers = #tpu.dot_dimension_numbers<[1], [0], [0], [1], [0, 0, 1, 1], [], []>} : vector<16x768xbf16>, vector<768x1024xbf16>, vector<16x1024xf32> -> vector<16x1024xf32>
    %c0_8 = arith.constant 0 : index
    %c0_9 = arith.constant 0 : index
    %10 = vector.load %arg6[%c0_8, %c0_9] : memref<1x1024xf32, #tpu.memory_space<vmem>>, vector<1x1024xf32>
    %11 = vector.broadcast %10 : vector<1x1024xf32> to vector<16x1024xf32>
    %12 = arith.addf %9, %11 : vector<16x1024xf32>
    %13 = vector.shape_cast %6 : vector<2x2x768xbf16> to vector<4x768xbf16>
    %c0_10 = arith.constant 0 : index
    %c0_11 = arith.constant 0 : index
    %14 = vector.load %arg7[%c0_10, %c0_11] : memref<768x1024xbf16, #tpu.memory_space<vmem>>, vector<768x1024xbf16>
    %cst_12 = arith.constant dense<0.000000e+00> : vector<4x1024xf32>
    %15 = tpu.matmul %13, %14, %cst_12 {dimension_numbers = #tpu.dot_dimension_numbers<[1], [0], [0], [1], [0, 0, 1, 1], [], []>} : vector<4x768xbf16>, vector<768x1024xbf16>, vector<4x1024xf32> -> vector<4x1024xf32>
    %c0_13 = arith.constant 0 : index
    %c0_14 = arith.constant 0 : index
    %16 = vector.load %arg8[%c0_13, %c0_14] : memref<1x1024xf32, #tpu.memory_space<vmem>>, vector<1x1024xf32>
    %17 = vector.broadcast %16 : vector<1x1024xf32> to vector<4x1024xf32>
    %18 = arith.addf %15, %17 : vector<4x1024xf32>
    %19 = vector.shape_cast %18 : vector<4x1024xf32> to vector<2x2x1024xf32>
    %c0_15 = arith.constant 0 : index
    %c0_16 = arith.constant 0 : index
    %20 = vector.load %arg4[%c0_15, %c0_16] : memref<2x1024xf32, #tpu.memory_space<vmem>>, vector<2x1024xf32>
    %21 = vector.shape_cast %20 : vector<2x1024xf32> to vector<1x2x1024xf32>
    %22 = vector.broadcast %21 : vector<1x2x1024xf32> to vector<2x2x1024xf32>
    %23 = arith.mulf %19, %22 : vector<2x2x1024xf32>
    %24 = vector.shape_cast %12 : vector<16x1024xf32> to vector<2x8x1024xf32>
    "tpu.trace_start"() <{level = 10 : i32, message = "bqh,bsh->bqs"}> : () -> ()
    %cst_17 = arith.constant dense<0.000000e+00> : vector<2x2x8xf32>
    %25 = tpu.matmul %23, %24, %cst_17 {dimension_numbers = #tpu.dot_dimension_numbers<[2], [2], [1], [1], [0, 0, 0, 1, 1, 1], [0], [0]>} : vector<2x2x1024xf32>, vector<2x8x1024xf32>, vector<2x2x8xf32> -> vector<2x2x8xf32>
    "tpu.trace_stop"() : () -> ()
    %c0_18 = arith.constant 0 : index
    %c0_19 = arith.constant 0 : index
    %c0_20 = arith.constant 0 : index
    %26 = vector.load %arg3[%c0_18, %c0_19, %c0_20] : memref<2x1x8xf32, #tpu.memory_space<vmem>>, vector<2x1x8xf32>
    %27 = vector.broadcast %26 : vector<2x1x8xf32> to vector<2x2x8xf32>
    %28 = arith.addf %25, %27 : vector<2x2x8xf32>
    %cst_21 = arith.constant dense<0xFF800000> : vector<2x2xf32>
    %29 = vector.multi_reduction <maximumf>, %28, %cst_21 [2] : vector<2x2x8xf32> to vector<2x2xf32>
    %30 = vector.shape_cast %29 : vector<2x2xf32> to vector<2x2x1xf32>
    %31 = vector.broadcast %30 : vector<2x2x1xf32> to vector<2x2x8xf32>
    %32 = arith.subf %28, %31 : vector<2x2x8xf32>
    %33 = math.exp %32 : vector<2x2x8xf32>
    %cst_22 = arith.constant dense<0.000000e+00> : vector<2x2xf32>
    %34 = vector.multi_reduction <add>, %33, %cst_22 [2] : vector<2x2x8xf32> to vector<2x2xf32>
    %35 = vector.shape_cast %34 : vector<2x2xf32> to vector<2x2x1xf32>
    %36 = tpu.reciprocal %35 {approx = true} : vector<2x2x1xf32> -> vector<2x2x1xf32>
    %37 = vector.broadcast %36 : vector<2x2x1xf32> to vector<2x2x8xf32>
    %38 = arith.mulf %33, %37 : vector<2x2x8xf32>
    %c0_23 = arith.constant 0 : index
    %c0_24 = arith.constant 0 : index
    %c0_25 = arith.constant 0 : index
    %39 = vector.load %arg9[%c0_23, %c0_24, %c0_25] : memref<2x2x8xf32, #tpu.memory_space<vmem>>, vector<2x2x8xf32>
    tpu.vector_store %arg9[%c0_23, %c0_24, %c0_25], %38 {strides = array<i32>} : memref<2x2x8xf32, #tpu.memory_space<vmem>>, vector<2x2x8xf32>,
    return
  }
  func.func @transform_0(%arg0: i32) -> (i32, i32, i32) {
    %c0_i32 = arith.constant 0 : i32
    %c0_i32_0 = arith.constant 0 : i32
    %c0_i32_1 = arith.constant 0 : i32
    return %arg0, %c0_i32, %c0_i32_0 : i32, i32, i32
  }
  func.func @transform_1(%arg0: i32) -> (i32, i32, i32) {
    %c0_i32 = arith.constant 0 : i32
    %c0_i32_0 = arith.constant 0 : i32
    %c0_i32_1 = arith.constant 0 : i32
    return %arg0, %c0_i32, %c0_i32_0 : i32, i32, i32
  }
  func.func @transform_2(%arg0: i32) -> (i32, i32, i32) {
    %c0_i32 = arith.constant 0 : i32
    %c0_i32_0 = arith.constant 0 : i32
    %c0_i32_1 = arith.constant 0 : i32
    return %arg0, %c0_i32, %c0_i32_0 : i32, i32, i32
  }
  func.func @transform_3(%arg0: i32) -> (i32, i32) {
    %c0_i32 = arith.constant 0 : i32
    %c0_i32_0 = arith.constant 0 : i32
    %c0_i32_1 = arith.constant 0 : i32
    return %c0_i32, %c0_i32_0 : i32, i32
  }
  func.func @transform_4(%arg0: i32) -> (i32, i32) {
    %c0_i32 = arith.constant 0 : i32
    %c0_i32_0 = arith.constant 0 : i32
    %c0_i32_1 = arith.constant 0 : i32
    return %c0_i32, %c0_i32_0 : i32, i32
  }
  func.func @transform_5(%arg0: i32) -> (i32, i32) {
    %c0_i32 = arith.constant 0 : i32
    %c0_i32_0 = arith.constant 0 : i32
    %c0_i32_1 = arith.constant 0 : i32
    return %c0_i32, %c0_i32_0 : i32, i32
  }
  func.func @transform_6(%arg0: i32) -> (i32, i32) {
    %c0_i32 = arith.constant 0 : i32
    %c0_i32_0 = arith.constant 0 : i32
    %c0_i32_1 = arith.constant 0 : i32
    return %c0_i32, %c0_i32_0 : i32, i32
  }
  func.func @transform_7(%arg0: i32) -> (i32, i32) {
    %c0_i32 = arith.constant 0 : i32
    %c0_i32_0 = arith.constant 0 : i32
    %c0_i32_1 = arith.constant 0 : i32
    return %c0_i32, %c0_i32_0 : i32, i32
  }
  func.func @transform_8(%arg0: i32) -> (i32, i32, i32) {
    %c0_i32 = arith.constant 0 : i32
    %c0_i32_0 = arith.constant 0 : i32
    %c0_i32_1 = arith.constant 0 : i32
    return %arg0, %c0_i32, %c0_i32_0 : i32, i32, i32
  }
}

</mosaic_0001>

<llo_original>
// kernel: tpu_custom_call.1
$region0: #{tpu_custom_call.1}
  #allocation0 [shape = 'u32[]', space=smem, size = 0x4, offset = 0x4, fixed_abs, tag = 'smem constant byte address 0x4 - core index']
  #allocation1 [shape = 'u32[144,128]{1,0:T(1,128)}', space=vmem, size = 0x12000, scoped, tag = 'internal scratch']
  %s0 = inlined_call_operand.hbm [shape: bf16[4,144,768], index: 0, kind: input, shape index: {}]
  %s1 = inlined_call_operand.vmem [shape: bf16[4,10,144], index: 1, kind: input, shape index: {}]
  %s2 = inlined_call_operand.hbm [shape: f32[4,1,8], index: 2, kind: input, shape index: {}]
  %s3 = inlined_call_operand.hbm [shape: f32[2,1024], index: 3, kind: input, shape index: {}]
  %s4 = inlined_call_operand.hbm [shape: bf16[768,1024], index: 4, kind: input, shape index: {}]
  %s5 = inlined_call_operand.hbm [shape: f32[1,1024], index: 5, kind: input, shape index: {}]
  %s6 = inlined_call_operand.hbm [shape: bf16[768,1024], index: 6, kind: input, shape index: {}]
  %s7 = inlined_call_operand.hbm [shape: f32[1,1024], index: 7, kind: input, shape index: {}]
  %s8 = inlined_call_operand.hbm [shape: f32[4,2,8], index: 8, kind: output, shape index: {}]
  %s9 = sld [smem:[#allocation0]]
  $region93: #{tpu_custom_call.1} parent=0
    _
  %s11 = ssub.s32 1, %s9
  %s12 = scalar_select 0, %s11, %s9
  $region1: #{tpu_custom_call.1} parent=0
    #allocation2 [shape = 'u8[884736]{0}', space=vmem, size = 0xd8000, scoped, tag = 'input window, operand 0']
    #allocation3 [shape = 's32[2]{0}', space=sflag, size = 0x8, scoped, tag = 'scoped memory for tpu_custom_call.1']
    #allocation4 [shape = 's32[2]{0}', space=sflag, size = 0x8, scoped, tag = 'scoped memory for tpu_custom_call.1']
    #allocation5 [shape = 'u8[2048]{0}', space=vmem, size = 0x800, scoped, tag = 'input window, operand 2']
    #allocation6 [shape = 's32[2]{0}', space=sflag, size = 0x8, scoped, tag = 'scoped memory for tpu_custom_call.1']
    #allocation7 [shape = 'u8[8192]{0}', space=vmem, size = 0x2000, scoped, tag = 'input window, operand 3, single buffered']
    #allocation8 [shape = 'u8[1572864]{0}', space=vmem, size = 0x180000, scoped, tag = 'input window, operand 4, single buffered']
    #allocation9 [shape = 's32[1]{0}', space=sflag, size = 0x4, scoped, tag = 'scoped memory for tpu_custom_call.1']
    #allocation10 [shape = 'u8[4096]{0}', space=vmem, size = 0x1000, scoped, tag = 'input window, operand 5, single buffered']
    #allocation11 [shape = 'u8[1572864]{0}', space=vmem, size = 0x180000, scoped, tag = 'input window, operand 6, single buffered']
    #allocation12 [shape = 's32[1]{0}', space=sflag, size = 0x4, scoped, tag = 'scoped memory for tpu_custom_call.1']
    #allocation13 [shape = 'u8[4096]{0}', space=vmem, size = 0x1000, scoped, tag = 'input window, operand 7, single buffered']
    #allocation14 [shape = 'u8[4096]{0}', space=vmem, size = 0x1000, scoped, tag = 'output window, operand 0']
    %13 = vsyncpa [#allocation3], 0
    %s14 = scalar_lea.sflag [#allocation3], 1
    %15 = vsyncpa %s14, 0
    %16 = vsyncpa [#allocation6], 0
    %s17 = scalar_lea.sflag [#allocation6], 1
    %18 = vsyncpa %s17, 0
    %19 = vsyncpa [#allocation9], 0
    %20 = vsyncpa [#allocation12], 0
    %21 = vsyncpa [#allocation4], 0
    %s22 = scalar_lea.sflag [#allocation4], 1
    %23 = vsyncpa %s22, 0
    loop: start=0, step=1, limit=4
    $region2: #{tpu_custom_call.1} parent=1 // loop_pre_header
      _
    $region3: #{tpu_custom_call.1} parent=1 // loop_header
      %s25 = sphi 0, %s29
      %p26 = scmp.ge.s32.totalorder %s25, 4
      %s35 = sphi 0, %s37
      %s38 = sphi 0, %s35
      %s39 = sphi 0, %s38
      %s55 = sphi 0, %s39
      %s61 = sphi 0, %s63
      %s64 = sphi 0, %s61
      %s65 = sphi 0, %s64
      %s81 = sphi 0, %s65
      %s87 = sphi 0, %s89
      %s90 = sphi 0, %s87
      %s91 = sphi 0, %s90
      %s107 = sphi 0, %s91
      %s111 = sphi 0, %s111
      %s113 = sphi 0, %s111
      %s114 = sphi 0, %s113
      %s128 = sphi 0, %s114
      %s132 = sphi 0, %s132
      %s134 = sphi 0, %s132
      %s135 = sphi 0, %s134
      %s149 = sphi 0, %s135
      %s153 = sphi 0, %s153
      %s155 = sphi 0, %s153
      %s156 = sphi 0, %s155
      %s170 = sphi 0, %s156
      %s174 = sphi 0, %s174
      %s176 = sphi 0, %s174
      %s177 = sphi 0, %s176
      %s191 = sphi 0, %s177
      %s195 = sphi 0, %s195
      %s197 = sphi 0, %s195
      %s198 = sphi 0, %s197
      %s212 = sphi 0, %s198
      %s218 = sphi 0, %s220
      %s221 = sphi 0, %s218
      %s222 = sphi 0, %s221
      %s238 = sphi 0, %s222
    $region4: #{tpu_custom_call.1} parent=1 // loop_header_branch
      %28 = sbr.rel (%p26) target = $region8
    $region5: #{tpu_custom_call.1} parent=1 // loop_body
      %s30 = ssub.s32 %s25, 1
      %s31 = ssub.s32 %s25, 2
      %s32 = sadd.s32 %s25, 1
      %s33 = ssub.s32 %s25, %s32
      %p34 = scmp.eq.s32.totalorder %s33, 0
      %s36 = sadd.s32 %s35, 1
      %s37 = scalar_select %p34, %s35, %s36
      %p40 = pneg %p34
      %p41 = scmp.eq.s32.totalorder %s25, 1
      %p42 = por %p40, %p41
      %p43 = scmp.ne.s32.totalorder %s35, %s38
      %p44 = scmp.eq.s32.totalorder %s25, 0
      %p45 = por %p43, %p44
      %p46 = scmp.ne.s32.totalorder %s35, %s38
      %p47 = scmp.eq.s32.totalorder %s30, 1
      %p48 = por %p46, %p47
      %p49 = scmp.ne.s32.totalorder %s38, %s39
      %p50 = scmp.eq.s32.totalorder %s30, 0
      %p51 = por %p49, %p50
      %p52 = scmp.ne.s32.totalorder %s38, %s39
      %p53 = scmp.eq.s32.totalorder %s31, 1
      %p54 = por %p52, %p53
      %p56 = scmp.ne.s32.totalorder %s39, %s55
      %p57 = scmp.eq.s32.totalorder %s31, 0
      %p58 = por %p56, %p57
      %s59 = ssub.s32 %s25, %s32
      %p60 = scmp.eq.s32.totalorder %s59, 0
      %s62 = sadd.s32 %s61, 1
      %s63 = scalar_select %p60, %s61, %s62
      %p66 = pneg %p60
      %p67 = scmp.eq.s32.totalorder %s25, 1
      %p68 = por %p66, %p67
      %p69 = scmp.ne.s32.totalorder %s61, %s64
      %p70 = scmp.eq.s32.totalorder %s25, 0
      %p71 = por %p69, %p70
      %p72 = scmp.ne.s32.totalorder %s61, %s64
      %p73 = scmp.eq.s32.totalorder %s30, 1
      %p74 = por %p72, %p73
      %p75 = scmp.ne.s32.totalorder %s64, %s65
      %p76 = scmp.eq.s32.totalorder %s30, 0
      %p77 = por %p75, %p76
      %p78 = scmp.ne.s32.totalorder %s64, %s65
      %p79 = scmp.eq.s32.totalorder %s31, 1
      %p80 = por %p78, %p79
      %p82 = scmp.ne.s32.totalorder %s65, %s81
      %p83 = scmp.eq.s32.totalorder %s31, 0
      %p84 = por %p82, %p83
      %s85 = ssub.s32 %s25, %s32
      %p86 = scmp.eq.s32.totalorder %s85, 0
      %s88 = sadd.s32 %s87, 1
      %s89 = scalar_select %p86, %s87, %s88
      %p92 = pneg %p86
      %p93 = scmp.eq.s32.totalorder %s25, 1
      %p94 = por %p92, %p93
      %p95 = scmp.ne.s32.totalorder %s87, %s90
      %p96 = scmp.eq.s32.totalorder %s25, 0
      %p97 = por %p95, %p96
      %p98 = scmp.ne.s32.totalorder %s87, %s90
      %p99 = scmp.eq.s32.totalorder %s30, 1
      %p100 = por %p98, %p99
      %p101 = scmp.ne.s32.totalorder %s90, %s91
      %p102 = scmp.eq.s32.totalorder %s30, 0
      %p103 = por %p101, %p102
      %p104 = scmp.ne.s32.totalorder %s90, %s91
      %p105 = scmp.eq.s32.totalorder %s31, 1
      %p106 = por %p104, %p105
      %p108 = scmp.ne.s32.totalorder %s91, %s107
      %p109 = scmp.eq.s32.totalorder %s31, 0
      %p110 = por %p108, %p109
      %s112 = sadd.s32 %s111, 1
      %p115 = scmp.eq.s32.totalorder %s25, 1
      %p116 = scmp.ne.s32.totalorder %s111, %s113
      %p117 = scmp.eq.s32.totalorder %s25, 0
      %p118 = por %p116, %p117
      %p119 = scmp.ne.s32.totalorder %s111, %s113
      %p120 = scmp.eq.s32.totalorder %s30, 1
      %p121 = por %p119, %p120
      %p122 = scmp.ne.s32.totalorder %s113, %s114
      %p123 = scmp.eq.s32.totalorder %s30, 0
      %p124 = por %p122, %p123
      %p125 = scmp.ne.s32.totalorder %s113, %s114
      %p126 = scmp.eq.s32.totalorder %s31, 1
      %p127 = por %p125, %p126
      %p129 = scmp.ne.s32.totalorder %s114, %s128
      %p130 = scmp.eq.s32.totalorder %s31, 0
      %p131 = por %p129, %p130
      %s133 = sadd.s32 %s132, 1
      %p136 = scmp.eq.s32.totalorder %s25, 1
      %p137 = scmp.ne.s32.totalorder %s132, %s134
      %p138 = scmp.eq.s32.totalorder %s25, 0
      %p139 = por %p137, %p138
      %p140 = scmp.ne.s32.totalorder %s132, %s134
      %p141 = scmp.eq.s32.totalorder %s30, 1
      %p142 = por %p140, %p141
      %p143 = scmp.ne.s32.totalorder %s134, %s135
      %p144 = scmp.eq.s32.totalorder %s30, 0
      %p145 = por %p143, %p144
      %p146 = scmp.ne.s32.totalorder %s134, %s135
      %p147 = scmp.eq.s32.totalorder %s31, 1
      %p148 = por %p146, %p147
      %p150 = scmp.ne.s32.totalorder %s135, %s149
      %p151 = scmp.eq.s32.totalorder %s31, 0
      %p152 = por %p150, %p151
      %s154 = sadd.s32 %s153, 1
      %p157 = scmp.eq.s32.totalorder %s25, 1
      %p158 = scmp.ne.s32.totalorder %s153, %s155
      %p159 = scmp.eq.s32.totalorder %s25, 0
      %p160 = por %p158, %p159
      %p161 = scmp.ne.s32.totalorder %s153, %s155
      %p162 = scmp.eq.s32.totalorder %s30, 1
      %p163 = por %p161, %p162
      %p164 = scmp.ne.s32.totalorder %s155, %s156
      %p165 = scmp.eq.s32.totalorder %s30, 0
      %p166 = por %p164, %p165
      %p167 = scmp.ne.s32.totalorder %s155, %s156
      %p168 = scmp.eq.s32.totalorder %s31, 1
      %p169 = por %p167, %p168
      %p171 = scmp.ne.s32.totalorder %s156, %s170
      %p172 = scmp.eq.s32.totalorder %s31, 0
      %p173 = por %p171, %p172
      %s175 = sadd.s32 %s174, 1
      %p178 = scmp.eq.s32.totalorder %s25, 1
      %p179 = scmp.ne.s32.totalorder %s174, %s176
      %p180 = scmp.eq.s32.totalorder %s25, 0
      %p181 = por %p179, %p180
      %p182 = scmp.ne.s32.totalorder %s174, %s176
      %p183 = scmp.eq.s32.totalorder %s30, 1
      %p184 = por %p182, %p183
      %p185 = scmp.ne.s32.totalorder %s176, %s177
      %p186 = scmp.eq.s32.totalorder %s30, 0
      %p187 = por %p185, %p186
      %p188 = scmp.ne.s32.totalorder %s176, %s177
      %p189 = scmp.eq.s32.totalorder %s31, 1
      %p190 = por %p188, %p189
      %p192 = scmp.ne.s32.totalorder %s177, %s191
      %p193 = scmp.eq.s32.totalorder %s31, 0
      %p194 = por %p192, %p193
      %s196 = sadd.s32 %s195, 1
      %p199 = scmp.eq.s32.totalorder %s25, 1
      %p200 = scmp.ne.s32.totalorder %s195, %s197
      %p201 = scmp.eq.s32.totalorder %s25, 0
      %p202 = por %p200, %p201
      %p203 = scmp.ne.s32.totalorder %s195, %s197
      %p204 = scmp.eq.s32.totalorder %s30, 1
      %p205 = por %p203, %p204
      %p206 = scmp.ne.s32.totalorder %s197, %s198
      %p207 = scmp.eq.s32.totalorder %s30, 0
      %p208 = por %p206, %p207
      %p209 = scmp.ne.s32.totalorder %s197, %s198
      %p210 = scmp.eq.s32.totalorder %s31, 1
      %p211 = por %p209, %p210
      %p213 = scmp.ne.s32.totalorder %s198, %s212
      %p214 = scmp.eq.s32.totalorder %s31, 0
      %p215 = por %p213, %p214
      %s216 = ssub.s32 %s25, %s32
      %p217 = scmp.eq.s32.totalorder %s216, 0
      %s219 = sadd.s32 %s218, 1
      %s220 = scalar_select %p217, %s218, %s219
      %p223 = pneg %p217
      %p224 = scmp.eq.s32.totalorder %s25, 1
      %p225 = por %p223, %p224
      %p226 = scmp.ne.s32.totalorder %s218, %s221
      %p227 = scmp.eq.s32.totalorder %s25, 0
      %p228 = por %p226, %p227
      %p229 = scmp.ne.s32.totalorder %s218, %s221
      %p230 = scmp.eq.s32.totalorder %s30, 1
      %p231 = por %p229, %p230
      %p232 = scmp.ne.s32.totalorder %s221, %s222
      %p233 = scmp.eq.s32.totalorder %s30, 0
      %p234 = por %p232, %p233
      %p235 = scmp.ne.s32.totalorder %s221, %s222
      %p236 = scmp.eq.s32.totalorder %s31, 1
      %p237 = por %p235, %p236
      %p239 = scmp.ne.s32.totalorder %s222, %s238
      %p240 = scmp.eq.s32.totalorder %s31, 0
      %p241 = por %p239, %p240
      %p242 = scmp.le.s32.totalorder 1, %s25
      %p243 = scmp.lt.s32.totalorder %s25, 3
      %p244 = pnand %p242, %p243
      %p245 = pneg %p244
      // Predicated region
      $region9: #{tpu_custom_call.1} parent=5 // pred_check
        _
      $region10: #{tpu_custom_call.1} parent=5 // pred_check_branch
        %247 = sbr.rel (%p244) target = $region12
      $region11: #{tpu_custom_call.1} parent=5 // pred_region
        %s248 = ssub.s32 %s25, 1
        // Predicated region
        $region13: #{tpu_custom_call.1} parent=11 // pred_check
          %p249 = pneg %p124
        $region14: #{tpu_custom_call.1} parent=11 // pred_check_branch
          %251 = sbr.rel (%p249) target = $region16
        $region15: #{tpu_custom_call.1} parent=11 // pred_region
          %s253 = ssub.s32 256, 256
          %254 = vsyncadd [#allocation6], %s253
          %s256 = sshll.u32 [#allocation7], 4
          %s257 = int_to_ptr.vmem [resolvable:$true] %s256
          %259 = dma.hbm_to_vmem [thread:$0]  %s3, 256, %s257, [#allocation6]
        $region16: #{tpu_custom_call.1} parent=11 // pred_fallthru
          _
        // Predicated region
        $region17: #{tpu_custom_call.1} parent=11 // pred_check
          %p260 = pneg %p145
        $region18: #{tpu_custom_call.1} parent=11 // pred_check_branch
          %262 = sbr.rel (%p260) target = $region20
        $region19: #{tpu_custom_call.1} parent=11 // pred_region
          %s264 = ssub.s32 49152, 49152
          %265 = vsyncadd [#allocation9], %s264
          %s266 = sshll.u32 [#allocation8], 4
          %s267 = int_to_ptr.vmem [resolvable:$true] %s266
          %272 = dma.hbm_to_vmem [thread:$0]  %s4, 49152, %s267, [#allocation9], 512, 512, 32
        $region20: #{tpu_custom_call.1} parent=11 // pred_fallthru
          _
        // Predicated region
        $region21: #{tpu_custom_call.1} parent=11 // pred_check
          %p273 = pneg %p166
        $region22: #{tpu_custom_call.1} parent=11 // pred_check_branch
          %275 = sbr.rel (%p273) target = $region24
        $region23: #{tpu_custom_call.1} parent=11 // pred_region
          %s277 = ssub.s32 128, 128
          %278 = vsyncadd [#allocation9], %s277
          %s280 = sshll.u32 [#allocation10], 4
          %s281 = int_to_ptr.vmem [resolvable:$true] %s280
          %283 = dma.hbm_to_vmem [thread:$0]  %s5, 128, %s281, [#allocation9]
        $region24: #{tpu_custom_call.1} parent=11 // pred_fallthru
          _
        // Predicated region
        $region25: #{tpu_custom_call.1} parent=11 // pred_check
          %p284 = pneg %p187
        $region26: #{tpu_custom_call.1} parent=11 // pred_check_branch
          %286 = sbr.rel (%p284) target = $region28
        $region27: #{tpu_custom_call.1} parent=11 // pred_region
          %s288 = ssub.s32 49152, 49152
          %289 = vsyncadd [#allocation12], %s288
          %s290 = sshll.u32 [#allocation11], 4
          %s291 = int_to_ptr.vmem [resolvable:$true] %s290
          %296 = dma.hbm_to_vmem [thread:$0]  %s6, 49152, %s291, [#allocation12], 512, 512, 32
        $region28: #{tpu_custom_call.1} parent=11 // pred_fallthru
          _
        // Predicated region
        $region29: #{tpu_custom_call.1} parent=11 // pred_check
          %p297 = pneg %p208
        $region30: #{tpu_custom_call.1} parent=11 // pred_check_branch
          %299 = sbr.rel (%p297) target = $region32
        $region31: #{tpu_custom_call.1} parent=11 // pred_region
          %s301 = ssub.s32 128, 128
          %302 = vsyncadd [#allocation12], %s301
          %s304 = sshll.u32 [#allocation13], 4
          %s305 = int_to_ptr.vmem [resolvable:$true] %s304
          %307 = dma.hbm_to_vmem [thread:$0]  %s7, 128, %s305, [#allocation12]
        $region32: #{tpu_custom_call.1} parent=11 // pred_fallthru
          _
      $region12: #{tpu_custom_call.1} parent=5 // pred_fallthru
        _
      %p308 = scmp.lt.s32.totalorder %s25, 2
      // Predicated region
      $region33: #{tpu_custom_call.1} parent=5 // pred_check
        %p309 = pneg %p308
      $region34: #{tpu_custom_call.1} parent=5 // pred_check_branch
        %311 = sbr.rel (%p309) target = $region36
      $region35: #{tpu_custom_call.1} parent=5 // pred_region
        // Predicated region
        $region37: #{tpu_custom_call.1} parent=35 // pred_check
          %p312 = pneg %p45
        $region38: #{tpu_custom_call.1} parent=35 // pred_check_branch
          %314 = sbr.rel (%p312) target = $region40
        $region39: #{tpu_custom_call.1} parent=35 // pred_region
          %s315 = sand.u32 %s35, 1
          %s316 = scalar_lea.sflag [#allocation3], %s315
          %s317 = sand.u32 %s35, 1
          %s318 = smul.addr %s317, 864
          %s319 = scalar_lea.vmem [#allocation2], %s318
          %s320 = smul.u32 2, %s25
          %s322 = ssub.s32 13824, 13824
          %323 = vsyncadd %s316, %s322
          %s324 = smul.addr %s320, 108
          %s325 = smul.addr %s324, 64
          %s326 = scalar_lea.hbm %s0, %s325
          %s327 = sshll.u32 %s319, 4
          %s328 = int_to_ptr.vmem [resolvable:$true] %s327
          %333 = dma.hbm_to_vmem [thread:$0]  %s326, 13824, %s328, %s316, 384, 384, 24
        $region40: #{tpu_custom_call.1} parent=35 // pred_fallthru
          _
        // Predicated region
        $region41: #{tpu_custom_call.1} parent=35 // pred_check
          %p334 = pneg %p71
        $region42: #{tpu_custom_call.1} parent=35 // pred_check_branch
          %336 = sbr.rel (%p334) target = $region44
        $region43: #{tpu_custom_call.1} parent=35 // pred_region
          %s337 = smul.u32 2, %s25
          %p338 = scmp.lt.s32.totalorder %s337, 3
          %s339 = scalar_select %p338, %s337, 3
          %s340 = smul.addr %s339, 4
          %s341 = smul.addr %s340, 4
          %s342 = scalar_lea.vmem %s1, %s341
          %s343 = smul.u32 2, %s25
        $region44: #{tpu_custom_call.1} parent=35 // pred_fallthru
          _
        // Predicated region
        $region45: #{tpu_custom_call.1} parent=35 // pred_check
          %p344 = pneg %p97
        $region46: #{tpu_custom_call.1} parent=35 // pred_check_branch
          %346 = sbr.rel (%p344) target = $region48
        $region47: #{tpu_custom_call.1} parent=35 // pred_region
          %s347 = sand.u32 %s25, 1
          %s348 = scalar_lea.sflag [#allocation6], %s347
          %s349 = sand.u32 %s87, 1
          %s350 = smul.addr %s349, 2
          %s351 = scalar_lea.vmem [#allocation5], %s350
          %s352 = smul.u32 2, %s25
          %s354 = ssub.s32 32, 32
          %355 = vsyncadd %s348, %s354
          %s356 = smul.addr %s352, 16
          %s357 = scalar_lea.hbm %s2, %s356
          %s358 = sshll.u32 %s351, 4
          %s359 = int_to_ptr.vmem [resolvable:$true] %s358
          %364 = dma.hbm_to_vmem [thread:$0]  %s357, 32, %s359, %s348, 16, 16, 1
        $region48: #{tpu_custom_call.1} parent=35 // pred_fallthru
          _
      $region36: #{tpu_custom_call.1} parent=5 // pred_fallthru
        _
      %p365 = scmp.le.s32.totalorder 1, %s25
      %p366 = scmp.lt.s32.totalorder %s25, 3
      %p367 = pnand %p365, %p366
      %p368 = pneg %p367
      // Predicated region
      $region49: #{tpu_custom_call.1} parent=5 // pred_check
        _
      $region50: #{tpu_custom_call.1} parent=5 // pred_check_branch
        %370 = sbr.rel (%p367) target = $region52
      $region51: #{tpu_custom_call.1} parent=5 // pred_region
        %s371 = ssub.s32 %s25, 1
        %s372 = sand.u32 %s38, 1
        %s373 = scalar_lea.sflag [#allocation3], %s372
        %s374 = sand.u32 %s38, 1
        %s375 = smul.addr %s374, 864
        %s376 = scalar_lea.vmem [#allocation2], %s375
        // Predicated region
        $region53: #{tpu_custom_call.1} parent=51 // pred_check
          %p377 = pneg %p51
        $region54: #{tpu_custom_call.1} parent=51 // pred_check_branch
          %379 = sbr.rel (%p377) target = $region56
        $region55: #{tpu_custom_call.1} parent=51 // pred_region
          %380 = dma.done %s373, 13824
        $region56: #{tpu_custom_call.1} parent=51 // pred_fallthru
          _
        %s381 = sand.u32 %s30, 1
        %s382 = scalar_lea.sflag [#allocation6], %s381
        %s383 = sand.u32 %s90, 1
        %s384 = smul.addr %s383, 2
        %s385 = scalar_lea.vmem [#allocation5], %s384
        // Predicated region
        $region57: #{tpu_custom_call.1} parent=51 // pred_check
          %p386 = pneg %p103
        $region58: #{tpu_custom_call.1} parent=51 // pred_check_branch
          %388 = sbr.rel (%p386) target = $region60
        $region59: #{tpu_custom_call.1} parent=51 // pred_region
          %389 = dma.done %s382, 32
        $region60: #{tpu_custom_call.1} parent=51 // pred_fallthru
          _
        // Predicated region
        $region61: #{tpu_custom_call.1} parent=51 // pred_check
          %p390 = pneg %p124
        $region62: #{tpu_custom_call.1} parent=51 // pred_check_branch
          %392 = sbr.rel (%p390) target = $region64
        $region63: #{tpu_custom_call.1} parent=51 // pred_region
          %393 = dma.done [#allocation6], 256
        $region64: #{tpu_custom_call.1} parent=51 // pred_fallthru
          _
        // Predicated region
        $region65: #{tpu_custom_call.1} parent=51 // pred_check
          %p394 = pneg %p145
        $region66: #{tpu_custom_call.1} parent=51 // pred_check_branch
          %396 = sbr.rel (%p394) target = $region68
        $region67: #{tpu_custom_call.1} parent=51 // pred_region
          %397 = dma.done [#allocation9], 49152
        $region68: #{tpu_custom_call.1} parent=51 // pred_fallthru
          _
        // Predicated region
        $region69: #{tpu_custom_call.1} parent=51 // pred_check
          %p398 = pneg %p166
        $region70: #{tpu_custom_call.1} parent=51 // pred_check_branch
          %400 = sbr.rel (%p398) target = $region72
        $region71: #{tpu_custom_call.1} parent=51 // pred_region
          %401 = dma.done [#allocation9], 128
        $region72: #{tpu_custom_call.1} parent=51 // pred_fallthru
          _
        // Predicated region
        $region73: #{tpu_custom_call.1} parent=51 // pred_check
          %p402 = pneg %p187
        $region74: #{tpu_custom_call.1} parent=51 // pred_check_branch
          %404 = sbr.rel (%p402) target = $region76
        $region75: #{tpu_custom_call.1} parent=51 // pred_region
          %405 = dma.done [#allocation12], 49152
        $region76: #{tpu_custom_call.1} parent=51 // pred_fallthru
          _
        // Predicated region
        $region77: #{tpu_custom_call.1} parent=51 // pred_check
          %p406 = pneg %p208
        $region78: #{tpu_custom_call.1} parent=51 // pred_check_branch
          %408 = sbr.rel (%p406) target = $region80
        $region79: #{tpu_custom_call.1} parent=51 // pred_region
          %409 = dma.done [#allocation12], 128
        $region80: #{tpu_custom_call.1} parent=51 // pred_fallthru
          _
        %s410 = sand.u32 %s38, 1
        %s411 = scalar_lea.sflag [#allocation3], %s410
        %s412 = sand.u32 %s38, 1
        %s413 = smul.addr %s412, 864
        %s414 = scalar_lea.vmem [#allocation2], %s413
        %p415 = pneg %p51
        %p416 = pneg %p48
        %s417 = smul.u32 2, %s30
        %p418 = scmp.lt.s32.totalorder %s417, 3
        %s419 = scalar_select %p418, %s417, 3
        %s420 = smul.addr %s419, 4
        %s421 = smul.addr %s420, 4
        %s422 = scalar_lea.vmem %s1, %s421
        %p423 = pneg %p77
        %p424 = pneg %p74
        %s425 = sand.u32 %s30, 1
        %s426 = scalar_lea.sflag [#allocation6], %s425
        %s427 = sand.u32 %s90, 1
        %s428 = smul.addr %s427, 2
        %s429 = scalar_lea.vmem [#allocation5], %s428
        %p430 = pneg %p103
        %p431 = pneg %p100
        %p432 = pneg %p124
        %p433 = pneg %p121
        %p434 = pneg %p145
        %p435 = pneg %p142
        %p436 = pneg %p166
        %p437 = pneg %p163
        %p438 = pneg %p187
        %p439 = pneg %p184
        %p440 = pneg %p208
        %p441 = pneg %p205
        %p442 = pneg %p234
        %p443 = pneg %p231
        %s444 = sand.u32 %s221, 1
        %s445 = scalar_lea.sflag [#allocation4], %s444
        %s446 = sand.u32 %s221, 1
        %s447 = smul.addr %s446, 4
        %s448 = scalar_lea.vmem [#allocation14], %s447
        %s449 = smul.u32 2, %s30
        %s450 = smul.u32 2, %s30
        %p451 = scmp.lt.s32.totalorder %s450, 3
        %s452 = scalar_select %p451, %s450, 3
        %s453 = smul.addr %s452, 4
        %s454 = smul.addr %s453, 4
        %s455 = scalar_lea.vmem %s1, %s454
        %s456 = smul.u32 2, %s30
        %s457 = smul.u32 2, %s30
        %s458 = smul.u32 2, %s30
        %v460 = vld [vmem:[%s455] sm:$0xff]
        %v461 = vld [vmem:[%s455 + $0x8] sm:$0x11]
        %v462 = vld [vmem:[%s455 + $0x10] sm:$0xff]
        %v463 = vld [vmem:[%s455 + $0x18] sm:$0x11]
        %v464 = vld [vmem:[%s376] sm:$0xff]
        %v465 = vld [vmem:[%s376 + $0x8] sm:$0xff]
        %v466 = vld [vmem:[%s376 + $0x10] sm:$0xff]
        %v467 = vld [vmem:[%s376 + $0x18] sm:$0xff]
        %v468 = vld [vmem:[%s376 + $0x20] sm:$0xff]
        %v469 = vld [vmem:[%s376 + $0x28] sm:$0xff]
        %v470 = vld [vmem:[%s376 + $0x30] sm:$0xff]
        %v471 = vld [vmem:[%s376 + $0x38] sm:$0xff]
        %v472 = vld [vmem:[%s376 + $0x40] sm:$0xff]
        %v473 = vld [vmem:[%s376 + $0x48] sm:$0xff]
        %v474 = vld [vmem:[%s376 + $0x50] sm:$0xff]
        %v475 = vld [vmem:[%s376 + $0x58] sm:$0xff]
        %v476 = vld [vmem:[%s376 + $0x60] sm:$0xff]
        %v477 = vld [vmem:[%s376 + $0x68] sm:$0xff]
        %v478 = vld [vmem:[%s376 + $0x70] sm:$0xff]
        %v479 = vld [vmem:[%s376 + $0x78] sm:$0xff]
        %v480 = vld [vmem:[%s376 + $0x80] sm:$0xff]
        %v481 = vld [vmem:[%s376 + $0x88] sm:$0xff]
        %v482 = vld [vmem:[%s376 + $0x90] sm:$0xff]
        %v483 = vld [vmem:[%s376 + $0x98] sm:$0xff]
        %v484 = vld [vmem:[%s376 + $0xa0] sm:$0xff]
        %v485 = vld [vmem:[%s376 + $0xa8] sm:$0xff]
        %v486 = vld [vmem:[%s376 + $0xb0] sm:$0xff]
        %v487 = vld [vmem:[%s376 + $0xb8] sm:$0xff]
        %v488 = vld [vmem:[%s376 + $0xc0] sm:$0xff]
        %v489 = vld [vmem:[%s376 + $0xc8] sm:$0xff]
        %v490 = vld [vmem:[%s376 + $0xd0] sm:$0xff]
        %v491 = vld [vmem:[%s376 + $0xd8] sm:$0xff]
        %v492 = vld [vmem:[%s376 + $0xe0] sm:$0xff]
        %v493 = vld [vmem:[%s376 + $0xe8] sm:$0xff]
        %v494 = vld [vmem:[%s376 + $0xf0] sm:$0xff]
        %v495 = vld [vmem:[%s376 + $0xf8] sm:$0xff]
        %v496 = vld [vmem:[%s376 + $0x100] sm:$0xff]
        %v497 = vld [vmem:[%s376 + $0x108] sm:$0xff]
        %v498 = vld [vmem:[%s376 + $0x110] sm:$0xff]
        %v499 = vld [vmem:[%s376 + $0x118] sm:$0xff]
        %v500 = vld [vmem:[%s376 + $0x120] sm:$0xff]
        %v501 = vld [vmem:[%s376 + $0x128] sm:$0xff]
        %v502 = vld [vmem:[%s376 + $0x130] sm:$0xff]
        %v503 = vld [vmem:[%s376 + $0x138] sm:$0xff]
        %v504 = vld [vmem:[%s376 + $0x140] sm:$0xff]
        %v505 = vld [vmem:[%s376 + $0x148] sm:$0xff]
        %v506 = vld [vmem:[%s376 + $0x150] sm:$0xff]
        %v507 = vld [vmem:[%s376 + $0x158] sm:$0xff]
        %v508 = vld [vmem:[%s376 + $0x160] sm:$0xff]
        %v509 = vld [vmem:[%s376 + $0x168] sm:$0xff]
        %v510 = vld [vmem:[%s376 + $0x170] sm:$0xff]
        %v511 = vld [vmem:[%s376 + $0x178] sm:$0xff]
        %v512 = vld [vmem:[%s376 + $0x180] sm:$0xff]
        %v513 = vld [vmem:[%s376 + $0x188] sm:$0xff]
        %v514 = vld [vmem:[%s376 + $0x190] sm:$0xff]
        %v515 = vld [vmem:[%s376 + $0x198] sm:$0xff]
        %v516 = vld [vmem:[%s376 + $0x1a0] sm:$0xff]
        %v517 = vld [vmem:[%s376 + $0x1a8] sm:$0xff]
        %v518 = vld [vmem:[%s376 + $0x1b0] sm:$0xff]
        %v519 = vld [vmem:[%s376 + $0x1b8] sm:$0xff]
        %v520 = vld [vmem:[%s376 + $0x1c0] sm:$0xff]
        %v521 = vld [vmem:[%s376 + $0x1c8] sm:$0xff]
        %v522 = vld [vmem:[%s376 + $0x1d0] sm:$0xff]
        %v523 = vld [vmem:[%s376 + $0x1d8] sm:$0xff]
        %v524 = vld [vmem:[%s376 + $0x1e0] sm:$0xff]
        %v525 = vld [vmem:[%s376 + $0x1e8] sm:$0xff]
        %v526 = vld [vmem:[%s376 + $0x1f0] sm:$0xff]
        %v527 = vld [vmem:[%s376 + $0x1f8] sm:$0xff]
        %v528 = vld [vmem:[%s376 + $0x200] sm:$0xff]
        %v529 = vld [vmem:[%s376 + $0x208] sm:$0xff]
        %v530 = vld [vmem:[%s376 + $0x210] sm:$0xff]
        %v531 = vld [vmem:[%s376 + $0x218] sm:$0xff]
        %v532 = vld [vmem:[%s376 + $0x220] sm:$0xff]
        %v533 = vld [vmem:[%s376 + $0x228] sm:$0xff]
        %v534 = vld [vmem:[%s376 + $0x230] sm:$0xff]
        %v535 = vld [vmem:[%s376 + $0x238] sm:$0xff]
        %v536 = vld [vmem:[%s376 + $0x240] sm:$0xff]
        %v537 = vld [vmem:[%s376 + $0x248] sm:$0xff]
        %v538 = vld [vmem:[%s376 + $0x250] sm:$0xff]
        %v539 = vld [vmem:[%s376 + $0x258] sm:$0xff]
        %v540 = vld [vmem:[%s376 + $0x260] sm:$0xff]
        %v541 = vld [vmem:[%s376 + $0x268] sm:$0xff]
        %v542 = vld [vmem:[%s376 + $0x270] sm:$0xff]
        %v543 = vld [vmem:[%s376 + $0x278] sm:$0xff]
        %v544 = vld [vmem:[%s376 + $0x280] sm:$0xff]
        %v545 = vld [vmem:[%s376 + $0x288] sm:$0xff]
        %v546 = vld [vmem:[%s376 + $0x290] sm:$0xff]
        %v547 = vld [vmem:[%s376 + $0x298] sm:$0xff]
        %v548 = vld [vmem:[%s376 + $0x2a0] sm:$0xff]
        %v549 = vld [vmem:[%s376 + $0x2a8] sm:$0xff]
        %v550 = vld [vmem:[%s376 + $0x2b0] sm:$0xff]
        %v551 = vld [vmem:[%s376 + $0x2b8] sm:$0xff]
        %v552 = vld [vmem:[%s376 + $0x2c0] sm:$0xff]
        %v553 = vld [vmem:[%s376 + $0x2c8] sm:$0xff]
        %v554 = vld [vmem:[%s376 + $0x2d0] sm:$0xff]
        %v555 = vld [vmem:[%s376 + $0x2d8] sm:$0xff]
        %v556 = vld [vmem:[%s376 + $0x2e0] sm:$0xff]
        %v557 = vld [vmem:[%s376 + $0x2e8] sm:$0xff]
        %v558 = vld [vmem:[%s376 + $0x2f0] sm:$0xff]
        %v559 = vld [vmem:[%s376 + $0x2f8] sm:$0xff]
        %v560 = vld [vmem:[%s376 + $0x300] sm:$0xff]
        %v561 = vld [vmem:[%s376 + $0x308] sm:$0xff]
        %v562 = vld [vmem:[%s376 + $0x310] sm:$0xff]
        %v563 = vld [vmem:[%s376 + $0x318] sm:$0xff]
        %v564 = vld [vmem:[%s376 + $0x320] sm:$0xff]
        %v565 = vld [vmem:[%s376 + $0x328] sm:$0xff]
        %v566 = vld [vmem:[%s376 + $0x330] sm:$0xff]
        %v567 = vld [vmem:[%s376 + $0x338] sm:$0xff]
        %v568 = vld [vmem:[%s376 + $0x340] sm:$0xff]
        %v569 = vld [vmem:[%s376 + $0x348] sm:$0xff]
        %v570 = vld [vmem:[%s376 + $0x350] sm:$0xff]
        %v571 = vld [vmem:[%s376 + $0x358] sm:$0xff]
        %v574 = vunpack.c.l.b16 %v460
        %v575 = vunpack.c.h.b16 %v460
        %v576 = vunpack.c.l.b16 %v461
        %v577 = vunpack.c.h.b16 %v461
        %v578 = vpack.c.b16 %v576, %v574
        %v579 = vpack.c.b16 %v577, %v575
        %v635 = vunpack.c.l.b16 %v464
        %v636 = vunpack.c.h.b16 %v464
        %v637 = vunpack.c.l.b16 %v465
        %v638 = vunpack.c.h.b16 %v465
        %v639 = vunpack.c.l.b16 %v466
        %v640 = vunpack.c.h.b16 %v466
        %v641 = vunpack.c.l.b16 %v467
        %v642 = vunpack.c.h.b16 %v467
        %v643 = vunpack.c.l.b16 %v468
        %v644 = vunpack.c.h.b16 %v468
        %v645 = vunpack.c.l.b16 %v469
        %v646 = vunpack.c.h.b16 %v469
        %v647 = vunpack.c.l.b16 %v470
        %v648 = vunpack.c.h.b16 %v470
        %v649 = vunpack.c.l.b16 %v471
        %v650 = vunpack.c.h.b16 %v471
        %v651 = vunpack.c.l.b16 %v472
        %v652 = vunpack.c.h.b16 %v472
        %v653 = vunpack.c.l.b16 %v473
        %v654 = vunpack.c.h.b16 %v473
        %v655 = vunpack.c.l.b16 %v474
        %v656 = vunpack.c.h.b16 %v474
        %v657 = vunpack.c.l.b16 %v475
        %v658 = vunpack.c.h.b16 %v475
        %v659 = vunpack.c.l.b16 %v476
        %v660 = vunpack.c.h.b16 %v476
        %v661 = vunpack.c.l.b16 %v477
        %v662 = vunpack.c.h.b16 %v477
        %v663 = vunpack.c.l.b16 %v478
        %v664 = vunpack.c.h.b16 %v478
        %v665 = vunpack.c.l.b16 %v479
        %v666 = vunpack.c.h.b16 %v479
        %v667 = vunpack.c.l.b16 %v480
        %v668 = vunpack.c.h.b16 %v480
        %v669 = vunpack.c.l.b16 %v481
        %v670 = vunpack.c.h.b16 %v481
        %v671 = vunpack.c.l.b16 %v482
        %v672 = vunpack.c.h.b16 %v482
        %v673 = vunpack.c.l.b16 %v483
        %v674 = vunpack.c.h.b16 %v483
        %v675 = vunpack.c.l.b16 %v484
        %v676 = vunpack.c.h.b16 %v484
        %v677 = vunpack.c.l.b16 %v485
        %v678 = vunpack.c.h.b16 %v485
        %v679 = vunpack.c.l.b16 %v486
        %v680 = vunpack.c.h.b16 %v486
        %v681 = vunpack.c.l.b16 %v487
        %v682 = vunpack.c.h.b16 %v487
        %v683 = vunpack.c.l.b16 %v488
        %v684 = vunpack.c.h.b16 %v488
        %v685 = vunpack.c.l.b16 %v489
        %v686 = vunpack.c.h.b16 %v489
        %v687 = vunpack.c.l.b16 %v490
        %v688 = vunpack.c.h.b16 %v490
        %v689 = vunpack.c.l.b16 %v491
        %v690 = vunpack.c.h.b16 %v491
        %v691 = vunpack.c.l.b16 %v492
        %v692 = vunpack.c.h.b16 %v492
        %v693 = vunpack.c.l.b16 %v493
        %v694 = vunpack.c.h.b16 %v493
        %v695 = vunpack.c.l.b16 %v494
        %v696 = vunpack.c.h.b16 %v494
        %v697 = vunpack.c.l.b16 %v495
        %v698 = vunpack.c.h.b16 %v495
        %v699 = vunpack.c.l.b16 %v496
        %v700 = vunpack.c.h.b16 %v496
        %v701 = vunpack.c.l.b16 %v497
        %v702 = vunpack.c.h.b16 %v497
        %v703 = vunpack.c.l.b16 %v498
        %v704 = vunpack.c.h.b16 %v498
        %v705 = vunpack.c.l.b16 %v499
        %v706 = vunpack.c.h.b16 %v499
        %v707 = vunpack.c.l.b16 %v500
        %v708 = vunpack.c.h.b16 %v500
        %v709 = vunpack.c.l.b16 %v501
        %v710 = vunpack.c.h.b16 %v501
        %v711 = vunpack.c.l.b16 %v502
        %v712 = vunpack.c.h.b16 %v502
        %v713 = vunpack.c.l.b16 %v503
        %v714 = vunpack.c.h.b16 %v503
        %v715 = vunpack.c.l.b16 %v504
        %v716 = vunpack.c.h.b16 %v504
        %v717 = vunpack.c.l.b16 %v505
        %v718 = vunpack.c.h.b16 %v505
        %v719 = vunpack.c.l.b16 %v506
        %v720 = vunpack.c.h.b16 %v506
        %v721 = vunpack.c.l.b16 %v507
        %v722 = vunpack.c.h.b16 %v507
        %v723 = vunpack.c.l.b16 %v508
        %v724 = vunpack.c.h.b16 %v508
        %v725 = vunpack.c.l.b16 %v509
        %v726 = vunpack.c.h.b16 %v509
        %v727 = vunpack.c.l.b16 %v510
        %v728 = vunpack.c.h.b16 %v510
        %v729 = vunpack.c.l.b16 %v511
        %v730 = vunpack.c.h.b16 %v511
        %v731 = vunpack.c.l.b16 %v512
        %v732 = vunpack.c.h.b16 %v512
        %v733 = vunpack.c.l.b16 %v513
        %v734 = vunpack.c.h.b16 %v513
        %v735 = vunpack.c.l.b16 %v514
        %v736 = vunpack.c.h.b16 %v514
        %v737 = vunpack.c.l.b16 %v515
        %v738 = vunpack.c.h.b16 %v515
        %v739 = vunpack.c.l.b16 %v516
        %v740 = vunpack.c.h.b16 %v516
        %v741 = vunpack.c.l.b16 %v517
        %v742 = vunpack.c.h.b16 %v517
        %v743 = vpack.c.b16 %v641, %v635
        %v744 = vpack.c.b16 %v642, %v636
        %v745 = vpack.c.b16 %v643, %v637
        %v746 = vpack.c.b16 %v644, %v638
        %v747 = vpack.c.b16 %v645, %v639
        %v748 = vpack.c.b16 %v646, %v640
        %v749 = vpack.c.b16 %v653, %v647
        %v750 = vpack.c.b16 %v654, %v648
        %v751 = vpack.c.b16 %v655, %v649
        %v752 = vpack.c.b16 %v656, %v650
        %v753 = vpack.c.b16 %v657, %v651
        %v754 = vpack.c.b16 %v658, %v652
        %v755 = vpack.c.b16 %v665, %v659
        %v756 = vpack.c.b16 %v666, %v660
        %v757 = vpack.c.b16 %v667, %v661
        %v758 = vpack.c.b16 %v668, %v662
        %v759 = vpack.c.b16 %v669, %v663
        %v760 = vpack.c.b16 %v670, %v664
        %v761 = vpack.c.b16 %v677, %v671
        %v762 = vpack.c.b16 %v678, %v672
        %v763 = vpack.c.b16 %v679, %v673
        %v764 = vpack.c.b16 %v680, %v674
        %v765 = vpack.c.b16 %v681, %v675
        %v766 = vpack.c.b16 %v682, %v676
        %v767 = vpack.c.b16 %v689, %v683
        %v768 = vpack.c.b16 %v690, %v684
        %v769 = vpack.c.b16 %v691, %v685
        %v770 = vpack.c.b16 %v692, %v686
        %v771 = vpack.c.b16 %v693, %v687
        %v772 = vpack.c.b16 %v694, %v688
        %v773 = vpack.c.b16 %v701, %v695
        %v774 = vpack.c.b16 %v702, %v696
        %v775 = vpack.c.b16 %v703, %v697
        %v776 = vpack.c.b16 %v704, %v698
        %v777 = vpack.c.b16 %v705, %v699
        %v778 = vpack.c.b16 %v706, %v700
        %v779 = vpack.c.b16 %v713, %v707
        %v780 = vpack.c.b16 %v714, %v708
        %v781 = vpack.c.b16 %v715, %v709
        %v782 = vpack.c.b16 %v716, %v710
        %v783 = vpack.c.b16 %v717, %v711
        %v784 = vpack.c.b16 %v718, %v712
        %v785 = vpack.c.b16 %v725, %v719
        %v786 = vpack.c.b16 %v726, %v720
        %v787 = vpack.c.b16 %v727, %v721
        %v788 = vpack.c.b16 %v728, %v722
        %v789 = vpack.c.b16 %v729, %v723
        %v790 = vpack.c.b16 %v730, %v724
        %v791 = vpack.c.b16 %v737, %v731
        %v792 = vpack.c.b16 %v738, %v732
        %v793 = vpack.c.b16 %v739, %v733
        %v794 = vpack.c.b16 %v740, %v734
        %v795 = vpack.c.b16 %v741, %v735
        %v796 = vpack.c.b16 %v742, %v736
        %vm851 = vcmask 130048
        %v853 = vsel %vm851, %v579, 0
        %855 = vmatprep.subr.bf16.mxu0 %v786
        %856 = vmatpush1.bf16.msra.mxu0 %v785
        %857 = vmatprep.subr.bf16.mxu0 %v780
        %858 = vmatpush1.bf16.msra.mxu0 %v779
        %859 = vmatprep.subr.bf16.mxu0 %v774
        %860 = vmatpush1.bf16.msra.mxu0 %v773
        %861 = vmatprep.subr.bf16.mxu0 %v768
        %862 = vmatpush1.bf16.msra.mxu0 %v767
        %863 = vmatprep.subr.bf16.mxu0 %v762
        %864 = vmatpush1.bf16.msra.mxu0 %v761
        %865 = vmatprep.subr.bf16.mxu0 %v756
        %866 = vmatpush1.bf16.msra.mxu0 %v755
        %867 = vmatprep.subr.bf16.mxu0 %v750
        %868 = vmatpush1.bf16.msra.mxu0 %v749
        %869 = vmatprep.subr.bf16.mxu0 %v744
        %870 = vmatpush1.bf16.msra.mxu0 %v743
        %871 = vmatprep.subr.bf16.mxu0 0
        %872 = vmatpush2.bf16.msra.mxu0 0
        %873 = vmatprep.subr.bf16.mxu0 0
        %874 = vmatpush2.bf16.msra.mxu0 0
        %875 = vmatprep.subr.bf16.mxu0 0
        %876 = vmatpush2.bf16.msra.mxu0 0
        %877 = vmatprep.subr.bf16.mxu0 0
        %878 = vmatpush2.bf16.msra.mxu0 0
        %879 = vmatprep.subr.bf16.mxu0 0
        %880 = vmatpush2.bf16.msra.mxu0 0
        %881 = vmatprep.subr.bf16.mxu0 0
        %882 = vmatpush2.bf16.msra.mxu0 0
        %883 = vmatprep.subr.bf16.mxu0 0
        %884 = vmatpush2.bf16.msra.mxu0 0
        %885 = vmatprep.subr.bf16.mxu0 %v792
        %886 = vmatpush2.bf16.msra.mxu0 %v791
        %887 = vmatprep.mubr.bf16.mxu0 %v853
        %888 = vmatmul.mubr.bf16.gmra.mxu0 %v578
        %v889 = vpop.f32.mrf.mxu0
        %v890 = vadd.f32 0.0, %v889
        %v891 = vpop.f32.mrf.mxu0
        %v892 = vadd.f32 0.0, %v891
        %v893 = vpop.f32.mrf.mxu0
        %v894 = vadd.f32 0.0, %v893
        %v895 = vpop.f32.mrf.mxu0
        %v896 = vadd.f32 0.0, %v895
        %897 = vdwg.mxu0
        %898 = vmatprep.subr.bf16.mxu0 %v788
        %899 = vmatpush1.bf16.msra.mxu0 %v787
        %900 = vmatprep.subr.bf16.mxu0 %v782
        %901 = vmatpush1.bf16.msra.mxu0 %v781
        %902 = vmatprep.subr.bf16.mxu0 %v776
        %903 = vmatpush1.bf16.msra.mxu0 %v775
        %904 = vmatprep.subr.bf16.mxu0 %v770
        %905 = vmatpush1.bf16.msra.mxu0 %v769
        %906 = vmatprep.subr.bf16.mxu0 %v764
        %907 = vmatpush1.bf16.msra.mxu0 %v763
        %908 = vmatprep.subr.bf16.mxu0 %v758
        %909 = vmatpush1.bf16.msra.mxu0 %v757
        %910 = vmatprep.subr.bf16.mxu0 %v752
        %911 = vmatpush1.bf16.msra.mxu0 %v751
        %912 = vmatprep.subr.bf16.mxu0 %v746
        %913 = vmatpush1.bf16.msra.mxu0 %v745
        %914 = vmatprep.subr.bf16.mxu0 0
        %915 = vmatpush2.bf16.msra.mxu0 0
        %916 = vmatprep.subr.bf16.mxu0 0
        %917 = vmatpush2.bf16.msra.mxu0 0
        %918 = vmatprep.subr.bf16.mxu0 0
        %919 = vmatpush2.bf16.msra.mxu0 0
        %920 = vmatprep.subr.bf16.mxu0 0
        %921 = vmatpush2.bf16.msra.mxu0 0
        %922 = vmatprep.subr.bf16.mxu0 0
        %923 = vmatpush2.bf16.msra.mxu0 0
        %924 = vmatprep.subr.bf16.mxu0 0
        %925 = vmatpush2.bf16.msra.mxu0 0
        %926 = vmatprep.subr.bf16.mxu0 0
        %927 = vmatpush2.bf16.msra.mxu0 0
        %928 = vmatprep.subr.bf16.mxu0 %v794
        %929 = vmatpush2.bf16.msra.mxu0 %v793
        %930 = vmatprep.mubr.bf16.mxu0 %v853
        %931 = vmatmul.mubr.bf16.gmra.mxu0 %v578
        %v932 = vpop.f32.mrf.mxu0
        %v933 = vadd.f32 0.0, %v932
        %v934 = vpop.f32.mrf.mxu0
        %v935 = vadd.f32 0.0, %v934
        %v936 = vpop.f32.mrf.mxu0
        %v937 = vadd.f32 0.0, %v936
        %v938 = vpop.f32.mrf.mxu0
        %v939 = vadd.f32 0.0, %v938
        %940 = vdwg.mxu0
        %941 = vmatprep.subr.bf16.mxu0 %v790
        %942 = vmatpush1.bf16.msra.mxu0 %v789
        %943 = vmatprep.subr.bf16.mxu0 %v784
        %944 = vmatpush1.bf16.msra.mxu0 %v783
        %945 = vmatprep.subr.bf16.mxu0 %v778
        %946 = vmatpush1.bf16.msra.mxu0 %v777
        %947 = vmatprep.subr.bf16.mxu0 %v772
        %948 = vmatpush1.bf16.msra.mxu0 %v771
        %949 = vmatprep.subr.bf16.mxu0 %v766
        %950 = vmatpush1.bf16.msra.mxu0 %v765
        %951 = vmatprep.subr.bf16.mxu0 %v760
        %952 = vmatpush1.bf16.msra.mxu0 %v759
        %953 = vmatprep.subr.bf16.mxu0 %v754
        %954 = vmatpush1.bf16.msra.mxu0 %v753
        %955 = vmatprep.subr.bf16.mxu0 %v748
        %956 = vmatpush1.bf16.msra.mxu0 %v747
        %957 = vmatprep.subr.bf16.mxu0 0
        %958 = vmatpush2.bf16.msra.mxu0 0
        %959 = vmatprep.subr.bf16.mxu0 0
        %960 = vmatpush2.bf16.msra.mxu0 0
        %961 = vmatprep.subr.bf16.mxu0 0
        %962 = vmatpush2.bf16.msra.mxu0 0
        %963 = vmatprep.subr.bf16.mxu0 0
        %964 = vmatpush2.bf16.msra.mxu0 0
        %965 = vmatprep.subr.bf16.mxu0 0
        %966 = vmatpush2.bf16.msra.mxu0 0
        %967 = vmatprep.subr.bf16.mxu0 0
        %968 = vmatpush2.bf16.msra.mxu0 0
        %969 = vmatprep.subr.bf16.mxu0 0
        %970 = vmatpush2.bf16.msra.mxu0 0
        %971 = vmatprep.subr.bf16.mxu0 %v796
        %972 = vmatpush2.bf16.msra.mxu0 %v795
        %973 = vmatprep.mubr.bf16.mxu0 %v853
        %974 = vmatmul.mubr.bf16.gmra.mxu0 %v578
        %v975 = vpop.f32.mrf.mxu0
        %v976 = vadd.f32 0.0, %v975
        %v977 = vpop.f32.mrf.mxu0
        %v978 = vadd.f32 0.0, %v977
        %v979 = vpop.f32.mrf.mxu0
        %v980 = vadd.f32 0.0, %v979
        %v981 = vpop.f32.mrf.mxu0
        %v982 = vadd.f32 0.0, %v981
        %983 = vdwg.mxu0
        %v986 = vunpack.c.l.b16 %v462
        %v987 = vunpack.c.h.b16 %v462
        %v988 = vunpack.c.l.b16 %v463
        %v989 = vunpack.c.h.b16 %v463
        %v990 = vpack.c.b16 %v988, %v986
        %v991 = vpack.c.b16 %v989, %v987
        %v1047 = vunpack.c.l.b16 %v518
        %v1048 = vunpack.c.h.b16 %v518
        %v1049 = vunpack.c.l.b16 %v519
        %v1050 = vunpack.c.h.b16 %v519
        %v1051 = vunpack.c.l.b16 %v520
        %v1052 = vunpack.c.h.b16 %v520
        %v1053 = vunpack.c.l.b16 %v521
        %v1054 = vunpack.c.h.b16 %v521
        %v1055 = vunpack.c.l.b16 %v522
        %v1056 = vunpack.c.h.b16 %v522
        %v1057 = vunpack.c.l.b16 %v523
        %v1058 = vunpack.c.h.b16 %v523
        %v1059 = vunpack.c.l.b16 %v524
        %v1060 = vunpack.c.h.b16 %v524
        %v1061 = vunpack.c.l.b16 %v525
        %v1062 = vunpack.c.h.b16 %v525
        %v1063 = vunpack.c.l.b16 %v526
        %v1064 = vunpack.c.h.b16 %v526
        %v1065 = vunpack.c.l.b16 %v527
        %v1066 = vunpack.c.h.b16 %v527
        %v1067 = vunpack.c.l.b16 %v528
        %v1068 = vunpack.c.h.b16 %v528
        %v1069 = vunpack.c.l.b16 %v529
        %v1070 = vunpack.c.h.b16 %v529
        %v1071 = vunpack.c.l.b16 %v530
        %v1072 = vunpack.c.h.b16 %v530
        %v1073 = vunpack.c.l.b16 %v531
        %v1074 = vunpack.c.h.b16 %v531
        %v1075 = vunpack.c.l.b16 %v532
        %v1076 = vunpack.c.h.b16 %v532
        %v1077 = vunpack.c.l.b16 %v533
        %v1078 = vunpack.c.h.b16 %v533
        %v1079 = vunpack.c.l.b16 %v534
        %v1080 = vunpack.c.h.b16 %v534
        %v1081 = vunpack.c.l.b16 %v535
        %v1082 = vunpack.c.h.b16 %v535
        %v1083 = vunpack.c.l.b16 %v536
        %v1084 = vunpack.c.h.b16 %v536
        %v1085 = vunpack.c.l.b16 %v537
        %v1086 = vunpack.c.h.b16 %v537
        %v1087 = vunpack.c.l.b16 %v538
        %v1088 = vunpack.c.h.b16 %v538
        %v1089 = vunpack.c.l.b16 %v539
        %v1090 = vunpack.c.h.b16 %v539
        %v1091 = vunpack.c.l.b16 %v540
        %v1092 = vunpack.c.h.b16 %v540
        %v1093 = vunpack.c.l.b16 %v541
        %v1094 = vunpack.c.h.b16 %v541
        %v1095 = vunpack.c.l.b16 %v542
        %v1096 = vunpack.c.h.b16 %v542
        %v1097 = vunpack.c.l.b16 %v543
        %v1098 = vunpack.c.h.b16 %v543
        %v1099 = vunpack.c.l.b16 %v544
        %v1100 = vunpack.c.h.b16 %v544
        %v1101 = vunpack.c.l.b16 %v545
        %v1102 = vunpack.c.h.b16 %v545
        %v1103 = vunpack.c.l.b16 %v546
        %v1104 = vunpack.c.h.b16 %v546
        %v1105 = vunpack.c.l.b16 %v547
        %v1106 = vunpack.c.h.b16 %v547
        %v1107 = vunpack.c.l.b16 %v548
        %v1108 = vunpack.c.h.b16 %v548
        %v1109 = vunpack.c.l.b16 %v549
        %v1110 = vunpack.c.h.b16 %v549
        %v1111 = vunpack.c.l.b16 %v550
        %v1112 = vunpack.c.h.b16 %v550
        %v1113 = vunpack.c.l.b16 %v551
        %v1114 = vunpack.c.h.b16 %v551
        %v1115 = vunpack.c.l.b16 %v552
        %v1116 = vunpack.c.h.b16 %v552
        %v1117 = vunpack.c.l.b16 %v553
        %v1118 = vunpack.c.h.b16 %v553
        %v1119 = vunpack.c.l.b16 %v554
        %v1120 = vunpack.c.h.b16 %v554
        %v1121 = vunpack.c.l.b16 %v555
        %v1122 = vunpack.c.h.b16 %v555
        %v1123 = vunpack.c.l.b16 %v556
        %v1124 = vunpack.c.h.b16 %v556
        %v1125 = vunpack.c.l.b16 %v557
        %v1126 = vunpack.c.h.b16 %v557
        %v1127 = vunpack.c.l.b16 %v558
        %v1128 = vunpack.c.h.b16 %v558
        %v1129 = vunpack.c.l.b16 %v559
        %v1130 = vunpack.c.h.b16 %v559
        %v1131 = vunpack.c.l.b16 %v560
        %v1132 = vunpack.c.h.b16 %v560
        %v1133 = vunpack.c.l.b16 %v561
        %v1134 = vunpack.c.h.b16 %v561
        %v1135 = vunpack.c.l.b16 %v562
        %v1136 = vunpack.c.h.b16 %v562
        %v1137 = vunpack.c.l.b16 %v563
        %v1138 = vunpack.c.h.b16 %v563
        %v1139 = vunpack.c.l.b16 %v564
        %v1140 = vunpack.c.h.b16 %v564
        %v1141 = vunpack.c.l.b16 %v565
        %v1142 = vunpack.c.h.b16 %v565
        %v1143 = vunpack.c.l.b16 %v566
        %v1144 = vunpack.c.h.b16 %v566
        %v1145 = vunpack.c.l.b16 %v567
        %v1146 = vunpack.c.h.b16 %v567
        %v1147 = vunpack.c.l.b16 %v568
        %v1148 = vunpack.c.h.b16 %v568
        %v1149 = vunpack.c.l.b16 %v569
        %v1150 = vunpack.c.h.b16 %v569
        %v1151 = vunpack.c.l.b16 %v570
        %v1152 = vunpack.c.h.b16 %v570
        %v1153 = vunpack.c.l.b16 %v571
        %v1154 = vunpack.c.h.b16 %v571
        %v1155 = vpack.c.b16 %v1053, %v1047
        %v1156 = vpack.c.b16 %v1054, %v1048
        %v1157 = vpack.c.b16 %v1055, %v1049
        %v1158 = vpack.c.b16 %v1056, %v1050
        %v1159 = vpack.c.b16 %v1057, %v1051
        %v1160 = vpack.c.b16 %v1058, %v1052
        %v1161 = vpack.c.b16 %v1065, %v1059
        %v1162 = vpack.c.b16 %v1066, %v1060
        %v1163 = vpack.c.b16 %v1067, %v1061
        %v1164 = vpack.c.b16 %v1068, %v1062
        %v1165 = vpack.c.b16 %v1069, %v1063
        %v1166 = vpack.c.b16 %v1070, %v1064
        %v1167 = vpack.c.b16 %v1077, %v1071
        %v1168 = vpack.c.b16 %v1078, %v1072
        %v1169 = vpack.c.b16 %v1079, %v1073
        %v1170 = vpack.c.b16 %v1080, %v1074
        %v1171 = vpack.c.b16 %v1081, %v1075
        %v1172 = vpack.c.b16 %v1082, %v1076
        %v1173 = vpack.c.b16 %v1089, %v1083
        %v1174 = vpack.c.b16 %v1090, %v1084
        %v1175 = vpack.c.b16 %v1091, %v1085
        %v1176 = vpack.c.b16 %v1092, %v1086
        %v1177 = vpack.c.b16 %v1093, %v1087
        %v1178 = vpack.c.b16 %v1094, %v1088
        %v1179 = vpack.c.b16 %v1101, %v1095
        %v1180 = vpack.c.b16 %v1102, %v1096
        %v1181 = vpack.c.b16 %v1103, %v1097
        %v1182 = vpack.c.b16 %v1104, %v1098
        %v1183 = vpack.c.b16 %v1105, %v1099
        %v1184 = vpack.c.b16 %v1106, %v1100
        %v1185 = vpack.c.b16 %v1113, %v1107
        %v1186 = vpack.c.b16 %v1114, %v1108
        %v1187 = vpack.c.b16 %v1115, %v1109
        %v1188 = vpack.c.b16 %v1116, %v1110
        %v1189 = vpack.c.b16 %v1117, %v1111
        %v1190 = vpack.c.b16 %v1118, %v1112
        %v1191 = vpack.c.b16 %v1125, %v1119
        %v1192 = vpack.c.b16 %v1126, %v1120
        %v1193 = vpack.c.b16 %v1127, %v1121
        %v1194 = vpack.c.b16 %v1128, %v1122
        %v1195 = vpack.c.b16 %v1129, %v1123
        %v1196 = vpack.c.b16 %v1130, %v1124
        %v1197 = vpack.c.b16 %v1137, %v1131
        %v1198 = vpack.c.b16 %v1138, %v1132
        %v1199 = vpack.c.b16 %v1139, %v1133
        %v1200 = vpack.c.b16 %v1140, %v1134
        %v1201 = vpack.c.b16 %v1141, %v1135
        %v1202 = vpack.c.b16 %v1142, %v1136
        %v1203 = vpack.c.b16 %v1149, %v1143
        %v1204 = vpack.c.b16 %v1150, %v1144
        %v1205 = vpack.c.b16 %v1151, %v1145
        %v1206 = vpack.c.b16 %v1152, %v1146
        %v1207 = vpack.c.b16 %v1153, %v1147
        %v1208 = vpack.c.b16 %v1154, %v1148
        %v1264 = vsel %vm851, %v991, 0
        %1266 = vmatprep.subr.bf16.mxu0 %v1198
        %1267 = vmatpush1.bf16.msra.mxu0 %v1197
        %1268 = vmatprep.subr.bf16.mxu0 %v1192
        %1269 = vmatpush1.bf16.msra.mxu0 %v1191
        %1270 = vmatprep.subr.bf16.mxu0 %v1186
        %1271 = vmatpush1.bf16.msra.mxu0 %v1185
        %1272 = vmatprep.subr.bf16.mxu0 %v1180
        %1273 = vmatpush1.bf16.msra.mxu0 %v1179
        %1274 = vmatprep.subr.bf16.mxu0 %v1174
        %1275 = vmatpush1.bf16.msra.mxu0 %v1173
        %1276 = vmatprep.subr.bf16.mxu0 %v1168
        %1277 = vmatpush1.bf16.msra.mxu0 %v1167
        %1278 = vmatprep.subr.bf16.mxu0 %v1162
        %1279 = vmatpush1.bf16.msra.mxu0 %v1161
        %1280 = vmatprep.subr.bf16.mxu0 %v1156
        %1281 = vmatpush1.bf16.msra.mxu0 %v1155
        %1282 = vmatprep.subr.bf16.mxu0 0
        %1283 = vmatpush2.bf16.msra.mxu0 0
        %1284 = vmatprep.subr.bf16.mxu0 0
        %1285 = vmatpush2.bf16.msra.mxu0 0
        %1286 = vmatprep.subr.bf16.mxu0 0
        %1287 = vmatpush2.bf16.msra.mxu0 0
        %1288 = vmatprep.subr.bf16.mxu0 0
        %1289 = vmatpush2.bf16.msra.mxu0 0
        %1290 = vmatprep.subr.bf16.mxu0 0
        %1291 = vmatpush2.bf16.msra.mxu0 0
        %1292 = vmatprep.subr.bf16.mxu0 0
        %1293 = vmatpush2.bf16.msra.mxu0 0
        %1294 = vmatprep.subr.bf16.mxu0 0
        %1295 = vmatpush2.bf16.msra.mxu0 0
        %1296 = vmatprep.subr.bf16.mxu0 %v1204
        %1297 = vmatpush2.bf16.msra.mxu0 %v1203
        %1298 = vmatprep.mubr.bf16.mxu0 %v1264
        %1299 = vmatmul.mubr.bf16.gmra.mxu0 %v990
        %v1300 = vpop.f32.mrf.mxu0
        %v1301 = vadd.f32 0.0, %v1300
        %v1302 = vpop.f32.mrf.mxu0
        %v1303 = vadd.f32 0.0, %v1302
        %v1304 = vpop.f32.mrf.mxu0
        %v1305 = vadd.f32 0.0, %v1304
        %v1306 = vpop.f32.mrf.mxu0
        %v1307 = vadd.f32 0.0, %v1306
        %1308 = vdwg.mxu0
        %1309 = vmatprep.subr.bf16.mxu0 %v1200
        %1310 = vmatpush1.bf16.msra.mxu0 %v1199
        %1311 = vmatprep.subr.bf16.mxu0 %v1194
        %1312 = vmatpush1.bf16.msra.mxu0 %v1193
        %1313 = vmatprep.subr.bf16.mxu0 %v1188
        %1314 = vmatpush1.bf16.msra.mxu0 %v1187
        %1315 = vmatprep.subr.bf16.mxu0 %v1182
        %1316 = vmatpush1.bf16.msra.mxu0 %v1181
        %1317 = vmatprep.subr.bf16.mxu0 %v1176
        %1318 = vmatpush1.bf16.msra.mxu0 %v1175
        %1319 = vmatprep.subr.bf16.mxu0 %v1170
        %1320 = vmatpush1.bf16.msra.mxu0 %v1169
        %1321 = vmatprep.subr.bf16.mxu0 %v1164
        %1322 = vmatpush1.bf16.msra.mxu0 %v1163
        %1323 = vmatprep.subr.bf16.mxu0 %v1158
        %1324 = vmatpush1.bf16.msra.mxu0 %v1157
        %1325 = vmatprep.subr.bf16.mxu0 0
        %1326 = vmatpush2.bf16.msra.mxu0 0
        %1327 = vmatprep.subr.bf16.mxu0 0
        %1328 = vmatpush2.bf16.msra.mxu0 0
        %1329 = vmatprep.subr.bf16.mxu0 0
        %1330 = vmatpush2.bf16.msra.mxu0 0
        %1331 = vmatprep.subr.bf16.mxu0 0
        %1332 = vmatpush2.bf16.msra.mxu0 0
        %1333 = vmatprep.subr.bf16.mxu0 0
        %1334 = vmatpush2.bf16.msra.mxu0 0
        %1335 = vmatprep.subr.bf16.mxu0 0
        %1336 = vmatpush2.bf16.msra.mxu0 0
        %1337 = vmatprep.subr.bf16.mxu0 0
        %1338 = vmatpush2.bf16.msra.mxu0 0
        %1339 = vmatprep.subr.bf16.mxu0 %v1206
        %1340 = vmatpush2.bf16.msra.mxu0 %v1205
        %1341 = vmatprep.mubr.bf16.mxu0 %v1264
        %1342 = vmatmul.mubr.bf16.gmra.mxu0 %v990
        %v1343 = vpop.f32.mrf.mxu0
        %v1344 = vadd.f32 0.0, %v1343
        %v1345 = vpop.f32.mrf.mxu0
        %v1346 = vadd.f32 0.0, %v1345
        %v1347 = vpop.f32.mrf.mxu0
        %v1348 = vadd.f32 0.0, %v1347
        %v1349 = vpop.f32.mrf.mxu0
        %v1350 = vadd.f32 0.0, %v1349
        %1351 = vdwg.mxu0
        %1352 = vmatprep.subr.bf16.mxu0 %v1202
        %1353 = vmatpush1.bf16.msra.mxu0 %v1201
        %1354 = vmatprep.subr.bf16.mxu0 %v1196
        %1355 = vmatpush1.bf16.msra.mxu0 %v1195
        %1356 = vmatprep.subr.bf16.mxu0 %v1190
        %1357 = vmatpush1.bf16.msra.mxu0 %v1189
        %1358 = vmatprep.subr.bf16.mxu0 %v1184
        %1359 = vmatpush1.bf16.msra.mxu0 %v1183
        %1360 = vmatprep.subr.bf16.mxu0 %v1178
        %1361 = vmatpush1.bf16.msra.mxu0 %v1177
        %1362 = vmatprep.subr.bf16.mxu0 %v1172
        %1363 = vmatpush1.bf16.msra.mxu0 %v1171
        %1364 = vmatprep.subr.bf16.mxu0 %v1166
        %1365 = vmatpush1.bf16.msra.mxu0 %v1165
        %1366 = vmatprep.subr.bf16.mxu0 %v1160
        %1367 = vmatpush1.bf16.msra.mxu0 %v1159
        %1368 = vmatprep.subr.bf16.mxu0 0
        %1369 = vmatpush2.bf16.msra.mxu0 0
        %1370 = vmatprep.subr.bf16.mxu0 0
        %1371 = vmatpush2.bf16.msra.mxu0 0
        %1372 = vmatprep.subr.bf16.mxu0 0
        %1373 = vmatpush2.bf16.msra.mxu0 0
        %1374 = vmatprep.subr.bf16.mxu0 0
        %1375 = vmatpush2.bf16.msra.mxu0 0
        %1376 = vmatprep.subr.bf16.mxu0 0
        %1377 = vmatpush2.bf16.msra.mxu0 0
        %1378 = vmatprep.subr.bf16.mxu0 0
        %1379 = vmatpush2.bf16.msra.mxu0 0
        %1380 = vmatprep.subr.bf16.mxu0 0
        %1381 = vmatpush2.bf16.msra.mxu0 0
        %1382 = vmatprep.subr.bf16.mxu0 %v1208
        %1383 = vmatpush2.bf16.msra.mxu0 %v1207
        %1384 = vmatprep.mubr.bf16.mxu0 %v1264
        %1385 = vmatmul.mubr.bf16.gmra.mxu0 %v990
        %v1386 = vpop.f32.mrf.mxu0
        %v1387 = vadd.f32 0.0, %v1386
        %v1388 = vpop.f32.mrf.mxu0
        %v1389 = vadd.f32 0.0, %v1388
        %v1390 = vpop.f32.mrf.mxu0
        %v1391 = vadd.f32 0.0, %v1390
        %v1392 = vpop.f32.mrf.mxu0
        %v1393 = vadd.f32 0.0, %v1392
        %1394 = vdwg.mxu0
        %v1395 = vpack.c.bf16 %v890, %v890
        %v1396 = vpack.c.bf16 %v892, %v892
        %v1397 = vpack.c.bf16 %v933, %v933
        %v1398 = vpack.c.bf16 %v935, %v935
        %v1399 = vpack.c.bf16 %v976, %v976
        %v1400 = vpack.c.bf16 %v978, %v978
        %v1401 = vpack.c.bf16 %v1301, %v1301
        %v1402 = vpack.c.bf16 %v1303, %v1303
        %v1403 = vpack.c.bf16 %v1344, %v1344
        %v1404 = vpack.c.bf16 %v1346, %v1346
        %v1405 = vpack.c.bf16 %v1387, %v1387
        %v1406 = vpack.c.bf16 %v1389, %v1389
        %v1407 = vpack.c.bf16 %v894, %v894
        %v1408 = vpack.c.bf16 %v896, %v896
        %v1409 = vpack.c.bf16 %v937, %v937
        %v1410 = vpack.c.bf16 %v939, %v939
        %v1411 = vpack.c.bf16 %v980, %v980
        %v1412 = vpack.c.bf16 %v982, %v982
        %v1413 = vpack.c.bf16 %v1305, %v1305
        %v1414 = vpack.c.bf16 %v1307, %v1307
        %v1415 = vpack.c.bf16 %v1348, %v1348
        %v1416 = vpack.c.bf16 %v1350, %v1350
        %v1417 = vpack.c.bf16 %v1391, %v1391
        %v1418 = vpack.c.bf16 %v1393, %v1393
        %v1431 = vunpack.c.l.b16 %v1395
        %v1432 = vunpack.c.l.b16 %v1396
        %v1433 = vunpack.c.l.b16 %v1397
        %v1434 = vunpack.c.l.b16 %v1398
        %v1435 = vunpack.c.l.b16 %v1399
        %v1436 = vunpack.c.l.b16 %v1400
        %v1437 = vunpack.c.l.b16 %v1401
        %v1438 = vunpack.c.l.b16 %v1402
        %v1439 = vunpack.c.l.b16 %v1403
        %v1440 = vunpack.c.l.b16 %v1404
        %v1441 = vunpack.c.l.b16 %v1405
        %v1442 = vunpack.c.l.b16 %v1406
        %v1443 = vld [vmem:[#allocation8] sm:$0xff]
        %v1444 = vld [vmem:[#allocation8 + $0x8] sm:$0xff]
        %v1445 = vld [vmem:[#allocation8 + $0x10] sm:$0xff]
        %v1446 = vld [vmem:[#allocation8 + $0x18] sm:$0xff]
        %v1447 = vld [vmem:[#allocation8 + $0x20] sm:$0xff]
        %v1448 = vld [vmem:[#allocation8 + $0x28] sm:$0xff]
        %v1449 = vld [vmem:[#allocation8 + $0x30] sm:$0xff]
        %v1450 = vld [vmem:[#allocation8 + $0x38] sm:$0xff]
        %v1451 = vld [vmem:[#allocation8 + $0x40] sm:$0xff]
        %v1452 = vld [vmem:[#allocation8 + $0x48] sm:$0xff]
        %v1453 = vld [vmem:[#allocation8 + $0x50] sm:$0xff]
        %v1454 = vld [vmem:[#allocation8 + $0x58] sm:$0xff]
        %v1455 = vld [vmem:[#allocation8 + $0x60] sm:$0xff]
        %v1456 = vld [vmem:[#allocation8 + $0x68] sm:$0xff]
        %v1457 = vld [vmem:[#allocation8 + $0x70] sm:$0xff]
        %v1458 = vld [vmem:[#allocation8 + $0x78] sm:$0xff]
        %v1459 = vld [vmem:[#allocation8 + $0x80] sm:$0xff]
        %v1460 = vld [vmem:[#allocation8 + $0x88] sm:$0xff]
        %v1461 = vld [vmem:[#allocation8 + $0x90] sm:$0xff]
        %v1462 = vld [vmem:[#allocation8 + $0x98] sm:$0xff]
        %v1463 = vld [vmem:[#allocation8 + $0xa0] sm:$0xff]
        %v1464 = vld [vmem:[#allocation8 + $0xa8] sm:$0xff]
        %v1465 = vld [vmem:[#allocation8 + $0xb0] sm:$0xff]
        %v1466 = vld [vmem:[#allocation8 + $0xb8] sm:$0xff]
        %v1467 = vld [vmem:[#allocation8 + $0xc0] sm:$0xff]
        %v1468 = vld [vmem:[#allocation8 + $0xc8] sm:$0xff]
        %v1469 = vld [vmem:[#allocation8 + $0xd0] sm:$0xff]
        %v1470 = vld [vmem:[#allocation8 + $0xd8] sm:$0xff]
        %v1471 = vld [vmem:[#allocation8 + $0xe0] sm:$0xff]
        %v1472 = vld [vmem:[#allocation8 + $0xe8] sm:$0xff]
        %v1473 = vld [vmem:[#allocation8 + $0xf0] sm:$0xff]
        %v1474 = vld [vmem:[#allocation8 + $0xf8] sm:$0xff]
        %v1475 = vld [vmem:[#allocation8 + $0x100] sm:$0xff]
        %v1476 = vld [vmem:[#allocation8 + $0x108] sm:$0xff]
        %v1477 = vld [vmem:[#allocation8 + $0x110] sm:$0xff]
        %v1478 = vld [vmem:[#allocation8 + $0x118] sm:$0xff]
        %v1479 = vld [vmem:[#allocation8 + $0x120] sm:$0xff]
        %v1480 = vld [vmem:[#allocation8 + $0x128] sm:$0xff]
        %v1481 = vld [vmem:[#allocation8 + $0x130] sm:$0xff]
        %v1482 = vld [vmem:[#allocation8 + $0x138] sm:$0xff]
        %v1483 = vld [vmem:[#allocation8 + $0x140] sm:$0xff]
        %v1484 = vld [vmem:[#allocation8 + $0x148] sm:$0xff]
        %v1485 = vld [vmem:[#allocation8 + $0x150] sm:$0xff]
        %v1486 = vld [vmem:[#allocation8 + $0x158] sm:$0xff]
        %v1487 = vld [vmem:[#allocation8 + $0x160] sm:$0xff]
        %v1488 = vld [vmem:[#allocation8 + $0x168] sm:$0xff]
        %v1489 = vld [vmem:[#allocation8 + $0x170] sm:$0xff]
        %v1490 = vld [vmem:[#allocation8 + $0x178] sm:$0xff]
        %v1491 = vld [vmem:[#allocation8 + $0x180] sm:$0xff]
        %v1492 = vld [vmem:[#allocation8 + $0x188] sm:$0xff]
        %v1493 = vld [vmem:[#allocation8 + $0x190] sm:$0xff]
        %v1494 = vld [vmem:[#allocation8 + $0x198] sm:$0xff]
        %v1495 = vld [vmem:[#allocation8 + $0x1a0] sm:$0xff]
        %v1496 = vld [vmem:[#allocation8 + $0x1a8] sm:$0xff]
        %v1497 = vld [vmem:[#allocation8 + $0x1b0] sm:$0xff]
        %v1498 = vld [vmem:[#allocation8 + $0x1b8] sm:$0xff]
        %v1499 = vld [vmem:[#allocation8 + $0x1c0] sm:$0xff]
        %v1500 = vld [vmem:[#allocation8 + $0x1c8] sm:$0xff]
        %v1501 = vld [vmem:[#allocation8 + $0x1d0] sm:$0xff]
        %v1502 = vld [vmem:[#allocation8 + $0x1d8] sm:$0xff]
        %v1503 = vld [vmem:[#allocation8 + $0x1e0] sm:$0xff]
        %v1504 = vld [vmem:[#allocation8 + $0x1e8] sm:$0xff]
        %v1505 = vld [vmem:[#allocation8 + $0x1f0] sm:$0xff]
        %v1506 = vld [vmem:[#allocation8 + $0x1f8] sm:$0xff]
        %v1507 = vld [vmem:[#allocation8 + $0x200] sm:$0xff]
        %v1508 = vld [vmem:[#allocation8 + $0x208] sm:$0xff]
        %v1509 = vld [vmem:[#allocation8 + $0x210] sm:$0xff]
        %v1510 = vld [vmem:[#allocation8 + $0x218] sm:$0xff]
        %v1511 = vld [vmem:[#allocation8 + $0x220] sm:$0xff]
        %v1512 = vld [vmem:[#allocation8 + $0x228] sm:$0xff]
        %v1513 = vld [vmem:[#allocation8 + $0x230] sm:$0xff]
        %v1514 = vld [vmem:[#allocation8 + $0x238] sm:$0xff]
        %v1515 = vld [vmem:[#allocation8 + $0x240] sm:$0xff]
        %v1516 = vld [vmem:[#allocation8 + $0x248] sm:$0xff]
        %v1517 = vld [vmem:[#allocation8 + $0x250] sm:$0xff]
        %v1518 = vld [vmem:[#allocation8 + $0x258] sm:$0xff]
        %v1519 = vld [vmem:[#allocation8 + $0x260] sm:$0xff]
        %v1520 = vld [vmem:[#allocation8 + $0x268] sm:$0xff]
        %v1521 = vld [vmem:[#allocation8 + $0x270] sm:$0xff]
        %v1522 = vld [vmem:[#allocation8 + $0x278] sm:$0xff]
        %v1523 = vld [vmem:[#allocation8 + $0x280] sm:$0xff]
        %v1524 = vld [vmem:[#allocation8 + $0x288] sm:$0xff]
        %v1525 = vld [vmem:[#allocation8 + $0x290] sm:$0xff]
        %v1526 = vld [vmem:[#allocation8 + $0x298] sm:$0xff]
        %v1527 = vld [vmem:[#allocation8 + $0x2a0] sm:$0xff]
        %v1528 = vld [vmem:[#allocation8 + $0x2a8] sm:$0xff]
        %v1529 = vld [vmem:[#allocation8 + $0x2b0] sm:$0xff]
        %v1530 = vld [vmem:[#allocation8 + $0x2b8] sm:$0xff]
        %v1531 = vld [vmem:[#allocation8 + $0x2c0] sm:$0xff]
        %v1532 = vld [vmem:[#allocation8 + $0x2c8] sm:$0xff]
        %v1533 = vld [vmem:[#allocation8 + $0x2d0] sm:$0xff]
        %v1534 = vld [vmem:[#allocation8 + $0x2d8] sm:$0xff]
        %v1535 = vld [vmem:[#allocation8 + $0x2e0] sm:$0xff]
        %v1536 = vld [vmem:[#allocation8 + $0x2e8] sm:$0xff]
        %v1537 = vld [vmem:[#allocation8 + $0x2f0] sm:$0xff]
        %v1538 = vld [vmem:[#allocation8 + $0x2f8] sm:$0xff]
        %v1539 = vld [vmem:[#allocation8 + $0x300] sm:$0xff]
        %v1540 = vld [vmem:[#allocation8 + $0x308] sm:$0xff]
        %v1541 = vld [vmem:[#allocation8 + $0x310] sm:$0xff]
        %v1542 = vld [vmem:[#allocation8 + $0x318] sm:$0xff]
        %v1543 = vld [vmem:[#allocation8 + $0x320] sm:$0xff]
        %v1544 = vld [vmem:[#allocation8 + $0x328] sm:$0xff]
        %v1545 = vld [vmem:[#allocation8 + $0x330] sm:$0xff]
        %v1546 = vld [vmem:[#allocation8 + $0x338] sm:$0xff]
        %v1547 = vld [vmem:[#allocation8 + $0x340] sm:$0xff]
        %v1548 = vld [vmem:[#allocation8 + $0x348] sm:$0xff]
        %v1549 = vld [vmem:[#allocation8 + $0x350] sm:$0xff]
        %v1550 = vld [vmem:[#allocation8 + $0x358] sm:$0xff]
        %v1551 = vld [vmem:[#allocation8 + $0x360] sm:$0xff]
        %v1552 = vld [vmem:[#allocation8 + $0x368] sm:$0xff]
        %v1553 = vld [vmem:[#allocation8 + $0x370] sm:$0xff]
        %v1554 = vld [vmem:[#allocation8 + $0x378] sm:$0xff]
        %v1555 = vld [vmem:[#allocation8 + $0x380] sm:$0xff]
        %v1556 = vld [vmem:[#allocation8 + $0x388] sm:$0xff]
        %v1557 = vld [vmem:[#allocation8 + $0x390] sm:$0xff]
        %v1558 = vld [vmem:[#allocation8 + $0x398] sm:$0xff]
        %v1559 = vld [vmem:[#allocation8 + $0x3a0] sm:$0xff]
        %v1560 = vld [vmem:[#allocation8 + $0x3a8] sm:$0xff]
        %v1561 = vld [vmem:[#allocation8 + $0x3b0] sm:$0xff]
        %v1562 = vld [vmem:[#allocation8 + $0x3b8] sm:$0xff]
        %v1563 = vld [vmem:[#allocation8 + $0x3c0] sm:$0xff]
        %v1564 = vld [vmem:[#allocation8 + $0x3c8] sm:$0xff]
        %v1565 = vld [vmem:[#allocation8 + $0x3d0] sm:$0xff]
        %v1566 = vld [vmem:[#allocation8 + $0x3d8] sm:$0xff]
        %v1567 = vld [vmem:[#allocation8 + $0x3e0] sm:$0xff]
        %v1568 = vld [vmem:[#allocation8 + $0x3e8] sm:$0xff]
        %v1569 = vld [vmem:[#allocation8 + $0x3f0] sm:$0xff]
        %v1570 = vld [vmem:[#allocation8 + $0x3f8] sm:$0xff]
        %v1571 = vld [vmem:[#allocation8 + $0x400] sm:$0xff]
        %v1572 = vld [vmem:[#allocation8 + $0x408] sm:$0xff]
        %v1573 = vld [vmem:[#allocation8 + $0x410] sm:$0xff]
        %v1574 = vld [vmem:[#allocation8 + $0x418] sm:$0xff]
        %v1575 = vld [vmem:[#allocation8 + $0x420] sm:$0xff]
        %v1576 = vld [vmem:[#allocation8 + $0x428] sm:$0xff]
        %v1577 = vld [vmem:[#allocation8 + $0x430] sm:$0xff]
        %v1578 = vld [vmem:[#allocation8 + $0x438] sm:$0xff]
        %v1579 = vld [vmem:[#allocation8 + $0x440] sm:$0xff]
        %v1580 = vld [vmem:[#allocation8 + $0x448] sm:$0xff]
        %v1581 = vld [vmem:[#allocation8 + $0x450] sm:$0xff]
        %v1582 = vld [vmem:[#allocation8 + $0x458] sm:$0xff]
        %v1583 = vld [vmem:[#allocation8 + $0x460] sm:$0xff]
        %v1584 = vld [vmem:[#allocation8 + $0x468] sm:$0xff]
        %v1585 = vld [vmem:[#allocation8 + $0x470] sm:$0xff]
        %v1586 = vld [vmem:[#allocation8 + $0x478] sm:$0xff]
        %v1587 = vld [vmem:[#allocation8 + $0x480] sm:$0xff]
        %v1588 = vld [vmem:[#allocation8 + $0x488] sm:$0xff]
        %v1589 = vld [vmem:[#allocation8 + $0x490] sm:$0xff]
        %v1590 = vld [vmem:[#allocation8 + $0x498] sm:$0xff]
        %v1591 = vld [vmem:[#allocation8 + $0x4a0] sm:$0xff]
        %v1592 = vld [vmem:[#allocation8 + $0x4a8] sm:$0xff]
        %v1593 = vld [vmem:[#allocation8 + $0x4b0] sm:$0xff]
        %v1594 = vld [vmem:[#allocation8 + $0x4b8] sm:$0xff]
        %v1595 = vld [vmem:[#allocation8 + $0x4c0] sm:$0xff]
        %v1596 = vld [vmem:[#allocation8 + $0x4c8] sm:$0xff]
        %v1597 = vld [vmem:[#allocation8 + $0x4d0] sm:$0xff]
        %v1598 = vld [vmem:[#allocation8 + $0x4d8] sm:$0xff]
        %v1599 = vld [vmem:[#allocation8 + $0x4e0] sm:$0xff]
        %v1600 = vld [vmem:[#allocation8 + $0x4e8] sm:$0xff]
        %v1601 = vld [vmem:[#allocation8 + $0x4f0] sm:$0xff]
        %v1602 = vld [vmem:[#allocation8 + $0x4f8] sm:$0xff]
        %v1603 = vld [vmem:[#allocation8 + $0x500] sm:$0xff]
        %v1604 = vld [vmem:[#allocation8 + $0x508] sm:$0xff]
        %v1605 = vld [vmem:[#allocation8 + $0x510] sm:$0xff]
        %v1606 = vld [vmem:[#allocation8 + $0x518] sm:$0xff]
        %v1607 = vld [vmem:[#allocation8 + $0x520] sm:$0xff]
        %v1608 = vld [vmem:[#allocation8 + $0x528] sm:$0xff]
        %v1609 = vld [vmem:[#allocation8 + $0x530] sm:$0xff]
        %v1610 = vld [vmem:[#allocation8 + $0x538] sm:$0xff]
        %v1611 = vld [vmem:[#allocation8 + $0x540] sm:$0xff]
        %v1612 = vld [vmem:[#allocation8 + $0x548] sm:$0xff]
        %v1613 = vld [vmem:[#allocation8 + $0x550] sm:$0xff]
        %v1614 = vld [vmem:[#allocation8 + $0x558] sm:$0xff]
        %v1615 = vld [vmem:[#allocation8 + $0x560] sm:$0xff]
        %v1616 = vld [vmem:[#allocation8 + $0x568] sm:$0xff]
        %v1617 = vld [vmem:[#allocation8 + $0x570] sm:$0xff]
        %v1618 = vld [vmem:[#allocation8 + $0x578] sm:$0xff]
        %v1619 = vld [vmem:[#allocation8 + $0x580] sm:$0xff]
        %v1620 = vld [vmem:[#allocation8 + $0x588] sm:$0xff]
        %v1621 = vld [vmem:[#allocation8 + $0x590] sm:$0xff]
        %v1622 = vld [vmem:[#allocation8 + $0x598] sm:$0xff]
        %v1623 = vld [vmem:[#allocation8 + $0x5a0] sm:$0xff]
        %v1624 = vld [vmem:[#allocation8 + $0x5a8] sm:$0xff]
        %v1625 = vld [vmem:[#allocation8 + $0x5b0] sm:$0xff]
        %v1626 = vld [vmem:[#allocation8 + $0x5b8] sm:$0xff]
        %v1627 = vld [vmem:[#allocation8 + $0x5c0] sm:$0xff]
        %v1628 = vld [vmem:[#allocation8 + $0x5c8] sm:$0xff]
        %v1629 = vld [vmem:[#allocation8 + $0x5d0] sm:$0xff]
        %v1630 = vld [vmem:[#allocation8 + $0x5d8] sm:$0xff]
        %v1631 = vld [vmem:[#allocation8 + $0x5e0] sm:$0xff]
        %v1632 = vld [vmem:[#allocation8 + $0x5e8] sm:$0xff]
        %v1633 = vld [vmem:[#allocation8 + $0x5f0] sm:$0xff]
        %v1634 = vld [vmem:[#allocation8 + $0x5f8] sm:$0xff]
        %v1635 = vld [vmem:[#allocation8 + $0x600] sm:$0xff]
        %v1636 = vld [vmem:[#allocation8 + $0x608] sm:$0xff]
        %v1637 = vld [vmem:[#allocation8 + $0x610] sm:$0xff]
        %v1638 = vld [vmem:[#allocation8 + $0x618] sm:$0xff]
        %v1639 = vld [vmem:[#allocation8 + $0x620] sm:$0xff]
        %v1640 = vld [vmem:[#allocation8 + $0x628] sm:$0xff]
        %v1641 = vld [vmem:[#allocation8 + $0x630] sm:$0xff]
        %v1642 = vld [vmem:[#allocation8 + $0x638] sm:$0xff]
        %v1643 = vld [vmem:[#allocation8 + $0x640] sm:$0xff]
        %v1644 = vld [vmem:[#allocation8 + $0x648] sm:$0xff]
        %v1645 = vld [vmem:[#allocation8 + $0x650] sm:$0xff]
        %v1646 = vld [vmem:[#allocation8 + $0x658] sm:$0xff]
        %v1647 = vld [vmem:[#allocation8 + $0x660] sm:$0xff]
        %v1648 = vld [vmem:[#allocation8 + $0x668] sm:$0xff]
        %v1649 = vld [vmem:[#allocation8 + $0x670] sm:$0xff]
        %v1650 = vld [vmem:[#allocation8 + $0x678] sm:$0xff]
        %v1651 = vld [vmem:[#allocation8 + $0x680] sm:$0xff]
        %v1652 = vld [vmem:[#allocation8 + $0x688] sm:$0xff]
        %v1653 = vld [vmem:[#allocation8 + $0x690] sm:$0xff]
        %v1654 = vld [vmem:[#allocation8 + $0x698] sm:$0xff]
        %v1655 = vld [vmem:[#allocation8 + $0x6a0] sm:$0xff]
        %v1656 = vld [vmem:[#allocation8 + $0x6a8] sm:$0xff]
        %v1657 = vld [vmem:[#allocation8 + $0x6b0] sm:$0xff]
        %v1658 = vld [vmem:[#allocation8 + $0x6b8] sm:$0xff]
        %v1659 = vld [vmem:[#allocation8 + $0x6c0] sm:$0xff]
        %v1660 = vld [vmem:[#allocation8 + $0x6c8] sm:$0xff]
        %v1661 = vld [vmem:[#allocation8 + $0x6d0] sm:$0xff]
        %v1662 = vld [vmem:[#allocation8 + $0x6d8] sm:$0xff]
        %v1663 = vld [vmem:[#allocation8 + $0x6e0] sm:$0xff]
        %v1664 = vld [vmem:[#allocation8 + $0x6e8] sm:$0xff]
        %v1665 = vld [vmem:[#allocation8 + $0x6f0] sm:$0xff]
        %v1666 = vld [vmem:[#allocation8 + $0x6f8] sm:$0xff]
        %v1667 = vld [vmem:[#allocation8 + $0x700] sm:$0xff]
        %v1668 = vld [vmem:[#allocation8 + $0x708] sm:$0xff]
        %v1669 = vld [vmem:[#allocation8 + $0x710] sm:$0xff]
        %v1670 = vld [vmem:[#allocation8 + $0x718] sm:$0xff]
        %v1671 = vld [vmem:[#allocation8 + $0x720] sm:$0xff]
        %v1672 = vld [vmem:[#allocation8 + $0x728] sm:$0xff]
        %v1673 = vld [vmem:[#allocation8 + $0x730] sm:$0xff]
        %v1674 = vld [vmem:[#allocation8 + $0x738] sm:$0xff]
        %v1675 = vld [vmem:[#allocation8 + $0x740] sm:$0xff]
        %v1676 = vld [vmem:[#allocation8 + $0x748] sm:$0xff]
        %v1677 = vld [vmem:[#allocation8 + $0x750] sm:$0xff]
        %v1678 = vld [vmem:[#allocation8 + $0x758] sm:$0xff]
        %v1679 = vld [vmem:[#allocation8 + $0x760] sm:$0xff]
        %v1680 = vld [vmem:[#allocation8 + $0x768] sm:$0xff]
        %v1681 = vld [vmem:[#allocation8 + $0x770] sm:$0xff]
        %v1682 = vld [vmem:[#allocation8 + $0x778] sm:$0xff]
        %v1683 = vld [vmem:[#allocation8 + $0x780] sm:$0xff]
        %v1684 = vld [vmem:[#allocation8 + $0x788] sm:$0xff]
        %v1685 = vld [vmem:[#allocation8 + $0x790] sm:$0xff]
        %v1686 = vld [vmem:[#allocation8 + $0x798] sm:$0xff]
        %v1687 = vld [vmem:[#allocation8 + $0x7a0] sm:$0xff]
        %v1688 = vld [vmem:[#allocation8 + $0x7a8] sm:$0xff]
        %v1689 = vld [vmem:[#allocation8 + $0x7b0] sm:$0xff]
        %v1690 = vld [vmem:[#allocation8 + $0x7b8] sm:$0xff]
        %v1691 = vld [vmem:[#allocation8 + $0x7c0] sm:$0xff]
        %v1692 = vld [vmem:[#allocation8 + $0x7c8] sm:$0xff]
        %v1693 = vld [vmem:[#allocation8 + $0x7d0] sm:$0xff]
        %v1694 = vld [vmem:[#allocation8 + $0x7d8] sm:$0xff]
        %v1695 = vld [vmem:[#allocation8 + $0x7e0] sm:$0xff]
        %v1696 = vld [vmem:[#allocation8 + $0x7e8] sm:$0xff]
        %v1697 = vld [vmem:[#allocation8 + $0x7f0] sm:$0xff]
        %v1698 = vld [vmem:[#allocation8 + $0x7f8] sm:$0xff]
        %v1699 = vld [vmem:[#allocation8 + $0x800] sm:$0xff]
        %v1700 = vld [vmem:[#allocation8 + $0x808] sm:$0xff]
        %v1701 = vld [vmem:[#allocation8 + $0x810] sm:$0xff]
        %v1702 = vld [vmem:[#allocation8 + $0x818] sm:$0xff]
        %v1703 = vld [vmem:[#allocation8 + $0x820] sm:$0xff]
        %v1704 = vld [vmem:[#allocation8 + $0x828] sm:$0xff]
        %v1705 = vld [vmem:[#allocation8 + $0x830] sm:$0xff]
        %v1706 = vld [vmem:[#allocation8 + $0x838] sm:$0xff]
        %v1707 = vld [vmem:[#allocation8 + $0x840] sm:$0xff]
        %v1708 = vld [vmem:[#allocation8 + $0x848] sm:$0xff]
        %v1709 = vld [vmem:[#allocation8 + $0x850] sm:$0xff]
        %v1710 = vld [vmem:[#allocation8 + $0x858] sm:$0xff]
        %v1711 = vld [vmem:[#allocation8 + $0x860] sm:$0xff]
        %v1712 = vld [vmem:[#allocation8 + $0x868] sm:$0xff]
        %v1713 = vld [vmem:[#allocation8 + $0x870] sm:$0xff]
        %v1714 = vld [vmem:[#allocation8 + $0x878] sm:$0xff]
        %v1715 = vld [vmem:[#allocation8 + $0x880] sm:$0xff]
        %v1716 = vld [vmem:[#allocation8 + $0x888] sm:$0xff]
        %v1717 = vld [vmem:[#allocation8 + $0x890] sm:$0xff]
        %v1718 = vld [vmem:[#allocation8 + $0x898] sm:$0xff]
        %v1719 = vld [vmem:[#allocation8 + $0x8a0] sm:$0xff]
        %v1720 = vld [vmem:[#allocation8 + $0x8a8] sm:$0xff]
        %v1721 = vld [vmem:[#allocation8 + $0x8b0] sm:$0xff]
        %v1722 = vld [vmem:[#allocation8 + $0x8b8] sm:$0xff]
        %v1723 = vld [vmem:[#allocation8 + $0x8c0] sm:$0xff]
        %v1724 = vld [vmem:[#allocation8 + $0x8c8] sm:$0xff]
        %v1725 = vld [vmem:[#allocation8 + $0x8d0] sm:$0xff]
        %v1726 = vld [vmem:[#allocation8 + $0x8d8] sm:$0xff]
        %v1727 = vld [vmem:[#allocation8 + $0x8e0] sm:$0xff]
        %v1728 = vld [vmem:[#allocation8 + $0x8e8] sm:$0xff]
        %v1729 = vld [vmem:[#allocation8 + $0x8f0] sm:$0xff]
        %v1730 = vld [vmem:[#allocation8 + $0x8f8] sm:$0xff]
        %v1731 = vld [vmem:[#allocation8 + $0x900] sm:$0xff]
        %v1732 = vld [vmem:[#allocation8 + $0x908] sm:$0xff]
        %v1733 = vld [vmem:[#allocation8 + $0x910] sm:$0xff]
        %v1734 = vld [vmem:[#allocation8 + $0x918] sm:$0xff]
        %v1735 = vld [vmem:[#allocation8 + $0x920] sm:$0xff]
        %v1736 = vld [vmem:[#allocation8 + $0x928] sm:$0xff]
        %v1737 = vld [vmem:[#allocation8 + $0x930] sm:$0xff]
        %v1738 = vld [vmem:[#allocation8 + $0x938] sm:$0xff]
        %v1739 = vld [vmem:[#allocation8 + $0x940] sm:$0xff]
        %v1740 = vld [vmem:[#allocation8 + $0x948] sm:$0xff]
        %v1741 = vld [vmem:[#allocation8 + $0x950] sm:$0xff]
        %v1742 = vld [vmem:[#allocation8 + $0x958] sm:$0xff]
        %v1743 = vld [vmem:[#allocation8 + $0x960] sm:$0xff]
        %v1744 = vld [vmem:[#allocation8 + $0x968] sm:$0xff]
        %v1745 = vld [vmem:[#allocation8 + $0x970] sm:$0xff]
        %v1746 = vld [vmem:[#allocation8 + $0x978] sm:$0xff]
        %v1747 = vld [vmem:[#allocation8 + $0x980] sm:$0xff]
        %v1748 = vld [vmem:[#allocation8 + $0x988] sm:$0xff]
        %v1749 = vld [vmem:[#allocation8 + $0x990] sm:$0xff]
        %v1750 = vld [vmem:[#allocation8 + $0x998] sm:$0xff]
        %v1751 = vld [vmem:[#allocation8 + $0x9a0] sm:$0xff]
        %v1752 = vld [vmem:[#allocation8 + $0x9a8] sm:$0xff]
        %v1753 = vld [vmem:[#allocation8 + $0x9b0] sm:$0xff]
        %v1754 = vld [vmem:[#allocation8 + $0x9b8] sm:$0xff]
        %v1755 = vld [vmem:[#allocation8 + $0x9c0] sm:$0xff]
        %v1756 = vld [vmem:[#allocation8 + $0x9c8] sm:$0xff]
        %v1757 = vld [vmem:[#allocation8 + $0x9d0] sm:$0xff]
        %v1758 = vld [vmem:[#allocation8 + $0x9d8] sm:$0xff]
        %v1759 = vld [vmem:[#allocation8 + $0x9e0] sm:$0xff]
        %v1760 = vld [vmem:[#allocation8 + $0x9e8] sm:$0xff]
        %v1761 = vld [vmem:[#allocation8 + $0x9f0] sm:$0xff]
        %v1762 = vld [vmem:[#allocation8 + $0x9f8] sm:$0xff]
        %v1763 = vld [vmem:[#allocation8 + $0xa00] sm:$0xff]
        %v1764 = vld [vmem:[#allocation8 + $0xa08] sm:$0xff]
        %v1765 = vld [vmem:[#allocation8 + $0xa10] sm:$0xff]
        %v1766 = vld [vmem:[#allocation8 + $0xa18] sm:$0xff]
        %v1767 = vld [vmem:[#allocation8 + $0xa20] sm:$0xff]
        %v1768 = vld [vmem:[#allocation8 + $0xa28] sm:$0xff]
        %v1769 = vld [vmem:[#allocation8 + $0xa30] sm:$0xff]
        %v1770 = vld [vmem:[#allocation8 + $0xa38] sm:$0xff]
        %v1771 = vld [vmem:[#allocation8 + $0xa40] sm:$0xff]
        %v1772 = vld [vmem:[#allocation8 + $0xa48] sm:$0xff]
        %v1773 = vld [vmem:[#allocation8 + $0xa50] sm:$0xff]
        %v1774 = vld [vmem:[#allocation8 + $0xa58] sm:$0xff]
        %v1775 = vld [vmem:[#allocation8 + $0xa60] sm:$0xff]
        %v1776 = vld [vmem:[#allocation8 + $0xa68] sm:$0xff]
        %v1777 = vld [vmem:[#allocation8 + $0xa70] sm:$0xff]
        %v1778 = vld [vmem:[#allocation8 + $0xa78] sm:$0xff]
        %v1779 = vld [vmem:[#allocation8 + $0xa80] sm:$0xff]
        %v1780 = vld [vmem:[#allocation8 + $0xa88] sm:$0xff]
        %v1781 = vld [vmem:[#allocation8 + $0xa90] sm:$0xff]
        %v1782 = vld [vmem:[#allocation8 + $0xa98] sm:$0xff]
        %v1783 = vld [vmem:[#allocation8 + $0xaa0] sm:$0xff]
        %v1784 = vld [vmem:[#allocation8 + $0xaa8] sm:$0xff]
        %v1785 = vld [vmem:[#allocation8 + $0xab0] sm:$0xff]
        %v1786 = vld [vmem:[#allocation8 + $0xab8] sm:$0xff]
        %v1787 = vld [vmem:[#allocation8 + $0xac0] sm:$0xff]
        %v1788 = vld [vmem:[#allocation8 + $0xac8] sm:$0xff]
        %v1789 = vld [vmem:[#allocation8 + $0xad0] sm:$0xff]
        %v1790 = vld [vmem:[#allocation8 + $0xad8] sm:$0xff]
        %v1791 = vld [vmem:[#allocation8 + $0xae0] sm:$0xff]
        %v1792 = vld [vmem:[#allocation8 + $0xae8] sm:$0xff]
        %v1793 = vld [vmem:[#allocation8 + $0xaf0] sm:$0xff]
        %v1794 = vld [vmem:[#allocation8 + $0xaf8] sm:$0xff]
        %v1795 = vld [vmem:[#allocation8 + $0xb00] sm:$0xff]
        %v1796 = vld [vmem:[#allocation8 + $0xb08] sm:$0xff]
        %v1797 = vld [vmem:[#allocation8 + $0xb10] sm:$0xff]
        %v1798 = vld [vmem:[#allocation8 + $0xb18] sm:$0xff]
        %v1799 = vld [vmem:[#allocation8 + $0xb20] sm:$0xff]
        %v1800 = vld [vmem:[#allocation8 + $0xb28] sm:$0xff]
        %v1801 = vld [vmem:[#allocation8 + $0xb30] sm:$0xff]
        %v1802 = vld [vmem:[#allocation8 + $0xb38] sm:$0xff]
        %v1803 = vld [vmem:[#allocation8 + $0xb40] sm:$0xff]
        %v1804 = vld [vmem:[#allocation8 + $0xb48] sm:$0xff]
        %v1805 = vld [vmem:[#allocation8 + $0xb50] sm:$0xff]
        %v1806 = vld [vmem:[#allocation8 + $0xb58] sm:$0xff]
        %v1807 = vld [vmem:[#allocation8 + $0xb60] sm:$0xff]
        %v1808 = vld [vmem:[#allocation8 + $0xb68] sm:$0xff]
        %v1809 = vld [vmem:[#allocation8 + $0xb70] sm:$0xff]
        %v1810 = vld [vmem:[#allocation8 + $0xb78] sm:$0xff]
        %v1811 = vld [vmem:[#allocation8 + $0xb80] sm:$0xff]
        %v1812 = vld [vmem:[#allocation8 + $0xb88] sm:$0xff]
        %v1813 = vld [vmem:[#allocation8 + $0xb90] sm:$0xff]
        %v1814 = vld [vmem:[#allocation8 + $0xb98] sm:$0xff]
        %v1815 = vld [vmem:[#allocation8 + $0xba0] sm:$0xff]
        %v1816 = vld [vmem:[#allocation8 + $0xba8] sm:$0xff]
        %v1817 = vld [vmem:[#allocation8 + $0xbb0] sm:$0xff]
        %v1818 = vld [vmem:[#allocation8 + $0xbb8] sm:$0xff]
        %v1819 = vld [vmem:[#allocation8 + $0xbc0] sm:$0xff]
        %v1820 = vld [vmem:[#allocation8 + $0xbc8] sm:$0xff]
        %v1821 = vld [vmem:[#allocation8 + $0xbd0] sm:$0xff]
        %v1822 = vld [vmem:[#allocation8 + $0xbd8] sm:$0xff]
        %v1823 = vld [vmem:[#allocation8 + $0xbe0] sm:$0xff]
        %v1824 = vld [vmem:[#allocation8 + $0xbe8] sm:$0xff]
        %v1825 = vld [vmem:[#allocation8 + $0xbf0] sm:$0xff]
        %v1826 = vld [vmem:[#allocation8 + $0xbf8] sm:$0xff]
        %v1827 = vld [vmem:[#allocation10] sm:$0xff]
        %v1829 = vlaneseq
        %v1830 = vshrl.u32 %v1829, 7
        %v1831 = vsub.s32 0, %v1830
        %v1832 = vrot.slane %v1827, %v1831
        %v1833 = vlaneseq
        %v1834 = vshrl.u32 %v1833, 7
        %v1835 = vsub.s32 1, %v1834
        %v1836 = vrot.slane %v1827, %v1835
        %v1837 = vlaneseq
        %v1838 = vshrl.u32 %v1837, 7
        %v1839 = vsub.s32 2, %v1838
        %v1840 = vrot.slane %v1827, %v1839
        %v1841 = vlaneseq
        %v1842 = vshrl.u32 %v1841, 7
        %v1843 = vsub.s32 3, %v1842
        %v1844 = vrot.slane %v1827, %v1843
        %v1845 = vlaneseq
        %v1846 = vshrl.u32 %v1845, 7
        %v1847 = vsub.s32 4, %v1846
        %v1848 = vrot.slane %v1827, %v1847
        %v1849 = vlaneseq
        %v1850 = vshrl.u32 %v1849, 7
        %v1851 = vsub.s32 5, %v1850
        %v1852 = vrot.slane %v1827, %v1851
        %v1853 = vlaneseq
        %v1854 = vshrl.u32 %v1853, 7
        %v1855 = vsub.s32 6, %v1854
        %v1856 = vrot.slane %v1827, %v1855
        %v1857 = vlaneseq
        %v1858 = vshrl.u32 %v1857, 7
        %v1859 = vsub.s32 7, %v1858
        %v1860 = vrot.slane %v1827, %v1859
        %v1869 = vpack.c.b16 %v1437, %v1431
        %v1870 = vpack.c.b16 %v1438, %v1432
        %v1871 = vpack.c.b16 %v1439, %v1433
        %v1872 = vpack.c.b16 %v1440, %v1434
        %v1873 = vpack.c.b16 %v1441, %v1435
        %v1874 = vpack.c.b16 %v1442, %v1436
        %v2265 = vunpack.c.l.b16 %v1443
        %v2266 = vunpack.c.h.b16 %v1443
        %v2267 = vunpack.c.l.b16 %v1444
        %v2268 = vunpack.c.h.b16 %v1444
        %v2269 = vunpack.c.l.b16 %v1445
        %v2270 = vunpack.c.h.b16 %v1445
        %v2271 = vunpack.c.l.b16 %v1446
        %v2272 = vunpack.c.h.b16 %v1446
        %v2273 = vunpack.c.l.b16 %v1447
        %v2274 = vunpack.c.h.b16 %v1447
        %v2275 = vunpack.c.l.b16 %v1448
        %v2276 = vunpack.c.h.b16 %v1448
        %v2277 = vunpack.c.l.b16 %v1449
        %v2278 = vunpack.c.h.b16 %v1449
        %v2279 = vunpack.c.l.b16 %v1450
        %v2280 = vunpack.c.h.b16 %v1450
        %v2281 = vunpack.c.l.b16 %v1451
        %v2282 = vunpack.c.h.b16 %v1451
        %v2283 = vunpack.c.l.b16 %v1452
        %v2284 = vunpack.c.h.b16 %v1452
        %v2285 = vunpack.c.l.b16 %v1453
        %v2286 = vunpack.c.h.b16 %v1453
        %v2287 = vunpack.c.l.b16 %v1454
        %v2288 = vunpack.c.h.b16 %v1454
        %v2289 = vunpack.c.l.b16 %v1455
        %v2290 = vunpack.c.h.b16 %v1455
        %v2291 = vunpack.c.l.b16 %v1456
        %v2292 = vunpack.c.h.b16 %v1456
        %v2293 = vunpack.c.l.b16 %v1457
        %v2294 = vunpack.c.h.b16 %v1457
        %v2295 = vunpack.c.l.b16 %v1458
        %v2296 = vunpack.c.h.b16 %v1458
        %v2297 = vunpack.c.l.b16 %v1459
        %v2298 = vunpack.c.h.b16 %v1459
        %v2299 = vunpack.c.l.b16 %v1460
        %v2300 = vunpack.c.h.b16 %v1460
        %v2301 = vunpack.c.l.b16 %v1461
        %v2302 = vunpack.c.h.b16 %v1461
        %v2303 = vunpack.c.l.b16 %v1462
        %v2304 = vunpack.c.h.b16 %v1462
        %v2305 = vunpack.c.l.b16 %v1463
        %v2306 = vunpack.c.h.b16 %v1463
        %v2307 = vunpack.c.l.b16 %v1464
        %v2308 = vunpack.c.h.b16 %v1464
        %v2309 = vunpack.c.l.b16 %v1465
        %v2310 = vunpack.c.h.b16 %v1465
        %v2311 = vunpack.c.l.b16 %v1466
        %v2312 = vunpack.c.h.b16 %v1466
        %v2313 = vunpack.c.l.b16 %v1467
        %v2314 = vunpack.c.h.b16 %v1467
        %v2315 = vunpack.c.l.b16 %v1468
        %v2316 = vunpack.c.h.b16 %v1468
        %v2317 = vunpack.c.l.b16 %v1469
        %v2318 = vunpack.c.h.b16 %v1469
        %v2319 = vunpack.c.l.b16 %v1470
        %v2320 = vunpack.c.h.b16 %v1470
        %v2321 = vunpack.c.l.b16 %v1471
        %v2322 = vunpack.c.h.b16 %v1471
        %v2323 = vunpack.c.l.b16 %v1472
        %v2324 = vunpack.c.h.b16 %v1472
        %v2325 = vunpack.c.l.b16 %v1473
        %v2326 = vunpack.c.h.b16 %v1473
        %v2327 = vunpack.c.l.b16 %v1474
        %v2328 = vunpack.c.h.b16 %v1474
        %v2329 = vunpack.c.l.b16 %v1475
        %v2330 = vunpack.c.h.b16 %v1475
        %v2331 = vunpack.c.l.b16 %v1476
        %v2332 = vunpack.c.h.b16 %v1476
        %v2333 = vunpack.c.l.b16 %v1477
        %v2334 = vunpack.c.h.b16 %v1477
        %v2335 = vunpack.c.l.b16 %v1478
        %v2336 = vunpack.c.h.b16 %v1478
        %v2337 = vunpack.c.l.b16 %v1479
        %v2338 = vunpack.c.h.b16 %v1479
        %v2339 = vunpack.c.l.b16 %v1480
        %v2340 = vunpack.c.h.b16 %v1480
        %v2341 = vunpack.c.l.b16 %v1481
        %v2342 = vunpack.c.h.b16 %v1481
        %v2343 = vunpack.c.l.b16 %v1482
        %v2344 = vunpack.c.h.b16 %v1482
        %v2345 = vunpack.c.l.b16 %v1483
        %v2346 = vunpack.c.h.b16 %v1483
        %v2347 = vunpack.c.l.b16 %v1484
        %v2348 = vunpack.c.h.b16 %v1484
        %v2349 = vunpack.c.l.b16 %v1485
        %v2350 = vunpack.c.h.b16 %v1485
        %v2351 = vunpack.c.l.b16 %v1486
        %v2352 = vunpack.c.h.b16 %v1486
        %v2353 = vunpack.c.l.b16 %v1487
        %v2354 = vunpack.c.h.b16 %v1487
        %v2355 = vunpack.c.l.b16 %v1488
        %v2356 = vunpack.c.h.b16 %v1488
        %v2357 = vunpack.c.l.b16 %v1489
        %v2358 = vunpack.c.h.b16 %v1489
        %v2359 = vunpack.c.l.b16 %v1490
        %v2360 = vunpack.c.h.b16 %v1490
        %v2361 = vunpack.c.l.b16 %v1491
        %v2362 = vunpack.c.h.b16 %v1491
        %v2363 = vunpack.c.l.b16 %v1492
        %v2364 = vunpack.c.h.b16 %v1492
        %v2365 = vunpack.c.l.b16 %v1493
        %v2366 = vunpack.c.h.b16 %v1493
        %v2367 = vunpack.c.l.b16 %v1494
        %v2368 = vunpack.c.h.b16 %v1494
        %v2369 = vunpack.c.l.b16 %v1495
        %v2370 = vunpack.c.h.b16 %v1495
        %v2371 = vunpack.c.l.b16 %v1496
        %v2372 = vunpack.c.h.b16 %v1496
        %v2373 = vunpack.c.l.b16 %v1497
        %v2374 = vunpack.c.h.b16 %v1497
        %v2375 = vunpack.c.l.b16 %v1498
        %v2376 = vunpack.c.h.b16 %v1498
        %v2377 = vunpack.c.l.b16 %v1499
        %v2378 = vunpack.c.h.b16 %v1499
        %v2379 = vunpack.c.l.b16 %v1500
        %v2380 = vunpack.c.h.b16 %v1500
        %v2381 = vunpack.c.l.b16 %v1501
        %v2382 = vunpack.c.h.b16 %v1501
        %v2383 = vunpack.c.l.b16 %v1502
        %v2384 = vunpack.c.h.b16 %v1502
        %v2385 = vunpack.c.l.b16 %v1503
        %v2386 = vunpack.c.h.b16 %v1503
        %v2387 = vunpack.c.l.b16 %v1504
        %v2388 = vunpack.c.h.b16 %v1504
        %v2389 = vunpack.c.l.b16 %v1505
        %v2390 = vunpack.c.h.b16 %v1505
        %v2391 = vunpack.c.l.b16 %v1506
        %v2392 = vunpack.c.h.b16 %v1506
        %v2393 = vunpack.c.l.b16 %v1507
        %v2394 = vunpack.c.h.b16 %v1507
        %v2395 = vunpack.c.l.b16 %v1508
        %v2396 = vunpack.c.h.b16 %v1508
        %v2397 = vunpack.c.l.b16 %v1509
        %v2398 = vunpack.c.h.b16 %v1509
        %v2399 = vunpack.c.l.b16 %v1510
        %v2400 = vunpack.c.h.b16 %v1510
        %v2401 = vunpack.c.l.b16 %v1511
        %v2402 = vunpack.c.h.b16 %v1511
        %v2403 = vunpack.c.l.b16 %v1512
        %v2404 = vunpack.c.h.b16 %v1512
        %v2405 = vunpack.c.l.b16 %v1513
        %v2406 = vunpack.c.h.b16 %v1513
        %v2407 = vunpack.c.l.b16 %v1514
        %v2408 = vunpack.c.h.b16 %v1514
        %v2409 = vunpack.c.l.b16 %v1515
        %v2410 = vunpack.c.h.b16 %v1515
        %v2411 = vunpack.c.l.b16 %v1516
        %v2412 = vunpack.c.h.b16 %v1516
        %v2413 = vunpack.c.l.b16 %v1517
        %v2414 = vunpack.c.h.b16 %v1517
        %v2415 = vunpack.c.l.b16 %v1518
        %v2416 = vunpack.c.h.b16 %v1518
        %v2417 = vunpack.c.l.b16 %v1519
        %v2418 = vunpack.c.h.b16 %v1519
        %v2419 = vunpack.c.l.b16 %v1520
        %v2420 = vunpack.c.h.b16 %v1520
        %v2421 = vunpack.c.l.b16 %v1521
        %v2422 = vunpack.c.h.b16 %v1521
        %v2423 = vunpack.c.l.b16 %v1522
        %v2424 = vunpack.c.h.b16 %v1522
        %v2425 = vunpack.c.l.b16 %v1523
        %v2426 = vunpack.c.h.b16 %v1523
        %v2427 = vunpack.c.l.b16 %v1524
        %v2428 = vunpack.c.h.b16 %v1524
        %v2429 = vunpack.c.l.b16 %v1525
        %v2430 = vunpack.c.h.b16 %v1525
        %v2431 = vunpack.c.l.b16 %v1526
        %v2432 = vunpack.c.h.b16 %v1526
        %v2433 = vunpack.c.l.b16 %v1527
        %v2434 = vunpack.c.h.b16 %v1527
        %v2435 = vunpack.c.l.b16 %v1528
        %v2436 = vunpack.c.h.b16 %v1528
        %v2437 = vunpack.c.l.b16 %v1529
        %v2438 = vunpack.c.h.b16 %v1529
        %v2439 = vunpack.c.l.b16 %v1530
        %v2440 = vunpack.c.h.b16 %v1530
        %v2441 = vunpack.c.l.b16 %v1531
        %v2442 = vunpack.c.h.b16 %v1531
        %v2443 = vunpack.c.l.b16 %v1532
        %v2444 = vunpack.c.h.b16 %v1532
        %v2445 = vunpack.c.l.b16 %v1533
        %v2446 = vunpack.c.h.b16 %v1533
        %v2447 = vunpack.c.l.b16 %v1534
        %v2448 = vunpack.c.h.b16 %v1534
        %v2449 = vunpack.c.l.b16 %v1535
        %v2450 = vunpack.c.h.b16 %v1535
        %v2451 = vunpack.c.l.b16 %v1536
        %v2452 = vunpack.c.h.b16 %v1536
        %v2453 = vunpack.c.l.b16 %v1537
        %v2454 = vunpack.c.h.b16 %v1537
        %v2455 = vunpack.c.l.b16 %v1538
        %v2456 = vunpack.c.h.b16 %v1538
        %v2457 = vunpack.c.l.b16 %v1539
        %v2458 = vunpack.c.h.b16 %v1539
        %v2459 = vunpack.c.l.b16 %v1540
        %v2460 = vunpack.c.h.b16 %v1540
        %v2461 = vunpack.c.l.b16 %v1541
        %v2462 = vunpack.c.h.b16 %v1541
        %v2463 = vunpack.c.l.b16 %v1542
        %v2464 = vunpack.c.h.b16 %v1542
        %v2465 = vunpack.c.l.b16 %v1543
        %v2466 = vunpack.c.h.b16 %v1543
        %v2467 = vunpack.c.l.b16 %v1544
        %v2468 = vunpack.c.h.b16 %v1544
        %v2469 = vunpack.c.l.b16 %v1545
        %v2470 = vunpack.c.h.b16 %v1545
        %v2471 = vunpack.c.l.b16 %v1546
        %v2472 = vunpack.c.h.b16 %v1546
        %v2473 = vunpack.c.l.b16 %v1547
        %v2474 = vunpack.c.h.b16 %v1547
        %v2475 = vunpack.c.l.b16 %v1548
        %v2476 = vunpack.c.h.b16 %v1548
        %v2477 = vunpack.c.l.b16 %v1549
        %v2478 = vunpack.c.h.b16 %v1549
        %v2479 = vunpack.c.l.b16 %v1550
        %v2480 = vunpack.c.h.b16 %v1550
        %v2481 = vunpack.c.l.b16 %v1551
        %v2482 = vunpack.c.h.b16 %v1551
        %v2483 = vunpack.c.l.b16 %v1552
        %v2484 = vunpack.c.h.b16 %v1552
        %v2485 = vunpack.c.l.b16 %v1553
        %v2486 = vunpack.c.h.b16 %v1553
        %v2487 = vunpack.c.l.b16 %v1554
        %v2488 = vunpack.c.h.b16 %v1554
        %v2489 = vunpack.c.l.b16 %v1555
        %v2490 = vunpack.c.h.b16 %v1555
        %v2491 = vunpack.c.l.b16 %v1556
        %v2492 = vunpack.c.h.b16 %v1556
        %v2493 = vunpack.c.l.b16 %v1557
        %v2494 = vunpack.c.h.b16 %v1557
        %v2495 = vunpack.c.l.b16 %v1558
        %v2496 = vunpack.c.h.b16 %v1558
        %v2497 = vunpack.c.l.b16 %v1559
        %v2498 = vunpack.c.h.b16 %v1559
        %v2499 = vunpack.c.l.b16 %v1560
        %v2500 = vunpack.c.h.b16 %v1560
        %v2501 = vunpack.c.l.b16 %v1561
        %v2502 = vunpack.c.h.b16 %v1561
        %v2503 = vunpack.c.l.b16 %v1562
        %v2504 = vunpack.c.h.b16 %v1562
        %v2505 = vunpack.c.l.b16 %v1563
        %v2506 = vunpack.c.h.b16 %v1563
        %v2507 = vunpack.c.l.b16 %v1564
        %v2508 = vunpack.c.h.b16 %v1564
        %v2509 = vunpack.c.l.b16 %v1565
        %v2510 = vunpack.c.h.b16 %v1565
        %v2511 = vunpack.c.l.b16 %v1566
        %v2512 = vunpack.c.h.b16 %v1566
        %v2513 = vunpack.c.l.b16 %v1567
        %v2514 = vunpack.c.h.b16 %v1567
        %v2515 = vunpack.c.l.b16 %v1568
        %v2516 = vunpack.c.h.b16 %v1568
        %v2517 = vunpack.c.l.b16 %v1569
        %v2518 = vunpack.c.h.b16 %v1569
        %v2519 = vunpack.c.l.b16 %v1570
        %v2520 = vunpack.c.h.b16 %v1570
        %v2521 = vunpack.c.l.b16 %v1571
        %v2522 = vunpack.c.h.b16 %v1571
        %v2523 = vunpack.c.l.b16 %v1572
        %v2524 = vunpack.c.h.b16 %v1572
        %v2525 = vunpack.c.l.b16 %v1573
        %v2526 = vunpack.c.h.b16 %v1573
        %v2527 = vunpack.c.l.b16 %v1574
        %v2528 = vunpack.c.h.b16 %v1574
        %v2529 = vunpack.c.l.b16 %v1575
        %v2530 = vunpack.c.h.b16 %v1575
        %v2531 = vunpack.c.l.b16 %v1576
        %v2532 = vunpack.c.h.b16 %v1576
        %v2533 = vunpack.c.l.b16 %v1577
        %v2534 = vunpack.c.h.b16 %v1577
        %v2535 = vunpack.c.l.b16 %v1578
        %v2536 = vunpack.c.h.b16 %v1578
        %v2537 = vunpack.c.l.b16 %v1579
        %v2538 = vunpack.c.h.b16 %v1579
        %v2539 = vunpack.c.l.b16 %v1580
        %v2540 = vunpack.c.h.b16 %v1580
        %v2541 = vunpack.c.l.b16 %v1581
        %v2542 = vunpack.c.h.b16 %v1581
        %v2543 = vunpack.c.l.b16 %v1582
        %v2544 = vunpack.c.h.b16 %v1582
        %v2545 = vunpack.c.l.b16 %v1583
        %v2546 = vunpack.c.h.b16 %v1583
        %v2547 = vunpack.c.l.b16 %v1584
        %v2548 = vunpack.c.h.b16 %v1584
        %v2549 = vunpack.c.l.b16 %v1585
        %v2550 = vunpack.c.h.b16 %v1585
        %v2551 = vunpack.c.l.b16 %v1586
        %v2552 = vunpack.c.h.b16 %v1586
        %v2553 = vunpack.c.l.b16 %v1587
        %v2554 = vunpack.c.h.b16 %v1587
        %v2555 = vunpack.c.l.b16 %v1588
        %v2556 = vunpack.c.h.b16 %v1588
        %v2557 = vunpack.c.l.b16 %v1589
        %v2558 = vunpack.c.h.b16 %v1589
        %v2559 = vunpack.c.l.b16 %v1590
        %v2560 = vunpack.c.h.b16 %v1590
        %v2561 = vunpack.c.l.b16 %v1591
        %v2562 = vunpack.c.h.b16 %v1591
        %v2563 = vunpack.c.l.b16 %v1592
        %v2564 = vunpack.c.h.b16 %v1592
        %v2565 = vunpack.c.l.b16 %v1593
        %v2566 = vunpack.c.h.b16 %v1593
        %v2567 = vunpack.c.l.b16 %v1594
        %v2568 = vunpack.c.h.b16 %v1594
        %v2569 = vunpack.c.l.b16 %v1595
        %v2570 = vunpack.c.h.b16 %v1595
        %v2571 = vunpack.c.l.b16 %v1596
        %v2572 = vunpack.c.h.b16 %v1596
        %v2573 = vunpack.c.l.b16 %v1597
        %v2574 = vunpack.c.h.b16 %v1597
        %v2575 = vunpack.c.l.b16 %v1598
        %v2576 = vunpack.c.h.b16 %v1598
        %v2577 = vunpack.c.l.b16 %v1599
        %v2578 = vunpack.c.h.b16 %v1599
        %v2579 = vunpack.c.l.b16 %v1600
        %v2580 = vunpack.c.h.b16 %v1600
        %v2581 = vunpack.c.l.b16 %v1601
        %v2582 = vunpack.c.h.b16 %v1601
        %v2583 = vunpack.c.l.b16 %v1602
        %v2584 = vunpack.c.h.b16 %v1602
        %v2585 = vunpack.c.l.b16 %v1603
        %v2586 = vunpack.c.h.b16 %v1603
        %v2587 = vunpack.c.l.b16 %v1604
        %v2588 = vunpack.c.h.b16 %v1604
        %v2589 = vunpack.c.l.b16 %v1605
        %v2590 = vunpack.c.h.b16 %v1605
        %v2591 = vunpack.c.l.b16 %v1606
        %v2592 = vunpack.c.h.b16 %v1606
        %v2593 = vunpack.c.l.b16 %v1607
        %v2594 = vunpack.c.h.b16 %v1607
        %v2595 = vunpack.c.l.b16 %v1608
        %v2596 = vunpack.c.h.b16 %v1608
        %v2597 = vunpack.c.l.b16 %v1609
        %v2598 = vunpack.c.h.b16 %v1609
        %v2599 = vunpack.c.l.b16 %v1610
        %v2600 = vunpack.c.h.b16 %v1610
        %v2601 = vunpack.c.l.b16 %v1611
        %v2602 = vunpack.c.h.b16 %v1611
        %v2603 = vunpack.c.l.b16 %v1612
        %v2604 = vunpack.c.h.b16 %v1612
        %v2605 = vunpack.c.l.b16 %v1613
        %v2606 = vunpack.c.h.b16 %v1613
        %v2607 = vunpack.c.l.b16 %v1614
        %v2608 = vunpack.c.h.b16 %v1614
        %v2609 = vunpack.c.l.b16 %v1615
        %v2610 = vunpack.c.h.b16 %v1615
        %v2611 = vunpack.c.l.b16 %v1616
        %v2612 = vunpack.c.h.b16 %v1616
        %v2613 = vunpack.c.l.b16 %v1617
        %v2614 = vunpack.c.h.b16 %v1617
        %v2615 = vunpack.c.l.b16 %v1618
        %v2616 = vunpack.c.h.b16 %v1618
        %v2617 = vunpack.c.l.b16 %v1619
        %v2618 = vunpack.c.h.b16 %v1619
        %v2619 = vunpack.c.l.b16 %v1620
        %v2620 = vunpack.c.h.b16 %v1620
        %v2621 = vunpack.c.l.b16 %v1621
        %v2622 = vunpack.c.h.b16 %v1621
        %v2623 = vunpack.c.l.b16 %v1622
        %v2624 = vunpack.c.h.b16 %v1622
        %v2625 = vunpack.c.l.b16 %v1623
        %v2626 = vunpack.c.h.b16 %v1623
        %v2627 = vunpack.c.l.b16 %v1624
        %v2628 = vunpack.c.h.b16 %v1624
        %v2629 = vunpack.c.l.b16 %v1625
        %v2630 = vunpack.c.h.b16 %v1625
        %v2631 = vunpack.c.l.b16 %v1626
        %v2632 = vunpack.c.h.b16 %v1626
        %v2633 = vunpack.c.l.b16 %v1627
        %v2634 = vunpack.c.h.b16 %v1627
        %v2635 = vunpack.c.l.b16 %v1628
        %v2636 = vunpack.c.h.b16 %v1628
        %v2637 = vunpack.c.l.b16 %v1629
        %v2638 = vunpack.c.h.b16 %v1629
        %v2639 = vunpack.c.l.b16 %v1630
        %v2640 = vunpack.c.h.b16 %v1630
        %v2641 = vunpack.c.l.b16 %v1631
        %v2642 = vunpack.c.h.b16 %v1631
        %v2643 = vunpack.c.l.b16 %v1632
        %v2644 = vunpack.c.h.b16 %v1632
        %v2645 = vunpack.c.l.b16 %v1633
        %v2646 = vunpack.c.h.b16 %v1633
        %v2647 = vunpack.c.l.b16 %v1634
        %v2648 = vunpack.c.h.b16 %v1634
        %v2649 = vunpack.c.l.b16 %v1635
        %v2650 = vunpack.c.h.b16 %v1635
        %v2651 = vunpack.c.l.b16 %v1636
        %v2652 = vunpack.c.h.b16 %v1636
        %v2653 = vunpack.c.l.b16 %v1637
        %v2654 = vunpack.c.h.b16 %v1637
        %v2655 = vunpack.c.l.b16 %v1638
        %v2656 = vunpack.c.h.b16 %v1638
        %v2657 = vunpack.c.l.b16 %v1639
        %v2658 = vunpack.c.h.b16 %v1639
        %v2659 = vunpack.c.l.b16 %v1640
        %v2660 = vunpack.c.h.b16 %v1640
        %v2661 = vunpack.c.l.b16 %v1641
        %v2662 = vunpack.c.h.b16 %v1641
        %v2663 = vunpack.c.l.b16 %v1642
        %v2664 = vunpack.c.h.b16 %v1642
        %v2665 = vunpack.c.l.b16 %v1643
        %v2666 = vunpack.c.h.b16 %v1643
        %v2667 = vunpack.c.l.b16 %v1644
        %v2668 = vunpack.c.h.b16 %v1644
        %v2669 = vunpack.c.l.b16 %v1645
        %v2670 = vunpack.c.h.b16 %v1645
        %v2671 = vunpack.c.l.b16 %v1646
        %v2672 = vunpack.c.h.b16 %v1646
        %v2673 = vunpack.c.l.b16 %v1647
        %v2674 = vunpack.c.h.b16 %v1647
        %v2675 = vunpack.c.l.b16 %v1648
        %v2676 = vunpack.c.h.b16 %v1648
        %v2677 = vunpack.c.l.b16 %v1649
        %v2678 = vunpack.c.h.b16 %v1649
        %v2679 = vunpack.c.l.b16 %v1650
        %v2680 = vunpack.c.h.b16 %v1650
        %v2681 = vunpack.c.l.b16 %v1651
        %v2682 = vunpack.c.h.b16 %v1651
        %v2683 = vunpack.c.l.b16 %v1652
        %v2684 = vunpack.c.h.b16 %v1652
        %v2685 = vunpack.c.l.b16 %v1653
        %v2686 = vunpack.c.h.b16 %v1653
        %v2687 = vunpack.c.l.b16 %v1654
        %v2688 = vunpack.c.h.b16 %v1654
        %v2689 = vunpack.c.l.b16 %v1655
        %v2690 = vunpack.c.h.b16 %v1655
        %v2691 = vunpack.c.l.b16 %v1656
        %v2692 = vunpack.c.h.b16 %v1656
        %v2693 = vunpack.c.l.b16 %v1657
        %v2694 = vunpack.c.h.b16 %v1657
        %v2695 = vunpack.c.l.b16 %v1658
        %v2696 = vunpack.c.h.b16 %v1658
        %v2697 = vunpack.c.l.b16 %v1659
        %v2698 = vunpack.c.h.b16 %v1659
        %v2699 = vunpack.c.l.b16 %v1660
        %v2700 = vunpack.c.h.b16 %v1660
        %v2701 = vunpack.c.l.b16 %v1661
        %v2702 = vunpack.c.h.b16 %v1661
        %v2703 = vunpack.c.l.b16 %v1662
        %v2704 = vunpack.c.h.b16 %v1662
        %v2705 = vunpack.c.l.b16 %v1663
        %v2706 = vunpack.c.h.b16 %v1663
        %v2707 = vunpack.c.l.b16 %v1664
        %v2708 = vunpack.c.h.b16 %v1664
        %v2709 = vunpack.c.l.b16 %v1665
        %v2710 = vunpack.c.h.b16 %v1665
        %v2711 = vunpack.c.l.b16 %v1666
        %v2712 = vunpack.c.h.b16 %v1666
        %v2713 = vunpack.c.l.b16 %v1667
        %v2714 = vunpack.c.h.b16 %v1667
        %v2715 = vunpack.c.l.b16 %v1668
        %v2716 = vunpack.c.h.b16 %v1668
        %v2717 = vunpack.c.l.b16 %v1669
        %v2718 = vunpack.c.h.b16 %v1669
        %v2719 = vunpack.c.l.b16 %v1670
        %v2720 = vunpack.c.h.b16 %v1670
        %v2721 = vunpack.c.l.b16 %v1671
        %v2722 = vunpack.c.h.b16 %v1671
        %v2723 = vunpack.c.l.b16 %v1672
        %v2724 = vunpack.c.h.b16 %v1672
        %v2725 = vunpack.c.l.b16 %v1673
        %v2726 = vunpack.c.h.b16 %v1673
        %v2727 = vunpack.c.l.b16 %v1674
        %v2728 = vunpack.c.h.b16 %v1674
        %v2729 = vunpack.c.l.b16 %v1675
        %v2730 = vunpack.c.h.b16 %v1675
        %v2731 = vunpack.c.l.b16 %v1676
        %v2732 = vunpack.c.h.b16 %v1676
        %v2733 = vunpack.c.l.b16 %v1677
        %v2734 = vunpack.c.h.b16 %v1677
        %v2735 = vunpack.c.l.b16 %v1678
        %v2736 = vunpack.c.h.b16 %v1678
        %v2737 = vunpack.c.l.b16 %v1679
        %v2738 = vunpack.c.h.b16 %v1679
        %v2739 = vunpack.c.l.b16 %v1680
        %v2740 = vunpack.c.h.b16 %v1680
        %v2741 = vunpack.c.l.b16 %v1681
        %v2742 = vunpack.c.h.b16 %v1681
        %v2743 = vunpack.c.l.b16 %v1682
        %v2744 = vunpack.c.h.b16 %v1682
        %v2745 = vunpack.c.l.b16 %v1683
        %v2746 = vunpack.c.h.b16 %v1683
        %v2747 = vunpack.c.l.b16 %v1684
        %v2748 = vunpack.c.h.b16 %v1684
        %v2749 = vunpack.c.l.b16 %v1685
        %v2750 = vunpack.c.h.b16 %v1685
        %v2751 = vunpack.c.l.b16 %v1686
        %v2752 = vunpack.c.h.b16 %v1686
        %v2753 = vunpack.c.l.b16 %v1687
        %v2754 = vunpack.c.h.b16 %v1687
        %v2755 = vunpack.c.l.b16 %v1688
        %v2756 = vunpack.c.h.b16 %v1688
        %v2757 = vunpack.c.l.b16 %v1689
        %v2758 = vunpack.c.h.b16 %v1689
        %v2759 = vunpack.c.l.b16 %v1690
        %v2760 = vunpack.c.h.b16 %v1690
        %v2761 = vunpack.c.l.b16 %v1691
        %v2762 = vunpack.c.h.b16 %v1691
        %v2763 = vunpack.c.l.b16 %v1692
        %v2764 = vunpack.c.h.b16 %v1692
        %v2765 = vunpack.c.l.b16 %v1693
        %v2766 = vunpack.c.h.b16 %v1693
        %v2767 = vunpack.c.l.b16 %v1694
        %v2768 = vunpack.c.h.b16 %v1694
        %v2769 = vunpack.c.l.b16 %v1695
        %v2770 = vunpack.c.h.b16 %v1695
        %v2771 = vunpack.c.l.b16 %v1696
        %v2772 = vunpack.c.h.b16 %v1696
        %v2773 = vunpack.c.l.b16 %v1697
        %v2774 = vunpack.c.h.b16 %v1697
        %v2775 = vunpack.c.l.b16 %v1698
        %v2776 = vunpack.c.h.b16 %v1698
        %v2777 = vunpack.c.l.b16 %v1699
        %v2778 = vunpack.c.h.b16 %v1699
        %v2779 = vunpack.c.l.b16 %v1700
        %v2780 = vunpack.c.h.b16 %v1700
        %v2781 = vunpack.c.l.b16 %v1701
        %v2782 = vunpack.c.h.b16 %v1701
        %v2783 = vunpack.c.l.b16 %v1702
        %v2784 = vunpack.c.h.b16 %v1702
        %v2785 = vunpack.c.l.b16 %v1703
        %v2786 = vunpack.c.h.b16 %v1703
        %v2787 = vunpack.c.l.b16 %v1704
        %v2788 = vunpack.c.h.b16 %v1704
        %v2789 = vunpack.c.l.b16 %v1705
        %v2790 = vunpack.c.h.b16 %v1705
        %v2791 = vunpack.c.l.b16 %v1706
        %v2792 = vunpack.c.h.b16 %v1706
        %v2793 = vunpack.c.l.b16 %v1707
        %v2794 = vunpack.c.h.b16 %v1707
        %v2795 = vunpack.c.l.b16 %v1708
        %v2796 = vunpack.c.h.b16 %v1708
        %v2797 = vunpack.c.l.b16 %v1709
        %v2798 = vunpack.c.h.b16 %v1709
        %v2799 = vunpack.c.l.b16 %v1710
        %v2800 = vunpack.c.h.b16 %v1710
        %v2801 = vunpack.c.l.b16 %v1711
        %v2802 = vunpack.c.h.b16 %v1711
        %v2803 = vunpack.c.l.b16 %v1712
        %v2804 = vunpack.c.h.b16 %v1712
        %v2805 = vunpack.c.l.b16 %v1713
        %v2806 = vunpack.c.h.b16 %v1713
        %v2807 = vunpack.c.l.b16 %v1714
        %v2808 = vunpack.c.h.b16 %v1714
        %v2809 = vunpack.c.l.b16 %v1715
        %v2810 = vunpack.c.h.b16 %v1715
        %v2811 = vunpack.c.l.b16 %v1716
        %v2812 = vunpack.c.h.b16 %v1716
        %v2813 = vunpack.c.l.b16 %v1717
        %v2814 = vunpack.c.h.b16 %v1717
        %v2815 = vunpack.c.l.b16 %v1718
        %v2816 = vunpack.c.h.b16 %v1718
        %v2817 = vunpack.c.l.b16 %v1719
        %v2818 = vunpack.c.h.b16 %v1719
        %v2819 = vunpack.c.l.b16 %v1720
        %v2820 = vunpack.c.h.b16 %v1720
        %v2821 = vunpack.c.l.b16 %v1721
        %v2822 = vunpack.c.h.b16 %v1721
        %v2823 = vunpack.c.l.b16 %v1722
        %v2824 = vunpack.c.h.b16 %v1722
        %v2825 = vunpack.c.l.b16 %v1723
        %v2826 = vunpack.c.h.b16 %v1723
        %v2827 = vunpack.c.l.b16 %v1724
        %v2828 = vunpack.c.h.b16 %v1724
        %v2829 = vunpack.c.l.b16 %v1725
        %v2830 = vunpack.c.h.b16 %v1725
        %v2831 = vunpack.c.l.b16 %v1726
        %v2832 = vunpack.c.h.b16 %v1726
        %v2833 = vunpack.c.l.b16 %v1727
        %v2834 = vunpack.c.h.b16 %v1727
        %v2835 = vunpack.c.l.b16 %v1728
        %v2836 = vunpack.c.h.b16 %v1728
        %v2837 = vunpack.c.l.b16 %v1729
        %v2838 = vunpack.c.h.b16 %v1729
        %v2839 = vunpack.c.l.b16 %v1730
        %v2840 = vunpack.c.h.b16 %v1730
        %v2841 = vunpack.c.l.b16 %v1731
        %v2842 = vunpack.c.h.b16 %v1731
        %v2843 = vunpack.c.l.b16 %v1732
        %v2844 = vunpack.c.h.b16 %v1732
        %v2845 = vunpack.c.l.b16 %v1733
        %v2846 = vunpack.c.h.b16 %v1733
        %v2847 = vunpack.c.l.b16 %v1734
        %v2848 = vunpack.c.h.b16 %v1734
        %v2849 = vunpack.c.l.b16 %v1735
        %v2850 = vunpack.c.h.b16 %v1735
        %v2851 = vunpack.c.l.b16 %v1736
        %v2852 = vunpack.c.h.b16 %v1736
        %v2853 = vunpack.c.l.b16 %v1737
        %v2854 = vunpack.c.h.b16 %v1737
        %v2855 = vunpack.c.l.b16 %v1738
        %v2856 = vunpack.c.h.b16 %v1738
        %v2857 = vunpack.c.l.b16 %v1739
        %v2858 = vunpack.c.h.b16 %v1739
        %v2859 = vunpack.c.l.b16 %v1740
        %v2860 = vunpack.c.h.b16 %v1740
        %v2861 = vunpack.c.l.b16 %v1741
        %v2862 = vunpack.c.h.b16 %v1741
        %v2863 = vunpack.c.l.b16 %v1742
        %v2864 = vunpack.c.h.b16 %v1742
        %v2865 = vunpack.c.l.b16 %v1743
        %v2866 = vunpack.c.h.b16 %v1743
        %v2867 = vunpack.c.l.b16 %v1744
        %v2868 = vunpack.c.h.b16 %v1744
        %v2869 = vunpack.c.l.b16 %v1745
        %v2870 = vunpack.c.h.b16 %v1745
        %v2871 = vunpack.c.l.b16 %v1746
        %v2872 = vunpack.c.h.b16 %v1746
        %v2873 = vunpack.c.l.b16 %v1747
        %v2874 = vunpack.c.h.b16 %v1747
        %v2875 = vunpack.c.l.b16 %v1748
        %v2876 = vunpack.c.h.b16 %v1748
        %v2877 = vunpack.c.l.b16 %v1749
        %v2878 = vunpack.c.h.b16 %v1749
        %v2879 = vunpack.c.l.b16 %v1750
        %v2880 = vunpack.c.h.b16 %v1750
        %v2881 = vunpack.c.l.b16 %v1751
        %v2882 = vunpack.c.h.b16 %v1751
        %v2883 = vunpack.c.l.b16 %v1752
        %v2884 = vunpack.c.h.b16 %v1752
        %v2885 = vunpack.c.l.b16 %v1753
        %v2886 = vunpack.c.h.b16 %v1753
        %v2887 = vunpack.c.l.b16 %v1754
        %v2888 = vunpack.c.h.b16 %v1754
        %v2889 = vunpack.c.l.b16 %v1755
        %v2890 = vunpack.c.h.b16 %v1755
        %v2891 = vunpack.c.l.b16 %v1756
        %v2892 = vunpack.c.h.b16 %v1756
        %v2893 = vunpack.c.l.b16 %v1757
        %v2894 = vunpack.c.h.b16 %v1757
        %v2895 = vunpack.c.l.b16 %v1758
        %v2896 = vunpack.c.h.b16 %v1758
        %v2897 = vunpack.c.l.b16 %v1759
        %v2898 = vunpack.c.h.b16 %v1759
        %v2899 = vunpack.c.l.b16 %v1760
        %v2900 = vunpack.c.h.b16 %v1760
        %v2901 = vunpack.c.l.b16 %v1761
        %v2902 = vunpack.c.h.b16 %v1761
        %v2903 = vunpack.c.l.b16 %v1762
        %v2904 = vunpack.c.h.b16 %v1762
        %v2905 = vunpack.c.l.b16 %v1763
        %v2906 = vunpack.c.h.b16 %v1763
        %v2907 = vunpack.c.l.b16 %v1764
        %v2908 = vunpack.c.h.b16 %v1764
        %v2909 = vunpack.c.l.b16 %v1765
        %v2910 = vunpack.c.h.b16 %v1765
        %v2911 = vunpack.c.l.b16 %v1766
        %v2912 = vunpack.c.h.b16 %v1766
        %v2913 = vunpack.c.l.b16 %v1767
        %v2914 = vunpack.c.h.b16 %v1767
        %v2915 = vunpack.c.l.b16 %v1768
        %v2916 = vunpack.c.h.b16 %v1768
        %v2917 = vunpack.c.l.b16 %v1769
        %v2918 = vunpack.c.h.b16 %v1769
        %v2919 = vunpack.c.l.b16 %v1770
        %v2920 = vunpack.c.h.b16 %v1770
        %v2921 = vunpack.c.l.b16 %v1771
        %v2922 = vunpack.c.h.b16 %v1771
        %v2923 = vunpack.c.l.b16 %v1772
        %v2924 = vunpack.c.h.b16 %v1772
        %v2925 = vunpack.c.l.b16 %v1773
        %v2926 = vunpack.c.h.b16 %v1773
        %v2927 = vunpack.c.l.b16 %v1774
        %v2928 = vunpack.c.h.b16 %v1774
        %v2929 = vunpack.c.l.b16 %v1775
        %v2930 = vunpack.c.h.b16 %v1775
        %v2931 = vunpack.c.l.b16 %v1776
        %v2932 = vunpack.c.h.b16 %v1776
        %v2933 = vunpack.c.l.b16 %v1777
        %v2934 = vunpack.c.h.b16 %v1777
        %v2935 = vunpack.c.l.b16 %v1778
        %v2936 = vunpack.c.h.b16 %v1778
        %v2937 = vunpack.c.l.b16 %v1779
        %v2938 = vunpack.c.h.b16 %v1779
        %v2939 = vunpack.c.l.b16 %v1780
        %v2940 = vunpack.c.h.b16 %v1780
        %v2941 = vunpack.c.l.b16 %v1781
        %v2942 = vunpack.c.h.b16 %v1781
        %v2943 = vunpack.c.l.b16 %v1782
        %v2944 = vunpack.c.h.b16 %v1782
        %v2945 = vunpack.c.l.b16 %v1783
        %v2946 = vunpack.c.h.b16 %v1783
        %v2947 = vunpack.c.l.b16 %v1784
        %v2948 = vunpack.c.h.b16 %v1784
        %v2949 = vunpack.c.l.b16 %v1785
        %v2950 = vunpack.c.h.b16 %v1785
        %v2951 = vunpack.c.l.b16 %v1786
        %v2952 = vunpack.c.h.b16 %v1786
        %v2953 = vunpack.c.l.b16 %v1787
        %v2954 = vunpack.c.h.b16 %v1787
        %v2955 = vunpack.c.l.b16 %v1788
        %v2956 = vunpack.c.h.b16 %v1788
        %v2957 = vunpack.c.l.b16 %v1789
        %v2958 = vunpack.c.h.b16 %v1789
        %v2959 = vunpack.c.l.b16 %v1790
        %v2960 = vunpack.c.h.b16 %v1790
        %v2961 = vunpack.c.l.b16 %v1791
        %v2962 = vunpack.c.h.b16 %v1791
        %v2963 = vunpack.c.l.b16 %v1792
        %v2964 = vunpack.c.h.b16 %v1792
        %v2965 = vunpack.c.l.b16 %v1793
        %v2966 = vunpack.c.h.b16 %v1793
        %v2967 = vunpack.c.l.b16 %v1794
        %v2968 = vunpack.c.h.b16 %v1794
        %v2969 = vunpack.c.l.b16 %v1795
        %v2970 = vunpack.c.h.b16 %v1795
        %v2971 = vunpack.c.l.b16 %v1796
        %v2972 = vunpack.c.h.b16 %v1796
        %v2973 = vunpack.c.l.b16 %v1797
        %v2974 = vunpack.c.h.b16 %v1797
        %v2975 = vunpack.c.l.b16 %v1798
        %v2976 = vunpack.c.h.b16 %v1798
        %v2977 = vunpack.c.l.b16 %v1799
        %v2978 = vunpack.c.h.b16 %v1799
        %v2979 = vunpack.c.l.b16 %v1800
        %v2980 = vunpack.c.h.b16 %v1800
        %v2981 = vunpack.c.l.b16 %v1801
        %v2982 = vunpack.c.h.b16 %v1801
        %v2983 = vunpack.c.l.b16 %v1802
        %v2984 = vunpack.c.h.b16 %v1802
        %v2985 = vunpack.c.l.b16 %v1803
        %v2986 = vunpack.c.h.b16 %v1803
        %v2987 = vunpack.c.l.b16 %v1804
        %v2988 = vunpack.c.h.b16 %v1804
        %v2989 = vunpack.c.l.b16 %v1805
        %v2990 = vunpack.c.h.b16 %v1805
        %v2991 = vunpack.c.l.b16 %v1806
        %v2992 = vunpack.c.h.b16 %v1806
        %v2993 = vunpack.c.l.b16 %v1807
        %v2994 = vunpack.c.h.b16 %v1807
        %v2995 = vunpack.c.l.b16 %v1808
        %v2996 = vunpack.c.h.b16 %v1808
        %v2997 = vunpack.c.l.b16 %v1809
        %v2998 = vunpack.c.h.b16 %v1809
        %v2999 = vunpack.c.l.b16 %v1810
        %v3000 = vunpack.c.h.b16 %v1810
        %v3001 = vunpack.c.l.b16 %v1811
        %v3002 = vunpack.c.h.b16 %v1811
        %v3003 = vunpack.c.l.b16 %v1812
        %v3004 = vunpack.c.h.b16 %v1812
        %v3005 = vunpack.c.l.b16 %v1813
        %v3006 = vunpack.c.h.b16 %v1813
        %v3007 = vunpack.c.l.b16 %v1814
        %v3008 = vunpack.c.h.b16 %v1814
        %v3009 = vunpack.c.l.b16 %v1815
        %v3010 = vunpack.c.h.b16 %v1815
        %v3011 = vunpack.c.l.b16 %v1816
        %v3012 = vunpack.c.h.b16 %v1816
        %v3013 = vunpack.c.l.b16 %v1817
        %v3014 = vunpack.c.h.b16 %v1817
        %v3015 = vunpack.c.l.b16 %v1818
        %v3016 = vunpack.c.h.b16 %v1818
        %v3017 = vunpack.c.l.b16 %v1819
        %v3018 = vunpack.c.h.b16 %v1819
        %v3019 = vunpack.c.l.b16 %v1820
        %v3020 = vunpack.c.h.b16 %v1820
        %v3021 = vunpack.c.l.b16 %v1821
        %v3022 = vunpack.c.h.b16 %v1821
        %v3023 = vunpack.c.l.b16 %v1822
        %v3024 = vunpack.c.h.b16 %v1822
        %v3025 = vunpack.c.l.b16 %v1823
        %v3026 = vunpack.c.h.b16 %v1823
        %v3027 = vunpack.c.l.b16 %v1824
        %v3028 = vunpack.c.h.b16 %v1824
        %v3029 = vunpack.c.l.b16 %v1825
        %v3030 = vunpack.c.h.b16 %v1825
        %v3031 = vunpack.c.l.b16 %v1826
        %v3032 = vunpack.c.h.b16 %v1826
        %v3033 = vpack.c.b16 %v2273, %v2265
        %v3034 = vpack.c.b16 %v2274, %v2266
        %v3035 = vpack.c.b16 %v2275, %v2267
        %v3036 = vpack.c.b16 %v2276, %v2268
        %v3037 = vpack.c.b16 %v2277, %v2269
        %v3038 = vpack.c.b16 %v2278, %v2270
        %v3039 = vpack.c.b16 %v2279, %v2271
        %v3040 = vpack.c.b16 %v2280, %v2272
        %v3041 = vpack.c.b16 %v2289, %v2281
        %v3042 = vpack.c.b16 %v2290, %v2282
        %v3043 = vpack.c.b16 %v2291, %v2283
        %v3044 = vpack.c.b16 %v2292, %v2284
        %v3045 = vpack.c.b16 %v2293, %v2285
        %v3046 = vpack.c.b16 %v2294, %v2286
        %v3047 = vpack.c.b16 %v2295, %v2287
        %v3048 = vpack.c.b16 %v2296, %v2288
        %v3049 = vpack.c.b16 %v2305, %v2297
        %v3050 = vpack.c.b16 %v2306, %v2298
        %v3051 = vpack.c.b16 %v2307, %v2299
        %v3052 = vpack.c.b16 %v2308, %v2300
        %v3053 = vpack.c.b16 %v2309, %v2301
        %v3054 = vpack.c.b16 %v2310, %v2302
        %v3055 = vpack.c.b16 %v2311, %v2303
        %v3056 = vpack.c.b16 %v2312, %v2304
        %v3057 = vpack.c.b16 %v2321, %v2313
        %v3058 = vpack.c.b16 %v2322, %v2314
        %v3059 = vpack.c.b16 %v2323, %v2315
        %v3060 = vpack.c.b16 %v2324, %v2316
        %v3061 = vpack.c.b16 %v2325, %v2317
        %v3062 = vpack.c.b16 %v2326, %v2318
        %v3063 = vpack.c.b16 %v2327, %v2319
        %v3064 = vpack.c.b16 %v2328, %v2320
        %v3065 = vpack.c.b16 %v2337, %v2329
        %v3066 = vpack.c.b16 %v2338, %v2330
        %v3067 = vpack.c.b16 %v2339, %v2331
        %v3068 = vpack.c.b16 %v2340, %v2332
        %v3069 = vpack.c.b16 %v2341, %v2333
        %v3070 = vpack.c.b16 %v2342, %v2334
        %v3071 = vpack.c.b16 %v2343, %v2335
        %v3072 = vpack.c.b16 %v2344, %v2336
        %v3073 = vpack.c.b16 %v2353, %v2345
        %v3074 = vpack.c.b16 %v2354, %v2346
        %v3075 = vpack.c.b16 %v2355, %v2347
        %v3076 = vpack.c.b16 %v2356, %v2348
        %v3077 = vpack.c.b16 %v2357, %v2349
        %v3078 = vpack.c.b16 %v2358, %v2350
        %v3079 = vpack.c.b16 %v2359, %v2351
        %v3080 = vpack.c.b16 %v2360, %v2352
        %v3081 = vpack.c.b16 %v2369, %v2361
        %v3082 = vpack.c.b16 %v2370, %v2362
        %v3083 = vpack.c.b16 %v2371, %v2363
        %v3084 = vpack.c.b16 %v2372, %v2364
        %v3085 = vpack.c.b16 %v2373, %v2365
        %v3086 = vpack.c.b16 %v2374, %v2366
        %v3087 = vpack.c.b16 %v2375, %v2367
        %v3088 = vpack.c.b16 %v2376, %v2368
        %v3089 = vpack.c.b16 %v2385, %v2377
        %v3090 = vpack.c.b16 %v2386, %v2378
        %v3091 = vpack.c.b16 %v2387, %v2379
        %v3092 = vpack.c.b16 %v2388, %v2380
        %v3093 = vpack.c.b16 %v2389, %v2381
        %v3094 = vpack.c.b16 %v2390, %v2382
        %v3095 = vpack.c.b16 %v2391, %v2383
        %v3096 = vpack.c.b16 %v2392, %v2384
        %v3097 = vpack.c.b16 %v2401, %v2393
        %v3098 = vpack.c.b16 %v2402, %v2394
        %v3099 = vpack.c.b16 %v2403, %v2395
        %v3100 = vpack.c.b16 %v2404, %v2396
        %v3101 = vpack.c.b16 %v2405, %v2397
        %v3102 = vpack.c.b16 %v2406, %v2398
        %v3103 = vpack.c.b16 %v2407, %v2399
        %v3104 = vpack.c.b16 %v2408, %v2400
        %v3105 = vpack.c.b16 %v2417, %v2409
        %v3106 = vpack.c.b16 %v2418, %v2410
        %v3107 = vpack.c.b16 %v2419, %v2411
        %v3108 = vpack.c.b16 %v2420, %v2412
        %v3109 = vpack.c.b16 %v2421, %v2413
        %v3110 = vpack.c.b16 %v2422, %v2414
        %v3111 = vpack.c.b16 %v2423, %v2415
        %v3112 = vpack.c.b16 %v2424, %v2416
        %v3113 = vpack.c.b16 %v2433, %v2425
        %v3114 = vpack.c.b16 %v2434, %v2426
        %v3115 = vpack.c.b16 %v2435, %v2427
        %v3116 = vpack.c.b16 %v2436, %v2428
        %v3117 = vpack.c.b16 %v2437, %v2429
        %v3118 = vpack.c.b16 %v2438, %v2430
        %v3119 = vpack.c.b16 %v2439, %v2431
        %v3120 = vpack.c.b16 %v2440, %v2432
        %v3121 = vpack.c.b16 %v2449, %v2441
        %v3122 = vpack.c.b16 %v2450, %v2442
        %v3123 = vpack.c.b16 %v2451, %v2443
        %v3124 = vpack.c.b16 %v2452, %v2444
        %v3125 = vpack.c.b16 %v2453, %v2445
        %v3126 = vpack.c.b16 %v2454, %v2446
        %v3127 = vpack.c.b16 %v2455, %v2447
        %v3128 = vpack.c.b16 %v2456, %v2448
        %v3129 = vpack.c.b16 %v2465, %v2457
        %v3130 = vpack.c.b16 %v2466, %v2458
        %v3131 = vpack.c.b16 %v2467, %v2459
        %v3132 = vpack.c.b16 %v2468, %v2460
        %v3133 = vpack.c.b16 %v2469, %v2461
        %v3134 = vpack.c.b16 %v2470, %v2462
        %v3135 = vpack.c.b16 %v2471, %v2463
        %v3136 = vpack.c.b16 %v2472, %v2464
        %v3137 = vpack.c.b16 %v2481, %v2473
        %v3138 = vpack.c.b16 %v2482, %v2474
        %v3139 = vpack.c.b16 %v2483, %v2475
        %v3140 = vpack.c.b16 %v2484, %v2476
        %v3141 = vpack.c.b16 %v2485, %v2477
        %v3142 = vpack.c.b16 %v2486, %v2478
        %v3143 = vpack.c.b16 %v2487, %v2479
        %v3144 = vpack.c.b16 %v2488, %v2480
        %v3145 = vpack.c.b16 %v2497, %v2489
        %v3146 = vpack.c.b16 %v2498, %v2490
        %v3147 = vpack.c.b16 %v2499, %v2491
        %v3148 = vpack.c.b16 %v2500, %v2492
        %v3149 = vpack.c.b16 %v2501, %v2493
        %v3150 = vpack.c.b16 %v2502, %v2494
        %v3151 = vpack.c.b16 %v2503, %v2495
        %v3152 = vpack.c.b16 %v2504, %v2496
        %v3153 = vpack.c.b16 %v2513, %v2505
        %v3154 = vpack.c.b16 %v2514, %v2506
        %v3155 = vpack.c.b16 %v2515, %v2507
        %v3156 = vpack.c.b16 %v2516, %v2508
        %v3157 = vpack.c.b16 %v2517, %v2509
        %v3158 = vpack.c.b16 %v2518, %v2510
        %v3159 = vpack.c.b16 %v2519, %v2511
        %v3160 = vpack.c.b16 %v2520, %v2512
        %v3161 = vpack.c.b16 %v2529, %v2521
        %v3162 = vpack.c.b16 %v2530, %v2522
        %v3163 = vpack.c.b16 %v2531, %v2523
        %v3164 = vpack.c.b16 %v2532, %v2524
        %v3165 = vpack.c.b16 %v2533, %v2525
        %v3166 = vpack.c.b16 %v2534, %v2526
        %v3167 = vpack.c.b16 %v2535, %v2527
        %v3168 = vpack.c.b16 %v2536, %v2528
        %v3169 = vpack.c.b16 %v2545, %v2537
        %v3170 = vpack.c.b16 %v2546, %v2538
        %v3171 = vpack.c.b16 %v2547, %v2539
        %v3172 = vpack.c.b16 %v2548, %v2540
        %v3173 = vpack.c.b16 %v2549, %v2541
        %v3174 = vpack.c.b16 %v2550, %v2542
        %v3175 = vpack.c.b16 %v2551, %v2543
        %v3176 = vpack.c.b16 %v2552, %v2544
        %v3177 = vpack.c.b16 %v2561, %v2553
        %v3178 = vpack.c.b16 %v2562, %v2554
        %v3179 = vpack.c.b16 %v2563, %v2555
        %v3180 = vpack.c.b16 %v2564, %v2556
        %v3181 = vpack.c.b16 %v2565, %v2557
        %v3182 = vpack.c.b16 %v2566, %v2558
        %v3183 = vpack.c.b16 %v2567, %v2559
        %v3184 = vpack.c.b16 %v2568, %v2560
        %v3185 = vpack.c.b16 %v2577, %v2569
        %v3186 = vpack.c.b16 %v2578, %v2570
        %v3187 = vpack.c.b16 %v2579, %v2571
        %v3188 = vpack.c.b16 %v2580, %v2572
        %v3189 = vpack.c.b16 %v2581, %v2573
        %v3190 = vpack.c.b16 %v2582, %v2574
        %v3191 = vpack.c.b16 %v2583, %v2575
        %v3192 = vpack.c.b16 %v2584, %v2576
        %v3193 = vpack.c.b16 %v2593, %v2585
        %v3194 = vpack.c.b16 %v2594, %v2586
        %v3195 = vpack.c.b16 %v2595, %v2587
        %v3196 = vpack.c.b16 %v2596, %v2588
        %v3197 = vpack.c.b16 %v2597, %v2589
        %v3198 = vpack.c.b16 %v2598, %v2590
        %v3199 = vpack.c.b16 %v2599, %v2591
        %v3200 = vpack.c.b16 %v2600, %v2592
        %v3201 = vpack.c.b16 %v2609, %v2601
        %v3202 = vpack.c.b16 %v2610, %v2602
        %v3203 = vpack.c.b16 %v2611, %v2603
        %v3204 = vpack.c.b16 %v2612, %v2604
        %v3205 = vpack.c.b16 %v2613, %v2605
        %v3206 = vpack.c.b16 %v2614, %v2606
        %v3207 = vpack.c.b16 %v2615, %v2607
        %v3208 = vpack.c.b16 %v2616, %v2608
        %v3209 = vpack.c.b16 %v2625, %v2617
        %v3210 = vpack.c.b16 %v2626, %v2618
        %v3211 = vpack.c.b16 %v2627, %v2619
        %v3212 = vpack.c.b16 %v2628, %v2620
        %v3213 = vpack.c.b16 %v2629, %v2621
        %v3214 = vpack.c.b16 %v2630, %v2622
        %v3215 = vpack.c.b16 %v2631, %v2623
        %v3216 = vpack.c.b16 %v2632, %v2624
        %v3217 = vpack.c.b16 %v2641, %v2633
        %v3218 = vpack.c.b16 %v2642, %v2634
        %v3219 = vpack.c.b16 %v2643, %v2635
        %v3220 = vpack.c.b16 %v2644, %v2636
        %v3221 = vpack.c.b16 %v2645, %v2637
        %v3222 = vpack.c.b16 %v2646, %v2638
        %v3223 = vpack.c.b16 %v2647, %v2639
        %v3224 = vpack.c.b16 %v2648, %v2640
        %v3225 = vpack.c.b16 %v2657, %v2649
        %v3226 = vpack.c.b16 %v2658, %v2650
        %v3227 = vpack.c.b16 %v2659, %v2651
        %v3228 = vpack.c.b16 %v2660, %v2652
        %v3229 = vpack.c.b16 %v2661, %v2653
        %v3230 = vpack.c.b16 %v2662, %v2654
        %v3231 = vpack.c.b16 %v2663, %v2655
        %v3232 = vpack.c.b16 %v2664, %v2656
        %v3233 = vpack.c.b16 %v2673, %v2665
        %v3234 = vpack.c.b16 %v2674, %v2666
        %v3235 = vpack.c.b16 %v2675, %v2667
        %v3236 = vpack.c.b16 %v2676, %v2668
        %v3237 = vpack.c.b16 %v2677, %v2669
        %v3238 = vpack.c.b16 %v2678, %v2670
        %v3239 = vpack.c.b16 %v2679, %v2671
        %v3240 = vpack.c.b16 %v2680, %v2672
        %v3241 = vpack.c.b16 %v2689, %v2681
        %v3242 = vpack.c.b16 %v2690, %v2682
        %v3243 = vpack.c.b16 %v2691, %v2683
        %v3244 = vpack.c.b16 %v2692, %v2684
        %v3245 = vpack.c.b16 %v2693, %v2685
        %v3246 = vpack.c.b16 %v2694, %v2686
        %v3247 = vpack.c.b16 %v2695, %v2687
        %v3248 = vpack.c.b16 %v2696, %v2688
        %v3249 = vpack.c.b16 %v2705, %v2697
        %v3250 = vpack.c.b16 %v2706, %v2698
        %v3251 = vpack.c.b16 %v2707, %v2699
        %v3252 = vpack.c.b16 %v2708, %v2700
        %v3253 = vpack.c.b16 %v2709, %v2701
        %v3254 = vpack.c.b16 %v2710, %v2702
        %v3255 = vpack.c.b16 %v2711, %v2703
        %v3256 = vpack.c.b16 %v2712, %v2704
        %v3257 = vpack.c.b16 %v2721, %v2713
        %v3258 = vpack.c.b16 %v2722, %v2714
        %v3259 = vpack.c.b16 %v2723, %v2715
        %v3260 = vpack.c.b16 %v2724, %v2716
        %v3261 = vpack.c.b16 %v2725, %v2717
        %v3262 = vpack.c.b16 %v2726, %v2718
        %v3263 = vpack.c.b16 %v2727, %v2719
        %v3264 = vpack.c.b16 %v2728, %v2720
        %v3265 = vpack.c.b16 %v2737, %v2729
        %v3266 = vpack.c.b16 %v2738, %v2730
        %v3267 = vpack.c.b16 %v2739, %v2731
        %v3268 = vpack.c.b16 %v2740, %v2732
        %v3269 = vpack.c.b16 %v2741, %v2733
        %v3270 = vpack.c.b16 %v2742, %v2734
        %v3271 = vpack.c.b16 %v2743, %v2735
        %v3272 = vpack.c.b16 %v2744, %v2736
        %v3273 = vpack.c.b16 %v2753, %v2745
        %v3274 = vpack.c.b16 %v2754, %v2746
        %v3275 = vpack.c.b16 %v2755, %v2747
        %v3276 = vpack.c.b16 %v2756, %v2748
        %v3277 = vpack.c.b16 %v2757, %v2749
        %v3278 = vpack.c.b16 %v2758, %v2750
        %v3279 = vpack.c.b16 %v2759, %v2751
        %v3280 = vpack.c.b16 %v2760, %v2752
        %v3281 = vpack.c.b16 %v2769, %v2761
        %v3282 = vpack.c.b16 %v2770, %v2762
        %v3283 = vpack.c.b16 %v2771, %v2763
        %v3284 = vpack.c.b16 %v2772, %v2764
        %v3285 = vpack.c.b16 %v2773, %v2765
        %v3286 = vpack.c.b16 %v2774, %v2766
        %v3287 = vpack.c.b16 %v2775, %v2767
        %v3288 = vpack.c.b16 %v2776, %v2768
        %v3289 = vpack.c.b16 %v2785, %v2777
        %v3290 = vpack.c.b16 %v2786, %v2778
        %v3291 = vpack.c.b16 %v2787, %v2779
        %v3292 = vpack.c.b16 %v2788, %v2780
        %v3293 = vpack.c.b16 %v2789, %v2781
        %v3294 = vpack.c.b16 %v2790, %v2782
        %v3295 = vpack.c.b16 %v2791, %v2783
        %v3296 = vpack.c.b16 %v2792, %v2784
        %v3297 = vpack.c.b16 %v2801, %v2793
        %v3298 = vpack.c.b16 %v2802, %v2794
        %v3299 = vpack.c.b16 %v2803, %v2795
        %v3300 = vpack.c.b16 %v2804, %v2796
        %v3301 = vpack.c.b16 %v2805, %v2797
        %v3302 = vpack.c.b16 %v2806, %v2798
        %v3303 = vpack.c.b16 %v2807, %v2799
        %v3304 = vpack.c.b16 %v2808, %v2800
        %v3305 = vpack.c.b16 %v2817, %v2809
        %v3306 = vpack.c.b16 %v2818, %v2810
        %v3307 = vpack.c.b16 %v2819, %v2811
        %v3308 = vpack.c.b16 %v2820, %v2812
        %v3309 = vpack.c.b16 %v2821, %v2813
        %v3310 = vpack.c.b16 %v2822, %v2814
        %v3311 = vpack.c.b16 %v2823, %v2815
        %v3312 = vpack.c.b16 %v2824, %v2816
        %v3313 = vpack.c.b16 %v2833, %v2825
        %v3314 = vpack.c.b16 %v2834, %v2826
        %v3315 = vpack.c.b16 %v2835, %v2827
        %v3316 = vpack.c.b16 %v2836, %v2828
        %v3317 = vpack.c.b16 %v2837, %v2829
        %v3318 = vpack.c.b16 %v2838, %v2830
        %v3319 = vpack.c.b16 %v2839, %v2831
        %v3320 = vpack.c.b16 %v2840, %v2832
        %v3321 = vpack.c.b16 %v2849, %v2841
        %v3322 = vpack.c.b16 %v2850, %v2842
        %v3323 = vpack.c.b16 %v2851, %v2843
        %v3324 = vpack.c.b16 %v2852, %v2844
        %v3325 = vpack.c.b16 %v2853, %v2845
        %v3326 = vpack.c.b16 %v2854, %v2846
        %v3327 = vpack.c.b16 %v2855, %v2847
        %v3328 = vpack.c.b16 %v2856, %v2848
        %v3329 = vpack.c.b16 %v2865, %v2857
        %v3330 = vpack.c.b16 %v2866, %v2858
        %v3331 = vpack.c.b16 %v2867, %v2859
        %v3332 = vpack.c.b16 %v2868, %v2860
        %v3333 = vpack.c.b16 %v2869, %v2861
        %v3334 = vpack.c.b16 %v2870, %v2862
        %v3335 = vpack.c.b16 %v2871, %v2863
        %v3336 = vpack.c.b16 %v2872, %v2864
        %v3337 = vpack.c.b16 %v2881, %v2873
        %v3338 = vpack.c.b16 %v2882, %v2874
        %v3339 = vpack.c.b16 %v2883, %v2875
        %v3340 = vpack.c.b16 %v2884, %v2876
        %v3341 = vpack.c.b16 %v2885, %v2877
        %v3342 = vpack.c.b16 %v2886, %v2878
        %v3343 = vpack.c.b16 %v2887, %v2879
        %v3344 = vpack.c.b16 %v2888, %v2880
        %v3345 = vpack.c.b16 %v2897, %v2889
        %v3346 = vpack.c.b16 %v2898, %v2890
        %v3347 = vpack.c.b16 %v2899, %v2891
        %v3348 = vpack.c.b16 %v2900, %v2892
        %v3349 = vpack.c.b16 %v2901, %v2893
        %v3350 = vpack.c.b16 %v2902, %v2894
        %v3351 = vpack.c.b16 %v2903, %v2895
        %v3352 = vpack.c.b16 %v2904, %v2896
        %v3353 = vpack.c.b16 %v2913, %v2905
        %v3354 = vpack.c.b16 %v2914, %v2906
        %v3355 = vpack.c.b16 %v2915, %v2907
        %v3356 = vpack.c.b16 %v2916, %v2908
        %v3357 = vpack.c.b16 %v2917, %v2909
        %v3358 = vpack.c.b16 %v2918, %v2910
        %v3359 = vpack.c.b16 %v2919, %v2911
        %v3360 = vpack.c.b16 %v2920, %v2912
        %v3361 = vpack.c.b16 %v2929, %v2921
        %v3362 = vpack.c.b16 %v2930, %v2922
        %v3363 = vpack.c.b16 %v2931, %v2923
        %v3364 = vpack.c.b16 %v2932, %v2924
        %v3365 = vpack.c.b16 %v2933, %v2925
        %v3366 = vpack.c.b16 %v2934, %v2926
        %v3367 = vpack.c.b16 %v2935, %v2927
        %v3368 = vpack.c.b16 %v2936, %v2928
        %v3369 = vpack.c.b16 %v2945, %v2937
        %v3370 = vpack.c.b16 %v2946, %v2938
        %v3371 = vpack.c.b16 %v2947, %v2939
        %v3372 = vpack.c.b16 %v2948, %v2940
        %v3373 = vpack.c.b16 %v2949, %v2941
        %v3374 = vpack.c.b16 %v2950, %v2942
        %v3375 = vpack.c.b16 %v2951, %v2943
        %v3376 = vpack.c.b16 %v2952, %v2944
        %v3377 = vpack.c.b16 %v2961, %v2953
        %v3378 = vpack.c.b16 %v2962, %v2954
        %v3379 = vpack.c.b16 %v2963, %v2955
        %v3380 = vpack.c.b16 %v2964, %v2956
        %v3381 = vpack.c.b16 %v2965, %v2957
        %v3382 = vpack.c.b16 %v2966, %v2958
        %v3383 = vpack.c.b16 %v2967, %v2959
        %v3384 = vpack.c.b16 %v2968, %v2960
        %v3385 = vpack.c.b16 %v2977, %v2969
        %v3386 = vpack.c.b16 %v2978, %v2970
        %v3387 = vpack.c.b16 %v2979, %v2971
        %v3388 = vpack.c.b16 %v2980, %v2972
        %v3389 = vpack.c.b16 %v2981, %v2973
        %v3390 = vpack.c.b16 %v2982, %v2974
        %v3391 = vpack.c.b16 %v2983, %v2975
        %v3392 = vpack.c.b16 %v2984, %v2976
        %v3393 = vpack.c.b16 %v2993, %v2985
        %v3394 = vpack.c.b16 %v2994, %v2986
        %v3395 = vpack.c.b16 %v2995, %v2987
        %v3396 = vpack.c.b16 %v2996, %v2988
        %v3397 = vpack.c.b16 %v2997, %v2989
        %v3398 = vpack.c.b16 %v2998, %v2990
        %v3399 = vpack.c.b16 %v2999, %v2991
        %v3400 = vpack.c.b16 %v3000, %v2992
        %v3401 = vpack.c.b16 %v3009, %v3001
        %v3402 = vpack.c.b16 %v3010, %v3002
        %v3403 = vpack.c.b16 %v3011, %v3003
        %v3404 = vpack.c.b16 %v3012, %v3004
        %v3405 = vpack.c.b16 %v3013, %v3005
        %v3406 = vpack.c.b16 %v3014, %v3006
        %v3407 = vpack.c.b16 %v3015, %v3007
        %v3408 = vpack.c.b16 %v3016, %v3008
        %v3409 = vpack.c.b16 %v3025, %v3017
        %v3410 = vpack.c.b16 %v3026, %v3018
        %v3411 = vpack.c.b16 %v3027, %v3019
        %v3412 = vpack.c.b16 %v3028, %v3020
        %v3413 = vpack.c.b16 %v3029, %v3021
        %v3414 = vpack.c.b16 %v3030, %v3022
        %v3415 = vpack.c.b16 %v3031, %v3023
        %v3416 = vpack.c.b16 %v3032, %v3024
        %3801 = vmatprep.subr.bf16.mxu0 %v3090
        %3802 = vmatpush1.bf16.msra.mxu0 %v3089
        %3803 = vmatprep.subr.bf16.mxu0 %v3082
        %3804 = vmatpush1.bf16.msra.mxu0 %v3081
        %3805 = vmatprep.subr.bf16.mxu0 %v3074
        %3806 = vmatpush1.bf16.msra.mxu0 %v3073
        %3807 = vmatprep.subr.bf16.mxu0 %v3066
        %3808 = vmatpush1.bf16.msra.mxu0 %v3065
        %3809 = vmatprep.subr.bf16.mxu0 %v3058
        %3810 = vmatpush1.bf16.msra.mxu0 %v3057
        %3811 = vmatprep.subr.bf16.mxu0 %v3050
        %3812 = vmatpush1.bf16.msra.mxu0 %v3049
        %3813 = vmatprep.subr.bf16.mxu0 %v3042
        %3814 = vmatpush1.bf16.msra.mxu0 %v3041
        %3815 = vmatprep.subr.bf16.mxu0 %v3034
        %3816 = vmatpush1.bf16.msra.mxu0 %v3033
        %3817 = vmatprep.subr.bf16.mxu0 %v3154
        %3818 = vmatpush2.bf16.msra.mxu0 %v3153
        %3819 = vmatprep.subr.bf16.mxu0 %v3146
        %3820 = vmatpush2.bf16.msra.mxu0 %v3145
        %3821 = vmatprep.subr.bf16.mxu0 %v3138
        %3822 = vmatpush2.bf16.msra.mxu0 %v3137
        %3823 = vmatprep.subr.bf16.mxu0 %v3130
        %3824 = vmatpush2.bf16.msra.mxu0 %v3129
        %3825 = vmatprep.subr.bf16.mxu0 %v3122
        %3826 = vmatpush2.bf16.msra.mxu0 %v3121
        %3827 = vmatprep.subr.bf16.mxu0 %v3114
        %3828 = vmatpush2.bf16.msra.mxu0 %v3113
        %3829 = vmatprep.subr.bf16.mxu0 %v3106
        %3830 = vmatpush2.bf16.msra.mxu0 %v3105
        %3831 = vmatprep.subr.bf16.mxu0 %v3098
        %3832 = vmatpush2.bf16.msra.mxu0 %v3097
        %3833 = vmatprep.mubr.bf16.mxu0 %v1870
        %3834 = vmatmul.mubr.bf16.gmra.mxu0 %v1869
        %v3835 = vpop.f32.mrf.mxu0
        %v3836 = vadd.f32 %v1832, %v3835
        %v3837 = vpop.f32.mrf.mxu0
        %v3838 = vadd.f32 %v1836, %v3837
        %v3839 = vpop.f32.mrf.mxu0
        %v3840 = vadd.f32 %v1832, %v3839
        %v3841 = vpop.f32.mrf.mxu0
        %v3842 = vadd.f32 %v1836, %v3841
        %3843 = vdwg.mxu0
        %3844 = vmatprep.subr.bf16.mxu0 %v3218
        %3845 = vmatpush1.bf16.msra.mxu0 %v3217
        %3846 = vmatprep.subr.bf16.mxu0 %v3210
        %3847 = vmatpush1.bf16.msra.mxu0 %v3209
        %3848 = vmatprep.subr.bf16.mxu0 %v3202
        %3849 = vmatpush1.bf16.msra.mxu0 %v3201
        %3850 = vmatprep.subr.bf16.mxu0 %v3194
        %3851 = vmatpush1.bf16.msra.mxu0 %v3193
        %3852 = vmatprep.subr.bf16.mxu0 %v3186
        %3853 = vmatpush1.bf16.msra.mxu0 %v3185
        %3854 = vmatprep.subr.bf16.mxu0 %v3178
        %3855 = vmatpush1.bf16.msra.mxu0 %v3177
        %3856 = vmatprep.subr.bf16.mxu0 %v3170
        %3857 = vmatpush1.bf16.msra.mxu0 %v3169
        %3858 = vmatprep.subr.bf16.mxu0 %v3162
        %3859 = vmatpush1.bf16.msra.mxu0 %v3161
        %3860 = vmatprep.subr.bf16.mxu0 %v3282
        %3861 = vmatpush2.bf16.msra.mxu0 %v3281
        %3862 = vmatprep.subr.bf16.mxu0 %v3274
        %3863 = vmatpush2.bf16.msra.mxu0 %v3273
        %3864 = vmatprep.subr.bf16.mxu0 %v3266
        %3865 = vmatpush2.bf16.msra.mxu0 %v3265
        %3866 = vmatprep.subr.bf16.mxu0 %v3258
        %3867 = vmatpush2.bf16.msra.mxu0 %v3257
        %3868 = vmatprep.subr.bf16.mxu0 %v3250
        %3869 = vmatpush2.bf16.msra.mxu0 %v3249
        %3870 = vmatprep.subr.bf16.mxu0 %v3242
        %3871 = vmatpush2.bf16.msra.mxu0 %v3241
        %3872 = vmatprep.subr.bf16.mxu0 %v3234
        %3873 = vmatpush2.bf16.msra.mxu0 %v3233
        %3874 = vmatprep.subr.bf16.mxu0 %v3226
        %3875 = vmatpush2.bf16.msra.mxu0 %v3225
        %3876 = vmatprep.mubr.bf16.mxu0 %v1872
        %3877 = vmatmul.mubr.bf16.gmra.mxu0 %v1871
        %v3878 = vpop.f32.mrf.mxu0
        %v3879 = vadd.f32 %v3836, %v3878
        %v3880 = vpop.f32.mrf.mxu0
        %v3881 = vadd.f32 %v3838, %v3880
        %v3882 = vpop.f32.mrf.mxu0
        %v3883 = vadd.f32 %v3840, %v3882
        %v3884 = vpop.f32.mrf.mxu0
        %v3885 = vadd.f32 %v3842, %v3884
        %3886 = vdwg.mxu0
        %3887 = vmatprep.subr.bf16.mxu0 %v3346
        %3888 = vmatpush1.bf16.msra.mxu0 %v3345
        %3889 = vmatprep.subr.bf16.mxu0 %v3338
        %3890 = vmatpush1.bf16.msra.mxu0 %v3337
        %3891 = vmatprep.subr.bf16.mxu0 %v3330
        %3892 = vmatpush1.bf16.msra.mxu0 %v3329
        %3893 = vmatprep.subr.bf16.mxu0 %v3322
        %3894 = vmatpush1.bf16.msra.mxu0 %v3321
        %3895 = vmatprep.subr.bf16.mxu0 %v3314
        %3896 = vmatpush1.bf16.msra.mxu0 %v3313
        %3897 = vmatprep.subr.bf16.mxu0 %v3306
        %3898 = vmatpush1.bf16.msra.mxu0 %v3305
        %3899 = vmatprep.subr.bf16.mxu0 %v3298
        %3900 = vmatpush1.bf16.msra.mxu0 %v3297
        %3901 = vmatprep.subr.bf16.mxu0 %v3290
        %3902 = vmatpush1.bf16.msra.mxu0 %v3289
        %3903 = vmatprep.subr.bf16.mxu0 %v3410
        %3904 = vmatpush2.bf16.msra.mxu0 %v3409
        %3905 = vmatprep.subr.bf16.mxu0 %v3402
        %3906 = vmatpush2.bf16.msra.mxu0 %v3401
        %3907 = vmatprep.subr.bf16.mxu0 %v3394
        %3908 = vmatpush2.bf16.msra.mxu0 %v3393
        %3909 = vmatprep.subr.bf16.mxu0 %v3386
        %3910 = vmatpush2.bf16.msra.mxu0 %v3385
        %3911 = vmatprep.subr.bf16.mxu0 %v3378
        %3912 = vmatpush2.bf16.msra.mxu0 %v3377
        %3913 = vmatprep.subr.bf16.mxu0 %v3370
        %3914 = vmatpush2.bf16.msra.mxu0 %v3369
        %3915 = vmatprep.subr.bf16.mxu0 %v3362
        %3916 = vmatpush2.bf16.msra.mxu0 %v3361
        %3917 = vmatprep.subr.bf16.mxu0 %v3354
        %3918 = vmatpush2.bf16.msra.mxu0 %v3353
        %3919 = vmatprep.mubr.bf16.mxu0 %v1874
        %3920 = vmatmul.mubr.bf16.gmra.mxu0 %v1873
        %v3921 = vpop.f32.mrf.mxu0
        %v3922 = vadd.f32 %v3879, %v3921
        %v3923 = vpop.f32.mrf.mxu0
        %v3924 = vadd.f32 %v3881, %v3923
        %v3925 = vpop.f32.mrf.mxu0
        %v3926 = vadd.f32 %v3883, %v3925
        %v3927 = vpop.f32.mrf.mxu0
        %v3928 = vadd.f32 %v3885, %v3927
        %3929 = vdwg.mxu0
        %3930 = vmatprep.subr.bf16.mxu0 %v3092
        %3931 = vmatpush1.bf16.msra.mxu0 %v3091
        %3932 = vmatprep.subr.bf16.mxu0 %v3084
        %3933 = vmatpush1.bf16.msra.mxu0 %v3083
        %3934 = vmatprep.subr.bf16.mxu0 %v3076
        %3935 = vmatpush1.bf16.msra.mxu0 %v3075
        %3936 = vmatprep.subr.bf16.mxu0 %v3068
        %3937 = vmatpush1.bf16.msra.mxu0 %v3067
        %3938 = vmatprep.subr.bf16.mxu0 %v3060
        %3939 = vmatpush1.bf16.msra.mxu0 %v3059
        %3940 = vmatprep.subr.bf16.mxu0 %v3052
        %3941 = vmatpush1.bf16.msra.mxu0 %v3051
        %3942 = vmatprep.subr.bf16.mxu0 %v3044
        %3943 = vmatpush1.bf16.msra.mxu0 %v3043
        %3944 = vmatprep.subr.bf16.mxu0 %v3036
        %3945 = vmatpush1.bf16.msra.mxu0 %v3035
        %3946 = vmatprep.subr.bf16.mxu0 %v3156
        %3947 = vmatpush2.bf16.msra.mxu0 %v3155
        %3948 = vmatprep.subr.bf16.mxu0 %v3148
        %3949 = vmatpush2.bf16.msra.mxu0 %v3147
        %3950 = vmatprep.subr.bf16.mxu0 %v3140
        %3951 = vmatpush2.bf16.msra.mxu0 %v3139
        %3952 = vmatprep.subr.bf16.mxu0 %v3132
        %3953 = vmatpush2.bf16.msra.mxu0 %v3131
        %3954 = vmatprep.subr.bf16.mxu0 %v3124
        %3955 = vmatpush2.bf16.msra.mxu0 %v3123
        %3956 = vmatprep.subr.bf16.mxu0 %v3116
        %3957 = vmatpush2.bf16.msra.mxu0 %v3115
        %3958 = vmatprep.subr.bf16.mxu0 %v3108
        %3959 = vmatpush2.bf16.msra.mxu0 %v3107
        %3960 = vmatprep.subr.bf16.mxu0 %v3100
        %3961 = vmatpush2.bf16.msra.mxu0 %v3099
        %3962 = vmatprep.mubr.bf16.mxu0 %v1870
        %3963 = vmatmul.mubr.bf16.gmra.mxu0 %v1869
        %v3964 = vpop.f32.mrf.mxu0
        %v3965 = vadd.f32 %v1840, %v3964
        %v3966 = vpop.f32.mrf.mxu0
        %v3967 = vadd.f32 %v1844, %v3966
        %v3968 = vpop.f32.mrf.mxu0
        %v3969 = vadd.f32 %v1840, %v3968
        %v3970 = vpop.f32.mrf.mxu0
        %v3971 = vadd.f32 %v1844, %v3970
        %3972 = vdwg.mxu0
        %3973 = vmatprep.subr.bf16.mxu0 %v3220
        %3974 = vmatpush1.bf16.msra.mxu0 %v3219
        %3975 = vmatprep.subr.bf16.mxu0 %v3212
        %3976 = vmatpush1.bf16.msra.mxu0 %v3211
        %3977 = vmatprep.subr.bf16.mxu0 %v3204
        %3978 = vmatpush1.bf16.msra.mxu0 %v3203
        %3979 = vmatprep.subr.bf16.mxu0 %v3196
        %3980 = vmatpush1.bf16.msra.mxu0 %v3195
        %3981 = vmatprep.subr.bf16.mxu0 %v3188
        %3982 = vmatpush1.bf16.msra.mxu0 %v3187
        %3983 = vmatprep.subr.bf16.mxu0 %v3180
        %3984 = vmatpush1.bf16.msra.mxu0 %v3179
        %3985 = vmatprep.subr.bf16.mxu0 %v3172
        %3986 = vmatpush1.bf16.msra.mxu0 %v3171
        %3987 = vmatprep.subr.bf16.mxu0 %v3164
        %3988 = vmatpush1.bf16.msra.mxu0 %v3163
        %3989 = vmatprep.subr.bf16.mxu0 %v3284
        %3990 = vmatpush2.bf16.msra.mxu0 %v3283
        %3991 = vmatprep.subr.bf16.mxu0 %v3276
        %3992 = vmatpush2.bf16.msra.mxu0 %v3275
        %3993 = vmatprep.subr.bf16.mxu0 %v3268
        %3994 = vmatpush2.bf16.msra.mxu0 %v3267
        %3995 = vmatprep.subr.bf16.mxu0 %v3260
        %3996 = vmatpush2.bf16.msra.mxu0 %v3259
        %3997 = vmatprep.subr.bf16.mxu0 %v3252
        %3998 = vmatpush2.bf16.msra.mxu0 %v3251
        %3999 = vmatprep.subr.bf16.mxu0 %v3244
        %4000 = vmatpush2.bf16.msra.mxu0 %v3243
        %4001 = vmatprep.subr.bf16.mxu0 %v3236
        %4002 = vmatpush2.bf16.msra.mxu0 %v3235
        %4003 = vmatprep.subr.bf16.mxu0 %v3228
        %4004 = vmatpush2.bf16.msra.mxu0 %v3227
        %4005 = vmatprep.mubr.bf16.mxu0 %v1872
        %4006 = vmatmul.mubr.bf16.gmra.mxu0 %v1871
        %v4007 = vpop.f32.mrf.mxu0
        %v4008 = vadd.f32 %v3965, %v4007
        %v4009 = vpop.f32.mrf.mxu0
        %v4010 = vadd.f32 %v3967, %v4009
        %v4011 = vpop.f32.mrf.mxu0
        %v4012 = vadd.f32 %v3969, %v4011
        %v4013 = vpop.f32.mrf.mxu0
        %v4014 = vadd.f32 %v3971, %v4013
        %4015 = vdwg.mxu0
        %4016 = vmatprep.subr.bf16.mxu0 %v3348
        %4017 = vmatpush1.bf16.msra.mxu0 %v3347
        %4018 = vmatprep.subr.bf16.mxu0 %v3340
        %4019 = vmatpush1.bf16.msra.mxu0 %v3339
        %4020 = vmatprep.subr.bf16.mxu0 %v3332
        %4021 = vmatpush1.bf16.msra.mxu0 %v3331
        %4022 = vmatprep.subr.bf16.mxu0 %v3324
        %4023 = vmatpush1.bf16.msra.mxu0 %v3323
        %4024 = vmatprep.subr.bf16.mxu0 %v3316
        %4025 = vmatpush1.bf16.msra.mxu0 %v3315
        %4026 = vmatprep.subr.bf16.mxu0 %v3308
        %4027 = vmatpush1.bf16.msra.mxu0 %v3307
        %4028 = vmatprep.subr.bf16.mxu0 %v3300
        %4029 = vmatpush1.bf16.msra.mxu0 %v3299
        %4030 = vmatprep.subr.bf16.mxu0 %v3292
        %4031 = vmatpush1.bf16.msra.mxu0 %v3291
        %4032 = vmatprep.subr.bf16.mxu0 %v3412
        %4033 = vmatpush2.bf16.msra.mxu0 %v3411
        %4034 = vmatprep.subr.bf16.mxu0 %v3404
        %4035 = vmatpush2.bf16.msra.mxu0 %v3403
        %4036 = vmatprep.subr.bf16.mxu0 %v3396
        %4037 = vmatpush2.bf16.msra.mxu0 %v3395
        %4038 = vmatprep.subr.bf16.mxu0 %v3388
        %4039 = vmatpush2.bf16.msra.mxu0 %v3387
        %4040 = vmatprep.subr.bf16.mxu0 %v3380
        %4041 = vmatpush2.bf16.msra.mxu0 %v3379
        %4042 = vmatprep.subr.bf16.mxu0 %v3372
        %4043 = vmatpush2.bf16.msra.mxu0 %v3371
        %4044 = vmatprep.subr.bf16.mxu0 %v3364
        %4045 = vmatpush2.bf16.msra.mxu0 %v3363
        %4046 = vmatprep.subr.bf16.mxu0 %v3356
        %4047 = vmatpush2.bf16.msra.mxu0 %v3355
        %4048 = vmatprep.mubr.bf16.mxu0 %v1874
        %4049 = vmatmul.mubr.bf16.gmra.mxu0 %v1873
        %v4050 = vpop.f32.mrf.mxu0
        %v4051 = vadd.f32 %v4008, %v4050
        %v4052 = vpop.f32.mrf.mxu0
        %v4053 = vadd.f32 %v4010, %v4052
        %v4054 = vpop.f32.mrf.mxu0
        %v4055 = vadd.f32 %v4012, %v4054
        %v4056 = vpop.f32.mrf.mxu0
        %v4057 = vadd.f32 %v4014, %v4056
        %4058 = vdwg.mxu0
        %4059 = vmatprep.subr.bf16.mxu0 %v3094
        %4060 = vmatpush1.bf16.msra.mxu0 %v3093
        %4061 = vmatprep.subr.bf16.mxu0 %v3086
        %4062 = vmatpush1.bf16.msra.mxu0 %v3085
        %4063 = vmatprep.subr.bf16.mxu0 %v3078
        %4064 = vmatpush1.bf16.msra.mxu0 %v3077
        %4065 = vmatprep.subr.bf16.mxu0 %v3070
        %4066 = vmatpush1.bf16.msra.mxu0 %v3069
        %4067 = vmatprep.subr.bf16.mxu0 %v3062
        %4068 = vmatpush1.bf16.msra.mxu0 %v3061
        %4069 = vmatprep.subr.bf16.mxu0 %v3054
        %4070 = vmatpush1.bf16.msra.mxu0 %v3053
        %4071 = vmatprep.subr.bf16.mxu0 %v3046
        %4072 = vmatpush1.bf16.msra.mxu0 %v3045
        %4073 = vmatprep.subr.bf16.mxu0 %v3038
        %4074 = vmatpush1.bf16.msra.mxu0 %v3037
        %4075 = vmatprep.subr.bf16.mxu0 %v3158
        %4076 = vmatpush2.bf16.msra.mxu0 %v3157
        %4077 = vmatprep.subr.bf16.mxu0 %v3150
        %4078 = vmatpush2.bf16.msra.mxu0 %v3149
        %4079 = vmatprep.subr.bf16.mxu0 %v3142
        %4080 = vmatpush2.bf16.msra.mxu0 %v3141
        %4081 = vmatprep.subr.bf16.mxu0 %v3134
        %4082 = vmatpush2.bf16.msra.mxu0 %v3133
        %4083 = vmatprep.subr.bf16.mxu0 %v3126
        %4084 = vmatpush2.bf16.msra.mxu0 %v3125
        %4085 = vmatprep.subr.bf16.mxu0 %v3118
        %4086 = vmatpush2.bf16.msra.mxu0 %v3117
        %4087 = vmatprep.subr.bf16.mxu0 %v3110
        %4088 = vmatpush2.bf16.msra.mxu0 %v3109
        %4089 = vmatprep.subr.bf16.mxu0 %v3102
        %4090 = vmatpush2.bf16.msra.mxu0 %v3101
        %4091 = vmatprep.mubr.bf16.mxu0 %v1870
        %4092 = vmatmul.mubr.bf16.gmra.mxu0 %v1869
        %v4093 = vpop.f32.mrf.mxu0
        %v4094 = vadd.f32 %v1848, %v4093
        %v4095 = vpop.f32.mrf.mxu0
        %v4096 = vadd.f32 %v1852, %v4095
        %v4097 = vpop.f32.mrf.mxu0
        %v4098 = vadd.f32 %v1848, %v4097
        %v4099 = vpop.f32.mrf.mxu0
        %v4100 = vadd.f32 %v1852, %v4099
        %4101 = vdwg.mxu0
        %4102 = vmatprep.subr.bf16.mxu0 %v3222
        %4103 = vmatpush1.bf16.msra.mxu0 %v3221
        %4104 = vmatprep.subr.bf16.mxu0 %v3214
        %4105 = vmatpush1.bf16.msra.mxu0 %v3213
        %4106 = vmatprep.subr.bf16.mxu0 %v3206
        %4107 = vmatpush1.bf16.msra.mxu0 %v3205
        %4108 = vmatprep.subr.bf16.mxu0 %v3198
        %4109 = vmatpush1.bf16.msra.mxu0 %v3197
        %4110 = vmatprep.subr.bf16.mxu0 %v3190
        %4111 = vmatpush1.bf16.msra.mxu0 %v3189
        %4112 = vmatprep.subr.bf16.mxu0 %v3182
        %4113 = vmatpush1.bf16.msra.mxu0 %v3181
        %4114 = vmatprep.subr.bf16.mxu0 %v3174
        %4115 = vmatpush1.bf16.msra.mxu0 %v3173
        %4116 = vmatprep.subr.bf16.mxu0 %v3166
        %4117 = vmatpush1.bf16.msra.mxu0 %v3165
        %4118 = vmatprep.subr.bf16.mxu0 %v3286
        %4119 = vmatpush2.bf16.msra.mxu0 %v3285
        %4120 = vmatprep.subr.bf16.mxu0 %v3278
        %4121 = vmatpush2.bf16.msra.mxu0 %v3277
        %4122 = vmatprep.subr.bf16.mxu0 %v3270
        %4123 = vmatpush2.bf16.msra.mxu0 %v3269
        %4124 = vmatprep.subr.bf16.mxu0 %v3262
        %4125 = vmatpush2.bf16.msra.mxu0 %v3261
        %4126 = vmatprep.subr.bf16.mxu0 %v3254
        %4127 = vmatpush2.bf16.msra.mxu0 %v3253
        %4128 = vmatprep.subr.bf16.mxu0 %v3246
        %4129 = vmatpush2.bf16.msra.mxu0 %v3245
        %4130 = vmatprep.subr.bf16.mxu0 %v3238
        %4131 = vmatpush2.bf16.msra.mxu0 %v3237
        %4132 = vmatprep.subr.bf16.mxu0 %v3230
        %4133 = vmatpush2.bf16.msra.mxu0 %v3229
        %4134 = vmatprep.mubr.bf16.mxu0 %v1872
        %4135 = vmatmul.mubr.bf16.gmra.mxu0 %v1871
        %v4136 = vpop.f32.mrf.mxu0
        %v4137 = vadd.f32 %v4094, %v4136
        %v4138 = vpop.f32.mrf.mxu0
        %v4139 = vadd.f32 %v4096, %v4138
        %v4140 = vpop.f32.mrf.mxu0
        %v4141 = vadd.f32 %v4098, %v4140
        %v4142 = vpop.f32.mrf.mxu0
        %v4143 = vadd.f32 %v4100, %v4142
        %4144 = vdwg.mxu0
        %4145 = vmatprep.subr.bf16.mxu0 %v3350
        %4146 = vmatpush1.bf16.msra.mxu0 %v3349
        %4147 = vmatprep.subr.bf16.mxu0 %v3342
        %4148 = vmatpush1.bf16.msra.mxu0 %v3341
        %4149 = vmatprep.subr.bf16.mxu0 %v3334
        %4150 = vmatpush1.bf16.msra.mxu0 %v3333
        %4151 = vmatprep.subr.bf16.mxu0 %v3326
        %4152 = vmatpush1.bf16.msra.mxu0 %v3325
        %4153 = vmatprep.subr.bf16.mxu0 %v3318
        %4154 = vmatpush1.bf16.msra.mxu0 %v3317
        %4155 = vmatprep.subr.bf16.mxu0 %v3310
        %4156 = vmatpush1.bf16.msra.mxu0 %v3309
        %4157 = vmatprep.subr.bf16.mxu0 %v3302
        %4158 = vmatpush1.bf16.msra.mxu0 %v3301
        %4159 = vmatprep.subr.bf16.mxu0 %v3294
        %4160 = vmatpush1.bf16.msra.mxu0 %v3293
        %4161 = vmatprep.subr.bf16.mxu0 %v3414
        %4162 = vmatpush2.bf16.msra.mxu0 %v3413
        %4163 = vmatprep.subr.bf16.mxu0 %v3406
        %4164 = vmatpush2.bf16.msra.mxu0 %v3405
        %4165 = vmatprep.subr.bf16.mxu0 %v3398
        %4166 = vmatpush2.bf16.msra.mxu0 %v3397
        %4167 = vmatprep.subr.bf16.mxu0 %v3390
        %4168 = vmatpush2.bf16.msra.mxu0 %v3389
        %4169 = vmatprep.subr.bf16.mxu0 %v3382
        %4170 = vmatpush2.bf16.msra.mxu0 %v3381
        %4171 = vmatprep.subr.bf16.mxu0 %v3374
        %4172 = vmatpush2.bf16.msra.mxu0 %v3373
        %4173 = vmatprep.subr.bf16.mxu0 %v3366
        %4174 = vmatpush2.bf16.msra.mxu0 %v3365
        %4175 = vmatprep.subr.bf16.mxu0 %v3358
        %4176 = vmatpush2.bf16.msra.mxu0 %v3357
        %4177 = vmatprep.mubr.bf16.mxu0 %v1874
        %4178 = vmatmul.mubr.bf16.gmra.mxu0 %v1873
        %v4179 = vpop.f32.mrf.mxu0
        %v4180 = vadd.f32 %v4137, %v4179
        %v4181 = vpop.f32.mrf.mxu0
        %v4182 = vadd.f32 %v4139, %v4181
        %v4183 = vpop.f32.mrf.mxu0
        %v4184 = vadd.f32 %v4141, %v4183
        %v4185 = vpop.f32.mrf.mxu0
        %v4186 = vadd.f32 %v4143, %v4185
        %4187 = vdwg.mxu0
        %4188 = vmatprep.subr.bf16.mxu0 %v3096
        %4189 = vmatpush1.bf16.msra.mxu0 %v3095
        %4190 = vmatprep.subr.bf16.mxu0 %v3088
        %4191 = vmatpush1.bf16.msra.mxu0 %v3087
        %4192 = vmatprep.subr.bf16.mxu0 %v3080
        %4193 = vmatpush1.bf16.msra.mxu0 %v3079
        %4194 = vmatprep.subr.bf16.mxu0 %v3072
        %4195 = vmatpush1.bf16.msra.mxu0 %v3071
        %4196 = vmatprep.subr.bf16.mxu0 %v3064
        %4197 = vmatpush1.bf16.msra.mxu0 %v3063
        %4198 = vmatprep.subr.bf16.mxu0 %v3056
        %4199 = vmatpush1.bf16.msra.mxu0 %v3055
        %4200 = vmatprep.subr.bf16.mxu0 %v3048
        %4201 = vmatpush1.bf16.msra.mxu0 %v3047
        %4202 = vmatprep.subr.bf16.mxu0 %v3040
        %4203 = vmatpush1.bf16.msra.mxu0 %v3039
        %4204 = vmatprep.subr.bf16.mxu0 %v3160
        %4205 = vmatpush2.bf16.msra.mxu0 %v3159
        %4206 = vmatprep.subr.bf16.mxu0 %v3152
        %4207 = vmatpush2.bf16.msra.mxu0 %v3151
        %4208 = vmatprep.subr.bf16.mxu0 %v3144
        %4209 = vmatpush2.bf16.msra.mxu0 %v3143
        %4210 = vmatprep.subr.bf16.mxu0 %v3136
        %4211 = vmatpush2.bf16.msra.mxu0 %v3135
        %4212 = vmatprep.subr.bf16.mxu0 %v3128
        %4213 = vmatpush2.bf16.msra.mxu0 %v3127
        %4214 = vmatprep.subr.bf16.mxu0 %v3120
        %4215 = vmatpush2.bf16.msra.mxu0 %v3119
        %4216 = vmatprep.subr.bf16.mxu0 %v3112
        %4217 = vmatpush2.bf16.msra.mxu0 %v3111
        %4218 = vmatprep.subr.bf16.mxu0 %v3104
        %4219 = vmatpush2.bf16.msra.mxu0 %v3103
        %4220 = vmatprep.mubr.bf16.mxu0 %v1870
        %4221 = vmatmul.mubr.bf16.gmra.mxu0 %v1869
        %v4222 = vpop.f32.mrf.mxu0
        %v4223 = vadd.f32 %v1856, %v4222
        %v4224 = vpop.f32.mrf.mxu0
        %v4225 = vadd.f32 %v1860, %v4224
        %v4226 = vpop.f32.mrf.mxu0
        %v4227 = vadd.f32 %v1856, %v4226
        %v4228 = vpop.f32.mrf.mxu0
        %v4229 = vadd.f32 %v1860, %v4228
        %4230 = vdwg.mxu0
        %4231 = vmatprep.subr.bf16.mxu0 %v3224
        %4232 = vmatpush1.bf16.msra.mxu0 %v3223
        %4233 = vmatprep.subr.bf16.mxu0 %v3216
        %4234 = vmatpush1.bf16.msra.mxu0 %v3215
        %4235 = vmatprep.subr.bf16.mxu0 %v3208
        %4236 = vmatpush1.bf16.msra.mxu0 %v3207
        %4237 = vmatprep.subr.bf16.mxu0 %v3200
        %4238 = vmatpush1.bf16.msra.mxu0 %v3199
        %4239 = vmatprep.subr.bf16.mxu0 %v3192
        %4240 = vmatpush1.bf16.msra.mxu0 %v3191
        %4241 = vmatprep.subr.bf16.mxu0 %v3184
        %4242 = vmatpush1.bf16.msra.mxu0 %v3183
        %4243 = vmatprep.subr.bf16.mxu0 %v3176
        %4244 = vmatpush1.bf16.msra.mxu0 %v3175
        %4245 = vmatprep.subr.bf16.mxu0 %v3168
        %4246 = vmatpush1.bf16.msra.mxu0 %v3167
        %4247 = vmatprep.subr.bf16.mxu0 %v3288
        %4248 = vmatpush2.bf16.msra.mxu0 %v3287
        %4249 = vmatprep.subr.bf16.mxu0 %v3280
        %4250 = vmatpush2.bf16.msra.mxu0 %v3279
        %4251 = vmatprep.subr.bf16.mxu0 %v3272
        %4252 = vmatpush2.bf16.msra.mxu0 %v3271
        %4253 = vmatprep.subr.bf16.mxu0 %v3264
        %4254 = vmatpush2.bf16.msra.mxu0 %v3263
        %4255 = vmatprep.subr.bf16.mxu0 %v3256
        %4256 = vmatpush2.bf16.msra.mxu0 %v3255
        %4257 = vmatprep.subr.bf16.mxu0 %v3248
        %4258 = vmatpush2.bf16.msra.mxu0 %v3247
        %4259 = vmatprep.subr.bf16.mxu0 %v3240
        %4260 = vmatpush2.bf16.msra.mxu0 %v3239
        %4261 = vmatprep.subr.bf16.mxu0 %v3232
        %4262 = vmatpush2.bf16.msra.mxu0 %v3231
        %4263 = vmatprep.mubr.bf16.mxu0 %v1872
        %4264 = vmatmul.mubr.bf16.gmra.mxu0 %v1871
        %v4265 = vpop.f32.mrf.mxu0
        %v4266 = vadd.f32 %v4223, %v4265
        %v4267 = vpop.f32.mrf.mxu0
        %v4268 = vadd.f32 %v4225, %v4267
        %v4269 = vpop.f32.mrf.mxu0
        %v4270 = vadd.f32 %v4227, %v4269
        %v4271 = vpop.f32.mrf.mxu0
        %v4272 = vadd.f32 %v4229, %v4271
        %4273 = vdwg.mxu0
        %4274 = vmatprep.subr.bf16.mxu0 %v3352
        %4275 = vmatpush1.bf16.msra.mxu0 %v3351
        %4276 = vmatprep.subr.bf16.mxu0 %v3344
        %4277 = vmatpush1.bf16.msra.mxu0 %v3343
        %4278 = vmatprep.subr.bf16.mxu0 %v3336
        %4279 = vmatpush1.bf16.msra.mxu0 %v3335
        %4280 = vmatprep.subr.bf16.mxu0 %v3328
        %4281 = vmatpush1.bf16.msra.mxu0 %v3327
        %4282 = vmatprep.subr.bf16.mxu0 %v3320
        %4283 = vmatpush1.bf16.msra.mxu0 %v3319
        %4284 = vmatprep.subr.bf16.mxu0 %v3312
        %4285 = vmatpush1.bf16.msra.mxu0 %v3311
        %4286 = vmatprep.subr.bf16.mxu0 %v3304
        %4287 = vmatpush1.bf16.msra.mxu0 %v3303
        %4288 = vmatprep.subr.bf16.mxu0 %v3296
        %4289 = vmatpush1.bf16.msra.mxu0 %v3295
        %4290 = vmatprep.subr.bf16.mxu0 %v3416
        %4291 = vmatpush2.bf16.msra.mxu0 %v3415
        %4292 = vmatprep.subr.bf16.mxu0 %v3408
        %4293 = vmatpush2.bf16.msra.mxu0 %v3407
        %4294 = vmatprep.subr.bf16.mxu0 %v3400
        %4295 = vmatpush2.bf16.msra.mxu0 %v3399
        %4296 = vmatprep.subr.bf16.mxu0 %v3392
        %4297 = vmatpush2.bf16.msra.mxu0 %v3391
        %4298 = vmatprep.subr.bf16.mxu0 %v3384
        %4299 = vmatpush2.bf16.msra.mxu0 %v3383
        %4300 = vmatprep.subr.bf16.mxu0 %v3376
        %4301 = vmatpush2.bf16.msra.mxu0 %v3375
        %4302 = vmatprep.subr.bf16.mxu0 %v3368
        %4303 = vmatpush2.bf16.msra.mxu0 %v3367
        %4304 = vmatprep.subr.bf16.mxu0 %v3360
        %4305 = vmatpush2.bf16.msra.mxu0 %v3359
        %4306 = vmatprep.mubr.bf16.mxu0 %v1874
        %4307 = vmatmul.mubr.bf16.gmra.mxu0 %v1873
        %v4308 = vpop.f32.mrf.mxu0
        %v4309 = vadd.f32 %v4266, %v4308
        %v4310 = vpop.f32.mrf.mxu0
        %v4311 = vadd.f32 %v4268, %v4310
        %v4312 = vpop.f32.mrf.mxu0
        %v4313 = vadd.f32 %v4270, %v4312
        %v4314 = vpop.f32.mrf.mxu0
        %v4315 = vadd.f32 %v4272, %v4314
        %4316 = vdwg.mxu0
        %v4329 = vcombine.low %v1407, %v1408
        %v4330 = vcombine.low %v1409, %v1410
        %v4331 = vcombine.low %v1411, %v1412
        %v4333 = vunpack.c.l.s4 1966171168
        %v4334 = vunpack.c.0.s8 %v4333
        %v4335 = vlaneseq
        %v4336 = vshrl.u32 %v4335, 7
        %v4337 = vsub.s32 %v4334, %v4336
        %v4338 = vrot.slane %v4329, %v4337
        %v4340 = vunpack.c.l.s4 1966171168
        %v4341 = vunpack.c.0.s8 %v4340
        %v4342 = vlaneseq
        %v4343 = vshrl.u32 %v4342, 7
        %v4344 = vsub.s32 %v4341, %v4343
        %v4345 = vrot.slane %v4330, %v4344
        %v4347 = vunpack.c.l.s4 1966171168
        %v4348 = vunpack.c.0.s8 %v4347
        %v4349 = vlaneseq
        %v4350 = vshrl.u32 %v4349, 7
        %v4351 = vsub.s32 %v4348, %v4350
        %v4352 = vrot.slane %v4331, %v4351
        %v4353 = vcombine.low %v4338, %v4345
        %v4355 = vunpack.c.l.s4 1966171168
        %v4356 = vunpack.c.0.s8 %v4355
        %v4357 = vlaneseq
        %v4358 = vshrl.u32 %v4357, 7
        %v4359 = vsub.s32 %v4356, %v4358
        %v4360 = vrot.slane %v4353, %v4359
        %v4362 = vunpack.c.l.s4 1966171168
        %v4363 = vunpack.c.0.s8 %v4362
        %v4364 = vlaneseq
        %v4365 = vshrl.u32 %v4364, 7
        %v4366 = vsub.s32 %v4363, %v4365
        %v4367 = vrot.slane %v4352, %v4366
        %v4368 = vcombine.low %v4360, %v4367
        %v4369 = vcombine.low %v1413, %v1414
        %v4370 = vcombine.low %v1415, %v1416
        %v4371 = vcombine.low %v1417, %v1418
        %v4373 = vunpack.c.l.s4 1966171168
        %v4374 = vunpack.c.0.s8 %v4373
        %v4375 = vlaneseq
        %v4376 = vshrl.u32 %v4375, 7
        %v4377 = vsub.s32 %v4374, %v4376
        %v4378 = vrot.slane %v4369, %v4377
        %v4380 = vunpack.c.l.s4 1966171168
        %v4381 = vunpack.c.0.s8 %v4380
        %v4382 = vlaneseq
        %v4383 = vshrl.u32 %v4382, 7
        %v4384 = vsub.s32 %v4381, %v4383
        %v4385 = vrot.slane %v4370, %v4384
        %v4387 = vunpack.c.l.s4 1966171168
        %v4388 = vunpack.c.0.s8 %v4387
        %v4389 = vlaneseq
        %v4390 = vshrl.u32 %v4389, 7
        %v4391 = vsub.s32 %v4388, %v4390
        %v4392 = vrot.slane %v4371, %v4391
        %v4393 = vcombine.low %v4378, %v4385
        %v4395 = vunpack.c.l.s4 1966171168
        %v4396 = vunpack.c.0.s8 %v4395
        %v4397 = vlaneseq
        %v4398 = vshrl.u32 %v4397, 7
        %v4399 = vsub.s32 %v4396, %v4398
        %v4400 = vrot.slane %v4393, %v4399
        %v4402 = vunpack.c.l.s4 1966171168
        %v4403 = vunpack.c.0.s8 %v4402
        %v4404 = vlaneseq
        %v4405 = vshrl.u32 %v4404, 7
        %v4406 = vsub.s32 %v4403, %v4405
        %v4407 = vrot.slane %v4392, %v4406
        %v4408 = vcombine.low %v4400, %v4407
        %v4409 = vld [vmem:[#allocation11] sm:$0xff]
        %v4410 = vld [vmem:[#allocation11 + $0x8] sm:$0xff]
        %v4411 = vld [vmem:[#allocation11 + $0x10] sm:$0xff]
        %v4412 = vld [vmem:[#allocation11 + $0x18] sm:$0xff]
        %v4413 = vld [vmem:[#allocation11 + $0x20] sm:$0xff]
        %v4414 = vld [vmem:[#allocation11 + $0x28] sm:$0xff]
        %v4415 = vld [vmem:[#allocation11 + $0x30] sm:$0xff]
        %v4416 = vld [vmem:[#allocation11 + $0x38] sm:$0xff]
        %v4417 = vld [vmem:[#allocation11 + $0x40] sm:$0xff]
        %v4418 = vld [vmem:[#allocation11 + $0x48] sm:$0xff]
        %v4419 = vld [vmem:[#allocation11 + $0x50] sm:$0xff]
        %v4420 = vld [vmem:[#allocation11 + $0x58] sm:$0xff]
        %v4421 = vld [vmem:[#allocation11 + $0x60] sm:$0xff]
        %v4422 = vld [vmem:[#allocation11 + $0x68] sm:$0xff]
        %v4423 = vld [vmem:[#allocation11 + $0x70] sm:$0xff]
        %v4424 = vld [vmem:[#allocation11 + $0x78] sm:$0xff]
        %v4425 = vld [vmem:[#allocation11 + $0x80] sm:$0xff]
        %v4426 = vld [vmem:[#allocation11 + $0x88] sm:$0xff]
        %v4427 = vld [vmem:[#allocation11 + $0x90] sm:$0xff]
        %v4428 = vld [vmem:[#allocation11 + $0x98] sm:$0xff]
        %v4429 = vld [vmem:[#allocation11 + $0xa0] sm:$0xff]
        %v4430 = vld [vmem:[#allocation11 + $0xa8] sm:$0xff]
        %v4431 = vld [vmem:[#allocation11 + $0xb0] sm:$0xff]
        %v4432 = vld [vmem:[#allocation11 + $0xb8] sm:$0xff]
        %v4433 = vld [vmem:[#allocation11 + $0xc0] sm:$0xff]
        %v4434 = vld [vmem:[#allocation11 + $0xc8] sm:$0xff]
        %v4435 = vld [vmem:[#allocation11 + $0xd0] sm:$0xff]
        %v4436 = vld [vmem:[#allocation11 + $0xd8] sm:$0xff]
        %v4437 = vld [vmem:[#allocation11 + $0xe0] sm:$0xff]
        %v4438 = vld [vmem:[#allocation11 + $0xe8] sm:$0xff]
        %v4439 = vld [vmem:[#allocation11 + $0xf0] sm:$0xff]
        %v4440 = vld [vmem:[#allocation11 + $0xf8] sm:$0xff]
        %v4441 = vld [vmem:[#allocation11 + $0x100] sm:$0xff]
        %v4442 = vld [vmem:[#allocation11 + $0x108] sm:$0xff]
        %v4443 = vld [vmem:[#allocation11 + $0x110] sm:$0xff]
        %v4444 = vld [vmem:[#allocation11 + $0x118] sm:$0xff]
        %v4445 = vld [vmem:[#allocation11 + $0x120] sm:$0xff]
        %v4446 = vld [vmem:[#allocation11 + $0x128] sm:$0xff]
        %v4447 = vld [vmem:[#allocation11 + $0x130] sm:$0xff]
        %v4448 = vld [vmem:[#allocation11 + $0x138] sm:$0xff]
        %v4449 = vld [vmem:[#allocation11 + $0x140] sm:$0xff]
        %v4450 = vld [vmem:[#allocation11 + $0x148] sm:$0xff]
        %v4451 = vld [vmem:[#allocation11 + $0x150] sm:$0xff]
        %v4452 = vld [vmem:[#allocation11 + $0x158] sm:$0xff]
        %v4453 = vld [vmem:[#allocation11 + $0x160] sm:$0xff]
        %v4454 = vld [vmem:[#allocation11 + $0x168] sm:$0xff]
        %v4455 = vld [vmem:[#allocation11 + $0x170] sm:$0xff]
        %v4456 = vld [vmem:[#allocation11 + $0x178] sm:$0xff]
        %v4457 = vld [vmem:[#allocation11 + $0x180] sm:$0xff]
        %v4458 = vld [vmem:[#allocation11 + $0x188] sm:$0xff]
        %v4459 = vld [vmem:[#allocation11 + $0x190] sm:$0xff]
        %v4460 = vld [vmem:[#allocation11 + $0x198] sm:$0xff]
        %v4461 = vld [vmem:[#allocation11 + $0x1a0] sm:$0xff]
        %v4462 = vld [vmem:[#allocation11 + $0x1a8] sm:$0xff]
        %v4463 = vld [vmem:[#allocation11 + $0x1b0] sm:$0xff]
        %v4464 = vld [vmem:[#allocation11 + $0x1b8] sm:$0xff]
        %v4465 = vld [vmem:[#allocation11 + $0x1c0] sm:$0xff]
        %v4466 = vld [vmem:[#allocation11 + $0x1c8] sm:$0xff]
        %v4467 = vld [vmem:[#allocation11 + $0x1d0] sm:$0xff]
        %v4468 = vld [vmem:[#allocation11 + $0x1d8] sm:$0xff]
        %v4469 = vld [vmem:[#allocation11 + $0x1e0] sm:$0xff]
        %v4470 = vld [vmem:[#allocation11 + $0x1e8] sm:$0xff]
        %v4471 = vld [vmem:[#allocation11 + $0x1f0] sm:$0xff]
        %v4472 = vld [vmem:[#allocation11 + $0x1f8] sm:$0xff]
        %v4473 = vld [vmem:[#allocation11 + $0x200] sm:$0xff]
        %v4474 = vld [vmem:[#allocation11 + $0x208] sm:$0xff]
        %v4475 = vld [vmem:[#allocation11 + $0x210] sm:$0xff]
        %v4476 = vld [vmem:[#allocation11 + $0x218] sm:$0xff]
        %v4477 = vld [vmem:[#allocation11 + $0x220] sm:$0xff]
        %v4478 = vld [vmem:[#allocation11 + $0x228] sm:$0xff]
        %v4479 = vld [vmem:[#allocation11 + $0x230] sm:$0xff]
        %v4480 = vld [vmem:[#allocation11 + $0x238] sm:$0xff]
        %v4481 = vld [vmem:[#allocation11 + $0x240] sm:$0xff]
        %v4482 = vld [vmem:[#allocation11 + $0x248] sm:$0xff]
        %v4483 = vld [vmem:[#allocation11 + $0x250] sm:$0xff]
        %v4484 = vld [vmem:[#allocation11 + $0x258] sm:$0xff]
        %v4485 = vld [vmem:[#allocation11 + $0x260] sm:$0xff]
        %v4486 = vld [vmem:[#allocation11 + $0x268] sm:$0xff]
        %v4487 = vld [vmem:[#allocation11 + $0x270] sm:$0xff]
        %v4488 = vld [vmem:[#allocation11 + $0x278] sm:$0xff]
        %v4489 = vld [vmem:[#allocation11 + $0x280] sm:$0xff]
        %v4490 = vld [vmem:[#allocation11 + $0x288] sm:$0xff]
        %v4491 = vld [vmem:[#allocation11 + $0x290] sm:$0xff]
        %v4492 = vld [vmem:[#allocation11 + $0x298] sm:$0xff]
        %v4493 = vld [vmem:[#allocation11 + $0x2a0] sm:$0xff]
        %v4494 = vld [vmem:[#allocation11 + $0x2a8] sm:$0xff]
        %v4495 = vld [vmem:[#allocation11 + $0x2b0] sm:$0xff]
        %v4496 = vld [vmem:[#allocation11 + $0x2b8] sm:$0xff]
        %v4497 = vld [vmem:[#allocation11 + $0x2c0] sm:$0xff]
        %v4498 = vld [vmem:[#allocation11 + $0x2c8] sm:$0xff]
        %v4499 = vld [vmem:[#allocation11 + $0x2d0] sm:$0xff]
        %v4500 = vld [vmem:[#allocation11 + $0x2d8] sm:$0xff]
        %v4501 = vld [vmem:[#allocation11 + $0x2e0] sm:$0xff]
        %v4502 = vld [vmem:[#allocation11 + $0x2e8] sm:$0xff]
        %v4503 = vld [vmem:[#allocation11 + $0x2f0] sm:$0xff]
        %v4504 = vld [vmem:[#allocation11 + $0x2f8] sm:$0xff]
        %v4505 = vld [vmem:[#allocation11 + $0x300] sm:$0xff]
        %v4506 = vld [vmem:[#allocation11 + $0x308] sm:$0xff]
        %v4507 = vld [vmem:[#allocation11 + $0x310] sm:$0xff]
        %v4508 = vld [vmem:[#allocation11 + $0x318] sm:$0xff]
        %v4509 = vld [vmem:[#allocation11 + $0x320] sm:$0xff]
        %v4510 = vld [vmem:[#allocation11 + $0x328] sm:$0xff]
        %v4511 = vld [vmem:[#allocation11 + $0x330] sm:$0xff]
        %v4512 = vld [vmem:[#allocation11 + $0x338] sm:$0xff]
        %v4513 = vld [vmem:[#allocation11 + $0x340] sm:$0xff]
        %v4514 = vld [vmem:[#allocation11 + $0x348] sm:$0xff]
        %v4515 = vld [vmem:[#allocation11 + $0x350] sm:$0xff]
        %v4516 = vld [vmem:[#allocation11 + $0x358] sm:$0xff]
        %v4517 = vld [vmem:[#allocation11 + $0x360] sm:$0xff]
        %v4518 = vld [vmem:[#allocation11 + $0x368] sm:$0xff]
        %v4519 = vld [vmem:[#allocation11 + $0x370] sm:$0xff]
        %v4520 = vld [vmem:[#allocation11 + $0x378] sm:$0xff]
        %v4521 = vld [vmem:[#allocation11 + $0x380] sm:$0xff]
        %v4522 = vld [vmem:[#allocation11 + $0x388] sm:$0xff]
        %v4523 = vld [vmem:[#allocation11 + $0x390] sm:$0xff]
        %v4524 = vld [vmem:[#allocation11 + $0x398] sm:$0xff]
        %v4525 = vld [vmem:[#allocation11 + $0x3a0] sm:$0xff]
        %v4526 = vld [vmem:[#allocation11 + $0x3a8] sm:$0xff]
        %v4527 = vld [vmem:[#allocation11 + $0x3b0] sm:$0xff]
        %v4528 = vld [vmem:[#allocation11 + $0x3b8] sm:$0xff]
        %v4529 = vld [vmem:[#allocation11 + $0x3c0] sm:$0xff]
        %v4530 = vld [vmem:[#allocation11 + $0x3c8] sm:$0xff]
        %v4531 = vld [vmem:[#allocation11 + $0x3d0] sm:$0xff]
        %v4532 = vld [vmem:[#allocation11 + $0x3d8] sm:$0xff]
        %v4533 = vld [vmem:[#allocation11 + $0x3e0] sm:$0xff]
        %v4534 = vld [vmem:[#allocation11 + $0x3e8] sm:$0xff]
        %v4535 = vld [vmem:[#allocation11 + $0x3f0] sm:$0xff]
        %v4536 = vld [vmem:[#allocation11 + $0x3f8] sm:$0xff]
        %v4537 = vld [vmem:[#allocation11 + $0x400] sm:$0xff]
        %v4538 = vld [vmem:[#allocation11 + $0x408] sm:$0xff]
        %v4539 = vld [vmem:[#allocation11 + $0x410] sm:$0xff]
        %v4540 = vld [vmem:[#allocation11 + $0x418] sm:$0xff]
        %v4541 = vld [vmem:[#allocation11 + $0x420] sm:$0xff]
        %v4542 = vld [vmem:[#allocation11 + $0x428] sm:$0xff]
        %v4543 = vld [vmem:[#allocation11 + $0x430] sm:$0xff]
        %v4544 = vld [vmem:[#allocation11 + $0x438] sm:$0xff]
        %v4545 = vld [vmem:[#allocation11 + $0x440] sm:$0xff]
        %v4546 = vld [vmem:[#allocation11 + $0x448] sm:$0xff]
        %v4547 = vld [vmem:[#allocation11 + $0x450] sm:$0xff]
        %v4548 = vld [vmem:[#allocation11 + $0x458] sm:$0xff]
        %v4549 = vld [vmem:[#allocation11 + $0x460] sm:$0xff]
        %v4550 = vld [vmem:[#allocation11 + $0x468] sm:$0xff]
        %v4551 = vld [vmem:[#allocation11 + $0x470] sm:$0xff]
        %v4552 = vld [vmem:[#allocation11 + $0x478] sm:$0xff]
        %v4553 = vld [vmem:[#allocation11 + $0x480] sm:$0xff]
        %v4554 = vld [vmem:[#allocation11 + $0x488] sm:$0xff]
        %v4555 = vld [vmem:[#allocation11 + $0x490] sm:$0xff]
        %v4556 = vld [vmem:[#allocation11 + $0x498] sm:$0xff]
        %v4557 = vld [vmem:[#allocation11 + $0x4a0] sm:$0xff]
        %v4558 = vld [vmem:[#allocation11 + $0x4a8] sm:$0xff]
        %v4559 = vld [vmem:[#allocation11 + $0x4b0] sm:$0xff]
        %v4560 = vld [vmem:[#allocation11 + $0x4b8] sm:$0xff]
        %v4561 = vld [vmem:[#allocation11 + $0x4c0] sm:$0xff]
        %v4562 = vld [vmem:[#allocation11 + $0x4c8] sm:$0xff]
        %v4563 = vld [vmem:[#allocation11 + $0x4d0] sm:$0xff]
        %v4564 = vld [vmem:[#allocation11 + $0x4d8] sm:$0xff]
        %v4565 = vld [vmem:[#allocation11 + $0x4e0] sm:$0xff]
        %v4566 = vld [vmem:[#allocation11 + $0x4e8] sm:$0xff]
        %v4567 = vld [vmem:[#allocation11 + $0x4f0] sm:$0xff]
        %v4568 = vld [vmem:[#allocation11 + $0x4f8] sm:$0xff]
        %v4569 = vld [vmem:[#allocation11 + $0x500] sm:$0xff]
        %v4570 = vld [vmem:[#allocation11 + $0x508] sm:$0xff]
        %v4571 = vld [vmem:[#allocation11 + $0x510] sm:$0xff]
        %v4572 = vld [vmem:[#allocation11 + $0x518] sm:$0xff]
        %v4573 = vld [vmem:[#allocation11 + $0x520] sm:$0xff]
        %v4574 = vld [vmem:[#allocation11 + $0x528] sm:$0xff]
        %v4575 = vld [vmem:[#allocation11 + $0x530] sm:$0xff]
        %v4576 = vld [vmem:[#allocation11 + $0x538] sm:$0xff]
        %v4577 = vld [vmem:[#allocation11 + $0x540] sm:$0xff]
        %v4578 = vld [vmem:[#allocation11 + $0x548] sm:$0xff]
        %v4579 = vld [vmem:[#allocation11 + $0x550] sm:$0xff]
        %v4580 = vld [vmem:[#allocation11 + $0x558] sm:$0xff]
        %v4581 = vld [vmem:[#allocation11 + $0x560] sm:$0xff]
        %v4582 = vld [vmem:[#allocation11 + $0x568] sm:$0xff]
        %v4583 = vld [vmem:[#allocation11 + $0x570] sm:$0xff]
        %v4584 = vld [vmem:[#allocation11 + $0x578] sm:$0xff]
        %v4585 = vld [vmem:[#allocation11 + $0x580] sm:$0xff]
        %v4586 = vld [vmem:[#allocation11 + $0x588] sm:$0xff]
        %v4587 = vld [vmem:[#allocation11 + $0x590] sm:$0xff]
        %v4588 = vld [vmem:[#allocation11 + $0x598] sm:$0xff]
        %v4589 = vld [vmem:[#allocation11 + $0x5a0] sm:$0xff]
        %v4590 = vld [vmem:[#allocation11 + $0x5a8] sm:$0xff]
        %v4591 = vld [vmem:[#allocation11 + $0x5b0] sm:$0xff]
        %v4592 = vld [vmem:[#allocation11 + $0x5b8] sm:$0xff]
        %v4593 = vld [vmem:[#allocation11 + $0x5c0] sm:$0xff]
        %v4594 = vld [vmem:[#allocation11 + $0x5c8] sm:$0xff]
        %v4595 = vld [vmem:[#allocation11 + $0x5d0] sm:$0xff]
        %v4596 = vld [vmem:[#allocation11 + $0x5d8] sm:$0xff]
        %v4597 = vld [vmem:[#allocation11 + $0x5e0] sm:$0xff]
        %v4598 = vld [vmem:[#allocation11 + $0x5e8] sm:$0xff]
        %v4599 = vld [vmem:[#allocation11 + $0x5f0] sm:$0xff]
        %v4600 = vld [vmem:[#allocation11 + $0x5f8] sm:$0xff]
        %v4601 = vld [vmem:[#allocation11 + $0x600] sm:$0xff]
        %v4602 = vld [vmem:[#allocation11 + $0x608] sm:$0xff]
        %v4603 = vld [vmem:[#allocation11 + $0x610] sm:$0xff]
        %v4604 = vld [vmem:[#allocation11 + $0x618] sm:$0xff]
        %v4605 = vld [vmem:[#allocation11 + $0x620] sm:$0xff]
        %v4606 = vld [vmem:[#allocation11 + $0x628] sm:$0xff]
        %v4607 = vld [vmem:[#allocation11 + $0x630] sm:$0xff]
        %v4608 = vld [vmem:[#allocation11 + $0x638] sm:$0xff]
        %v4609 = vld [vmem:[#allocation11 + $0x640] sm:$0xff]
        %v4610 = vld [vmem:[#allocation11 + $0x648] sm:$0xff]
        %v4611 = vld [vmem:[#allocation11 + $0x650] sm:$0xff]
        %v4612 = vld [vmem:[#allocation11 + $0x658] sm:$0xff]
        %v4613 = vld [vmem:[#allocation11 + $0x660] sm:$0xff]
        %v4614 = vld [vmem:[#allocation11 + $0x668] sm:$0xff]
        %v4615 = vld [vmem:[#allocation11 + $0x670] sm:$0xff]
        %v4616 = vld [vmem:[#allocation11 + $0x678] sm:$0xff]
        %v4617 = vld [vmem:[#allocation11 + $0x680] sm:$0xff]
        %v4618 = vld [vmem:[#allocation11 + $0x688] sm:$0xff]
        %v4619 = vld [vmem:[#allocation11 + $0x690] sm:$0xff]
        %v4620 = vld [vmem:[#allocation11 + $0x698] sm:$0xff]
        %v4621 = vld [vmem:[#allocation11 + $0x6a0] sm:$0xff]
        %v4622 = vld [vmem:[#allocation11 + $0x6a8] sm:$0xff]
        %v4623 = vld [vmem:[#allocation11 + $0x6b0] sm:$0xff]
        %v4624 = vld [vmem:[#allocation11 + $0x6b8] sm:$0xff]
        %v4625 = vld [vmem:[#allocation11 + $0x6c0] sm:$0xff]
        %v4626 = vld [vmem:[#allocation11 + $0x6c8] sm:$0xff]
        %v4627 = vld [vmem:[#allocation11 + $0x6d0] sm:$0xff]
        %v4628 = vld [vmem:[#allocation11 + $0x6d8] sm:$0xff]
        %v4629 = vld [vmem:[#allocation11 + $0x6e0] sm:$0xff]
        %v4630 = vld [vmem:[#allocation11 + $0x6e8] sm:$0xff]
        %v4631 = vld [vmem:[#allocation11 + $0x6f0] sm:$0xff]
        %v4632 = vld [vmem:[#allocation11 + $0x6f8] sm:$0xff]
        %v4633 = vld [vmem:[#allocation11 + $0x700] sm:$0xff]
        %v4634 = vld [vmem:[#allocation11 + $0x708] sm:$0xff]
        %v4635 = vld [vmem:[#allocation11 + $0x710] sm:$0xff]
        %v4636 = vld [vmem:[#allocation11 + $0x718] sm:$0xff]
        %v4637 = vld [vmem:[#allocation11 + $0x720] sm:$0xff]
        %v4638 = vld [vmem:[#allocation11 + $0x728] sm:$0xff]
        %v4639 = vld [vmem:[#allocation11 + $0x730] sm:$0xff]
        %v4640 = vld [vmem:[#allocation11 + $0x738] sm:$0xff]
        %v4641 = vld [vmem:[#allocation11 + $0x740] sm:$0xff]
        %v4642 = vld [vmem:[#allocation11 + $0x748] sm:$0xff]
        %v4643 = vld [vmem:[#allocation11 + $0x750] sm:$0xff]
        %v4644 = vld [vmem:[#allocation11 + $0x758] sm:$0xff]
        %v4645 = vld [vmem:[#allocation11 + $0x760] sm:$0xff]
        %v4646 = vld [vmem:[#allocation11 + $0x768] sm:$0xff]
        %v4647 = vld [vmem:[#allocation11 + $0x770] sm:$0xff]
        %v4648 = vld [vmem:[#allocation11 + $0x778] sm:$0xff]
        %v4649 = vld [vmem:[#allocation11 + $0x780] sm:$0xff]
        %v4650 = vld [vmem:[#allocation11 + $0x788] sm:$0xff]
        %v4651 = vld [vmem:[#allocation11 + $0x790] sm:$0xff]
        %v4652 = vld [vmem:[#allocation11 + $0x798] sm:$0xff]
        %v4653 = vld [vmem:[#allocation11 + $0x7a0] sm:$0xff]
        %v4654 = vld [vmem:[#allocation11 + $0x7a8] sm:$0xff]
        %v4655 = vld [vmem:[#allocation11 + $0x7b0] sm:$0xff]
        %v4656 = vld [vmem:[#allocation11 + $0x7b8] sm:$0xff]
        %v4657 = vld [vmem:[#allocation11 + $0x7c0] sm:$0xff]
        %v4658 = vld [vmem:[#allocation11 + $0x7c8] sm:$0xff]
        %v4659 = vld [vmem:[#allocation11 + $0x7d0] sm:$0xff]
        %v4660 = vld [vmem:[#allocation11 + $0x7d8] sm:$0xff]
        %v4661 = vld [vmem:[#allocation11 + $0x7e0] sm:$0xff]
        %v4662 = vld [vmem:[#allocation11 + $0x7e8] sm:$0xff]
        %v4663 = vld [vmem:[#allocation11 + $0x7f0] sm:$0xff]
        %v4664 = vld [vmem:[#allocation11 + $0x7f8] sm:$0xff]
        %v4665 = vld [vmem:[#allocation11 + $0x800] sm:$0xff]
        %v4666 = vld [vmem:[#allocation11 + $0x808] sm:$0xff]
        %v4667 = vld [vmem:[#allocation11 + $0x810] sm:$0xff]
        %v4668 = vld [vmem:[#allocation11 + $0x818] sm:$0xff]
        %v4669 = vld [vmem:[#allocation11 + $0x820] sm:$0xff]
        %v4670 = vld [vmem:[#allocation11 + $0x828] sm:$0xff]
        %v4671 = vld [vmem:[#allocation11 + $0x830] sm:$0xff]
        %v4672 = vld [vmem:[#allocation11 + $0x838] sm:$0xff]
        %v4673 = vld [vmem:[#allocation11 + $0x840] sm:$0xff]
        %v4674 = vld [vmem:[#allocation11 + $0x848] sm:$0xff]
        %v4675 = vld [vmem:[#allocation11 + $0x850] sm:$0xff]
        %v4676 = vld [vmem:[#allocation11 + $0x858] sm:$0xff]
        %v4677 = vld [vmem:[#allocation11 + $0x860] sm:$0xff]
        %v4678 = vld [vmem:[#allocation11 + $0x868] sm:$0xff]
        %v4679 = vld [vmem:[#allocation11 + $0x870] sm:$0xff]
        %v4680 = vld [vmem:[#allocation11 + $0x878] sm:$0xff]
        %v4681 = vld [vmem:[#allocation11 + $0x880] sm:$0xff]
        %v4682 = vld [vmem:[#allocation11 + $0x888] sm:$0xff]
        %v4683 = vld [vmem:[#allocation11 + $0x890] sm:$0xff]
        %v4684 = vld [vmem:[#allocation11 + $0x898] sm:$0xff]
        %v4685 = vld [vmem:[#allocation11 + $0x8a0] sm:$0xff]
        %v4686 = vld [vmem:[#allocation11 + $0x8a8] sm:$0xff]
        %v4687 = vld [vmem:[#allocation11 + $0x8b0] sm:$0xff]
        %v4688 = vld [vmem:[#allocation11 + $0x8b8] sm:$0xff]
        %v4689 = vld [vmem:[#allocation11 + $0x8c0] sm:$0xff]
        %v4690 = vld [vmem:[#allocation11 + $0x8c8] sm:$0xff]
        %v4691 = vld [vmem:[#allocation11 + $0x8d0] sm:$0xff]
        %v4692 = vld [vmem:[#allocation11 + $0x8d8] sm:$0xff]
        %v4693 = vld [vmem:[#allocation11 + $0x8e0] sm:$0xff]
        %v4694 = vld [vmem:[#allocation11 + $0x8e8] sm:$0xff]
        %v4695 = vld [vmem:[#allocation11 + $0x8f0] sm:$0xff]
        %v4696 = vld [vmem:[#allocation11 + $0x8f8] sm:$0xff]
        %v4697 = vld [vmem:[#allocation11 + $0x900] sm:$0xff]
        %v4698 = vld [vmem:[#allocation11 + $0x908] sm:$0xff]
        %v4699 = vld [vmem:[#allocation11 + $0x910] sm:$0xff]
        %v4700 = vld [vmem:[#allocation11 + $0x918] sm:$0xff]
        %v4701 = vld [vmem:[#allocation11 + $0x920] sm:$0xff]
        %v4702 = vld [vmem:[#allocation11 + $0x928] sm:$0xff]
        %v4703 = vld [vmem:[#allocation11 + $0x930] sm:$0xff]
        %v4704 = vld [vmem:[#allocation11 + $0x938] sm:$0xff]
        %v4705 = vld [vmem:[#allocation11 + $0x940] sm:$0xff]
        %v4706 = vld [vmem:[#allocation11 + $0x948] sm:$0xff]
        %v4707 = vld [vmem:[#allocation11 + $0x950] sm:$0xff]
        %v4708 = vld [vmem:[#allocation11 + $0x958] sm:$0xff]
        %v4709 = vld [vmem:[#allocation11 + $0x960] sm:$0xff]
        %v4710 = vld [vmem:[#allocation11 + $0x968] sm:$0xff]
        %v4711 = vld [vmem:[#allocation11 + $0x970] sm:$0xff]
        %v4712 = vld [vmem:[#allocation11 + $0x978] sm:$0xff]
        %v4713 = vld [vmem:[#allocation11 + $0x980] sm:$0xff]
        %v4714 = vld [vmem:[#allocation11 + $0x988] sm:$0xff]
        %v4715 = vld [vmem:[#allocation11 + $0x990] sm:$0xff]
        %v4716 = vld [vmem:[#allocation11 + $0x998] sm:$0xff]
        %v4717 = vld [vmem:[#allocation11 + $0x9a0] sm:$0xff]
        %v4718 = vld [vmem:[#allocation11 + $0x9a8] sm:$0xff]
        %v4719 = vld [vmem:[#allocation11 + $0x9b0] sm:$0xff]
        %v4720 = vld [vmem:[#allocation11 + $0x9b8] sm:$0xff]
        %v4721 = vld [vmem:[#allocation11 + $0x9c0] sm:$0xff]
        %v4722 = vld [vmem:[#allocation11 + $0x9c8] sm:$0xff]
        %v4723 = vld [vmem:[#allocation11 + $0x9d0] sm:$0xff]
        %v4724 = vld [vmem:[#allocation11 + $0x9d8] sm:$0xff]
        %v4725 = vld [vmem:[#allocation11 + $0x9e0] sm:$0xff]
        %v4726 = vld [vmem:[#allocation11 + $0x9e8] sm:$0xff]
        %v4727 = vld [vmem:[#allocation11 + $0x9f0] sm:$0xff]
        %v4728 = vld [vmem:[#allocation11 + $0x9f8] sm:$0xff]
        %v4729 = vld [vmem:[#allocation11 + $0xa00] sm:$0xff]
        %v4730 = vld [vmem:[#allocation11 + $0xa08] sm:$0xff]
        %v4731 = vld [vmem:[#allocation11 + $0xa10] sm:$0xff]
        %v4732 = vld [vmem:[#allocation11 + $0xa18] sm:$0xff]
        %v4733 = vld [vmem:[#allocation11 + $0xa20] sm:$0xff]
        %v4734 = vld [vmem:[#allocation11 + $0xa28] sm:$0xff]
        %v4735 = vld [vmem:[#allocation11 + $0xa30] sm:$0xff]
        %v4736 = vld [vmem:[#allocation11 + $0xa38] sm:$0xff]
        %v4737 = vld [vmem:[#allocation11 + $0xa40] sm:$0xff]
        %v4738 = vld [vmem:[#allocation11 + $0xa48] sm:$0xff]
        %v4739 = vld [vmem:[#allocation11 + $0xa50] sm:$0xff]
        %v4740 = vld [vmem:[#allocation11 + $0xa58] sm:$0xff]
        %v4741 = vld [vmem:[#allocation11 + $0xa60] sm:$0xff]
        %v4742 = vld [vmem:[#allocation11 + $0xa68] sm:$0xff]
        %v4743 = vld [vmem:[#allocation11 + $0xa70] sm:$0xff]
        %v4744 = vld [vmem:[#allocation11 + $0xa78] sm:$0xff]
        %v4745 = vld [vmem:[#allocation11 + $0xa80] sm:$0xff]
        %v4746 = vld [vmem:[#allocation11 + $0xa88] sm:$0xff]
        %v4747 = vld [vmem:[#allocation11 + $0xa90] sm:$0xff]
        %v4748 = vld [vmem:[#allocation11 + $0xa98] sm:$0xff]
        %v4749 = vld [vmem:[#allocation11 + $0xaa0] sm:$0xff]
        %v4750 = vld [vmem:[#allocation11 + $0xaa8] sm:$0xff]
        %v4751 = vld [vmem:[#allocation11 + $0xab0] sm:$0xff]
        %v4752 = vld [vmem:[#allocation11 + $0xab8] sm:$0xff]
        %v4753 = vld [vmem:[#allocation11 + $0xac0] sm:$0xff]
        %v4754 = vld [vmem:[#allocation11 + $0xac8] sm:$0xff]
        %v4755 = vld [vmem:[#allocation11 + $0xad0] sm:$0xff]
        %v4756 = vld [vmem:[#allocation11 + $0xad8] sm:$0xff]
        %v4757 = vld [vmem:[#allocation11 + $0xae0] sm:$0xff]
        %v4758 = vld [vmem:[#allocation11 + $0xae8] sm:$0xff]
        %v4759 = vld [vmem:[#allocation11 + $0xaf0] sm:$0xff]
        %v4760 = vld [vmem:[#allocation11 + $0xaf8] sm:$0xff]
        %v4761 = vld [vmem:[#allocation11 + $0xb00] sm:$0xff]
        %v4762 = vld [vmem:[#allocation11 + $0xb08] sm:$0xff]
        %v4763 = vld [vmem:[#allocation11 + $0xb10] sm:$0xff]
        %v4764 = vld [vmem:[#allocation11 + $0xb18] sm:$0xff]
        %v4765 = vld [vmem:[#allocation11 + $0xb20] sm:$0xff]
        %v4766 = vld [vmem:[#allocation11 + $0xb28] sm:$0xff]
        %v4767 = vld [vmem:[#allocation11 + $0xb30] sm:$0xff]
        %v4768 = vld [vmem:[#allocation11 + $0xb38] sm:$0xff]
        %v4769 = vld [vmem:[#allocation11 + $0xb40] sm:$0xff]
        %v4770 = vld [vmem:[#allocation11 + $0xb48] sm:$0xff]
        %v4771 = vld [vmem:[#allocation11 + $0xb50] sm:$0xff]
        %v4772 = vld [vmem:[#allocation11 + $0xb58] sm:$0xff]
        %v4773 = vld [vmem:[#allocation11 + $0xb60] sm:$0xff]
        %v4774 = vld [vmem:[#allocation11 + $0xb68] sm:$0xff]
        %v4775 = vld [vmem:[#allocation11 + $0xb70] sm:$0xff]
        %v4776 = vld [vmem:[#allocation11 + $0xb78] sm:$0xff]
        %v4777 = vld [vmem:[#allocation11 + $0xb80] sm:$0xff]
        %v4778 = vld [vmem:[#allocation11 + $0xb88] sm:$0xff]
        %v4779 = vld [vmem:[#allocation11 + $0xb90] sm:$0xff]
        %v4780 = vld [vmem:[#allocation11 + $0xb98] sm:$0xff]
        %v4781 = vld [vmem:[#allocation11 + $0xba0] sm:$0xff]
        %v4782 = vld [vmem:[#allocation11 + $0xba8] sm:$0xff]
        %v4783 = vld [vmem:[#allocation11 + $0xbb0] sm:$0xff]
        %v4784 = vld [vmem:[#allocation11 + $0xbb8] sm:$0xff]
        %v4785 = vld [vmem:[#allocation11 + $0xbc0] sm:$0xff]
        %v4786 = vld [vmem:[#allocation11 + $0xbc8] sm:$0xff]
        %v4787 = vld [vmem:[#allocation11 + $0xbd0] sm:$0xff]
        %v4788 = vld [vmem:[#allocation11 + $0xbd8] sm:$0xff]
        %v4789 = vld [vmem:[#allocation11 + $0xbe0] sm:$0xff]
        %v4790 = vld [vmem:[#allocation11 + $0xbe8] sm:$0xff]
        %v4791 = vld [vmem:[#allocation11 + $0xbf0] sm:$0xff]
        %v4792 = vld [vmem:[#allocation11 + $0xbf8] sm:$0xff]
        %v4793 = vld [vmem:[#allocation13] sm:$0xff]
        %v4795 = vlaneseq
        %v4796 = vshrl.u32 %v4795, 7
        %v4797 = vsub.s32 0, %v4796
        %v4798 = vrot.slane %v4793, %v4797
        %v4799 = vlaneseq
        %v4800 = vshrl.u32 %v4799, 7
        %v4801 = vsub.s32 1, %v4800
        %v4802 = vrot.slane %v4793, %v4801
        %v4803 = vlaneseq
        %v4804 = vshrl.u32 %v4803, 7
        %v4805 = vsub.s32 2, %v4804
        %v4806 = vrot.slane %v4793, %v4805
        %v4807 = vlaneseq
        %v4808 = vshrl.u32 %v4807, 7
        %v4809 = vsub.s32 3, %v4808
        %v4810 = vrot.slane %v4793, %v4809
        %v4811 = vlaneseq
        %v4812 = vshrl.u32 %v4811, 7
        %v4813 = vsub.s32 4, %v4812
        %v4814 = vrot.slane %v4793, %v4813
        %v4815 = vlaneseq
        %v4816 = vshrl.u32 %v4815, 7
        %v4817 = vsub.s32 5, %v4816
        %v4818 = vrot.slane %v4793, %v4817
        %v4819 = vlaneseq
        %v4820 = vshrl.u32 %v4819, 7
        %v4821 = vsub.s32 6, %v4820
        %v4822 = vrot.slane %v4793, %v4821
        %v4823 = vlaneseq
        %v4824 = vshrl.u32 %v4823, 7
        %v4825 = vsub.s32 7, %v4824
        %v4826 = vrot.slane %v4793, %v4825
        %v4835 = vcombine.low %v4368, %v4408
        %v4836 = vcombine.high %v4368, %v4408
        %v4838 = vunpack.c.l.s4 1966171168
        %v4839 = vunpack.c.0.s8 %v4838
        %v4840 = vlaneseq
        %v4841 = vshrl.u32 %v4840, 7
        %v4842 = vsub.s32 %v4839, %v4841
        %v4843 = vrot.slane %v4835, %v4842
        %v4845 = vunpack.c.l.s4 1966171168
        %v4846 = vunpack.c.0.s8 %v4845
        %v4847 = vlaneseq
        %v4848 = vshrl.u32 %v4847, 7
        %v4849 = vsub.s32 %v4846, %v4848
        %v4850 = vrot.slane %v4836, %v4849
        %v4851 = vcombine.high %v4843, %v4843
        %v4852 = vcombine.high %v4850, %v4850
        %v4854 = vunpack.c.l.s4 1966171168
        %v4855 = vunpack.c.0.s8 %v4854
        %v4856 = vlaneseq
        %v4857 = vshrl.u32 %v4856, 7
        %v4858 = vsub.s32 %v4855, %v4857
        %v4859 = vrot.slane %v4843, %v4858
        %v4861 = vunpack.c.l.s4 1966171168
        %v4862 = vunpack.c.0.s8 %v4861
        %v4863 = vlaneseq
        %v4864 = vshrl.u32 %v4863, 7
        %v4865 = vsub.s32 %v4862, %v4864
        %v4866 = vrot.slane %v4850, %v4865
        %v4868 = vunpack.c.l.s4 1966171168
        %v4869 = vunpack.c.0.s8 %v4868
        %v4870 = vlaneseq
        %v4871 = vshrl.u32 %v4870, 7
        %v4872 = vsub.s32 %v4869, %v4871
        %v4873 = vrot.slane %v4851, %v4872
        %v4875 = vunpack.c.l.s4 1966171168
        %v4876 = vunpack.c.0.s8 %v4875
        %v4877 = vlaneseq
        %v4878 = vshrl.u32 %v4877, 7
        %v4879 = vsub.s32 %v4876, %v4878
        %v4880 = vrot.slane %v4852, %v4879
        %v4881 = vcombine.high %v4859, %v4859
        %v4882 = vcombine.high %v4873, %v4873
        %v5273 = vunpack.c.l.b16 %v4409
        %v5274 = vunpack.c.h.b16 %v4409
        %v5275 = vunpack.c.l.b16 %v4410
        %v5276 = vunpack.c.h.b16 %v4410
        %v5277 = vunpack.c.l.b16 %v4411
        %v5278 = vunpack.c.h.b16 %v4411
        %v5279 = vunpack.c.l.b16 %v4412
        %v5280 = vunpack.c.h.b16 %v4412
        %v5281 = vunpack.c.l.b16 %v4413
        %v5282 = vunpack.c.h.b16 %v4413
        %v5283 = vunpack.c.l.b16 %v4414
        %v5284 = vunpack.c.h.b16 %v4414
        %v5285 = vunpack.c.l.b16 %v4415
        %v5286 = vunpack.c.h.b16 %v4415
        %v5287 = vunpack.c.l.b16 %v4416
        %v5288 = vunpack.c.h.b16 %v4416
        %v5289 = vunpack.c.l.b16 %v4417
        %v5290 = vunpack.c.h.b16 %v4417
        %v5291 = vunpack.c.l.b16 %v4418
        %v5292 = vunpack.c.h.b16 %v4418
        %v5293 = vunpack.c.l.b16 %v4419
        %v5294 = vunpack.c.h.b16 %v4419
        %v5295 = vunpack.c.l.b16 %v4420
        %v5296 = vunpack.c.h.b16 %v4420
        %v5297 = vunpack.c.l.b16 %v4421
        %v5298 = vunpack.c.h.b16 %v4421
        %v5299 = vunpack.c.l.b16 %v4422
        %v5300 = vunpack.c.h.b16 %v4422
        %v5301 = vunpack.c.l.b16 %v4423
        %v5302 = vunpack.c.h.b16 %v4423
        %v5303 = vunpack.c.l.b16 %v4424
        %v5304 = vunpack.c.h.b16 %v4424
        %v5305 = vunpack.c.l.b16 %v4425
        %v5306 = vunpack.c.h.b16 %v4425
        %v5307 = vunpack.c.l.b16 %v4426
        %v5308 = vunpack.c.h.b16 %v4426
        %v5309 = vunpack.c.l.b16 %v4427
        %v5310 = vunpack.c.h.b16 %v4427
        %v5311 = vunpack.c.l.b16 %v4428
        %v5312 = vunpack.c.h.b16 %v4428
        %v5313 = vunpack.c.l.b16 %v4429
        %v5314 = vunpack.c.h.b16 %v4429
        %v5315 = vunpack.c.l.b16 %v4430
        %v5316 = vunpack.c.h.b16 %v4430
        %v5317 = vunpack.c.l.b16 %v4431
        %v5318 = vunpack.c.h.b16 %v4431
        %v5319 = vunpack.c.l.b16 %v4432
        %v5320 = vunpack.c.h.b16 %v4432
        %v5321 = vunpack.c.l.b16 %v4433
        %v5322 = vunpack.c.h.b16 %v4433
        %v5323 = vunpack.c.l.b16 %v4434
        %v5324 = vunpack.c.h.b16 %v4434
        %v5325 = vunpack.c.l.b16 %v4435
        %v5326 = vunpack.c.h.b16 %v4435
        %v5327 = vunpack.c.l.b16 %v4436
        %v5328 = vunpack.c.h.b16 %v4436
        %v5329 = vunpack.c.l.b16 %v4437
        %v5330 = vunpack.c.h.b16 %v4437
        %v5331 = vunpack.c.l.b16 %v4438
        %v5332 = vunpack.c.h.b16 %v4438
        %v5333 = vunpack.c.l.b16 %v4439
        %v5334 = vunpack.c.h.b16 %v4439
        %v5335 = vunpack.c.l.b16 %v4440
        %v5336 = vunpack.c.h.b16 %v4440
        %v5337 = vunpack.c.l.b16 %v4441
        %v5338 = vunpack.c.h.b16 %v4441
        %v5339 = vunpack.c.l.b16 %v4442
        %v5340 = vunpack.c.h.b16 %v4442
        %v5341 = vunpack.c.l.b16 %v4443
        %v5342 = vunpack.c.h.b16 %v4443
        %v5343 = vunpack.c.l.b16 %v4444
        %v5344 = vunpack.c.h.b16 %v4444
        %v5345 = vunpack.c.l.b16 %v4445
        %v5346 = vunpack.c.h.b16 %v4445
        %v5347 = vunpack.c.l.b16 %v4446
        %v5348 = vunpack.c.h.b16 %v4446
        %v5349 = vunpack.c.l.b16 %v4447
        %v5350 = vunpack.c.h.b16 %v4447
        %v5351 = vunpack.c.l.b16 %v4448
        %v5352 = vunpack.c.h.b16 %v4448
        %v5353 = vunpack.c.l.b16 %v4449
        %v5354 = vunpack.c.h.b16 %v4449
        %v5355 = vunpack.c.l.b16 %v4450
        %v5356 = vunpack.c.h.b16 %v4450
        %v5357 = vunpack.c.l.b16 %v4451
        %v5358 = vunpack.c.h.b16 %v4451
        %v5359 = vunpack.c.l.b16 %v4452
        %v5360 = vunpack.c.h.b16 %v4452
        %v5361 = vunpack.c.l.b16 %v4453
        %v5362 = vunpack.c.h.b16 %v4453
        %v5363 = vunpack.c.l.b16 %v4454
        %v5364 = vunpack.c.h.b16 %v4454
        %v5365 = vunpack.c.l.b16 %v4455
        %v5366 = vunpack.c.h.b16 %v4455
        %v5367 = vunpack.c.l.b16 %v4456
        %v5368 = vunpack.c.h.b16 %v4456
        %v5369 = vunpack.c.l.b16 %v4457
        %v5370 = vunpack.c.h.b16 %v4457
        %v5371 = vunpack.c.l.b16 %v4458
        %v5372 = vunpack.c.h.b16 %v4458
        %v5373 = vunpack.c.l.b16 %v4459
        %v5374 = vunpack.c.h.b16 %v4459
        %v5375 = vunpack.c.l.b16 %v4460
        %v5376 = vunpack.c.h.b16 %v4460
        %v5377 = vunpack.c.l.b16 %v4461
        %v5378 = vunpack.c.h.b16 %v4461
        %v5379 = vunpack.c.l.b16 %v4462
        %v5380 = vunpack.c.h.b16 %v4462
        %v5381 = vunpack.c.l.b16 %v4463
        %v5382 = vunpack.c.h.b16 %v4463
        %v5383 = vunpack.c.l.b16 %v4464
        %v5384 = vunpack.c.h.b16 %v4464
        %v5385 = vunpack.c.l.b16 %v4465
        %v5386 = vunpack.c.h.b16 %v4465
        %v5387 = vunpack.c.l.b16 %v4466
        %v5388 = vunpack.c.h.b16 %v4466
        %v5389 = vunpack.c.l.b16 %v4467
        %v5390 = vunpack.c.h.b16 %v4467
        %v5391 = vunpack.c.l.b16 %v4468
        %v5392 = vunpack.c.h.b16 %v4468
        %v5393 = vunpack.c.l.b16 %v4469
        %v5394 = vunpack.c.h.b16 %v4469
        %v5395 = vunpack.c.l.b16 %v4470
        %v5396 = vunpack.c.h.b16 %v4470
        %v5397 = vunpack.c.l.b16 %v4471
        %v5398 = vunpack.c.h.b16 %v4471
        %v5399 = vunpack.c.l.b16 %v4472
        %v5400 = vunpack.c.h.b16 %v4472
        %v5401 = vunpack.c.l.b16 %v4473
        %v5402 = vunpack.c.h.b16 %v4473
        %v5403 = vunpack.c.l.b16 %v4474
        %v5404 = vunpack.c.h.b16 %v4474
        %v5405 = vunpack.c.l.b16 %v4475
        %v5406 = vunpack.c.h.b16 %v4475
        %v5407 = vunpack.c.l.b16 %v4476
        %v5408 = vunpack.c.h.b16 %v4476
        %v5409 = vunpack.c.l.b16 %v4477
        %v5410 = vunpack.c.h.b16 %v4477
        %v5411 = vunpack.c.l.b16 %v4478
        %v5412 = vunpack.c.h.b16 %v4478
        %v5413 = vunpack.c.l.b16 %v4479
        %v5414 = vunpack.c.h.b16 %v4479
        %v5415 = vunpack.c.l.b16 %v4480
        %v5416 = vunpack.c.h.b16 %v4480
        %v5417 = vunpack.c.l.b16 %v4481
        %v5418 = vunpack.c.h.b16 %v4481
        %v5419 = vunpack.c.l.b16 %v4482
        %v5420 = vunpack.c.h.b16 %v4482
        %v5421 = vunpack.c.l.b16 %v4483
        %v5422 = vunpack.c.h.b16 %v4483
        %v5423 = vunpack.c.l.b16 %v4484
        %v5424 = vunpack.c.h.b16 %v4484
        %v5425 = vunpack.c.l.b16 %v4485
        %v5426 = vunpack.c.h.b16 %v4485
        %v5427 = vunpack.c.l.b16 %v4486
        %v5428 = vunpack.c.h.b16 %v4486
        %v5429 = vunpack.c.l.b16 %v4487
        %v5430 = vunpack.c.h.b16 %v4487
        %v5431 = vunpack.c.l.b16 %v4488
        %v5432 = vunpack.c.h.b16 %v4488
        %v5433 = vunpack.c.l.b16 %v4489
        %v5434 = vunpack.c.h.b16 %v4489
        %v5435 = vunpack.c.l.b16 %v4490
        %v5436 = vunpack.c.h.b16 %v4490
        %v5437 = vunpack.c.l.b16 %v4491
        %v5438 = vunpack.c.h.b16 %v4491
        %v5439 = vunpack.c.l.b16 %v4492
        %v5440 = vunpack.c.h.b16 %v4492
        %v5441 = vunpack.c.l.b16 %v4493
        %v5442 = vunpack.c.h.b16 %v4493
        %v5443 = vunpack.c.l.b16 %v4494
        %v5444 = vunpack.c.h.b16 %v4494
        %v5445 = vunpack.c.l.b16 %v4495
        %v5446 = vunpack.c.h.b16 %v4495
        %v5447 = vunpack.c.l.b16 %v4496
        %v5448 = vunpack.c.h.b16 %v4496
        %v5449 = vunpack.c.l.b16 %v4497
        %v5450 = vunpack.c.h.b16 %v4497
        %v5451 = vunpack.c.l.b16 %v4498
        %v5452 = vunpack.c.h.b16 %v4498
        %v5453 = vunpack.c.l.b16 %v4499
        %v5454 = vunpack.c.h.b16 %v4499
        %v5455 = vunpack.c.l.b16 %v4500
        %v5456 = vunpack.c.h.b16 %v4500
        %v5457 = vunpack.c.l.b16 %v4501
        %v5458 = vunpack.c.h.b16 %v4501
        %v5459 = vunpack.c.l.b16 %v4502
        %v5460 = vunpack.c.h.b16 %v4502
        %v5461 = vunpack.c.l.b16 %v4503
        %v5462 = vunpack.c.h.b16 %v4503
        %v5463 = vunpack.c.l.b16 %v4504
        %v5464 = vunpack.c.h.b16 %v4504
        %v5465 = vunpack.c.l.b16 %v4505
        %v5466 = vunpack.c.h.b16 %v4505
        %v5467 = vunpack.c.l.b16 %v4506
        %v5468 = vunpack.c.h.b16 %v4506
        %v5469 = vunpack.c.l.b16 %v4507
        %v5470 = vunpack.c.h.b16 %v4507
        %v5471 = vunpack.c.l.b16 %v4508
        %v5472 = vunpack.c.h.b16 %v4508
        %v5473 = vunpack.c.l.b16 %v4509
        %v5474 = vunpack.c.h.b16 %v4509
        %v5475 = vunpack.c.l.b16 %v4510
        %v5476 = vunpack.c.h.b16 %v4510
        %v5477 = vunpack.c.l.b16 %v4511
        %v5478 = vunpack.c.h.b16 %v4511
        %v5479 = vunpack.c.l.b16 %v4512
        %v5480 = vunpack.c.h.b16 %v4512
        %v5481 = vunpack.c.l.b16 %v4513
        %v5482 = vunpack.c.h.b16 %v4513
        %v5483 = vunpack.c.l.b16 %v4514
        %v5484 = vunpack.c.h.b16 %v4514
        %v5485 = vunpack.c.l.b16 %v4515
        %v5486 = vunpack.c.h.b16 %v4515
        %v5487 = vunpack.c.l.b16 %v4516
        %v5488 = vunpack.c.h.b16 %v4516
        %v5489 = vunpack.c.l.b16 %v4517
        %v5490 = vunpack.c.h.b16 %v4517
        %v5491 = vunpack.c.l.b16 %v4518
        %v5492 = vunpack.c.h.b16 %v4518
        %v5493 = vunpack.c.l.b16 %v4519
        %v5494 = vunpack.c.h.b16 %v4519
        %v5495 = vunpack.c.l.b16 %v4520
        %v5496 = vunpack.c.h.b16 %v4520
        %v5497 = vunpack.c.l.b16 %v4521
        %v5498 = vunpack.c.h.b16 %v4521
        %v5499 = vunpack.c.l.b16 %v4522
        %v5500 = vunpack.c.h.b16 %v4522
        %v5501 = vunpack.c.l.b16 %v4523
        %v5502 = vunpack.c.h.b16 %v4523
        %v5503 = vunpack.c.l.b16 %v4524
        %v5504 = vunpack.c.h.b16 %v4524
        %v5505 = vunpack.c.l.b16 %v4525
        %v5506 = vunpack.c.h.b16 %v4525
        %v5507 = vunpack.c.l.b16 %v4526
        %v5508 = vunpack.c.h.b16 %v4526
        %v5509 = vunpack.c.l.b16 %v4527
        %v5510 = vunpack.c.h.b16 %v4527
        %v5511 = vunpack.c.l.b16 %v4528
        %v5512 = vunpack.c.h.b16 %v4528
        %v5513 = vunpack.c.l.b16 %v4529
        %v5514 = vunpack.c.h.b16 %v4529
        %v5515 = vunpack.c.l.b16 %v4530
        %v5516 = vunpack.c.h.b16 %v4530
        %v5517 = vunpack.c.l.b16 %v4531
        %v5518 = vunpack.c.h.b16 %v4531
        %v5519 = vunpack.c.l.b16 %v4532
        %v5520 = vunpack.c.h.b16 %v4532
        %v5521 = vunpack.c.l.b16 %v4533
        %v5522 = vunpack.c.h.b16 %v4533
        %v5523 = vunpack.c.l.b16 %v4534
        %v5524 = vunpack.c.h.b16 %v4534
        %v5525 = vunpack.c.l.b16 %v4535
        %v5526 = vunpack.c.h.b16 %v4535
        %v5527 = vunpack.c.l.b16 %v4536
        %v5528 = vunpack.c.h.b16 %v4536
        %v5529 = vunpack.c.l.b16 %v4537
        %v5530 = vunpack.c.h.b16 %v4537
        %v5531 = vunpack.c.l.b16 %v4538
        %v5532 = vunpack.c.h.b16 %v4538
        %v5533 = vunpack.c.l.b16 %v4539
        %v5534 = vunpack.c.h.b16 %v4539
        %v5535 = vunpack.c.l.b16 %v4540
        %v5536 = vunpack.c.h.b16 %v4540
        %v5537 = vunpack.c.l.b16 %v4541
        %v5538 = vunpack.c.h.b16 %v4541
        %v5539 = vunpack.c.l.b16 %v4542
        %v5540 = vunpack.c.h.b16 %v4542
        %v5541 = vunpack.c.l.b16 %v4543
        %v5542 = vunpack.c.h.b16 %v4543
        %v5543 = vunpack.c.l.b16 %v4544
        %v5544 = vunpack.c.h.b16 %v4544
        %v5545 = vunpack.c.l.b16 %v4545
        %v5546 = vunpack.c.h.b16 %v4545
        %v5547 = vunpack.c.l.b16 %v4546
        %v5548 = vunpack.c.h.b16 %v4546
        %v5549 = vunpack.c.l.b16 %v4547
        %v5550 = vunpack.c.h.b16 %v4547
        %v5551 = vunpack.c.l.b16 %v4548
        %v5552 = vunpack.c.h.b16 %v4548
        %v5553 = vunpack.c.l.b16 %v4549
        %v5554 = vunpack.c.h.b16 %v4549
        %v5555 = vunpack.c.l.b16 %v4550
        %v5556 = vunpack.c.h.b16 %v4550
        %v5557 = vunpack.c.l.b16 %v4551
        %v5558 = vunpack.c.h.b16 %v4551
        %v5559 = vunpack.c.l.b16 %v4552
        %v5560 = vunpack.c.h.b16 %v4552
        %v5561 = vunpack.c.l.b16 %v4553
        %v5562 = vunpack.c.h.b16 %v4553
        %v5563 = vunpack.c.l.b16 %v4554
        %v5564 = vunpack.c.h.b16 %v4554
        %v5565 = vunpack.c.l.b16 %v4555
        %v5566 = vunpack.c.h.b16 %v4555
        %v5567 = vunpack.c.l.b16 %v4556
        %v5568 = vunpack.c.h.b16 %v4556
        %v5569 = vunpack.c.l.b16 %v4557
        %v5570 = vunpack.c.h.b16 %v4557
        %v5571 = vunpack.c.l.b16 %v4558
        %v5572 = vunpack.c.h.b16 %v4558
        %v5573 = vunpack.c.l.b16 %v4559
        %v5574 = vunpack.c.h.b16 %v4559
        %v5575 = vunpack.c.l.b16 %v4560
        %v5576 = vunpack.c.h.b16 %v4560
        %v5577 = vunpack.c.l.b16 %v4561
        %v5578 = vunpack.c.h.b16 %v4561
        %v5579 = vunpack.c.l.b16 %v4562
        %v5580 = vunpack.c.h.b16 %v4562
        %v5581 = vunpack.c.l.b16 %v4563
        %v5582 = vunpack.c.h.b16 %v4563
        %v5583 = vunpack.c.l.b16 %v4564
        %v5584 = vunpack.c.h.b16 %v4564
        %v5585 = vunpack.c.l.b16 %v4565
        %v5586 = vunpack.c.h.b16 %v4565
        %v5587 = vunpack.c.l.b16 %v4566
        %v5588 = vunpack.c.h.b16 %v4566
        %v5589 = vunpack.c.l.b16 %v4567
        %v5590 = vunpack.c.h.b16 %v4567
        %v5591 = vunpack.c.l.b16 %v4568
        %v5592 = vunpack.c.h.b16 %v4568
        %v5593 = vunpack.c.l.b16 %v4569
        %v5594 = vunpack.c.h.b16 %v4569
        %v5595 = vunpack.c.l.b16 %v4570
        %v5596 = vunpack.c.h.b16 %v4570
        %v5597 = vunpack.c.l.b16 %v4571
        %v5598 = vunpack.c.h.b16 %v4571
        %v5599 = vunpack.c.l.b16 %v4572
        %v5600 = vunpack.c.h.b16 %v4572
        %v5601 = vunpack.c.l.b16 %v4573
        %v5602 = vunpack.c.h.b16 %v4573
        %v5603 = vunpack.c.l.b16 %v4574
        %v5604 = vunpack.c.h.b16 %v4574
        %v5605 = vunpack.c.l.b16 %v4575
        %v5606 = vunpack.c.h.b16 %v4575
        %v5607 = vunpack.c.l.b16 %v4576
        %v5608 = vunpack.c.h.b16 %v4576
        %v5609 = vunpack.c.l.b16 %v4577
        %v5610 = vunpack.c.h.b16 %v4577
        %v5611 = vunpack.c.l.b16 %v4578
        %v5612 = vunpack.c.h.b16 %v4578
        %v5613 = vunpack.c.l.b16 %v4579
        %v5614 = vunpack.c.h.b16 %v4579
        %v5615 = vunpack.c.l.b16 %v4580
        %v5616 = vunpack.c.h.b16 %v4580
        %v5617 = vunpack.c.l.b16 %v4581
        %v5618 = vunpack.c.h.b16 %v4581
        %v5619 = vunpack.c.l.b16 %v4582
        %v5620 = vunpack.c.h.b16 %v4582
        %v5621 = vunpack.c.l.b16 %v4583
        %v5622 = vunpack.c.h.b16 %v4583
        %v5623 = vunpack.c.l.b16 %v4584
        %v5624 = vunpack.c.h.b16 %v4584
        %v5625 = vunpack.c.l.b16 %v4585
        %v5626 = vunpack.c.h.b16 %v4585
        %v5627 = vunpack.c.l.b16 %v4586
        %v5628 = vunpack.c.h.b16 %v4586
        %v5629 = vunpack.c.l.b16 %v4587
        %v5630 = vunpack.c.h.b16 %v4587
        %v5631 = vunpack.c.l.b16 %v4588
        %v5632 = vunpack.c.h.b16 %v4588
        %v5633 = vunpack.c.l.b16 %v4589
        %v5634 = vunpack.c.h.b16 %v4589
        %v5635 = vunpack.c.l.b16 %v4590
        %v5636 = vunpack.c.h.b16 %v4590
        %v5637 = vunpack.c.l.b16 %v4591
        %v5638 = vunpack.c.h.b16 %v4591
        %v5639 = vunpack.c.l.b16 %v4592
        %v5640 = vunpack.c.h.b16 %v4592
        %v5641 = vunpack.c.l.b16 %v4593
        %v5642 = vunpack.c.h.b16 %v4593
        %v5643 = vunpack.c.l.b16 %v4594
        %v5644 = vunpack.c.h.b16 %v4594
        %v5645 = vunpack.c.l.b16 %v4595
        %v5646 = vunpack.c.h.b16 %v4595
        %v5647 = vunpack.c.l.b16 %v4596
        %v5648 = vunpack.c.h.b16 %v4596
        %v5649 = vunpack.c.l.b16 %v4597
        %v5650 = vunpack.c.h.b16 %v4597
        %v5651 = vunpack.c.l.b16 %v4598
        %v5652 = vunpack.c.h.b16 %v4598
        %v5653 = vunpack.c.l.b16 %v4599
        %v5654 = vunpack.c.h.b16 %v4599
        %v5655 = vunpack.c.l.b16 %v4600
        %v5656 = vunpack.c.h.b16 %v4600
        %v5657 = vunpack.c.l.b16 %v4601
        %v5658 = vunpack.c.h.b16 %v4601
        %v5659 = vunpack.c.l.b16 %v4602
        %v5660 = vunpack.c.h.b16 %v4602
        %v5661 = vunpack.c.l.b16 %v4603
        %v5662 = vunpack.c.h.b16 %v4603
        %v5663 = vunpack.c.l.b16 %v4604
        %v5664 = vunpack.c.h.b16 %v4604
        %v5665 = vunpack.c.l.b16 %v4605
        %v5666 = vunpack.c.h.b16 %v4605
        %v5667 = vunpack.c.l.b16 %v4606
        %v5668 = vunpack.c.h.b16 %v4606
        %v5669 = vunpack.c.l.b16 %v4607
        %v5670 = vunpack.c.h.b16 %v4607
        %v5671 = vunpack.c.l.b16 %v4608
        %v5672 = vunpack.c.h.b16 %v4608
        %v5673 = vunpack.c.l.b16 %v4609
        %v5674 = vunpack.c.h.b16 %v4609
        %v5675 = vunpack.c.l.b16 %v4610
        %v5676 = vunpack.c.h.b16 %v4610
        %v5677 = vunpack.c.l.b16 %v4611
        %v5678 = vunpack.c.h.b16 %v4611
        %v5679 = vunpack.c.l.b16 %v4612
        %v5680 = vunpack.c.h.b16 %v4612
        %v5681 = vunpack.c.l.b16 %v4613
        %v5682 = vunpack.c.h.b16 %v4613
        %v5683 = vunpack.c.l.b16 %v4614
        %v5684 = vunpack.c.h.b16 %v4614
        %v5685 = vunpack.c.l.b16 %v4615
        %v5686 = vunpack.c.h.b16 %v4615
        %v5687 = vunpack.c.l.b16 %v4616
        %v5688 = vunpack.c.h.b16 %v4616
        %v5689 = vunpack.c.l.b16 %v4617
        %v5690 = vunpack.c.h.b16 %v4617
        %v5691 = vunpack.c.l.b16 %v4618
        %v5692 = vunpack.c.h.b16 %v4618
        %v5693 = vunpack.c.l.b16 %v4619
        %v5694 = vunpack.c.h.b16 %v4619
        %v5695 = vunpack.c.l.b16 %v4620
        %v5696 = vunpack.c.h.b16 %v4620
        %v5697 = vunpack.c.l.b16 %v4621
        %v5698 = vunpack.c.h.b16 %v4621
        %v5699 = vunpack.c.l.b16 %v4622
        %v5700 = vunpack.c.h.b16 %v4622
        %v5701 = vunpack.c.l.b16 %v4623
        %v5702 = vunpack.c.h.b16 %v4623
        %v5703 = vunpack.c.l.b16 %v4624
        %v5704 = vunpack.c.h.b16 %v4624
        %v5705 = vunpack.c.l.b16 %v4625
        %v5706 = vunpack.c.h.b16 %v4625
        %v5707 = vunpack.c.l.b16 %v4626
        %v5708 = vunpack.c.h.b16 %v4626
        %v5709 = vunpack.c.l.b16 %v4627
        %v5710 = vunpack.c.h.b16 %v4627
        %v5711 = vunpack.c.l.b16 %v4628
        %v5712 = vunpack.c.h.b16 %v4628
        %v5713 = vunpack.c.l.b16 %v4629
        %v5714 = vunpack.c.h.b16 %v4629
        %v5715 = vunpack.c.l.b16 %v4630
        %v5716 = vunpack.c.h.b16 %v4630
        %v5717 = vunpack.c.l.b16 %v4631
        %v5718 = vunpack.c.h.b16 %v4631
        %v5719 = vunpack.c.l.b16 %v4632
        %v5720 = vunpack.c.h.b16 %v4632
        %v5721 = vunpack.c.l.b16 %v4633
        %v5722 = vunpack.c.h.b16 %v4633
        %v5723 = vunpack.c.l.b16 %v4634
        %v5724 = vunpack.c.h.b16 %v4634
        %v5725 = vunpack.c.l.b16 %v4635
        %v5726 = vunpack.c.h.b16 %v4635
        %v5727 = vunpack.c.l.b16 %v4636
        %v5728 = vunpack.c.h.b16 %v4636
        %v5729 = vunpack.c.l.b16 %v4637
        %v5730 = vunpack.c.h.b16 %v4637
        %v5731 = vunpack.c.l.b16 %v4638
        %v5732 = vunpack.c.h.b16 %v4638
        %v5733 = vunpack.c.l.b16 %v4639
        %v5734 = vunpack.c.h.b16 %v4639
        %v5735 = vunpack.c.l.b16 %v4640
        %v5736 = vunpack.c.h.b16 %v4640
        %v5737 = vunpack.c.l.b16 %v4641
        %v5738 = vunpack.c.h.b16 %v4641
        %v5739 = vunpack.c.l.b16 %v4642
        %v5740 = vunpack.c.h.b16 %v4642
        %v5741 = vunpack.c.l.b16 %v4643
        %v5742 = vunpack.c.h.b16 %v4643
        %v5743 = vunpack.c.l.b16 %v4644
        %v5744 = vunpack.c.h.b16 %v4644
        %v5745 = vunpack.c.l.b16 %v4645
        %v5746 = vunpack.c.h.b16 %v4645
        %v5747 = vunpack.c.l.b16 %v4646
        %v5748 = vunpack.c.h.b16 %v4646
        %v5749 = vunpack.c.l.b16 %v4647
        %v5750 = vunpack.c.h.b16 %v4647
        %v5751 = vunpack.c.l.b16 %v4648
        %v5752 = vunpack.c.h.b16 %v4648
        %v5753 = vunpack.c.l.b16 %v4649
        %v5754 = vunpack.c.h.b16 %v4649
        %v5755 = vunpack.c.l.b16 %v4650
        %v5756 = vunpack.c.h.b16 %v4650
        %v5757 = vunpack.c.l.b16 %v4651
        %v5758 = vunpack.c.h.b16 %v4651
        %v5759 = vunpack.c.l.b16 %v4652
        %v5760 = vunpack.c.h.b16 %v4652
        %v5761 = vunpack.c.l.b16 %v4653
        %v5762 = vunpack.c.h.b16 %v4653
        %v5763 = vunpack.c.l.b16 %v4654
        %v5764 = vunpack.c.h.b16 %v4654
        %v5765 = vunpack.c.l.b16 %v4655
        %v5766 = vunpack.c.h.b16 %v4655
        %v5767 = vunpack.c.l.b16 %v4656
        %v5768 = vunpack.c.h.b16 %v4656
        %v5769 = vunpack.c.l.b16 %v4657
        %v5770 = vunpack.c.h.b16 %v4657
        %v5771 = vunpack.c.l.b16 %v4658
        %v5772 = vunpack.c.h.b16 %v4658
        %v5773 = vunpack.c.l.b16 %v4659
        %v5774 = vunpack.c.h.b16 %v4659
        %v5775 = vunpack.c.l.b16 %v4660
        %v5776 = vunpack.c.h.b16 %v4660
        %v5777 = vunpack.c.l.b16 %v4661
        %v5778 = vunpack.c.h.b16 %v4661
        %v5779 = vunpack.c.l.b16 %v4662
        %v5780 = vunpack.c.h.b16 %v4662
        %v5781 = vunpack.c.l.b16 %v4663
        %v5782 = vunpack.c.h.b16 %v4663
        %v5783 = vunpack.c.l.b16 %v4664
        %v5784 = vunpack.c.h.b16 %v4664
        %v5785 = vunpack.c.l.b16 %v4665
        %v5786 = vunpack.c.h.b16 %v4665
        %v5787 = vunpack.c.l.b16 %v4666
        %v5788 = vunpack.c.h.b16 %v4666
        %v5789 = vunpack.c.l.b16 %v4667
        %v5790 = vunpack.c.h.b16 %v4667
        %v5791 = vunpack.c.l.b16 %v4668
        %v5792 = vunpack.c.h.b16 %v4668
        %v5793 = vunpack.c.l.b16 %v4669
        %v5794 = vunpack.c.h.b16 %v4669
        %v5795 = vunpack.c.l.b16 %v4670
        %v5796 = vunpack.c.h.b16 %v4670
        %v5797 = vunpack.c.l.b16 %v4671
        %v5798 = vunpack.c.h.b16 %v4671
        %v5799 = vunpack.c.l.b16 %v4672
        %v5800 = vunpack.c.h.b16 %v4672
        %v5801 = vunpack.c.l.b16 %v4673
        %v5802 = vunpack.c.h.b16 %v4673
        %v5803 = vunpack.c.l.b16 %v4674
        %v5804 = vunpack.c.h.b16 %v4674
        %v5805 = vunpack.c.l.b16 %v4675
        %v5806 = vunpack.c.h.b16 %v4675
        %v5807 = vunpack.c.l.b16 %v4676
        %v5808 = vunpack.c.h.b16 %v4676
        %v5809 = vunpack.c.l.b16 %v4677
        %v5810 = vunpack.c.h.b16 %v4677
        %v5811 = vunpack.c.l.b16 %v4678
        %v5812 = vunpack.c.h.b16 %v4678
        %v5813 = vunpack.c.l.b16 %v4679
        %v5814 = vunpack.c.h.b16 %v4679
        %v5815 = vunpack.c.l.b16 %v4680
        %v5816 = vunpack.c.h.b16 %v4680
        %v5817 = vunpack.c.l.b16 %v4681
        %v5818 = vunpack.c.h.b16 %v4681
        %v5819 = vunpack.c.l.b16 %v4682
        %v5820 = vunpack.c.h.b16 %v4682
        %v5821 = vunpack.c.l.b16 %v4683
        %v5822 = vunpack.c.h.b16 %v4683
        %v5823 = vunpack.c.l.b16 %v4684
        %v5824 = vunpack.c.h.b16 %v4684
        %v5825 = vunpack.c.l.b16 %v4685
        %v5826 = vunpack.c.h.b16 %v4685
        %v5827 = vunpack.c.l.b16 %v4686
        %v5828 = vunpack.c.h.b16 %v4686
        %v5829 = vunpack.c.l.b16 %v4687
        %v5830 = vunpack.c.h.b16 %v4687
        %v5831 = vunpack.c.l.b16 %v4688
        %v5832 = vunpack.c.h.b16 %v4688
        %v5833 = vunpack.c.l.b16 %v4689
        %v5834 = vunpack.c.h.b16 %v4689
        %v5835 = vunpack.c.l.b16 %v4690
        %v5836 = vunpack.c.h.b16 %v4690
        %v5837 = vunpack.c.l.b16 %v4691
        %v5838 = vunpack.c.h.b16 %v4691
        %v5839 = vunpack.c.l.b16 %v4692
        %v5840 = vunpack.c.h.b16 %v4692
        %v5841 = vunpack.c.l.b16 %v4693
        %v5842 = vunpack.c.h.b16 %v4693
        %v5843 = vunpack.c.l.b16 %v4694
        %v5844 = vunpack.c.h.b16 %v4694
        %v5845 = vunpack.c.l.b16 %v4695
        %v5846 = vunpack.c.h.b16 %v4695
        %v5847 = vunpack.c.l.b16 %v4696
        %v5848 = vunpack.c.h.b16 %v4696
        %v5849 = vunpack.c.l.b16 %v4697
        %v5850 = vunpack.c.h.b16 %v4697
        %v5851 = vunpack.c.l.b16 %v4698
        %v5852 = vunpack.c.h.b16 %v4698
        %v5853 = vunpack.c.l.b16 %v4699
        %v5854 = vunpack.c.h.b16 %v4699
        %v5855 = vunpack.c.l.b16 %v4700
        %v5856 = vunpack.c.h.b16 %v4700
        %v5857 = vunpack.c.l.b16 %v4701
        %v5858 = vunpack.c.h.b16 %v4701
        %v5859 = vunpack.c.l.b16 %v4702
        %v5860 = vunpack.c.h.b16 %v4702
        %v5861 = vunpack.c.l.b16 %v4703
        %v5862 = vunpack.c.h.b16 %v4703
        %v5863 = vunpack.c.l.b16 %v4704
        %v5864 = vunpack.c.h.b16 %v4704
        %v5865 = vunpack.c.l.b16 %v4705
        %v5866 = vunpack.c.h.b16 %v4705
        %v5867 = vunpack.c.l.b16 %v4706
        %v5868 = vunpack.c.h.b16 %v4706
        %v5869 = vunpack.c.l.b16 %v4707
        %v5870 = vunpack.c.h.b16 %v4707
        %v5871 = vunpack.c.l.b16 %v4708
        %v5872 = vunpack.c.h.b16 %v4708
        %v5873 = vunpack.c.l.b16 %v4709
        %v5874 = vunpack.c.h.b16 %v4709
        %v5875 = vunpack.c.l.b16 %v4710
        %v5876 = vunpack.c.h.b16 %v4710
        %v5877 = vunpack.c.l.b16 %v4711
        %v5878 = vunpack.c.h.b16 %v4711
        %v5879 = vunpack.c.l.b16 %v4712
        %v5880 = vunpack.c.h.b16 %v4712
        %v5881 = vunpack.c.l.b16 %v4713
        %v5882 = vunpack.c.h.b16 %v4713
        %v5883 = vunpack.c.l.b16 %v4714
        %v5884 = vunpack.c.h.b16 %v4714
        %v5885 = vunpack.c.l.b16 %v4715
        %v5886 = vunpack.c.h.b16 %v4715
        %v5887 = vunpack.c.l.b16 %v4716
        %v5888 = vunpack.c.h.b16 %v4716
        %v5889 = vunpack.c.l.b16 %v4717
        %v5890 = vunpack.c.h.b16 %v4717
        %v5891 = vunpack.c.l.b16 %v4718
        %v5892 = vunpack.c.h.b16 %v4718
        %v5893 = vunpack.c.l.b16 %v4719
        %v5894 = vunpack.c.h.b16 %v4719
        %v5895 = vunpack.c.l.b16 %v4720
        %v5896 = vunpack.c.h.b16 %v4720
        %v5897 = vunpack.c.l.b16 %v4721
        %v5898 = vunpack.c.h.b16 %v4721
        %v5899 = vunpack.c.l.b16 %v4722
        %v5900 = vunpack.c.h.b16 %v4722
        %v5901 = vunpack.c.l.b16 %v4723
        %v5902 = vunpack.c.h.b16 %v4723
        %v5903 = vunpack.c.l.b16 %v4724
        %v5904 = vunpack.c.h.b16 %v4724
        %v5905 = vunpack.c.l.b16 %v4725
        %v5906 = vunpack.c.h.b16 %v4725
        %v5907 = vunpack.c.l.b16 %v4726
        %v5908 = vunpack.c.h.b16 %v4726
        %v5909 = vunpack.c.l.b16 %v4727
        %v5910 = vunpack.c.h.b16 %v4727
        %v5911 = vunpack.c.l.b16 %v4728
        %v5912 = vunpack.c.h.b16 %v4728
        %v5913 = vunpack.c.l.b16 %v4729
        %v5914 = vunpack.c.h.b16 %v4729
        %v5915 = vunpack.c.l.b16 %v4730
        %v5916 = vunpack.c.h.b16 %v4730
        %v5917 = vunpack.c.l.b16 %v4731
        %v5918 = vunpack.c.h.b16 %v4731
        %v5919 = vunpack.c.l.b16 %v4732
        %v5920 = vunpack.c.h.b16 %v4732
        %v5921 = vunpack.c.l.b16 %v4733
        %v5922 = vunpack.c.h.b16 %v4733
        %v5923 = vunpack.c.l.b16 %v4734
        %v5924 = vunpack.c.h.b16 %v4734
        %v5925 = vunpack.c.l.b16 %v4735
        %v5926 = vunpack.c.h.b16 %v4735
        %v5927 = vunpack.c.l.b16 %v4736
        %v5928 = vunpack.c.h.b16 %v4736
        %v5929 = vunpack.c.l.b16 %v4737
        %v5930 = vunpack.c.h.b16 %v4737
        %v5931 = vunpack.c.l.b16 %v4738
        %v5932 = vunpack.c.h.b16 %v4738
        %v5933 = vunpack.c.l.b16 %v4739
        %v5934 = vunpack.c.h.b16 %v4739
        %v5935 = vunpack.c.l.b16 %v4740
        %v5936 = vunpack.c.h.b16 %v4740
        %v5937 = vunpack.c.l.b16 %v4741
        %v5938 = vunpack.c.h.b16 %v4741
        %v5939 = vunpack.c.l.b16 %v4742
        %v5940 = vunpack.c.h.b16 %v4742
        %v5941 = vunpack.c.l.b16 %v4743
        %v5942 = vunpack.c.h.b16 %v4743
        %v5943 = vunpack.c.l.b16 %v4744
        %v5944 = vunpack.c.h.b16 %v4744
        %v5945 = vunpack.c.l.b16 %v4745
        %v5946 = vunpack.c.h.b16 %v4745
        %v5947 = vunpack.c.l.b16 %v4746
        %v5948 = vunpack.c.h.b16 %v4746
        %v5949 = vunpack.c.l.b16 %v4747
        %v5950 = vunpack.c.h.b16 %v4747
        %v5951 = vunpack.c.l.b16 %v4748
        %v5952 = vunpack.c.h.b16 %v4748
        %v5953 = vunpack.c.l.b16 %v4749
        %v5954 = vunpack.c.h.b16 %v4749
        %v5955 = vunpack.c.l.b16 %v4750
        %v5956 = vunpack.c.h.b16 %v4750
        %v5957 = vunpack.c.l.b16 %v4751
        %v5958 = vunpack.c.h.b16 %v4751
        %v5959 = vunpack.c.l.b16 %v4752
        %v5960 = vunpack.c.h.b16 %v4752
        %v5961 = vunpack.c.l.b16 %v4753
        %v5962 = vunpack.c.h.b16 %v4753
        %v5963 = vunpack.c.l.b16 %v4754
        %v5964 = vunpack.c.h.b16 %v4754
        %v5965 = vunpack.c.l.b16 %v4755
        %v5966 = vunpack.c.h.b16 %v4755
        %v5967 = vunpack.c.l.b16 %v4756
        %v5968 = vunpack.c.h.b16 %v4756
        %v5969 = vunpack.c.l.b16 %v4757
        %v5970 = vunpack.c.h.b16 %v4757
        %v5971 = vunpack.c.l.b16 %v4758
        %v5972 = vunpack.c.h.b16 %v4758
        %v5973 = vunpack.c.l.b16 %v4759
        %v5974 = vunpack.c.h.b16 %v4759
        %v5975 = vunpack.c.l.b16 %v4760
        %v5976 = vunpack.c.h.b16 %v4760
        %v5977 = vunpack.c.l.b16 %v4761
        %v5978 = vunpack.c.h.b16 %v4761
        %v5979 = vunpack.c.l.b16 %v4762
        %v5980 = vunpack.c.h.b16 %v4762
        %v5981 = vunpack.c.l.b16 %v4763
        %v5982 = vunpack.c.h.b16 %v4763
        %v5983 = vunpack.c.l.b16 %v4764
        %v5984 = vunpack.c.h.b16 %v4764
        %v5985 = vunpack.c.l.b16 %v4765
        %v5986 = vunpack.c.h.b16 %v4765
        %v5987 = vunpack.c.l.b16 %v4766
        %v5988 = vunpack.c.h.b16 %v4766
        %v5989 = vunpack.c.l.b16 %v4767
        %v5990 = vunpack.c.h.b16 %v4767
        %v5991 = vunpack.c.l.b16 %v4768
        %v5992 = vunpack.c.h.b16 %v4768
        %v5993 = vunpack.c.l.b16 %v4769
        %v5994 = vunpack.c.h.b16 %v4769
        %v5995 = vunpack.c.l.b16 %v4770
        %v5996 = vunpack.c.h.b16 %v4770
        %v5997 = vunpack.c.l.b16 %v4771
        %v5998 = vunpack.c.h.b16 %v4771
        %v5999 = vunpack.c.l.b16 %v4772
        %v6000 = vunpack.c.h.b16 %v4772
        %v6001 = vunpack.c.l.b16 %v4773
        %v6002 = vunpack.c.h.b16 %v4773
        %v6003 = vunpack.c.l.b16 %v4774
        %v6004 = vunpack.c.h.b16 %v4774
        %v6005 = vunpack.c.l.b16 %v4775
        %v6006 = vunpack.c.h.b16 %v4775
        %v6007 = vunpack.c.l.b16 %v4776
        %v6008 = vunpack.c.h.b16 %v4776
        %v6009 = vunpack.c.l.b16 %v4777
        %v6010 = vunpack.c.h.b16 %v4777
        %v6011 = vunpack.c.l.b16 %v4778
        %v6012 = vunpack.c.h.b16 %v4778
        %v6013 = vunpack.c.l.b16 %v4779
        %v6014 = vunpack.c.h.b16 %v4779
        %v6015 = vunpack.c.l.b16 %v4780
        %v6016 = vunpack.c.h.b16 %v4780
        %v6017 = vunpack.c.l.b16 %v4781
        %v6018 = vunpack.c.h.b16 %v4781
        %v6019 = vunpack.c.l.b16 %v4782
        %v6020 = vunpack.c.h.b16 %v4782
        %v6021 = vunpack.c.l.b16 %v4783
        %v6022 = vunpack.c.h.b16 %v4783
        %v6023 = vunpack.c.l.b16 %v4784
        %v6024 = vunpack.c.h.b16 %v4784
        %v6025 = vunpack.c.l.b16 %v4785
        %v6026 = vunpack.c.h.b16 %v4785
        %v6027 = vunpack.c.l.b16 %v4786
        %v6028 = vunpack.c.h.b16 %v4786
        %v6029 = vunpack.c.l.b16 %v4787
        %v6030 = vunpack.c.h.b16 %v4787
        %v6031 = vunpack.c.l.b16 %v4788
        %v6032 = vunpack.c.h.b16 %v4788
        %v6033 = vunpack.c.l.b16 %v4789
        %v6034 = vunpack.c.h.b16 %v4789
        %v6035 = vunpack.c.l.b16 %v4790
        %v6036 = vunpack.c.h.b16 %v4790
        %v6037 = vunpack.c.l.b16 %v4791
        %v6038 = vunpack.c.h.b16 %v4791
        %v6039 = vunpack.c.l.b16 %v4792
        %v6040 = vunpack.c.h.b16 %v4792
        %v6041 = vpack.c.b16 %v5281, %v5273
        %v6042 = vpack.c.b16 %v5282, %v5274
        %v6043 = vpack.c.b16 %v5283, %v5275
        %v6044 = vpack.c.b16 %v5284, %v5276
        %v6045 = vpack.c.b16 %v5285, %v5277
        %v6046 = vpack.c.b16 %v5286, %v5278
        %v6047 = vpack.c.b16 %v5287, %v5279
        %v6048 = vpack.c.b16 %v5288, %v5280
        %v6049 = vpack.c.b16 %v5297, %v5289
        %v6050 = vpack.c.b16 %v5298, %v5290
        %v6051 = vpack.c.b16 %v5299, %v5291
        %v6052 = vpack.c.b16 %v5300, %v5292
        %v6053 = vpack.c.b16 %v5301, %v5293
        %v6054 = vpack.c.b16 %v5302, %v5294
        %v6055 = vpack.c.b16 %v5303, %v5295
        %v6056 = vpack.c.b16 %v5304, %v5296
        %v6057 = vpack.c.b16 %v5313, %v5305
        %v6058 = vpack.c.b16 %v5314, %v5306
        %v6059 = vpack.c.b16 %v5315, %v5307
        %v6060 = vpack.c.b16 %v5316, %v5308
        %v6061 = vpack.c.b16 %v5317, %v5309
        %v6062 = vpack.c.b16 %v5318, %v5310
        %v6063 = vpack.c.b16 %v5319, %v5311
        %v6064 = vpack.c.b16 %v5320, %v5312
        %v6065 = vpack.c.b16 %v5329, %v5321
        %v6066 = vpack.c.b16 %v5330, %v5322
        %v6067 = vpack.c.b16 %v5331, %v5323
        %v6068 = vpack.c.b16 %v5332, %v5324
        %v6069 = vpack.c.b16 %v5333, %v5325
        %v6070 = vpack.c.b16 %v5334, %v5326
        %v6071 = vpack.c.b16 %v5335, %v5327
        %v6072 = vpack.c.b16 %v5336, %v5328
        %v6073 = vpack.c.b16 %v5345, %v5337
        %v6074 = vpack.c.b16 %v5346, %v5338
        %v6075 = vpack.c.b16 %v5347, %v5339
        %v6076 = vpack.c.b16 %v5348, %v5340
        %v6077 = vpack.c.b16 %v5349, %v5341
        %v6078 = vpack.c.b16 %v5350, %v5342
        %v6079 = vpack.c.b16 %v5351, %v5343
        %v6080 = vpack.c.b16 %v5352, %v5344
        %v6081 = vpack.c.b16 %v5361, %v5353
        %v6082 = vpack.c.b16 %v5362, %v5354
        %v6083 = vpack.c.b16 %v5363, %v5355
        %v6084 = vpack.c.b16 %v5364, %v5356
        %v6085 = vpack.c.b16 %v5365, %v5357
        %v6086 = vpack.c.b16 %v5366, %v5358
        %v6087 = vpack.c.b16 %v5367, %v5359
        %v6088 = vpack.c.b16 %v5368, %v5360
        %v6089 = vpack.c.b16 %v5377, %v5369
        %v6090 = vpack.c.b16 %v5378, %v5370
        %v6091 = vpack.c.b16 %v5379, %v5371
        %v6092 = vpack.c.b16 %v5380, %v5372
        %v6093 = vpack.c.b16 %v5381, %v5373
        %v6094 = vpack.c.b16 %v5382, %v5374
        %v6095 = vpack.c.b16 %v5383, %v5375
        %v6096 = vpack.c.b16 %v5384, %v5376
        %v6097 = vpack.c.b16 %v5393, %v5385
        %v6098 = vpack.c.b16 %v5394, %v5386
        %v6099 = vpack.c.b16 %v5395, %v5387
        %v6100 = vpack.c.b16 %v5396, %v5388
        %v6101 = vpack.c.b16 %v5397, %v5389
        %v6102 = vpack.c.b16 %v5398, %v5390
        %v6103 = vpack.c.b16 %v5399, %v5391
        %v6104 = vpack.c.b16 %v5400, %v5392
        %v6105 = vpack.c.b16 %v5409, %v5401
        %v6106 = vpack.c.b16 %v5410, %v5402
        %v6107 = vpack.c.b16 %v5411, %v5403
        %v6108 = vpack.c.b16 %v5412, %v5404
        %v6109 = vpack.c.b16 %v5413, %v5405
        %v6110 = vpack.c.b16 %v5414, %v5406
        %v6111 = vpack.c.b16 %v5415, %v5407
        %v6112 = vpack.c.b16 %v5416, %v5408
        %v6113 = vpack.c.b16 %v5425, %v5417
        %v6114 = vpack.c.b16 %v5426, %v5418
        %v6115 = vpack.c.b16 %v5427, %v5419
        %v6116 = vpack.c.b16 %v5428, %v5420
        %v6117 = vpack.c.b16 %v5429, %v5421
        %v6118 = vpack.c.b16 %v5430, %v5422
        %v6119 = vpack.c.b16 %v5431, %v5423
        %v6120 = vpack.c.b16 %v5432, %v5424
        %v6121 = vpack.c.b16 %v5441, %v5433
        %v6122 = vpack.c.b16 %v5442, %v5434
        %v6123 = vpack.c.b16 %v5443, %v5435
        %v6124 = vpack.c.b16 %v5444, %v5436
        %v6125 = vpack.c.b16 %v5445, %v5437
        %v6126 = vpack.c.b16 %v5446, %v5438
        %v6127 = vpack.c.b16 %v5447, %v5439
        %v6128 = vpack.c.b16 %v5448, %v5440
        %v6129 = vpack.c.b16 %v5457, %v5449
        %v6130 = vpack.c.b16 %v5458, %v5450
        %v6131 = vpack.c.b16 %v5459, %v5451
        %v6132 = vpack.c.b16 %v5460, %v5452
        %v6133 = vpack.c.b16 %v5461, %v5453
        %v6134 = vpack.c.b16 %v5462, %v5454
        %v6135 = vpack.c.b16 %v5463, %v5455
        %v6136 = vpack.c.b16 %v5464, %v5456
        %v6137 = vpack.c.b16 %v5473, %v5465
        %v6138 = vpack.c.b16 %v5474, %v5466
        %v6139 = vpack.c.b16 %v5475, %v5467
        %v6140 = vpack.c.b16 %v5476, %v5468
        %v6141 = vpack.c.b16 %v5477, %v5469
        %v6142 = vpack.c.b16 %v5478, %v5470
        %v6143 = vpack.c.b16 %v5479, %v5471
        %v6144 = vpack.c.b16 %v5480, %v5472
        %v6145 = vpack.c.b16 %v5489, %v5481
        %v6146 = vpack.c.b16 %v5490, %v5482
        %v6147 = vpack.c.b16 %v5491, %v5483
        %v6148 = vpack.c.b16 %v5492, %v5484
        %v6149 = vpack.c.b16 %v5493, %v5485
        %v6150 = vpack.c.b16 %v5494, %v5486
        %v6151 = vpack.c.b16 %v5495, %v5487
        %v6152 = vpack.c.b16 %v5496, %v5488
        %v6153 = vpack.c.b16 %v5505, %v5497
        %v6154 = vpack.c.b16 %v5506, %v5498
        %v6155 = vpack.c.b16 %v5507, %v5499
        %v6156 = vpack.c.b16 %v5508, %v5500
        %v6157 = vpack.c.b16 %v5509, %v5501
        %v6158 = vpack.c.b16 %v5510, %v5502
        %v6159 = vpack.c.b16 %v5511, %v5503
        %v6160 = vpack.c.b16 %v5512, %v5504
        %v6161 = vpack.c.b16 %v5521, %v5513
        %v6162 = vpack.c.b16 %v5522, %v5514
        %v6163 = vpack.c.b16 %v5523, %v5515
        %v6164 = vpack.c.b16 %v5524, %v5516
        %v6165 = vpack.c.b16 %v5525, %v5517
        %v6166 = vpack.c.b16 %v5526, %v5518
        %v6167 = vpack.c.b16 %v5527, %v5519
        %v6168 = vpack.c.b16 %v5528, %v5520
        %v6169 = vpack.c.b16 %v5537, %v5529
        %v6170 = vpack.c.b16 %v5538, %v5530
        %v6171 = vpack.c.b16 %v5539, %v5531
        %v6172 = vpack.c.b16 %v5540, %v5532
        %v6173 = vpack.c.b16 %v5541, %v5533
        %v6174 = vpack.c.b16 %v5542, %v5534
        %v6175 = vpack.c.b16 %v5543, %v5535
        %v6176 = vpack.c.b16 %v5544, %v5536
        %v6177 = vpack.c.b16 %v5553, %v5545
        %v6178 = vpack.c.b16 %v5554, %v5546
        %v6179 = vpack.c.b16 %v5555, %v5547
        %v6180 = vpack.c.b16 %v5556, %v5548
        %v6181 = vpack.c.b16 %v5557, %v5549
        %v6182 = vpack.c.b16 %v5558, %v5550
        %v6183 = vpack.c.b16 %v5559, %v5551
        %v6184 = vpack.c.b16 %v5560, %v5552
        %v6185 = vpack.c.b16 %v5569, %v5561
        %v6186 = vpack.c.b16 %v5570, %v5562
        %v6187 = vpack.c.b16 %v5571, %v5563
        %v6188 = vpack.c.b16 %v5572, %v5564
        %v6189 = vpack.c.b16 %v5573, %v5565
        %v6190 = vpack.c.b16 %v5574, %v5566
        %v6191 = vpack.c.b16 %v5575, %v5567
        %v6192 = vpack.c.b16 %v5576, %v5568
        %v6193 = vpack.c.b16 %v5585, %v5577
        %v6194 = vpack.c.b16 %v5586, %v5578
        %v6195 = vpack.c.b16 %v5587, %v5579
        %v6196 = vpack.c.b16 %v5588, %v5580
        %v6197 = vpack.c.b16 %v5589, %v5581
        %v6198 = vpack.c.b16 %v5590, %v5582
        %v6199 = vpack.c.b16 %v5591, %v5583
        %v6200 = vpack.c.b16 %v5592, %v5584
        %v6201 = vpack.c.b16 %v5601, %v5593
        %v6202 = vpack.c.b16 %v5602, %v5594
        %v6203 = vpack.c.b16 %v5603, %v5595
        %v6204 = vpack.c.b16 %v5604, %v5596
        %v6205 = vpack.c.b16 %v5605, %v5597
        %v6206 = vpack.c.b16 %v5606, %v5598
        %v6207 = vpack.c.b16 %v5607, %v5599
        %v6208 = vpack.c.b16 %v5608, %v5600
        %v6209 = vpack.c.b16 %v5617, %v5609
        %v6210 = vpack.c.b16 %v5618, %v5610
        %v6211 = vpack.c.b16 %v5619, %v5611
        %v6212 = vpack.c.b16 %v5620, %v5612
        %v6213 = vpack.c.b16 %v5621, %v5613
        %v6214 = vpack.c.b16 %v5622, %v5614
        %v6215 = vpack.c.b16 %v5623, %v5615
        %v6216 = vpack.c.b16 %v5624, %v5616
        %v6217 = vpack.c.b16 %v5633, %v5625
        %v6218 = vpack.c.b16 %v5634, %v5626
        %v6219 = vpack.c.b16 %v5635, %v5627
        %v6220 = vpack.c.b16 %v5636, %v5628
        %v6221 = vpack.c.b16 %v5637, %v5629
        %v6222 = vpack.c.b16 %v5638, %v5630
        %v6223 = vpack.c.b16 %v5639, %v5631
        %v6224 = vpack.c.b16 %v5640, %v5632
        %v6225 = vpack.c.b16 %v5649, %v5641
        %v6226 = vpack.c.b16 %v5650, %v5642
        %v6227 = vpack.c.b16 %v5651, %v5643
        %v6228 = vpack.c.b16 %v5652, %v5644
        %v6229 = vpack.c.b16 %v5653, %v5645
        %v6230 = vpack.c.b16 %v5654, %v5646
        %v6231 = vpack.c.b16 %v5655, %v5647
        %v6232 = vpack.c.b16 %v5656, %v5648
        %v6233 = vpack.c.b16 %v5665, %v5657
        %v6234 = vpack.c.b16 %v5666, %v5658
        %v6235 = vpack.c.b16 %v5667, %v5659
        %v6236 = vpack.c.b16 %v5668, %v5660
        %v6237 = vpack.c.b16 %v5669, %v5661
        %v6238 = vpack.c.b16 %v5670, %v5662
        %v6239 = vpack.c.b16 %v5671, %v5663
        %v6240 = vpack.c.b16 %v5672, %v5664
        %v6241 = vpack.c.b16 %v5681, %v5673
        %v6242 = vpack.c.b16 %v5682, %v5674
        %v6243 = vpack.c.b16 %v5683, %v5675
        %v6244 = vpack.c.b16 %v5684, %v5676
        %v6245 = vpack.c.b16 %v5685, %v5677
        %v6246 = vpack.c.b16 %v5686, %v5678
        %v6247 = vpack.c.b16 %v5687, %v5679
        %v6248 = vpack.c.b16 %v5688, %v5680
        %v6249 = vpack.c.b16 %v5697, %v5689
        %v6250 = vpack.c.b16 %v5698, %v5690
        %v6251 = vpack.c.b16 %v5699, %v5691
        %v6252 = vpack.c.b16 %v5700, %v5692
        %v6253 = vpack.c.b16 %v5701, %v5693
        %v6254 = vpack.c.b16 %v5702, %v5694
        %v6255 = vpack.c.b16 %v5703, %v5695
        %v6256 = vpack.c.b16 %v5704, %v5696
        %v6257 = vpack.c.b16 %v5713, %v5705
        %v6258 = vpack.c.b16 %v5714, %v5706
        %v6259 = vpack.c.b16 %v5715, %v5707
        %v6260 = vpack.c.b16 %v5716, %v5708
        %v6261 = vpack.c.b16 %v5717, %v5709
        %v6262 = vpack.c.b16 %v5718, %v5710
        %v6263 = vpack.c.b16 %v5719, %v5711
        %v6264 = vpack.c.b16 %v5720, %v5712
        %v6265 = vpack.c.b16 %v5729, %v5721
        %v6266 = vpack.c.b16 %v5730, %v5722
        %v6267 = vpack.c.b16 %v5731, %v5723
        %v6268 = vpack.c.b16 %v5732, %v5724
        %v6269 = vpack.c.b16 %v5733, %v5725
        %v6270 = vpack.c.b16 %v5734, %v5726
        %v6271 = vpack.c.b16 %v5735, %v5727
        %v6272 = vpack.c.b16 %v5736, %v5728
        %v6273 = vpack.c.b16 %v5745, %v5737
        %v6274 = vpack.c.b16 %v5746, %v5738
        %v6275 = vpack.c.b16 %v5747, %v5739
        %v6276 = vpack.c.b16 %v5748, %v5740
        %v6277 = vpack.c.b16 %v5749, %v5741
        %v6278 = vpack.c.b16 %v5750, %v5742
        %v6279 = vpack.c.b16 %v5751, %v5743
        %v6280 = vpack.c.b16 %v5752, %v5744
        %v6281 = vpack.c.b16 %v5761, %v5753
        %v6282 = vpack.c.b16 %v5762, %v5754
        %v6283 = vpack.c.b16 %v5763, %v5755
        %v6284 = vpack.c.b16 %v5764, %v5756
        %v6285 = vpack.c.b16 %v5765, %v5757
        %v6286 = vpack.c.b16 %v5766, %v5758
        %v6287 = vpack.c.b16 %v5767, %v5759
        %v6288 = vpack.c.b16 %v5768, %v5760
        %v6289 = vpack.c.b16 %v5777, %v5769
        %v6290 = vpack.c.b16 %v5778, %v5770
        %v6291 = vpack.c.b16 %v5779, %v5771
        %v6292 = vpack.c.b16 %v5780, %v5772
        %v6293 = vpack.c.b16 %v5781, %v5773
        %v6294 = vpack.c.b16 %v5782, %v5774
        %v6295 = vpack.c.b16 %v5783, %v5775
        %v6296 = vpack.c.b16 %v5784, %v5776
        %v6297 = vpack.c.b16 %v5793, %v5785
        %v6298 = vpack.c.b16 %v5794, %v5786
        %v6299 = vpack.c.b16 %v5795, %v5787
        %v6300 = vpack.c.b16 %v5796, %v5788
        %v6301 = vpack.c.b16 %v5797, %v5789
        %v6302 = vpack.c.b16 %v5798, %v5790
        %v6303 = vpack.c.b16 %v5799, %v5791
        %v6304 = vpack.c.b16 %v5800, %v5792
        %v6305 = vpack.c.b16 %v5809, %v5801
        %v6306 = vpack.c.b16 %v5810, %v5802
        %v6307 = vpack.c.b16 %v5811, %v5803
        %v6308 = vpack.c.b16 %v5812, %v5804
        %v6309 = vpack.c.b16 %v5813, %v5805
        %v6310 = vpack.c.b16 %v5814, %v5806
        %v6311 = vpack.c.b16 %v5815, %v5807
        %v6312 = vpack.c.b16 %v5816, %v5808
        %v6313 = vpack.c.b16 %v5825, %v5817
        %v6314 = vpack.c.b16 %v5826, %v5818
        %v6315 = vpack.c.b16 %v5827, %v5819
        %v6316 = vpack.c.b16 %v5828, %v5820
        %v6317 = vpack.c.b16 %v5829, %v5821
        %v6318 = vpack.c.b16 %v5830, %v5822
        %v6319 = vpack.c.b16 %v5831, %v5823
        %v6320 = vpack.c.b16 %v5832, %v5824
        %v6321 = vpack.c.b16 %v5841, %v5833
        %v6322 = vpack.c.b16 %v5842, %v5834
        %v6323 = vpack.c.b16 %v5843, %v5835
        %v6324 = vpack.c.b16 %v5844, %v5836
        %v6325 = vpack.c.b16 %v5845, %v5837
        %v6326 = vpack.c.b16 %v5846, %v5838
        %v6327 = vpack.c.b16 %v5847, %v5839
        %v6328 = vpack.c.b16 %v5848, %v5840
        %v6329 = vpack.c.b16 %v5857, %v5849
        %v6330 = vpack.c.b16 %v5858, %v5850
        %v6331 = vpack.c.b16 %v5859, %v5851
        %v6332 = vpack.c.b16 %v5860, %v5852
        %v6333 = vpack.c.b16 %v5861, %v5853
        %v6334 = vpack.c.b16 %v5862, %v5854
        %v6335 = vpack.c.b16 %v5863, %v5855
        %v6336 = vpack.c.b16 %v5864, %v5856
        %v6337 = vpack.c.b16 %v5873, %v5865
        %v6338 = vpack.c.b16 %v5874, %v5866
        %v6339 = vpack.c.b16 %v5875, %v5867
        %v6340 = vpack.c.b16 %v5876, %v5868
        %v6341 = vpack.c.b16 %v5877, %v5869
        %v6342 = vpack.c.b16 %v5878, %v5870
        %v6343 = vpack.c.b16 %v5879, %v5871
        %v6344 = vpack.c.b16 %v5880, %v5872
        %v6345 = vpack.c.b16 %v5889, %v5881
        %v6346 = vpack.c.b16 %v5890, %v5882
        %v6347 = vpack.c.b16 %v5891, %v5883
        %v6348 = vpack.c.b16 %v5892, %v5884
        %v6349 = vpack.c.b16 %v5893, %v5885
        %v6350 = vpack.c.b16 %v5894, %v5886
        %v6351 = vpack.c.b16 %v5895, %v5887
        %v6352 = vpack.c.b16 %v5896, %v5888
        %v6353 = vpack.c.b16 %v5905, %v5897
        %v6354 = vpack.c.b16 %v5906, %v5898
        %v6355 = vpack.c.b16 %v5907, %v5899
        %v6356 = vpack.c.b16 %v5908, %v5900
        %v6357 = vpack.c.b16 %v5909, %v5901
        %v6358 = vpack.c.b16 %v5910, %v5902
        %v6359 = vpack.c.b16 %v5911, %v5903
        %v6360 = vpack.c.b16 %v5912, %v5904
        %v6361 = vpack.c.b16 %v5921, %v5913
        %v6362 = vpack.c.b16 %v5922, %v5914
        %v6363 = vpack.c.b16 %v5923, %v5915
        %v6364 = vpack.c.b16 %v5924, %v5916
        %v6365 = vpack.c.b16 %v5925, %v5917
        %v6366 = vpack.c.b16 %v5926, %v5918
        %v6367 = vpack.c.b16 %v5927, %v5919
        %v6368 = vpack.c.b16 %v5928, %v5920
        %v6369 = vpack.c.b16 %v5937, %v5929
        %v6370 = vpack.c.b16 %v5938, %v5930
        %v6371 = vpack.c.b16 %v5939, %v5931
        %v6372 = vpack.c.b16 %v5940, %v5932
        %v6373 = vpack.c.b16 %v5941, %v5933
        %v6374 = vpack.c.b16 %v5942, %v5934
        %v6375 = vpack.c.b16 %v5943, %v5935
        %v6376 = vpack.c.b16 %v5944, %v5936
        %v6377 = vpack.c.b16 %v5953, %v5945
        %v6378 = vpack.c.b16 %v5954, %v5946
        %v6379 = vpack.c.b16 %v5955, %v5947
        %v6380 = vpack.c.b16 %v5956, %v5948
        %v6381 = vpack.c.b16 %v5957, %v5949
        %v6382 = vpack.c.b16 %v5958, %v5950
        %v6383 = vpack.c.b16 %v5959, %v5951
        %v6384 = vpack.c.b16 %v5960, %v5952
        %v6385 = vpack.c.b16 %v5969, %v5961
        %v6386 = vpack.c.b16 %v5970, %v5962
        %v6387 = vpack.c.b16 %v5971, %v5963
        %v6388 = vpack.c.b16 %v5972, %v5964
        %v6389 = vpack.c.b16 %v5973, %v5965
        %v6390 = vpack.c.b16 %v5974, %v5966
        %v6391 = vpack.c.b16 %v5975, %v5967
        %v6392 = vpack.c.b16 %v5976, %v5968
        %v6393 = vpack.c.b16 %v5985, %v5977
        %v6394 = vpack.c.b16 %v5986, %v5978
        %v6395 = vpack.c.b16 %v5987, %v5979
        %v6396 = vpack.c.b16 %v5988, %v5980
        %v6397 = vpack.c.b16 %v5989, %v5981
        %v6398 = vpack.c.b16 %v5990, %v5982
        %v6399 = vpack.c.b16 %v5991, %v5983
        %v6400 = vpack.c.b16 %v5992, %v5984
        %v6401 = vpack.c.b16 %v6001, %v5993
        %v6402 = vpack.c.b16 %v6002, %v5994
        %v6403 = vpack.c.b16 %v6003, %v5995
        %v6404 = vpack.c.b16 %v6004, %v5996
        %v6405 = vpack.c.b16 %v6005, %v5997
        %v6406 = vpack.c.b16 %v6006, %v5998
        %v6407 = vpack.c.b16 %v6007, %v5999
        %v6408 = vpack.c.b16 %v6008, %v6000
        %v6409 = vpack.c.b16 %v6017, %v6009
        %v6410 = vpack.c.b16 %v6018, %v6010
        %v6411 = vpack.c.b16 %v6019, %v6011
        %v6412 = vpack.c.b16 %v6020, %v6012
        %v6413 = vpack.c.b16 %v6021, %v6013
        %v6414 = vpack.c.b16 %v6022, %v6014
        %v6415 = vpack.c.b16 %v6023, %v6015
        %v6416 = vpack.c.b16 %v6024, %v6016
        %v6417 = vpack.c.b16 %v6033, %v6025
        %v6418 = vpack.c.b16 %v6034, %v6026
        %v6419 = vpack.c.b16 %v6035, %v6027
        %v6420 = vpack.c.b16 %v6036, %v6028
        %v6421 = vpack.c.b16 %v6037, %v6029
        %v6422 = vpack.c.b16 %v6038, %v6030
        %v6423 = vpack.c.b16 %v6039, %v6031
        %v6424 = vpack.c.b16 %v6040, %v6032
        %6809 = vmatprep.subr.bf16.mxu0 %v6098
        %6810 = vmatpush1.bf16.msra.mxu0 %v6097
        %6811 = vmatprep.subr.bf16.mxu0 %v6090
        %6812 = vmatpush1.bf16.msra.mxu0 %v6089
        %6813 = vmatprep.subr.bf16.mxu0 %v6082
        %6814 = vmatpush1.bf16.msra.mxu0 %v6081
        %6815 = vmatprep.subr.bf16.mxu0 %v6074
        %6816 = vmatpush1.bf16.msra.mxu0 %v6073
        %6817 = vmatprep.subr.bf16.mxu0 %v6066
        %6818 = vmatpush1.bf16.msra.mxu0 %v6065
        %6819 = vmatprep.subr.bf16.mxu0 %v6058
        %6820 = vmatpush1.bf16.msra.mxu0 %v6057
        %6821 = vmatprep.subr.bf16.mxu0 %v6050
        %6822 = vmatpush1.bf16.msra.mxu0 %v6049
        %6823 = vmatprep.subr.bf16.mxu0 %v6042
        %6824 = vmatpush1.bf16.msra.mxu0 %v6041
        %6825 = vmatprep.subr.bf16.mxu0 %v6162
        %6826 = vmatpush2.bf16.msra.mxu0 %v6161
        %6827 = vmatprep.subr.bf16.mxu0 %v6154
        %6828 = vmatpush2.bf16.msra.mxu0 %v6153
        %6829 = vmatprep.subr.bf16.mxu0 %v6146
        %6830 = vmatpush2.bf16.msra.mxu0 %v6145
        %6831 = vmatprep.subr.bf16.mxu0 %v6138
        %6832 = vmatpush2.bf16.msra.mxu0 %v6137
        %6833 = vmatprep.subr.bf16.mxu0 %v6130
        %6834 = vmatpush2.bf16.msra.mxu0 %v6129
        %6835 = vmatprep.subr.bf16.mxu0 %v6122
        %6836 = vmatpush2.bf16.msra.mxu0 %v6121
        %6837 = vmatprep.subr.bf16.mxu0 %v6114
        %6838 = vmatpush2.bf16.msra.mxu0 %v6113
        %6839 = vmatprep.subr.bf16.mxu0 %v6106
        %6840 = vmatpush2.bf16.msra.mxu0 %v6105
        %6841 = vmatprep.mubr.bf16.mxu0 %v4873
        %6842 = vmatmul.mubr.bf16.gmra.mxu0 %v4859
        %v6843 = vpop.f32.mrf.mxu0
        %v6844 = vadd.f32 %v4798, %v6843
        %v6845 = vpop.f32.mrf.mxu0
        %v6846 = vadd.f32 %v4802, %v6845
        %v6847 = vpop.f32.mrf.mxu0
        %v6848 = vpop.f32.mrf.mxu0
        %6849 = vdwg.mxu0
        %6850 = vmatprep.subr.bf16.mxu0 %v6226
        %6851 = vmatpush1.bf16.msra.mxu0 %v6225
        %6852 = vmatprep.subr.bf16.mxu0 %v6218
        %6853 = vmatpush1.bf16.msra.mxu0 %v6217
        %6854 = vmatprep.subr.bf16.mxu0 %v6210
        %6855 = vmatpush1.bf16.msra.mxu0 %v6209
        %6856 = vmatprep.subr.bf16.mxu0 %v6202
        %6857 = vmatpush1.bf16.msra.mxu0 %v6201
        %6858 = vmatprep.subr.bf16.mxu0 %v6194
        %6859 = vmatpush1.bf16.msra.mxu0 %v6193
        %6860 = vmatprep.subr.bf16.mxu0 %v6186
        %6861 = vmatpush1.bf16.msra.mxu0 %v6185
        %6862 = vmatprep.subr.bf16.mxu0 %v6178
        %6863 = vmatpush1.bf16.msra.mxu0 %v6177
        %6864 = vmatprep.subr.bf16.mxu0 %v6170
        %6865 = vmatpush1.bf16.msra.mxu0 %v6169
        %6866 = vmatprep.subr.bf16.mxu0 %v6290
        %6867 = vmatpush2.bf16.msra.mxu0 %v6289
        %6868 = vmatprep.subr.bf16.mxu0 %v6282
        %6869 = vmatpush2.bf16.msra.mxu0 %v6281
        %6870 = vmatprep.subr.bf16.mxu0 %v6274
        %6871 = vmatpush2.bf16.msra.mxu0 %v6273
        %6872 = vmatprep.subr.bf16.mxu0 %v6266
        %6873 = vmatpush2.bf16.msra.mxu0 %v6265
        %6874 = vmatprep.subr.bf16.mxu0 %v6258
        %6875 = vmatpush2.bf16.msra.mxu0 %v6257
        %6876 = vmatprep.subr.bf16.mxu0 %v6250
        %6877 = vmatpush2.bf16.msra.mxu0 %v6249
        %6878 = vmatprep.subr.bf16.mxu0 %v6242
        %6879 = vmatpush2.bf16.msra.mxu0 %v6241
        %6880 = vmatprep.subr.bf16.mxu0 %v6234
        %6881 = vmatpush2.bf16.msra.mxu0 %v6233
        %6882 = vmatprep.mubr.bf16.mxu0 %v4882
        %6883 = vmatmul.mubr.bf16.gmra.mxu0 %v4881
        %v6884 = vpop.f32.mrf.mxu0
        %v6885 = vadd.f32 %v6844, %v6884
        %v6886 = vpop.f32.mrf.mxu0
        %v6887 = vadd.f32 %v6846, %v6886
        %v6888 = vpop.f32.mrf.mxu0
        %v6889 = vpop.f32.mrf.mxu0
        %6890 = vdwg.mxu0
        %6891 = vmatprep.subr.bf16.mxu0 %v6354
        %6892 = vmatpush1.bf16.msra.mxu0 %v6353
        %6893 = vmatprep.subr.bf16.mxu0 %v6346
        %6894 = vmatpush1.bf16.msra.mxu0 %v6345
        %6895 = vmatprep.subr.bf16.mxu0 %v6338
        %6896 = vmatpush1.bf16.msra.mxu0 %v6337
        %6897 = vmatprep.subr.bf16.mxu0 %v6330
        %6898 = vmatpush1.bf16.msra.mxu0 %v6329
        %6899 = vmatprep.subr.bf16.mxu0 %v6322
        %6900 = vmatpush1.bf16.msra.mxu0 %v6321
        %6901 = vmatprep.subr.bf16.mxu0 %v6314
        %6902 = vmatpush1.bf16.msra.mxu0 %v6313
        %6903 = vmatprep.subr.bf16.mxu0 %v6306
        %6904 = vmatpush1.bf16.msra.mxu0 %v6305
        %6905 = vmatprep.subr.bf16.mxu0 %v6298
        %6906 = vmatpush1.bf16.msra.mxu0 %v6297
        %6907 = vmatprep.subr.bf16.mxu0 %v6418
        %6908 = vmatpush2.bf16.msra.mxu0 %v6417
        %6909 = vmatprep.subr.bf16.mxu0 %v6410
        %6910 = vmatpush2.bf16.msra.mxu0 %v6409
        %6911 = vmatprep.subr.bf16.mxu0 %v6402
        %6912 = vmatpush2.bf16.msra.mxu0 %v6401
        %6913 = vmatprep.subr.bf16.mxu0 %v6394
        %6914 = vmatpush2.bf16.msra.mxu0 %v6393
        %6915 = vmatprep.subr.bf16.mxu0 %v6386
        %6916 = vmatpush2.bf16.msra.mxu0 %v6385
        %6917 = vmatprep.subr.bf16.mxu0 %v6378
        %6918 = vmatpush2.bf16.msra.mxu0 %v6377
        %6919 = vmatprep.subr.bf16.mxu0 %v6370
        %6920 = vmatpush2.bf16.msra.mxu0 %v6369
        %6921 = vmatprep.subr.bf16.mxu0 %v6362
        %6922 = vmatpush2.bf16.msra.mxu0 %v6361
        %6923 = vmatprep.mubr.bf16.mxu0 %v4880
        %6924 = vmatmul.mubr.bf16.gmra.mxu0 %v4866
        %v6925 = vpop.f32.mrf.mxu0
        %v6926 = vadd.f32 %v6885, %v6925
        %v6927 = vpop.f32.mrf.mxu0
        %v6928 = vadd.f32 %v6887, %v6927
        %v6929 = vpop.f32.mrf.mxu0
        %v6930 = vpop.f32.mrf.mxu0
        %6931 = vdwg.mxu0
        %6932 = vmatprep.subr.bf16.mxu0 %v6100
        %6933 = vmatpush1.bf16.msra.mxu0 %v6099
        %6934 = vmatprep.subr.bf16.mxu0 %v6092
        %6935 = vmatpush1.bf16.msra.mxu0 %v6091
        %6936 = vmatprep.subr.bf16.mxu0 %v6084
        %6937 = vmatpush1.bf16.msra.mxu0 %v6083
        %6938 = vmatprep.subr.bf16.mxu0 %v6076
        %6939 = vmatpush1.bf16.msra.mxu0 %v6075
        %6940 = vmatprep.subr.bf16.mxu0 %v6068
        %6941 = vmatpush1.bf16.msra.mxu0 %v6067
        %6942 = vmatprep.subr.bf16.mxu0 %v6060
        %6943 = vmatpush1.bf16.msra.mxu0 %v6059
        %6944 = vmatprep.subr.bf16.mxu0 %v6052
        %6945 = vmatpush1.bf16.msra.mxu0 %v6051
        %6946 = vmatprep.subr.bf16.mxu0 %v6044
        %6947 = vmatpush1.bf16.msra.mxu0 %v6043
        %6948 = vmatprep.subr.bf16.mxu0 %v6164
        %6949 = vmatpush2.bf16.msra.mxu0 %v6163
        %6950 = vmatprep.subr.bf16.mxu0 %v6156
        %6951 = vmatpush2.bf16.msra.mxu0 %v6155
        %6952 = vmatprep.subr.bf16.mxu0 %v6148
        %6953 = vmatpush2.bf16.msra.mxu0 %v6147
        %6954 = vmatprep.subr.bf16.mxu0 %v6140
        %6955 = vmatpush2.bf16.msra.mxu0 %v6139
        %6956 = vmatprep.subr.bf16.mxu0 %v6132
        %6957 = vmatpush2.bf16.msra.mxu0 %v6131
        %6958 = vmatprep.subr.bf16.mxu0 %v6124
        %6959 = vmatpush2.bf16.msra.mxu0 %v6123
        %6960 = vmatprep.subr.bf16.mxu0 %v6116
        %6961 = vmatpush2.bf16.msra.mxu0 %v6115
        %6962 = vmatprep.subr.bf16.mxu0 %v6108
        %6963 = vmatpush2.bf16.msra.mxu0 %v6107
        %6964 = vmatprep.mubr.bf16.mxu0 %v4873
        %6965 = vmatmul.mubr.bf16.gmra.mxu0 %v4859
        %v6966 = vpop.f32.mrf.mxu0
        %v6967 = vadd.f32 %v4806, %v6966
        %v6968 = vpop.f32.mrf.mxu0
        %v6969 = vadd.f32 %v4810, %v6968
        %v6970 = vpop.f32.mrf.mxu0
        %v6971 = vpop.f32.mrf.mxu0
        %6972 = vdwg.mxu0
        %6973 = vmatprep.subr.bf16.mxu0 %v6228
        %6974 = vmatpush1.bf16.msra.mxu0 %v6227
        %6975 = vmatprep.subr.bf16.mxu0 %v6220
        %6976 = vmatpush1.bf16.msra.mxu0 %v6219
        %6977 = vmatprep.subr.bf16.mxu0 %v6212
        %6978 = vmatpush1.bf16.msra.mxu0 %v6211
        %6979 = vmatprep.subr.bf16.mxu0 %v6204
        %6980 = vmatpush1.bf16.msra.mxu0 %v6203
        %6981 = vmatprep.subr.bf16.mxu0 %v6196
        %6982 = vmatpush1.bf16.msra.mxu0 %v6195
        %6983 = vmatprep.subr.bf16.mxu0 %v6188
        %6984 = vmatpush1.bf16.msra.mxu0 %v6187
        %6985 = vmatprep.subr.bf16.mxu0 %v6180
        %6986 = vmatpush1.bf16.msra.mxu0 %v6179
        %6987 = vmatprep.subr.bf16.mxu0 %v6172
        %6988 = vmatpush1.bf16.msra.mxu0 %v6171
        %6989 = vmatprep.subr.bf16.mxu0 %v6292
        %6990 = vmatpush2.bf16.msra.mxu0 %v6291
        %6991 = vmatprep.subr.bf16.mxu0 %v6284
        %6992 = vmatpush2.bf16.msra.mxu0 %v6283
        %6993 = vmatprep.subr.bf16.mxu0 %v6276
        %6994 = vmatpush2.bf16.msra.mxu0 %v6275
        %6995 = vmatprep.subr.bf16.mxu0 %v6268
        %6996 = vmatpush2.bf16.msra.mxu0 %v6267
        %6997 = vmatprep.subr.bf16.mxu0 %v6260
        %6998 = vmatpush2.bf16.msra.mxu0 %v6259
        %6999 = vmatprep.subr.bf16.mxu0 %v6252
        %7000 = vmatpush2.bf16.msra.mxu0 %v6251
        %7001 = vmatprep.subr.bf16.mxu0 %v6244
        %7002 = vmatpush2.bf16.msra.mxu0 %v6243
        %7003 = vmatprep.subr.bf16.mxu0 %v6236
        %7004 = vmatpush2.bf16.msra.mxu0 %v6235
        %7005 = vmatprep.mubr.bf16.mxu0 %v4882
        %7006 = vmatmul.mubr.bf16.gmra.mxu0 %v4881
        %v7007 = vpop.f32.mrf.mxu0
        %v7008 = vadd.f32 %v6967, %v7007
        %v7009 = vpop.f32.mrf.mxu0
        %v7010 = vadd.f32 %v6969, %v7009
        %v7011 = vpop.f32.mrf.mxu0
        %v7012 = vpop.f32.mrf.mxu0
        %7013 = vdwg.mxu0
        %7014 = vmatprep.subr.bf16.mxu0 %v6356
        %7015 = vmatpush1.bf16.msra.mxu0 %v6355
        %7016 = vmatprep.subr.bf16.mxu0 %v6348
        %7017 = vmatpush1.bf16.msra.mxu0 %v6347
        %7018 = vmatprep.subr.bf16.mxu0 %v6340
        %7019 = vmatpush1.bf16.msra.mxu0 %v6339
        %7020 = vmatprep.subr.bf16.mxu0 %v6332
        %7021 = vmatpush1.bf16.msra.mxu0 %v6331
        %7022 = vmatprep.subr.bf16.mxu0 %v6324
        %7023 = vmatpush1.bf16.msra.mxu0 %v6323
        %7024 = vmatprep.subr.bf16.mxu0 %v6316
        %7025 = vmatpush1.bf16.msra.mxu0 %v6315
        %7026 = vmatprep.subr.bf16.mxu0 %v6308
        %7027 = vmatpush1.bf16.msra.mxu0 %v6307
        %7028 = vmatprep.subr.bf16.mxu0 %v6300
        %7029 = vmatpush1.bf16.msra.mxu0 %v6299
        %7030 = vmatprep.subr.bf16.mxu0 %v6420
        %7031 = vmatpush2.bf16.msra.mxu0 %v6419
        %7032 = vmatprep.subr.bf16.mxu0 %v6412
        %7033 = vmatpush2.bf16.msra.mxu0 %v6411
        %7034 = vmatprep.subr.bf16.mxu0 %v6404
        %7035 = vmatpush2.bf16.msra.mxu0 %v6403
        %7036 = vmatprep.subr.bf16.mxu0 %v6396
        %7037 = vmatpush2.bf16.msra.mxu0 %v6395
        %7038 = vmatprep.subr.bf16.mxu0 %v6388
        %7039 = vmatpush2.bf16.msra.mxu0 %v6387
        %7040 = vmatprep.subr.bf16.mxu0 %v6380
        %7041 = vmatpush2.bf16.msra.mxu0 %v6379
        %7042 = vmatprep.subr.bf16.mxu0 %v6372
        %7043 = vmatpush2.bf16.msra.mxu0 %v6371
        %7044 = vmatprep.subr.bf16.mxu0 %v6364
        %7045 = vmatpush2.bf16.msra.mxu0 %v6363
        %7046 = vmatprep.mubr.bf16.mxu0 %v4880
        %7047 = vmatmul.mubr.bf16.gmra.mxu0 %v4866
        %v7048 = vpop.f32.mrf.mxu0
        %v7049 = vadd.f32 %v7008, %v7048
        %v7050 = vpop.f32.mrf.mxu0
        %v7051 = vadd.f32 %v7010, %v7050
        %v7052 = vpop.f32.mrf.mxu0
        %v7053 = vpop.f32.mrf.mxu0
        %7054 = vdwg.mxu0
        %7055 = vmatprep.subr.bf16.mxu0 %v6102
        %7056 = vmatpush1.bf16.msra.mxu0 %v6101
        %7057 = vmatprep.subr.bf16.mxu0 %v6094
        %7058 = vmatpush1.bf16.msra.mxu0 %v6093
        %7059 = vmatprep.subr.bf16.mxu0 %v6086
        %7060 = vmatpush1.bf16.msra.mxu0 %v6085
        %7061 = vmatprep.subr.bf16.mxu0 %v6078
        %7062 = vmatpush1.bf16.msra.mxu0 %v6077
        %7063 = vmatprep.subr.bf16.mxu0 %v6070
        %7064 = vmatpush1.bf16.msra.mxu0 %v6069
        %7065 = vmatprep.subr.bf16.mxu0 %v6062
        %7066 = vmatpush1.bf16.msra.mxu0 %v6061
        %7067 = vmatprep.subr.bf16.mxu0 %v6054
        %7068 = vmatpush1.bf16.msra.mxu0 %v6053
        %7069 = vmatprep.subr.bf16.mxu0 %v6046
        %7070 = vmatpush1.bf16.msra.mxu0 %v6045
        %7071 = vmatprep.subr.bf16.mxu0 %v6166
        %7072 = vmatpush2.bf16.msra.mxu0 %v6165
        %7073 = vmatprep.subr.bf16.mxu0 %v6158
        %7074 = vmatpush2.bf16.msra.mxu0 %v6157
        %7075 = vmatprep.subr.bf16.mxu0 %v6150
        %7076 = vmatpush2.bf16.msra.mxu0 %v6149
        %7077 = vmatprep.subr.bf16.mxu0 %v6142
        %7078 = vmatpush2.bf16.msra.mxu0 %v6141
        %7079 = vmatprep.subr.bf16.mxu0 %v6134
        %7080 = vmatpush2.bf16.msra.mxu0 %v6133
        %7081 = vmatprep.subr.bf16.mxu0 %v6126
        %7082 = vmatpush2.bf16.msra.mxu0 %v6125
        %7083 = vmatprep.subr.bf16.mxu0 %v6118
        %7084 = vmatpush2.bf16.msra.mxu0 %v6117
        %7085 = vmatprep.subr.bf16.mxu0 %v6110
        %7086 = vmatpush2.bf16.msra.mxu0 %v6109
        %7087 = vmatprep.mubr.bf16.mxu0 %v4873
        %7088 = vmatmul.mubr.bf16.gmra.mxu0 %v4859
        %v7089 = vpop.f32.mrf.mxu0
        %v7090 = vadd.f32 %v4814, %v7089
        %v7091 = vpop.f32.mrf.mxu0
        %v7092 = vadd.f32 %v4818, %v7091
        %v7093 = vpop.f32.mrf.mxu0
        %v7094 = vpop.f32.mrf.mxu0
        %7095 = vdwg.mxu0
        %7096 = vmatprep.subr.bf16.mxu0 %v6230
        %7097 = vmatpush1.bf16.msra.mxu0 %v6229
        %7098 = vmatprep.subr.bf16.mxu0 %v6222
        %7099 = vmatpush1.bf16.msra.mxu0 %v6221
        %7100 = vmatprep.subr.bf16.mxu0 %v6214
        %7101 = vmatpush1.bf16.msra.mxu0 %v6213
        %7102 = vmatprep.subr.bf16.mxu0 %v6206
        %7103 = vmatpush1.bf16.msra.mxu0 %v6205
        %7104 = vmatprep.subr.bf16.mxu0 %v6198
        %7105 = vmatpush1.bf16.msra.mxu0 %v6197
        %7106 = vmatprep.subr.bf16.mxu0 %v6190
        %7107 = vmatpush1.bf16.msra.mxu0 %v6189
        %7108 = vmatprep.subr.bf16.mxu0 %v6182
        %7109 = vmatpush1.bf16.msra.mxu0 %v6181
        %7110 = vmatprep.subr.bf16.mxu0 %v6174
        %7111 = vmatpush1.bf16.msra.mxu0 %v6173
        %7112 = vmatprep.subr.bf16.mxu0 %v6294
        %7113 = vmatpush2.bf16.msra.mxu0 %v6293
        %7114 = vmatprep.subr.bf16.mxu0 %v6286
        %7115 = vmatpush2.bf16.msra.mxu0 %v6285
        %7116 = vmatprep.subr.bf16.mxu0 %v6278
        %7117 = vmatpush2.bf16.msra.mxu0 %v6277
        %7118 = vmatprep.subr.bf16.mxu0 %v6270
        %7119 = vmatpush2.bf16.msra.mxu0 %v6269
        %7120 = vmatprep.subr.bf16.mxu0 %v6262
        %7121 = vmatpush2.bf16.msra.mxu0 %v6261
        %7122 = vmatprep.subr.bf16.mxu0 %v6254
        %7123 = vmatpush2.bf16.msra.mxu0 %v6253
        %7124 = vmatprep.subr.bf16.mxu0 %v6246
        %7125 = vmatpush2.bf16.msra.mxu0 %v6245
        %7126 = vmatprep.subr.bf16.mxu0 %v6238
        %7127 = vmatpush2.bf16.msra.mxu0 %v6237
        %7128 = vmatprep.mubr.bf16.mxu0 %v4882
        %7129 = vmatmul.mubr.bf16.gmra.mxu0 %v4881
        %v7130 = vpop.f32.mrf.mxu0
        %v7131 = vadd.f32 %v7090, %v7130
        %v7132 = vpop.f32.mrf.mxu0
        %v7133 = vadd.f32 %v7092, %v7132
        %v7134 = vpop.f32.mrf.mxu0
        %v7135 = vpop.f32.mrf.mxu0
        %7136 = vdwg.mxu0
        %7137 = vmatprep.subr.bf16.mxu0 %v6358
        %7138 = vmatpush1.bf16.msra.mxu0 %v6357
        %7139 = vmatprep.subr.bf16.mxu0 %v6350
        %7140 = vmatpush1.bf16.msra.mxu0 %v6349
        %7141 = vmatprep.subr.bf16.mxu0 %v6342
        %7142 = vmatpush1.bf16.msra.mxu0 %v6341
        %7143 = vmatprep.subr.bf16.mxu0 %v6334
        %7144 = vmatpush1.bf16.msra.mxu0 %v6333
        %7145 = vmatprep.subr.bf16.mxu0 %v6326
        %7146 = vmatpush1.bf16.msra.mxu0 %v6325
        %7147 = vmatprep.subr.bf16.mxu0 %v6318
        %7148 = vmatpush1.bf16.msra.mxu0 %v6317
        %7149 = vmatprep.subr.bf16.mxu0 %v6310
        %7150 = vmatpush1.bf16.msra.mxu0 %v6309
        %7151 = vmatprep.subr.bf16.mxu0 %v6302
        %7152 = vmatpush1.bf16.msra.mxu0 %v6301
        %7153 = vmatprep.subr.bf16.mxu0 %v6422
        %7154 = vmatpush2.bf16.msra.mxu0 %v6421
        %7155 = vmatprep.subr.bf16.mxu0 %v6414
        %7156 = vmatpush2.bf16.msra.mxu0 %v6413
        %7157 = vmatprep.subr.bf16.mxu0 %v6406
        %7158 = vmatpush2.bf16.msra.mxu0 %v6405
        %7159 = vmatprep.subr.bf16.mxu0 %v6398
        %7160 = vmatpush2.bf16.msra.mxu0 %v6397
        %7161 = vmatprep.subr.bf16.mxu0 %v6390
        %7162 = vmatpush2.bf16.msra.mxu0 %v6389
        %7163 = vmatprep.subr.bf16.mxu0 %v6382
        %7164 = vmatpush2.bf16.msra.mxu0 %v6381
        %7165 = vmatprep.subr.bf16.mxu0 %v6374
        %7166 = vmatpush2.bf16.msra.mxu0 %v6373
        %7167 = vmatprep.subr.bf16.mxu0 %v6366
        %7168 = vmatpush2.bf16.msra.mxu0 %v6365
        %7169 = vmatprep.mubr.bf16.mxu0 %v4880
        %7170 = vmatmul.mubr.bf16.gmra.mxu0 %v4866
        %v7171 = vpop.f32.mrf.mxu0
        %v7172 = vadd.f32 %v7131, %v7171
        %v7173 = vpop.f32.mrf.mxu0
        %v7174 = vadd.f32 %v7133, %v7173
        %v7175 = vpop.f32.mrf.mxu0
        %v7176 = vpop.f32.mrf.mxu0
        %7177 = vdwg.mxu0
        %7178 = vmatprep.subr.bf16.mxu0 %v6104
        %7179 = vmatpush1.bf16.msra.mxu0 %v6103
        %7180 = vmatprep.subr.bf16.mxu0 %v6096
        %7181 = vmatpush1.bf16.msra.mxu0 %v6095
        %7182 = vmatprep.subr.bf16.mxu0 %v6088
        %7183 = vmatpush1.bf16.msra.mxu0 %v6087
        %7184 = vmatprep.subr.bf16.mxu0 %v6080
        %7185 = vmatpush1.bf16.msra.mxu0 %v6079
        %7186 = vmatprep.subr.bf16.mxu0 %v6072
        %7187 = vmatpush1.bf16.msra.mxu0 %v6071
        %7188 = vmatprep.subr.bf16.mxu0 %v6064
        %7189 = vmatpush1.bf16.msra.mxu0 %v6063
        %7190 = vmatprep.subr.bf16.mxu0 %v6056
        %7191 = vmatpush1.bf16.msra.mxu0 %v6055
        %7192 = vmatprep.subr.bf16.mxu0 %v6048
        %7193 = vmatpush1.bf16.msra.mxu0 %v6047
        %7194 = vmatprep.subr.bf16.mxu0 %v6168
        %7195 = vmatpush2.bf16.msra.mxu0 %v6167
        %7196 = vmatprep.subr.bf16.mxu0 %v6160
        %7197 = vmatpush2.bf16.msra.mxu0 %v6159
        %7198 = vmatprep.subr.bf16.mxu0 %v6152
        %7199 = vmatpush2.bf16.msra.mxu0 %v6151
        %7200 = vmatprep.subr.bf16.mxu0 %v6144
        %7201 = vmatpush2.bf16.msra.mxu0 %v6143
        %7202 = vmatprep.subr.bf16.mxu0 %v6136
        %7203 = vmatpush2.bf16.msra.mxu0 %v6135
        %7204 = vmatprep.subr.bf16.mxu0 %v6128
        %7205 = vmatpush2.bf16.msra.mxu0 %v6127
        %7206 = vmatprep.subr.bf16.mxu0 %v6120
        %7207 = vmatpush2.bf16.msra.mxu0 %v6119
        %7208 = vmatprep.subr.bf16.mxu0 %v6112
        %7209 = vmatpush2.bf16.msra.mxu0 %v6111
        %7210 = vmatprep.mubr.bf16.mxu0 %v4873
        %7211 = vmatmul.mubr.bf16.gmra.mxu0 %v4859
        %v7212 = vpop.f32.mrf.mxu0
        %v7213 = vadd.f32 %v4822, %v7212
        %v7214 = vpop.f32.mrf.mxu0
        %v7215 = vadd.f32 %v4826, %v7214
        %v7216 = vpop.f32.mrf.mxu0
        %v7217 = vpop.f32.mrf.mxu0
        %7218 = vdwg.mxu0
        %7219 = vmatprep.subr.bf16.mxu0 %v6232
        %7220 = vmatpush1.bf16.msra.mxu0 %v6231
        %7221 = vmatprep.subr.bf16.mxu0 %v6224
        %7222 = vmatpush1.bf16.msra.mxu0 %v6223
        %7223 = vmatprep.subr.bf16.mxu0 %v6216
        %7224 = vmatpush1.bf16.msra.mxu0 %v6215
        %7225 = vmatprep.subr.bf16.mxu0 %v6208
        %7226 = vmatpush1.bf16.msra.mxu0 %v6207
        %7227 = vmatprep.subr.bf16.mxu0 %v6200
        %7228 = vmatpush1.bf16.msra.mxu0 %v6199
        %7229 = vmatprep.subr.bf16.mxu0 %v6192
        %7230 = vmatpush1.bf16.msra.mxu0 %v6191
        %7231 = vmatprep.subr.bf16.mxu0 %v6184
        %7232 = vmatpush1.bf16.msra.mxu0 %v6183
        %7233 = vmatprep.subr.bf16.mxu0 %v6176
        %7234 = vmatpush1.bf16.msra.mxu0 %v6175
        %7235 = vmatprep.subr.bf16.mxu0 %v6296
        %7236 = vmatpush2.bf16.msra.mxu0 %v6295
        %7237 = vmatprep.subr.bf16.mxu0 %v6288
        %7238 = vmatpush2.bf16.msra.mxu0 %v6287
        %7239 = vmatprep.subr.bf16.mxu0 %v6280
        %7240 = vmatpush2.bf16.msra.mxu0 %v6279
        %7241 = vmatprep.subr.bf16.mxu0 %v6272
        %7242 = vmatpush2.bf16.msra.mxu0 %v6271
        %7243 = vmatprep.subr.bf16.mxu0 %v6264
        %7244 = vmatpush2.bf16.msra.mxu0 %v6263
        %7245 = vmatprep.subr.bf16.mxu0 %v6256
        %7246 = vmatpush2.bf16.msra.mxu0 %v6255
        %7247 = vmatprep.subr.bf16.mxu0 %v6248
        %7248 = vmatpush2.bf16.msra.mxu0 %v6247
        %7249 = vmatprep.subr.bf16.mxu0 %v6240
        %7250 = vmatpush2.bf16.msra.mxu0 %v6239
        %7251 = vmatprep.mubr.bf16.mxu0 %v4882
        %7252 = vmatmul.mubr.bf16.gmra.mxu0 %v4881
        %v7253 = vpop.f32.mrf.mxu0
        %v7254 = vadd.f32 %v7213, %v7253
        %v7255 = vpop.f32.mrf.mxu0
        %v7256 = vadd.f32 %v7215, %v7255
        %v7257 = vpop.f32.mrf.mxu0
        %v7258 = vpop.f32.mrf.mxu0
        %7259 = vdwg.mxu0
        %7260 = vmatprep.subr.bf16.mxu0 %v6360
        %7261 = vmatpush1.bf16.msra.mxu0 %v6359
        %7262 = vmatprep.subr.bf16.mxu0 %v6352
        %7263 = vmatpush1.bf16.msra.mxu0 %v6351
        %7264 = vmatprep.subr.bf16.mxu0 %v6344
        %7265 = vmatpush1.bf16.msra.mxu0 %v6343
        %7266 = vmatprep.subr.bf16.mxu0 %v6336
        %7267 = vmatpush1.bf16.msra.mxu0 %v6335
        %7268 = vmatprep.subr.bf16.mxu0 %v6328
        %7269 = vmatpush1.bf16.msra.mxu0 %v6327
        %7270 = vmatprep.subr.bf16.mxu0 %v6320
        %7271 = vmatpush1.bf16.msra.mxu0 %v6319
        %7272 = vmatprep.subr.bf16.mxu0 %v6312
        %7273 = vmatpush1.bf16.msra.mxu0 %v6311
        %7274 = vmatprep.subr.bf16.mxu0 %v6304
        %7275 = vmatpush1.bf16.msra.mxu0 %v6303
        %7276 = vmatprep.subr.bf16.mxu0 %v6424
        %7277 = vmatpush2.bf16.msra.mxu0 %v6423
        %7278 = vmatprep.subr.bf16.mxu0 %v6416
        %7279 = vmatpush2.bf16.msra.mxu0 %v6415
        %7280 = vmatprep.subr.bf16.mxu0 %v6408
        %7281 = vmatpush2.bf16.msra.mxu0 %v6407
        %7282 = vmatprep.subr.bf16.mxu0 %v6400
        %7283 = vmatpush2.bf16.msra.mxu0 %v6399
        %7284 = vmatprep.subr.bf16.mxu0 %v6392
        %7285 = vmatpush2.bf16.msra.mxu0 %v6391
        %7286 = vmatprep.subr.bf16.mxu0 %v6384
        %7287 = vmatpush2.bf16.msra.mxu0 %v6383
        %7288 = vmatprep.subr.bf16.mxu0 %v6376
        %7289 = vmatpush2.bf16.msra.mxu0 %v6375
        %7290 = vmatprep.subr.bf16.mxu0 %v6368
        %7291 = vmatpush2.bf16.msra.mxu0 %v6367
        %7292 = vmatprep.mubr.bf16.mxu0 %v4880
        %7293 = vmatmul.mubr.bf16.gmra.mxu0 %v4866
        %v7294 = vpop.f32.mrf.mxu0
        %v7295 = vadd.f32 %v7254, %v7294
        %v7296 = vpop.f32.mrf.mxu0
        %v7297 = vadd.f32 %v7256, %v7296
        %v7298 = vpop.f32.mrf.mxu0
        %v7299 = vpop.f32.mrf.mxu0
        %7300 = vdwg.mxu0
        %v7309 = vcombine.low %v6926, %v6928
        %v7310 = vcombine.low %v7049, %v7051
        %v7312 = vunpack.c.l.s4 1983009808
        %v7313 = vunpack.c.0.s8 %v7312
        %v7314 = vlaneseq
        %v7315 = vshrl.u32 %v7314, 7
        %v7316 = vsub.s32 %v7313, %v7315
        %v7317 = vrot.slane %v7309, %v7316
        %v7319 = vunpack.c.l.s4 1983009808
        %v7320 = vunpack.c.0.s8 %v7319
        %v7321 = vlaneseq
        %v7322 = vshrl.u32 %v7321, 7
        %v7323 = vsub.s32 %v7320, %v7322
        %v7324 = vrot.slane %v7310, %v7323
        %v7325 = vcombine.low %v7317, %v7324
        %v7326 = vcombine.high %v7317, %v7324
        %v7327 = vcombine.low %v7172, %v7174
        %v7328 = vcombine.low %v7295, %v7297
        %v7330 = vunpack.c.l.s4 1983009808
        %v7331 = vunpack.c.0.s8 %v7330
        %v7332 = vlaneseq
        %v7333 = vshrl.u32 %v7332, 7
        %v7334 = vsub.s32 %v7331, %v7333
        %v7335 = vrot.slane %v7327, %v7334
        %v7337 = vunpack.c.l.s4 1983009808
        %v7338 = vunpack.c.0.s8 %v7337
        %v7339 = vlaneseq
        %v7340 = vshrl.u32 %v7339, 7
        %v7341 = vsub.s32 %v7338, %v7340
        %v7342 = vrot.slane %v7328, %v7341
        %v7343 = vcombine.low %v7335, %v7342
        %v7344 = vcombine.high %v7335, %v7342
        %v7349 = vld [vmem:[#allocation7] sm:$0xff]
        %v7350 = vld [vmem:[#allocation7 + $0x8] sm:$0xff]
        %v7351 = vmul.f32 %v7325, %v7349
        %v7352 = vmul.f32 %v7343, %v7350
        %v7353 = vmul.f32 %v7326, %v7349
        %v7354 = vmul.f32 %v7344, %v7350
        %v7355 = vld [vmem:[%s385] sm:$0x1]
        %v7356 = vld [vmem:[%s385 + $0x1] sm:$0x1]
        %v7359 = vlaneseq
        %v7360 = vshrl.u32 %v7359, 7
        %v7361 = vsub.s32 0, %v7360
        %v7362 = vrot.slane %v7355, %v7361
        %v7363 = vlaneseq
        %v7364 = vshrl.u32 %v7363, 7
        %v7365 = vsub.s32 0, %v7364
        %v7366 = vrot.slane %v7356, %v7365
        %v7371 = vcombine.high %v7351, %v7351
        %v7373 = vunpack.c.l.s4 1983009808
        %v7374 = vunpack.c.0.s8 %v7373
        %v7375 = vlaneseq
        %v7376 = vshrl.u32 %v7375, 7
        %v7377 = vsub.s32 %v7374, %v7376
        %v7378 = vrot.slane %v7351, %v7377
        %v7380 = vunpack.c.l.s4 1983009808
        %v7381 = vunpack.c.0.s8 %v7380
        %v7382 = vlaneseq
        %v7383 = vshrl.u32 %v7382, 7
        %v7384 = vsub.s32 %v7381, %v7383
        %v7385 = vrot.slane %v7371, %v7384
        %v7386 = vcombine.high %v7378, %v7378
        %v7387 = vcombine.high %v7385, %v7385
        %v7388 = vcombine.high %v7352, %v7352
        %v7390 = vunpack.c.l.s4 1983009808
        %v7391 = vunpack.c.0.s8 %v7390
        %v7392 = vlaneseq
        %v7393 = vshrl.u32 %v7392, 7
        %v7394 = vsub.s32 %v7391, %v7393
        %v7395 = vrot.slane %v7352, %v7394
        %v7397 = vunpack.c.l.s4 1983009808
        %v7398 = vunpack.c.0.s8 %v7397
        %v7399 = vlaneseq
        %v7400 = vshrl.u32 %v7399, 7
        %v7401 = vsub.s32 %v7398, %v7400
        %v7402 = vrot.slane %v7388, %v7401
        %v7403 = vcombine.high %v7395, %v7395
        %v7404 = vcombine.high %v7402, %v7402
        %7413 = vmatprep.subr.mxu0 0.0
        %7414 = vmatpush1.xpose.msra.mxu0 0.0
        %7415 = vmatprep.subr.mxu0 0.0
        %7416 = vmatpush1.xpose.msra.mxu0 0.0
        %7417 = vmatprep.subr.mxu0 0.0
        %7418 = vmatpush1.xpose.msra.mxu0 0.0
        %7419 = vmatprep.subr.mxu0 0.0
        %7420 = vmatpush1.xpose.msra.mxu0 0.0
        %7421 = vmatprep.subr.mxu0 0.0
        %7422 = vmatpush1.xpose.msra.mxu0 0.0
        %7423 = vmatprep.subr.mxu0 0.0
        %7424 = vmatpush1.xpose.msra.mxu0 0.0
        %7425 = vmatprep.subr.mxu0 0.0
        %7426 = vmatpush1.xpose.msra.mxu0 0.0
        %7427 = vmatprep.subr.mxu0 0.0
        %7428 = vmatpush1.xpose.msra.mxu0 0.0
        %7429 = vmatprep.subr.mxu0 0.0
        %7430 = vmatpush1.xpose.msra.mxu0 0.0
        %7431 = vmatprep.subr.mxu0 0.0
        %7432 = vmatpush1.xpose.msra.mxu0 0.0
        %7433 = vmatprep.subr.mxu0 0.0
        %7434 = vmatpush1.xpose.msra.mxu0 0.0
        %7435 = vmatprep.subr.mxu0 0.0
        %7436 = vmatpush1.xpose.msra.mxu0 0.0
        %7437 = vmatprep.subr.mxu0 0.0
        %7438 = vmatpush1.xpose.msra.mxu0 0.0
        %7439 = vmatprep.subr.mxu0 0.0
        %7440 = vmatpush1.xpose.msra.mxu0 0.0
        %7441 = vmatprep.subr.mxu0 0.0
        %7442 = vmatpush1.xpose.msra.mxu0 0.0
        %7443 = vmatprep.subr.mxu0 %v3924
        %7444 = vmatpush1.xpose.msra.mxu0 %v3922
        %7445 = vmatprep.subr.mxu0 0.0
        %7446 = vmatpush2.xpose.msra.mxu0 0.0
        %7447 = vmatprep.subr.mxu0 0.0
        %7448 = vmatpush2.xpose.msra.mxu0 0.0
        %7449 = vmatprep.subr.mxu0 0.0
        %7450 = vmatpush2.xpose.msra.mxu0 0.0
        %7451 = vmatprep.subr.mxu0 0.0
        %7452 = vmatpush2.xpose.msra.mxu0 0.0
        %7453 = vmatprep.subr.mxu0 0.0
        %7454 = vmatpush2.xpose.msra.mxu0 0.0
        %7455 = vmatprep.subr.mxu0 0.0
        %7456 = vmatpush2.xpose.msra.mxu0 0.0
        %7457 = vmatprep.subr.mxu0 0.0
        %7458 = vmatpush2.xpose.msra.mxu0 0.0
        %7459 = vmatprep.subr.mxu0 0.0
        %7460 = vmatpush2.xpose.msra.mxu0 0.0
        %7461 = vmatprep.subr.mxu0 0.0
        %7462 = vmatpush2.xpose.msra.mxu0 0.0
        %7463 = vmatprep.subr.mxu0 0.0
        %7464 = vmatpush2.xpose.msra.mxu0 0.0
        %7465 = vmatprep.subr.mxu0 0.0
        %7466 = vmatpush2.xpose.msra.mxu0 0.0
        %7467 = vmatprep.subr.mxu0 0.0
        %7468 = vmatpush2.xpose.msra.mxu0 0.0
        %7469 = vmatprep.subr.mxu0 0.0
        %7470 = vmatpush2.xpose.msra.mxu0 0.0
        %7471 = vmatprep.subr.mxu0 0.0
        %7472 = vmatpush2.xpose.msra.mxu0 0.0
        %7473 = vmatprep.subr.mxu0 0.0
        %7474 = vmatpush2.xpose.msra.mxu0 0.0
        %7475 = vmatprep.subr.mxu0 0.0
        %7476 = vmatpush2.xpose.msra.mxu0 0.0
        %7477 = vmatprep.mubr.f32.mxu0 %v7386
        %7478 = vmatmul.mubr.f32.gmra.mxu0 %v7378
        %v7479 = vpop.f32.mrf.mxu0
        %v7480 = vadd.f32 %v7362, %v7479
        %v7481 = vpop.f32.mrf.mxu0
        %7482 = vdwg.mxu0
        %7483 = vmatprep.subr.mxu0 0.0
        %7484 = vmatpush1.xpose.msra.mxu0 0.0
        %7485 = vmatprep.subr.mxu0 0.0
        %7486 = vmatpush1.xpose.msra.mxu0 0.0
        %7487 = vmatprep.subr.mxu0 0.0
        %7488 = vmatpush1.xpose.msra.mxu0 0.0
        %7489 = vmatprep.subr.mxu0 0.0
        %7490 = vmatpush1.xpose.msra.mxu0 0.0
        %7491 = vmatprep.subr.mxu0 0.0
        %7492 = vmatpush1.xpose.msra.mxu0 0.0
        %7493 = vmatprep.subr.mxu0 0.0
        %7494 = vmatpush1.xpose.msra.mxu0 0.0
        %7495 = vmatprep.subr.mxu0 0.0
        %7496 = vmatpush1.xpose.msra.mxu0 0.0
        %7497 = vmatprep.subr.mxu0 0.0
        %7498 = vmatpush1.xpose.msra.mxu0 0.0
        %7499 = vmatprep.subr.mxu0 0.0
        %7500 = vmatpush1.xpose.msra.mxu0 0.0
        %7501 = vmatprep.subr.mxu0 0.0
        %7502 = vmatpush1.xpose.msra.mxu0 0.0
        %7503 = vmatprep.subr.mxu0 0.0
        %7504 = vmatpush1.xpose.msra.mxu0 0.0
        %7505 = vmatprep.subr.mxu0 0.0
        %7506 = vmatpush1.xpose.msra.mxu0 0.0
        %7507 = vmatprep.subr.mxu0 0.0
        %7508 = vmatpush1.xpose.msra.mxu0 0.0
        %7509 = vmatprep.subr.mxu0 0.0
        %7510 = vmatpush1.xpose.msra.mxu0 0.0
        %7511 = vmatprep.subr.mxu0 0.0
        %7512 = vmatpush1.xpose.msra.mxu0 0.0
        %7513 = vmatprep.subr.mxu0 %v4053
        %7514 = vmatpush1.xpose.msra.mxu0 %v4051
        %7515 = vmatprep.subr.mxu0 0.0
        %7516 = vmatpush2.xpose.msra.mxu0 0.0
        %7517 = vmatprep.subr.mxu0 0.0
        %7518 = vmatpush2.xpose.msra.mxu0 0.0
        %7519 = vmatprep.subr.mxu0 0.0
        %7520 = vmatpush2.xpose.msra.mxu0 0.0
        %7521 = vmatprep.subr.mxu0 0.0
        %7522 = vmatpush2.xpose.msra.mxu0 0.0
        %7523 = vmatprep.subr.mxu0 0.0
        %7524 = vmatpush2.xpose.msra.mxu0 0.0
        %7525 = vmatprep.subr.mxu0 0.0
        %7526 = vmatpush2.xpose.msra.mxu0 0.0
        %7527 = vmatprep.subr.mxu0 0.0
        %7528 = vmatpush2.xpose.msra.mxu0 0.0
        %7529 = vmatprep.subr.mxu0 0.0
        %7530 = vmatpush2.xpose.msra.mxu0 0.0
        %7531 = vmatprep.subr.mxu0 0.0
        %7532 = vmatpush2.xpose.msra.mxu0 0.0
        %7533 = vmatprep.subr.mxu0 0.0
        %7534 = vmatpush2.xpose.msra.mxu0 0.0
        %7535 = vmatprep.subr.mxu0 0.0
        %7536 = vmatpush2.xpose.msra.mxu0 0.0
        %7537 = vmatprep.subr.mxu0 0.0
        %7538 = vmatpush2.xpose.msra.mxu0 0.0
        %7539 = vmatprep.subr.mxu0 0.0
        %7540 = vmatpush2.xpose.msra.mxu0 0.0
        %7541 = vmatprep.subr.mxu0 0.0
        %7542 = vmatpush2.xpose.msra.mxu0 0.0
        %7543 = vmatprep.subr.mxu0 0.0
        %7544 = vmatpush2.xpose.msra.mxu0 0.0
        %7545 = vmatprep.subr.mxu0 0.0
        %7546 = vmatpush2.xpose.msra.mxu0 0.0
        %7547 = vmatprep.mubr.f32.mxu0 %v7387
        %7548 = vmatmul.mubr.f32.gmra.mxu0 %v7385
        %v7549 = vpop.f32.mrf.mxu0
        %v7550 = vadd.f32 %v7480, %v7549
        %v7551 = vpop.f32.mrf.mxu0
        %7552 = vdwg.mxu0
        %7553 = vmatprep.subr.mxu0 0.0
        %7554 = vmatpush1.xpose.msra.mxu0 0.0
        %7555 = vmatprep.subr.mxu0 0.0
        %7556 = vmatpush1.xpose.msra.mxu0 0.0
        %7557 = vmatprep.subr.mxu0 0.0
        %7558 = vmatpush1.xpose.msra.mxu0 0.0
        %7559 = vmatprep.subr.mxu0 0.0
        %7560 = vmatpush1.xpose.msra.mxu0 0.0
        %7561 = vmatprep.subr.mxu0 0.0
        %7562 = vmatpush1.xpose.msra.mxu0 0.0
        %7563 = vmatprep.subr.mxu0 0.0
        %7564 = vmatpush1.xpose.msra.mxu0 0.0
        %7565 = vmatprep.subr.mxu0 0.0
        %7566 = vmatpush1.xpose.msra.mxu0 0.0
        %7567 = vmatprep.subr.mxu0 0.0
        %7568 = vmatpush1.xpose.msra.mxu0 0.0
        %7569 = vmatprep.subr.mxu0 0.0
        %7570 = vmatpush1.xpose.msra.mxu0 0.0
        %7571 = vmatprep.subr.mxu0 0.0
        %7572 = vmatpush1.xpose.msra.mxu0 0.0
        %7573 = vmatprep.subr.mxu0 0.0
        %7574 = vmatpush1.xpose.msra.mxu0 0.0
        %7575 = vmatprep.subr.mxu0 0.0
        %7576 = vmatpush1.xpose.msra.mxu0 0.0
        %7577 = vmatprep.subr.mxu0 0.0
        %7578 = vmatpush1.xpose.msra.mxu0 0.0
        %7579 = vmatprep.subr.mxu0 0.0
        %7580 = vmatpush1.xpose.msra.mxu0 0.0
        %7581 = vmatprep.subr.mxu0 0.0
        %7582 = vmatpush1.xpose.msra.mxu0 0.0
        %7583 = vmatprep.subr.mxu0 %v4182
        %7584 = vmatpush1.xpose.msra.mxu0 %v4180
        %7585 = vmatprep.subr.mxu0 0.0
        %7586 = vmatpush2.xpose.msra.mxu0 0.0
        %7587 = vmatprep.subr.mxu0 0.0
        %7588 = vmatpush2.xpose.msra.mxu0 0.0
        %7589 = vmatprep.subr.mxu0 0.0
        %7590 = vmatpush2.xpose.msra.mxu0 0.0
        %7591 = vmatprep.subr.mxu0 0.0
        %7592 = vmatpush2.xpose.msra.mxu0 0.0
        %7593 = vmatprep.subr.mxu0 0.0
        %7594 = vmatpush2.xpose.msra.mxu0 0.0
        %7595 = vmatprep.subr.mxu0 0.0
        %7596 = vmatpush2.xpose.msra.mxu0 0.0
        %7597 = vmatprep.subr.mxu0 0.0
        %7598 = vmatpush2.xpose.msra.mxu0 0.0
        %7599 = vmatprep.subr.mxu0 0.0
        %7600 = vmatpush2.xpose.msra.mxu0 0.0
        %7601 = vmatprep.subr.mxu0 0.0
        %7602 = vmatpush2.xpose.msra.mxu0 0.0
        %7603 = vmatprep.subr.mxu0 0.0
        %7604 = vmatpush2.xpose.msra.mxu0 0.0
        %7605 = vmatprep.subr.mxu0 0.0
        %7606 = vmatpush2.xpose.msra.mxu0 0.0
        %7607 = vmatprep.subr.mxu0 0.0
        %7608 = vmatpush2.xpose.msra.mxu0 0.0
        %7609 = vmatprep.subr.mxu0 0.0
        %7610 = vmatpush2.xpose.msra.mxu0 0.0
        %7611 = vmatprep.subr.mxu0 0.0
        %7612 = vmatpush2.xpose.msra.mxu0 0.0
        %7613 = vmatprep.subr.mxu0 0.0
        %7614 = vmatpush2.xpose.msra.mxu0 0.0
        %7615 = vmatprep.subr.mxu0 0.0
        %7616 = vmatpush2.xpose.msra.mxu0 0.0
        %7617 = vmatprep.mubr.f32.mxu0 %v7403
        %7618 = vmatmul.mubr.f32.gmra.mxu0 %v7395
        %v7619 = vpop.f32.mrf.mxu0
        %v7620 = vadd.f32 %v7550, %v7619
        %v7621 = vpop.f32.mrf.mxu0
        %7622 = vdwg.mxu0
        %7623 = vmatprep.subr.mxu0 0.0
        %7624 = vmatpush1.xpose.msra.mxu0 0.0
        %7625 = vmatprep.subr.mxu0 0.0
        %7626 = vmatpush1.xpose.msra.mxu0 0.0
        %7627 = vmatprep.subr.mxu0 0.0
        %7628 = vmatpush1.xpose.msra.mxu0 0.0
        %7629 = vmatprep.subr.mxu0 0.0
        %7630 = vmatpush1.xpose.msra.mxu0 0.0
        %7631 = vmatprep.subr.mxu0 0.0
        %7632 = vmatpush1.xpose.msra.mxu0 0.0
        %7633 = vmatprep.subr.mxu0 0.0
        %7634 = vmatpush1.xpose.msra.mxu0 0.0
        %7635 = vmatprep.subr.mxu0 0.0
        %7636 = vmatpush1.xpose.msra.mxu0 0.0
        %7637 = vmatprep.subr.mxu0 0.0
        %7638 = vmatpush1.xpose.msra.mxu0 0.0
        %7639 = vmatprep.subr.mxu0 0.0
        %7640 = vmatpush1.xpose.msra.mxu0 0.0
        %7641 = vmatprep.subr.mxu0 0.0
        %7642 = vmatpush1.xpose.msra.mxu0 0.0
        %7643 = vmatprep.subr.mxu0 0.0
        %7644 = vmatpush1.xpose.msra.mxu0 0.0
        %7645 = vmatprep.subr.mxu0 0.0
        %7646 = vmatpush1.xpose.msra.mxu0 0.0
        %7647 = vmatprep.subr.mxu0 0.0
        %7648 = vmatpush1.xpose.msra.mxu0 0.0
        %7649 = vmatprep.subr.mxu0 0.0
        %7650 = vmatpush1.xpose.msra.mxu0 0.0
        %7651 = vmatprep.subr.mxu0 0.0
        %7652 = vmatpush1.xpose.msra.mxu0 0.0
        %7653 = vmatprep.subr.mxu0 %v4311
        %7654 = vmatpush1.xpose.msra.mxu0 %v4309
        %7655 = vmatprep.subr.mxu0 0.0
        %7656 = vmatpush2.xpose.msra.mxu0 0.0
        %7657 = vmatprep.subr.mxu0 0.0
        %7658 = vmatpush2.xpose.msra.mxu0 0.0
        %7659 = vmatprep.subr.mxu0 0.0
        %7660 = vmatpush2.xpose.msra.mxu0 0.0
        %7661 = vmatprep.subr.mxu0 0.0
        %7662 = vmatpush2.xpose.msra.mxu0 0.0
        %7663 = vmatprep.subr.mxu0 0.0
        %7664 = vmatpush2.xpose.msra.mxu0 0.0
        %7665 = vmatprep.subr.mxu0 0.0
        %7666 = vmatpush2.xpose.msra.mxu0 0.0
        %7667 = vmatprep.subr.mxu0 0.0
        %7668 = vmatpush2.xpose.msra.mxu0 0.0
        %7669 = vmatprep.subr.mxu0 0.0
        %7670 = vmatpush2.xpose.msra.mxu0 0.0
        %7671 = vmatprep.subr.mxu0 0.0
        %7672 = vmatpush2.xpose.msra.mxu0 0.0
        %7673 = vmatprep.subr.mxu0 0.0
        %7674 = vmatpush2.xpose.msra.mxu0 0.0
        %7675 = vmatprep.subr.mxu0 0.0
        %7676 = vmatpush2.xpose.msra.mxu0 0.0
        %7677 = vmatprep.subr.mxu0 0.0
        %7678 = vmatpush2.xpose.msra.mxu0 0.0
        %7679 = vmatprep.subr.mxu0 0.0
        %7680 = vmatpush2.xpose.msra.mxu0 0.0
        %7681 = vmatprep.subr.mxu0 0.0
        %7682 = vmatpush2.xpose.msra.mxu0 0.0
        %7683 = vmatprep.subr.mxu0 0.0
        %7684 = vmatpush2.xpose.msra.mxu0 0.0
        %7685 = vmatprep.subr.mxu0 0.0
        %7686 = vmatpush2.xpose.msra.mxu0 0.0
        %7687 = vmatprep.mubr.f32.mxu0 %v7404
        %7688 = vmatmul.mubr.f32.gmra.mxu0 %v7402
        %v7689 = vpop.f32.mrf.mxu0
        %v7690 = vadd.f32 %v7620, %v7689
        %v7691 = vpop.f32.mrf.mxu0
        %7692 = vdwg.mxu0
        %v7695 = vcombine.high %v7353, %v7353
        %v7697 = vunpack.c.l.s4 1983009808
        %v7698 = vunpack.c.0.s8 %v7697
        %v7699 = vlaneseq
        %v7700 = vshrl.u32 %v7699, 7
        %v7701 = vsub.s32 %v7698, %v7700
        %v7702 = vrot.slane %v7353, %v7701
        %v7704 = vunpack.c.l.s4 1983009808
        %v7705 = vunpack.c.0.s8 %v7704
        %v7706 = vlaneseq
        %v7707 = vshrl.u32 %v7706, 7
        %v7708 = vsub.s32 %v7705, %v7707
        %v7709 = vrot.slane %v7695, %v7708
        %v7710 = vcombine.high %v7702, %v7702
        %v7711 = vcombine.high %v7709, %v7709
        %v7712 = vcombine.high %v7354, %v7354
        %v7714 = vunpack.c.l.s4 1983009808
        %v7715 = vunpack.c.0.s8 %v7714
        %v7716 = vlaneseq
        %v7717 = vshrl.u32 %v7716, 7
        %v7718 = vsub.s32 %v7715, %v7717
        %v7719 = vrot.slane %v7354, %v7718
        %v7721 = vunpack.c.l.s4 1983009808
        %v7722 = vunpack.c.0.s8 %v7721
        %v7723 = vlaneseq
        %v7724 = vshrl.u32 %v7723, 7
        %v7725 = vsub.s32 %v7722, %v7724
        %v7726 = vrot.slane %v7712, %v7725
        %v7727 = vcombine.high %v7719, %v7719
        %v7728 = vcombine.high %v7726, %v7726
        %7737 = vmatprep.subr.mxu0 0.0
        %7738 = vmatpush1.xpose.msra.mxu0 0.0
        %7739 = vmatprep.subr.mxu0 0.0
        %7740 = vmatpush1.xpose.msra.mxu0 0.0
        %7741 = vmatprep.subr.mxu0 0.0
        %7742 = vmatpush1.xpose.msra.mxu0 0.0
        %7743 = vmatprep.subr.mxu0 0.0
        %7744 = vmatpush1.xpose.msra.mxu0 0.0
        %7745 = vmatprep.subr.mxu0 0.0
        %7746 = vmatpush1.xpose.msra.mxu0 0.0
        %7747 = vmatprep.subr.mxu0 0.0
        %7748 = vmatpush1.xpose.msra.mxu0 0.0
        %7749 = vmatprep.subr.mxu0 0.0
        %7750 = vmatpush1.xpose.msra.mxu0 0.0
        %7751 = vmatprep.subr.mxu0 0.0
        %7752 = vmatpush1.xpose.msra.mxu0 0.0
        %7753 = vmatprep.subr.mxu0 0.0
        %7754 = vmatpush1.xpose.msra.mxu0 0.0
        %7755 = vmatprep.subr.mxu0 0.0
        %7756 = vmatpush1.xpose.msra.mxu0 0.0
        %7757 = vmatprep.subr.mxu0 0.0
        %7758 = vmatpush1.xpose.msra.mxu0 0.0
        %7759 = vmatprep.subr.mxu0 0.0
        %7760 = vmatpush1.xpose.msra.mxu0 0.0
        %7761 = vmatprep.subr.mxu0 0.0
        %7762 = vmatpush1.xpose.msra.mxu0 0.0
        %7763 = vmatprep.subr.mxu0 0.0
        %7764 = vmatpush1.xpose.msra.mxu0 0.0
        %7765 = vmatprep.subr.mxu0 0.0
        %7766 = vmatpush1.xpose.msra.mxu0 0.0
        %7767 = vmatprep.subr.mxu0 %v3928
        %7768 = vmatpush1.xpose.msra.mxu0 %v3926
        %7769 = vmatprep.subr.mxu0 0.0
        %7770 = vmatpush2.xpose.msra.mxu0 0.0
        %7771 = vmatprep.subr.mxu0 0.0
        %7772 = vmatpush2.xpose.msra.mxu0 0.0
        %7773 = vmatprep.subr.mxu0 0.0
        %7774 = vmatpush2.xpose.msra.mxu0 0.0
        %7775 = vmatprep.subr.mxu0 0.0
        %7776 = vmatpush2.xpose.msra.mxu0 0.0
        %7777 = vmatprep.subr.mxu0 0.0
        %7778 = vmatpush2.xpose.msra.mxu0 0.0
        %7779 = vmatprep.subr.mxu0 0.0
        %7780 = vmatpush2.xpose.msra.mxu0 0.0
        %7781 = vmatprep.subr.mxu0 0.0
        %7782 = vmatpush2.xpose.msra.mxu0 0.0
        %7783 = vmatprep.subr.mxu0 0.0
        %7784 = vmatpush2.xpose.msra.mxu0 0.0
        %7785 = vmatprep.subr.mxu0 0.0
        %7786 = vmatpush2.xpose.msra.mxu0 0.0
        %7787 = vmatprep.subr.mxu0 0.0
        %7788 = vmatpush2.xpose.msra.mxu0 0.0
        %7789 = vmatprep.subr.mxu0 0.0
        %7790 = vmatpush2.xpose.msra.mxu0 0.0
        %7791 = vmatprep.subr.mxu0 0.0
        %7792 = vmatpush2.xpose.msra.mxu0 0.0
        %7793 = vmatprep.subr.mxu0 0.0
        %7794 = vmatpush2.xpose.msra.mxu0 0.0
        %7795 = vmatprep.subr.mxu0 0.0
        %7796 = vmatpush2.xpose.msra.mxu0 0.0
        %7797 = vmatprep.subr.mxu0 0.0
        %7798 = vmatpush2.xpose.msra.mxu0 0.0
        %7799 = vmatprep.subr.mxu0 0.0
        %7800 = vmatpush2.xpose.msra.mxu0 0.0
        %7801 = vmatprep.mubr.f32.mxu0 %v7710
        %7802 = vmatmul.mubr.f32.gmra.mxu0 %v7702
        %v7803 = vpop.f32.mrf.mxu0
        %v7804 = vadd.f32 %v7366, %v7803
        %v7805 = vpop.f32.mrf.mxu0
        %7806 = vdwg.mxu0
        %7807 = vmatprep.subr.mxu0 0.0
        %7808 = vmatpush1.xpose.msra.mxu0 0.0
        %7809 = vmatprep.subr.mxu0 0.0
        %7810 = vmatpush1.xpose.msra.mxu0 0.0
        %7811 = vmatprep.subr.mxu0 0.0
        %7812 = vmatpush1.xpose.msra.mxu0 0.0
        %7813 = vmatprep.subr.mxu0 0.0
        %7814 = vmatpush1.xpose.msra.mxu0 0.0
        %7815 = vmatprep.subr.mxu0 0.0
        %7816 = vmatpush1.xpose.msra.mxu0 0.0
        %7817 = vmatprep.subr.mxu0 0.0
        %7818 = vmatpush1.xpose.msra.mxu0 0.0
        %7819 = vmatprep.subr.mxu0 0.0
        %7820 = vmatpush1.xpose.msra.mxu0 0.0
        %7821 = vmatprep.subr.mxu0 0.0
        %7822 = vmatpush1.xpose.msra.mxu0 0.0
        %7823 = vmatprep.subr.mxu0 0.0
        %7824 = vmatpush1.xpose.msra.mxu0 0.0
        %7825 = vmatprep.subr.mxu0 0.0
        %7826 = vmatpush1.xpose.msra.mxu0 0.0
        %7827 = vmatprep.subr.mxu0 0.0
        %7828 = vmatpush1.xpose.msra.mxu0 0.0
        %7829 = vmatprep.subr.mxu0 0.0
        %7830 = vmatpush1.xpose.msra.mxu0 0.0
        %7831 = vmatprep.subr.mxu0 0.0
        %7832 = vmatpush1.xpose.msra.mxu0 0.0
        %7833 = vmatprep.subr.mxu0 0.0
        %7834 = vmatpush1.xpose.msra.mxu0 0.0
        %7835 = vmatprep.subr.mxu0 0.0
        %7836 = vmatpush1.xpose.msra.mxu0 0.0
        %7837 = vmatprep.subr.mxu0 %v4057
        %7838 = vmatpush1.xpose.msra.mxu0 %v4055
        %7839 = vmatprep.subr.mxu0 0.0
        %7840 = vmatpush2.xpose.msra.mxu0 0.0
        %7841 = vmatprep.subr.mxu0 0.0
        %7842 = vmatpush2.xpose.msra.mxu0 0.0
        %7843 = vmatprep.subr.mxu0 0.0
        %7844 = vmatpush2.xpose.msra.mxu0 0.0
        %7845 = vmatprep.subr.mxu0 0.0
        %7846 = vmatpush2.xpose.msra.mxu0 0.0
        %7847 = vmatprep.subr.mxu0 0.0
        %7848 = vmatpush2.xpose.msra.mxu0 0.0
        %7849 = vmatprep.subr.mxu0 0.0
        %7850 = vmatpush2.xpose.msra.mxu0 0.0
        %7851 = vmatprep.subr.mxu0 0.0
        %7852 = vmatpush2.xpose.msra.mxu0 0.0
        %7853 = vmatprep.subr.mxu0 0.0
        %7854 = vmatpush2.xpose.msra.mxu0 0.0
        %7855 = vmatprep.subr.mxu0 0.0
        %7856 = vmatpush2.xpose.msra.mxu0 0.0
        %7857 = vmatprep.subr.mxu0 0.0
        %7858 = vmatpush2.xpose.msra.mxu0 0.0
        %7859 = vmatprep.subr.mxu0 0.0
        %7860 = vmatpush2.xpose.msra.mxu0 0.0
        %7861 = vmatprep.subr.mxu0 0.0
        %7862 = vmatpush2.xpose.msra.mxu0 0.0
        %7863 = vmatprep.subr.mxu0 0.0
        %7864 = vmatpush2.xpose.msra.mxu0 0.0
        %7865 = vmatprep.subr.mxu0 0.0
        %7866 = vmatpush2.xpose.msra.mxu0 0.0
        %7867 = vmatprep.subr.mxu0 0.0
        %7868 = vmatpush2.xpose.msra.mxu0 0.0
        %7869 = vmatprep.subr.mxu0 0.0
        %7870 = vmatpush2.xpose.msra.mxu0 0.0
        %7871 = vmatprep.mubr.f32.mxu0 %v7711
        %7872 = vmatmul.mubr.f32.gmra.mxu0 %v7709
        %v7873 = vpop.f32.mrf.mxu0
        %v7874 = vadd.f32 %v7804, %v7873
        %v7875 = vpop.f32.mrf.mxu0
        %7876 = vdwg.mxu0
        %7877 = vmatprep.subr.mxu0 0.0
        %7878 = vmatpush1.xpose.msra.mxu0 0.0
        %7879 = vmatprep.subr.mxu0 0.0
        %7880 = vmatpush1.xpose.msra.mxu0 0.0
        %7881 = vmatprep.subr.mxu0 0.0
        %7882 = vmatpush1.xpose.msra.mxu0 0.0
        %7883 = vmatprep.subr.mxu0 0.0
        %7884 = vmatpush1.xpose.msra.mxu0 0.0
        %7885 = vmatprep.subr.mxu0 0.0
        %7886 = vmatpush1.xpose.msra.mxu0 0.0
        %7887 = vmatprep.subr.mxu0 0.0
        %7888 = vmatpush1.xpose.msra.mxu0 0.0
        %7889 = vmatprep.subr.mxu0 0.0
        %7890 = vmatpush1.xpose.msra.mxu0 0.0
        %7891 = vmatprep.subr.mxu0 0.0
        %7892 = vmatpush1.xpose.msra.mxu0 0.0
        %7893 = vmatprep.subr.mxu0 0.0
        %7894 = vmatpush1.xpose.msra.mxu0 0.0
        %7895 = vmatprep.subr.mxu0 0.0
        %7896 = vmatpush1.xpose.msra.mxu0 0.0
        %7897 = vmatprep.subr.mxu0 0.0
        %7898 = vmatpush1.xpose.msra.mxu0 0.0
        %7899 = vmatprep.subr.mxu0 0.0
        %7900 = vmatpush1.xpose.msra.mxu0 0.0
        %7901 = vmatprep.subr.mxu0 0.0
        %7902 = vmatpush1.xpose.msra.mxu0 0.0
        %7903 = vmatprep.subr.mxu0 0.0
        %7904 = vmatpush1.xpose.msra.mxu0 0.0
        %7905 = vmatprep.subr.mxu0 0.0
        %7906 = vmatpush1.xpose.msra.mxu0 0.0
        %7907 = vmatprep.subr.mxu0 %v4186
        %7908 = vmatpush1.xpose.msra.mxu0 %v4184
        %7909 = vmatprep.subr.mxu0 0.0
        %7910 = vmatpush2.xpose.msra.mxu0 0.0
        %7911 = vmatprep.subr.mxu0 0.0
        %7912 = vmatpush2.xpose.msra.mxu0 0.0
        %7913 = vmatprep.subr.mxu0 0.0
        %7914 = vmatpush2.xpose.msra.mxu0 0.0
        %7915 = vmatprep.subr.mxu0 0.0
        %7916 = vmatpush2.xpose.msra.mxu0 0.0
        %7917 = vmatprep.subr.mxu0 0.0
        %7918 = vmatpush2.xpose.msra.mxu0 0.0
        %7919 = vmatprep.subr.mxu0 0.0
        %7920 = vmatpush2.xpose.msra.mxu0 0.0
        %7921 = vmatprep.subr.mxu0 0.0
        %7922 = vmatpush2.xpose.msra.mxu0 0.0
        %7923 = vmatprep.subr.mxu0 0.0
        %7924 = vmatpush2.xpose.msra.mxu0 0.0
        %7925 = vmatprep.subr.mxu0 0.0
        %7926 = vmatpush2.xpose.msra.mxu0 0.0
        %7927 = vmatprep.subr.mxu0 0.0
        %7928 = vmatpush2.xpose.msra.mxu0 0.0
        %7929 = vmatprep.subr.mxu0 0.0
        %7930 = vmatpush2.xpose.msra.mxu0 0.0
        %7931 = vmatprep.subr.mxu0 0.0
        %7932 = vmatpush2.xpose.msra.mxu0 0.0
        %7933 = vmatprep.subr.mxu0 0.0
        %7934 = vmatpush2.xpose.msra.mxu0 0.0
        %7935 = vmatprep.subr.mxu0 0.0
        %7936 = vmatpush2.xpose.msra.mxu0 0.0
        %7937 = vmatprep.subr.mxu0 0.0
        %7938 = vmatpush2.xpose.msra.mxu0 0.0
        %7939 = vmatprep.subr.mxu0 0.0
        %7940 = vmatpush2.xpose.msra.mxu0 0.0
        %7941 = vmatprep.mubr.f32.mxu0 %v7727
        %7942 = vmatmul.mubr.f32.gmra.mxu0 %v7719
        %v7943 = vpop.f32.mrf.mxu0
        %v7944 = vadd.f32 %v7874, %v7943
        %v7945 = vpop.f32.mrf.mxu0
        %7946 = vdwg.mxu0
        %7947 = vmatprep.subr.mxu0 0.0
        %7948 = vmatpush1.xpose.msra.mxu0 0.0
        %7949 = vmatprep.subr.mxu0 0.0
        %7950 = vmatpush1.xpose.msra.mxu0 0.0
        %7951 = vmatprep.subr.mxu0 0.0
        %7952 = vmatpush1.xpose.msra.mxu0 0.0
        %7953 = vmatprep.subr.mxu0 0.0
        %7954 = vmatpush1.xpose.msra.mxu0 0.0
        %7955 = vmatprep.subr.mxu0 0.0
        %7956 = vmatpush1.xpose.msra.mxu0 0.0
        %7957 = vmatprep.subr.mxu0 0.0
        %7958 = vmatpush1.xpose.msra.mxu0 0.0
        %7959 = vmatprep.subr.mxu0 0.0
        %7960 = vmatpush1.xpose.msra.mxu0 0.0
        %7961 = vmatprep.subr.mxu0 0.0
        %7962 = vmatpush1.xpose.msra.mxu0 0.0
        %7963 = vmatprep.subr.mxu0 0.0
        %7964 = vmatpush1.xpose.msra.mxu0 0.0
        %7965 = vmatprep.subr.mxu0 0.0
        %7966 = vmatpush1.xpose.msra.mxu0 0.0
        %7967 = vmatprep.subr.mxu0 0.0
        %7968 = vmatpush1.xpose.msra.mxu0 0.0
        %7969 = vmatprep.subr.mxu0 0.0
        %7970 = vmatpush1.xpose.msra.mxu0 0.0
        %7971 = vmatprep.subr.mxu0 0.0
        %7972 = vmatpush1.xpose.msra.mxu0 0.0
        %7973 = vmatprep.subr.mxu0 0.0
        %7974 = vmatpush1.xpose.msra.mxu0 0.0
        %7975 = vmatprep.subr.mxu0 0.0
        %7976 = vmatpush1.xpose.msra.mxu0 0.0
        %7977 = vmatprep.subr.mxu0 %v4315
        %7978 = vmatpush1.xpose.msra.mxu0 %v4313
        %7979 = vmatprep.subr.mxu0 0.0
        %7980 = vmatpush2.xpose.msra.mxu0 0.0
        %7981 = vmatprep.subr.mxu0 0.0
        %7982 = vmatpush2.xpose.msra.mxu0 0.0
        %7983 = vmatprep.subr.mxu0 0.0
        %7984 = vmatpush2.xpose.msra.mxu0 0.0
        %7985 = vmatprep.subr.mxu0 0.0
        %7986 = vmatpush2.xpose.msra.mxu0 0.0
        %7987 = vmatprep.subr.mxu0 0.0
        %7988 = vmatpush2.xpose.msra.mxu0 0.0
        %7989 = vmatprep.subr.mxu0 0.0
        %7990 = vmatpush2.xpose.msra.mxu0 0.0
        %7991 = vmatprep.subr.mxu0 0.0
        %7992 = vmatpush2.xpose.msra.mxu0 0.0
        %7993 = vmatprep.subr.mxu0 0.0
        %7994 = vmatpush2.xpose.msra.mxu0 0.0
        %7995 = vmatprep.subr.mxu0 0.0
        %7996 = vmatpush2.xpose.msra.mxu0 0.0
        %7997 = vmatprep.subr.mxu0 0.0
        %7998 = vmatpush2.xpose.msra.mxu0 0.0
        %7999 = vmatprep.subr.mxu0 0.0
        %8000 = vmatpush2.xpose.msra.mxu0 0.0
        %8001 = vmatprep.subr.mxu0 0.0
        %8002 = vmatpush2.xpose.msra.mxu0 0.0
        %8003 = vmatprep.subr.mxu0 0.0
        %8004 = vmatpush2.xpose.msra.mxu0 0.0
        %8005 = vmatprep.subr.mxu0 0.0
        %8006 = vmatpush2.xpose.msra.mxu0 0.0
        %8007 = vmatprep.subr.mxu0 0.0
        %8008 = vmatpush2.xpose.msra.mxu0 0.0
        %8009 = vmatprep.subr.mxu0 0.0
        %8010 = vmatpush2.xpose.msra.mxu0 0.0
        %8011 = vmatprep.mubr.f32.mxu0 %v7728
        %8012 = vmatmul.mubr.f32.gmra.mxu0 %v7726
        %v8013 = vpop.f32.mrf.mxu0
        %v8014 = vadd.f32 %v7944, %v8013
        %v8015 = vpop.f32.mrf.mxu0
        %8016 = vdwg.mxu0
        %vm8017 = vcmask 58368
        %v8018 = vsel %vm8017, %v7690, -inf
        %8019 = vmax.xlane.f32.xlu0 %v8018
        %v8020 = vpop.xlane.xlu0 %8019
        %v8021 = vsel %vm8017, %v8014, -inf
        %8022 = vmax.xlane.f32.xlu0 %v8021
        %v8023 = vpop.xlane.xlu0 %8022
        %v8024 = vsub.f32 %v7690, %v8020
        %v8025 = vsub.f32 %v8014, %v8023
        %v8026 = vmul.f32 %v8024, 1.442695
        %v8027 = vpow.pop %v8026
        %v8028 = vmul.f32 %v8025, 1.442695
        %v8029 = vpow.pop %v8028
        %v8030 = vsel %vm8017, %v8027, 0.0
        %8031 = vadd.xlane.f32.xlu0 %v8030
        %v8032 = vpop.xlane.xlu0 %8031
        %v8033 = vsel %vm8017, %v8029, 0.0
        %8034 = vadd.xlane.f32.xlu0 %v8033
        %v8035 = vpop.xlane.xlu0 %8034
        %v8036 = vrcp.pop %v8032
        %v8037 = vrcp.pop %v8035
        %v8038 = vmul.f32 %v8027, %v8036
        %v8039 = vmul.f32 %v8029, %v8037
        %8040 = vst.msk [vmem:[%s448] sm:$0x3] %vm8017, %v8038
        %8041 = vst.msk [vmem:[%s448 + $0x2] sm:$0x3] %vm8017, %v8039
        %s8042 = sand.u32 %s221, 1
        %s8043 = scalar_lea.sflag [#allocation4], %s8042
        %s8044 = sand.u32 %s221, 1
        %s8045 = smul.addr %s8044, 4
        %s8046 = scalar_lea.vmem [#allocation14], %s8045
        // Predicated region
        $region81: #{tpu_custom_call.1} parent=51 // pred_check
          %p8047 = pneg %p231
        $region82: #{tpu_custom_call.1} parent=51 // pred_check_branch
          %8049 = sbr.rel (%p8047) target = $region84
        $region83: #{tpu_custom_call.1} parent=51 // pred_region
          %s8050 = smul.u32 2, %s30
          %s8052 = ssub.s32 64, 64
          %8053 = vsyncadd %s8043, %s8052
          %s8054 = smul.addr %s8050, 32
          %s8055 = scalar_lea.hbm %s8, %s8054
          %s8056 = sshll.u32 %s8046, 4
          %s8057 = int_to_ptr.vmem [resolvable:$true] %s8056
          %8062 = dma.vmem_to_hbm [thread:$0]  %s8057, 64, %s8055, %s8043, 32, 32, 2
        $region84: #{tpu_custom_call.1} parent=51 // pred_fallthru
          _
      $region52: #{tpu_custom_call.1} parent=5 // pred_fallthru
        _
      %p8063 = scmp.le.s32.totalorder 2, %s25
      // Predicated region
      $region85: #{tpu_custom_call.1} parent=5 // pred_check
        %p8064 = pneg %p8063
      $region86: #{tpu_custom_call.1} parent=5 // pred_check_branch
        %8066 = sbr.rel (%p8064) target = $region88
      $region87: #{tpu_custom_call.1} parent=5 // pred_region
        %s8067 = ssub.s32 %s25, 2
        // Predicated region
        $region89: #{tpu_custom_call.1} parent=87 // pred_check
          %p8068 = pneg %p237
        $region90: #{tpu_custom_call.1} parent=87 // pred_check_branch
          %8070 = sbr.rel (%p8068) target = $region92
        $region91: #{tpu_custom_call.1} parent=87 // pred_region
          %s8071 = sand.u32 %s222, 1
          %s8072 = scalar_lea.sflag [#allocation4], %s8071
          %s8073 = sand.u32 %s222, 1
          %s8074 = smul.addr %s8073, 4
          %s8075 = scalar_lea.vmem [#allocation14], %s8074
          %8076 = dma.done %s8072, 64
        $region92: #{tpu_custom_call.1} parent=87 // pred_fallthru
          _
      $region88: #{tpu_custom_call.1} parent=5 // pred_fallthru
        _
    $region6: #{tpu_custom_call.1} parent=1 // loop_footer
      %s29 = sadd.s32 1, %s25
    $region7: #{tpu_custom_call.1} parent=1 // loop_footer_branch
      %24 = sbr.rel target = $region3
    $region8: #{tpu_custom_call.1} parent=1 // loop_exit
      _
    %8077 = vsyncpa [#allocation3], 1
    %s8078 = scalar_lea.sflag [#allocation3], 1
    %8079 = vsyncpa %s8078, 1
    %8080 = vsyncpa [#allocation6], 1
    %s8081 = scalar_lea.sflag [#allocation6], 1
    %8082 = vsyncpa %s8081, 1
    %8083 = vsyncpa [#allocation9], 1
    %8084 = vsyncpa [#allocation12], 1
    %8085 = vsyncpa [#allocation4], 1
    %s8086 = scalar_lea.sflag [#allocation4], 1
    %8087 = vsyncpa %s8086, 1

</llo_original>
